<compile_context>
chip_gen: v5e
topology: v5e:2x2
jax: 0.10.0
libtpu: 0.0.40
codegen_flags: <defaults>
</compile_context>

<pallas_src>
import functools

import jax
import jax.numpy as jnp
from jax.experimental import pallas as pl
from jax.experimental.pallas import tpu as pltpu

_VMEM_LIMIT = 32 * 1024 * 1024   # explicit scoped-VMEM budget (safe on v5e/v6e/v7x)


# ----------------------------------------------------------------------------
# Tiled matmul kernel: out = A @ W + b  (bf16 MXU operands, f32 accumulation)
# Used for every 1x1 conv and for the LSTM input / output projections.
# ----------------------------------------------------------------------------

def _mm_bias_kernel(a_ref, w_ref, b_ref, o_ref, acc_ref):
    k = pl.program_id(2)

    @pl.when(k == 0)
    def _():
        acc_ref[...] = jnp.zeros_like(acc_ref)

    # Per-tile cast to bf16 inside the kernel (no wrapper-side HBM cast pass).
    acc_ref[...] += jnp.dot(a_ref[...].astype(jnp.bfloat16), w_ref[...],
                            preferred_element_type=jnp.float32)

    @pl.when(k == pl.num_programs(2) - 1)
    def _():
        o_ref[...] = (acc_ref[...] + b_ref[...]).astype(o_ref.dtype)


def _pick_tile(dim, unit, cap):
    """Largest tile <= cap dividing `dim` (prefer multiples of `unit`)."""
    if dim <= cap:
        return dim
    t = (cap // unit) * unit
    while t >= unit:
        if dim % t == 0:
            return t
        t -= unit
    for t in range(cap, 0, -1):          # bounded fallback: keeps VMEM in budget
        if dim % t == 0:
            return t
    return dim


def pallas_matmul_bias(a, w, b, out_dtype=jnp.bfloat16,
                       tm_cap=256, tn_cap=512, tk_cap=512):
    """out = a @ w + b ; a:(M,K) float, w:(K,N) (stored bf16), b:(N,)."""
    M, K = a.shape
    K2, N = w.shape
    assert K == K2
    w = w.astype(jnp.bfloat16)
    b2 = b.reshape(1, N).astype(jnp.float32)

    tm = _pick_tile(M, 16, tm_cap)   # 16: bf16 sublane packing
    tk = _pick_tile(K, 128, tk_cap)
    tn = _pick_tile(N, 128, tn_cap)
    grid = (M // tm, N // tn, K // tk)

    return pl.pallas_call(
        _mm_bias_kernel,
        out_shape=jax.ShapeDtypeStruct((M, N), out_dtype),
        grid=grid,
        in_specs=[
            pl.BlockSpec((tm, tk), lambda i, j, k: (i, k)),
            pl.BlockSpec((tk, tn), lambda i, j, k: (k, j)),
            pl.BlockSpec((1, tn), lambda i, j, k: (0, j)),
        ],
        out_specs=pl.BlockSpec((tm, tn), lambda i, j, k: (i, j)),
        scratch_shapes=[pltpu.VMEM((tm, tn), jnp.float32)],
        compiler_params=pltpu.CompilerParams(
            dimension_semantics=("parallel", "parallel", "arbitrary"),
            vmem_limit_bytes=_VMEM_LIMIT),
    )(a, w, b2)


# ----------------------------------------------------------------------------
# Fused GroupNorm + ReLU + Conv1d(K, pad) [+ residual add] kernel, channels-last
# ----------------------------------------------------------------------------

def _fused_gn_conv_kernel(*refs, ksize, pad, l_out, gn_count, eps,
                          use_gn, relu, has_skip):
    it = iter(refs)
    x_ref = next(it)
    if use_gn:
        gamma_ref, beta_ref, gmat_ref = next(it), next(it), next(it)
    w_ref, b_ref = next(it), next(it)
    skip_ref = next(it) if has_skip else None
    o_ref = next(it)

    if use_gn:
        x = x_ref[0].astype(jnp.float32)                       # (L, Cin)
        inv_n = 1.0 / gn_count
        # Mean-subtracted two-pass (in VMEM) variance: numerically safer than
        # E[x^2]-E[x]^2 now that activations travel in bf16. Group aggregation
        # is a small block-diagonal (C,C) matmul.
        mean_c = jnp.dot(jnp.sum(x, axis=0, keepdims=True), gmat_ref[...],
                         preferred_element_type=jnp.float32) * inv_n
        d = x - mean_c
        var_c = jnp.dot(jnp.sum(d * d, axis=0, keepdims=True), gmat_ref[...],
                        preferred_element_type=jnp.float32) * inv_n
        y = d * jax.lax.rsqrt(var_c + eps) * gamma_ref[...] + beta_ref[...]
        if relu:
            y = jnp.maximum(y, 0.0)
        yb = y.astype(jnp.bfloat16)
    else:
        yb = x_ref[0].astype(jnp.bfloat16)
        if relu:
            yb = jnp.maximum(yb, 0.0)

    if pad > 0:                                # in-kernel halo pad (VMEM, no HBM pass)
        z = jnp.zeros((pad, yb.shape[1]), yb.dtype)
        yb = jnp.concatenate([z, yb, z], axis=0)

    if ksize > 1:                              # fold K into the MXU contraction
        cols = jnp.concatenate([yb[k:k + l_out, :] for k in range(ksize)], axis=-1)
    else:
        cols = yb[:l_out, :]
    out = jnp.dot(cols, w_ref[...], preferred_element_type=jnp.float32) + b_ref[...]
    if has_skip:
        out = out + skip_ref[0].astype(jnp.float32)   # fused residual add
    o_ref[0] = out.astype(o_ref.dtype)


def fused_conv1d(x, w_flat, b, *, ksize, pad, gn=None, relu=False, skip=None,
                 eps=1e-5):
    """act(GroupNorm(x)) -> Conv1d, channels-last.

    x: (B, L, Cin); w_flat: (K*Cin, Cout) bf16 (k-major); b: (Cout,).
    gn: optional (gamma(1,Cin), beta(1,Cin), gmat(Cin,Cin), num_groups).
    skip: optional (B, L_out, Cout) tensor added before the store.
    Returns (B, L_out, Cout) bf16 with L_out = L + 2*pad - K + 1 (stride 1).
    """
    # TODO(synk): add an L-tile grid axis (with carried GN stats) for long
    # sequences; at these sizes a whole-L block per batch fits VMEM easily.
    B, L, Cin = x.shape
    KC, Cout = w_flat.shape
    L_out = L + 2 * pad - ksize + 1
    b2 = b.reshape(1, Cout).astype(jnp.float32)

    use_gn = gn is not None
    has_skip = skip is not None

    args = [x]
    in_specs = [pl.BlockSpec((1, L, Cin), lambda i: (i, 0, 0))]
    gn_count = 1.0
    if use_gn:
        gamma2, beta2, gmat, groups = gn
        assert Cin % groups == 0
        gn_count = float((Cin // groups) * L)
        args += [gamma2, beta2, gmat]
        in_specs += [pl.BlockSpec((1, Cin), lambda i: (0, 0)),
                     pl.BlockSpec((1, Cin), lambda i: (0, 0)),
                     pl.BlockSpec((Cin, Cin), lambda i: (0, 0))]
    args += [w_flat, b2]
    in_specs += [pl.BlockSpec((KC, Cout), lambda i: (0, 0)),
                 pl.BlockSpec((1, Cout), lambda i: (0, 0))]
    if has_skip:
        args.append(skip)
        in_specs.append(pl.BlockSpec((1, L_out, Cout), lambda i: (i, 0, 0)))

    kernel = functools.partial(_fused_gn_conv_kernel, ksize=ksize, pad=pad,
                               l_out=L_out, gn_count=gn_count, eps=eps,
                               use_gn=use_gn, relu=relu, has_skip=has_skip)
    # TODO(synk): lane-dense (channel-padded to 128) activation layout would
    # further help the v5e store path; channels here are 32/64.
    return pl.pallas_call(
        kernel,
        out_shape=jax.ShapeDtypeStruct((B, L_out, Cout), jnp.bfloat16),
        grid=(B,),
        in_specs=in_specs,
        out_specs=pl.BlockSpec((1, L_out, Cout), lambda i: (i, 0, 0)),
        compiler_params=pltpu.CompilerParams(
            dimension_semantics=("parallel",),
            vmem_limit_bytes=_VMEM_LIMIT),
    )(*args)


# ----------------------------------------------------------------------------
# Module pieces (operate on preprocessed, kernel-ready parameters)
# ----------------------------------------------------------------------------

def conv1x1(x, p, out_dtype=jnp.bfloat16):
    B, L, Cin = x.shape
    y = pallas_matmul_bias(x.reshape(B * L, Cin), p["w"], p["b"],
                           out_dtype=out_dtype)
    return y.reshape(B, L, -1)


def apply_upsample(x, p):
    if p["factor"] == 1:
        return fused_conv1d(x, p["w"], p["b"], ksize=p["ksize"], pad=p["pad"])
    # Polyphase ConvTranspose1d: one K=3 conv on the un-stuffed input producing
    # (B, L, stride*Cout) with phases grouped along channels; a contiguous
    # reshape interleaves them to (B, L*stride, Cout).
    y = fused_conv1d(x, p["w"], p["b"], ksize=p["ksize"], pad=p["pad"])
    B, L, _ = y.shape
    return y.reshape(B, L * p["factor"], p["cout"])


def conv_block(x, bp, relu=True, skip=None):
    return fused_conv1d(x, bp["w"], bp["b"], ksize=bp["ksize"], pad=bp["pad"],
                        gn=(bp["gamma"], bp["beta"], bp["gmat"], bp["groups"]),
                        relu=relu, skip=skip)


def resnet_block1d(x, p):
    h = conv_block(x, p["block1"])
    skip = conv1x1(x, p["to_out"]) if p["to_out"] is not None else x
    # Residual add fused into block2's epilogue (no standalone XLA add pass).
    return conv_block(h, p["block2"], skip=skip)


def lstm_layer(x, p):
    """Bidirectional LSTM + Linear(2D->D) + skip. x: (B, T, D) bf16."""
    B, T, D = x.shape
    xt = jnp.transpose(x, (1, 0, 2))                               # (T, B, D)
    # Fused input projection for BOTH directions: one matmul, N = 8D.
    gx = pallas_matmul_bias(xt.reshape(T * B, D), p["w_ih"], p["b_cat"],
                            out_dtype=jnp.float32).reshape(T, B, 8 * D)
    gxf = gx[..., :4 * D]
    gxr = gx[..., 4 * D:][::-1]
    w_hh = p["w_hh_blk"]                                           # (2D, 8D) blockdiag

    def cell(g, c):
        i, f, gg, o = jnp.split(g, 4, axis=-1)                     # torch order i,f,g,o
        c = jax.nn.sigmoid(f) * c + jax.nn.sigmoid(i) * jnp.tanh(gg)
        return jax.nn.sigmoid(o) * jnp.tanh(c), c

    # TODO(synk): the recurrence is inherently sequential; it stays in one
    # merged lax.scan (fwd + bwd per step) rather than a Pallas kernel.
    def step(carry, inp):
        hf, cf, hr, cr = carry
        g_f, g_r = inp
        gh = jnp.concatenate([hf, hr], axis=-1) @ w_hh             # (B, 8D)
        hf, cf = cell(g_f + gh[:, :4 * D], cf)
        hr, cr = cell(g_r + gh[:, 4 * D:], cr)
        return (hf, cf, hr, cr), (hf, hr)

    z = jnp.zeros((B, D), jnp.float32)
    _, (hs_f, hs_r) = jax.lax.scan(step, (z, z, z, z), (gxf, gxr))
    y = jnp.concatenate([hs_f, hs_r[::-1]], axis=-1)               # (T, B, 2D)
    y = pallas_matmul_bias(y.reshape(T * B, 2 * D), p["proj_w"], p["proj_b"],
                           out_dtype=jnp.float32).reshape(T, B, D)
    y = y + xt.astype(jnp.float32)                                 # skip connection
    return jnp.transpose(y, (1, 0, 2)).astype(jnp.bfloat16)


def decoder1d_forward(params, x):
    """x: (B, C_latent, L) like PyTorch; internally channels-last bf16."""
    B, Cl, L = x.shape
    h = x.astype(jnp.bfloat16).transpose(0, 2, 1)                  # (B, L, Cl)
    h = conv1x1(h, params["initial_conv"])
    h = lstm_layer(h, params["lstm"])
    for layer in params["decoder"]:
        h = apply_upsample(h, layer["upsample"])
        for rp in layer["res"]:
            h = resnet_block1d(h, rp)
    out = conv1x1(h, params["final_conv"], out_dtype=jnp.float32)
    return {"x_hat": out.transpose(0, 2, 1)}                       # (B, C, L_out)


# ----------------------------------------------------------------------------
# One-time parameter preprocessing (hoisted out of the forward pass)
# ----------------------------------------------------------------------------

def _prep_conv1x1(c):
    return {"w": c["w"][:, :, 0].T.astype(jnp.bfloat16),           # (Cin, Cout)
            "b": c["b"].astype(jnp.float32)}


def _prep_conv_weight(w, b):
    """PyTorch Conv1d weight (Cout, Cin, K) -> (K*Cin, Cout) bf16, k-major."""
    Cout, Cin, K = w.shape
    wf = jnp.transpose(w, (2, 1, 0)).reshape(K * Cin, Cout).astype(jnp.bfloat16)
    return wf, b.astype(jnp.float32), K


def _group_matrix(C, G):
    grp = jnp.arange(C) // (C // G)
    return (grp[:, None] == grp[None, :]).astype(jnp.float32)      # (C, C) blockdiag


def _prep_conv_block(p, num_groups):
    wf, b, K = _prep_conv_weight(p["w"], p["b"])
    Cin = p["w"].shape[1]
    return {"w": wf, "b": b, "ksize": K, "pad": p["padding"],
            "gamma": p["gn_gamma"].reshape(1, Cin).astype(jnp.float32),
            "beta": p["gn_beta"].reshape(1, Cin).astype(jnp.float32),
            "gmat": _group_matrix(Cin, num_groups), "groups": num_groups}


def _prep_upsample(p):
    if p["factor"] == 1:
        wf, b, K = _prep_conv_weight(p["w"], p["b"])
        return {"factor": 1, "w": wf, "b": b, "ksize": K, "pad": 1}
    # Polyphase fold of ConvTranspose1d(K=2s, stride=s, pad=ceil(s/2), outpad=s%2):
    # out[s*j + r] = x[j + m0 - 1] * w[k0 + s] + x[j + m0] * w[k0]
    # with k0 = (r + pad) % s, m0 = (r + pad) // s in {0, 1} -> one K=3, pad=1 conv
    # whose output channels are grouped by phase r.
    s = p["factor"]
    w = p["w"]                                                     # (Cin, Cout, 2s)
    Cin, Cout, K = w.shape
    pad = s // 2 + s % 2
    w_eff = jnp.zeros((3, Cin, s * Cout), jnp.float32)
    for r in range(s):
        k0 = (r + pad) % s
        m0 = (r + pad) // s
        w_eff = w_eff.at[m0, :, r * Cout:(r + 1) * Cout].set(w[:, :, k0 + s])
        w_eff = w_eff.at[m0 + 1, :, r * Cout:(r + 1) * Cout].set(w[:, :, k0])
    return {"factor": s,
            "w": w_eff.reshape(3 * Cin, s * Cout).astype(jnp.bfloat16),
            "b": jnp.tile(p["b"], s).astype(jnp.float32),
            "ksize": 3, "pad": 1, "cout": Cout}


def _prep_lstm(p):
    D = p["w_hh_f"].shape[1]
    w_ih = jnp.concatenate([p["w_ih_f"].T, p["w_ih_r"].T], axis=1).astype(jnp.bfloat16)
    b_cat = jnp.concatenate([p["b_ih_f"] + p["b_hh_f"],
                             p["b_ih_r"] + p["b_hh_r"]]).astype(jnp.float32)
    w_hh_blk = jnp.zeros((2 * D, 8 * D), jnp.float32)
    w_hh_blk = w_hh_blk.at[:D, :4 * D].set(p["w_hh_f"].T)
    w_hh_blk = w_hh_blk.at[D:, 4 * D:].set(p["w_hh_r"].T)
    return {"w_ih": w_ih, "b_cat": b_cat, "w_hh_blk": w_hh_blk,
            "proj_w": p["proj_w"].T.astype(jnp.bfloat16),
            "proj_b": p["proj_b"].astype(jnp.float32)}


def preprocess_params(raw, num_groups):
    return {
        "initial_conv": _prep_conv1x1(raw["initial_conv"]),
        "final_conv": _prep_conv1x1(raw["final_conv"]),
        "lstm": _prep_lstm(raw["lstm"]),
        "decoder": [
            {"upsample": _prep_upsample(layer["upsample"]),
             "res": [{"block1": _prep_conv_block(rp["block1"], num_groups),
                      "block2": _prep_conv_block(rp["block2"], num_groups),
                      "to_out": (_prep_conv1x1(rp["to_out"])
                                 if rp["to_out"] is not None else None)}
                     for rp in layer["res"]]}
            for layer in raw["decoder"]],
    }


# ----------------------------------------------------------------------------
# Deterministic parameter initialization (synthetic weights, PyTorch layouts)
# ----------------------------------------------------------------------------

class _KeyGen:
    def __init__(self, seed):
        self._k = jax.random.PRNGKey(seed)

    def __call__(self):
        self._k, k = jax.random.split(self._k)
        return k


def _init_conv(kg, cout, cin, k):
    s = (cin * k) ** -0.5
    return {"w": jax.random.uniform(kg(), (cout, cin, k), jnp.float32, -s, s),
            "b": jax.random.uniform(kg(), (cout,), jnp.float32, -s, s)}


def _init_conv_block(kg, cin, cout, k=3, padding=1):
    c = _init_conv(kg, cout, cin, k)
    return {"gn_gamma": jnp.ones((cin,), jnp.float32),
            "gn_beta": jnp.zeros((cin,), jnp.float32),
            "w": c["w"], "b": c["b"], "padding": padding}


def _init_resnet(kg, cin, cout):
    return {"block1": _init_conv_block(kg, cin, cout),
            "block2": _init_conv_block(kg, cout, cout),
            "to_out": _init_conv(kg, cout, cin, 1) if cin != cout else None}


def _init_upsample(kg, ch, factor):
    if factor == 1:
        p = _init_conv(kg, ch, ch, 3)
        p.update(factor=1)
        return p
    K = factor * 2
    s = (ch * K) ** -0.5
    return {"factor": factor,
            "w": jax.random.uniform(kg(), (ch, ch, K), jnp.float32, -s, s),  # (Cin,Cout,K)
            "b": jax.random.uniform(kg(), (ch,), jnp.float32, -s, s)}


def _init_lstm(kg, d):
    s = d ** -0.5

    def u(shape):
        return jax.random.uniform(kg(), shape, jnp.float32, -s, s)

    return {"w_ih_f": u((4 * d, d)), "w_hh_f": u((4 * d, d)),
            "b_ih_f": u((4 * d,)), "b_hh_f": u((4 * d,)),
            "w_ih_r": u((4 * d, d)), "w_hh_r": u((4 * d, d)),
            "b_ih_r": u((4 * d,)), "b_hh_r": u((4 * d,)),
            "proj_w": u((d, 2 * d)), "proj_b": u((d,))}


def init_decoder1d_params(seed, in_channels, out_channels, channels, factors,
                          res_blocks):
    kg = _KeyGen(seed)
    params = {
        "initial_conv": _init_conv(kg, channels[-1], out_channels, 1),
        "lstm": _init_lstm(kg, channels[-1]),
        "decoder": [],
        "final_conv": _init_conv(kg, in_channels, channels[0], 1),
    }
    for i in range(len(channels) - 1, -1, -1):
        layer = {"upsample": _init_upsample(kg, channels[i], factors[i]), "res": []}
        for j in range(res_blocks):
            out_ch = channels[i] if j != res_blocks - 1 else channels[max(i - 1, 0)]
            layer["res"].append(_init_resnet(kg, channels[i], out_ch))
        params["decoder"].append(layer)
    return params


# ----------------------------------------------------------------------------
# Main
# ----------------------------------------------------------------------------

if __name__ == "__main__":
    in_channels = 2        # audio channels produced by the decoder
    latent_channels = 8    # "out_channels" arg of Decoder1d == input channel count
    channels = [32, 64]
    factors = [2, 2]
    res_blocks = 2
    num_groups = 4
    L = 8                  # latent sequence length
    B = 2

    raw = init_decoder1d_params(seed=42, in_channels=in_channels,
                                out_channels=latent_channels,
                                channels=channels, factors=factors,
                                res_blocks=res_blocks)
    params = preprocess_params(raw, num_groups)

    x = jax.random.normal(jax.random.PRNGKey(0),
                          (B, latent_channels, L), jnp.float32)

    fwd = jax.jit(lambda inp: decoder1d_forward(params, inp))
    out = fwd(x)
    x_hat = jax.block_until_ready(out["x_hat"])

    expected_len = L
    for f in factors:
        expected_len *= f
    assert x_hat.shape == (B, in_channels, expected_len), x_hat.shape
    assert x_hat.dtype == jnp.float32
    assert bool(jnp.all(jnp.isfinite(x_hat)))
    print("KERNEL_OK")
</pallas_src>

<mosaic_0001>
module attributes {stable_mosaic.version = 11 : i64} {
  func.func @_mm_bias_kernel(%arg0: i32, %arg1: i32, %arg2: i32, %arg3: memref<16x8xbf16, #tpu.memory_space<vmem>>, %arg4: memref<8x64xbf16, #tpu.memory_space<vmem>>, %arg5: memref<1x64xf32, #tpu.memory_space<vmem>>, %arg6: memref<16x64xbf16, #tpu.memory_space<vmem>>, %arg7: memref<16x64xf32, #tpu.memory_space<vmem>>) attributes {dimension_semantics = [#tpu.dimension_semantics<parallel>, #tpu.dimension_semantics<parallel>, #tpu.dimension_semantics<arbitrary>], iteration_bounds = array<i64: 1, 1, 1>, scalar_prefetch = 0 : i64, scratch_operands = 1 : i64, tpu.core_type = #tpu.core_type<tc>, window_params = [{transform_indices = @transform_0, window_bounds = array<i64: 16, 8>}, {transform_indices = @transform_1, window_bounds = array<i64: 8, 64>}, {transform_indices = @transform_2, window_bounds = array<i64: 1, 64>}, {transform_indices = @transform_3, window_bounds = array<i64: 16, 64>}]} {
    %c0_i32 = arith.constant 0 : i32
    %0 = arith.cmpi eq, %arg2, %c0_i32 : i32
    %1 = arith.extui %0 : i1 to i32
    %c0_i32_0 = arith.constant 0 : i32
    %2 = arith.cmpi ne, %1, %c0_i32_0 : i32
    scf.if %2 {
      %cst_10 = arith.constant 0.000000e+00 : f32
      %12 = vector.broadcast %cst_10 : f32 to vector<16x64xf32>
      %c0_11 = arith.constant 0 : index
      %c0_12 = arith.constant 0 : index
      %13 = vector.load %arg7[%c0_11, %c0_12] : memref<16x64xf32, #tpu.memory_space<vmem>>, vector<16x64xf32>
      tpu.vector_store %arg7[%c0_11, %c0_12], %12 {strides = array<i32>} : memref<16x64xf32, #tpu.memory_space<vmem>>, vector<16x64xf32>,
    } else {
    }
    %c0 = arith.constant 0 : index
    %c0_1 = arith.constant 0 : index
    %3 = vector.load %arg7[%c0, %c0_1] : memref<16x64xf32, #tpu.memory_space<vmem>>, vector<16x64xf32>
    %c0_2 = arith.constant 0 : index
    %c0_3 = arith.constant 0 : index
    %4 = vector.load %arg3[%c0_2, %c0_3] : memref<16x8xbf16, #tpu.memory_space<vmem>>, vector<16x8xbf16>
    %c0_4 = arith.constant 0 : index
    %c0_5 = arith.constant 0 : index
    %5 = vector.load %arg4[%c0_4, %c0_5] : memref<8x64xbf16, #tpu.memory_space<vmem>>, vector<8x64xbf16>
    %cst = arith.constant dense<0.000000e+00> : vector<16x64xf32>
    %6 = tpu.matmul %4, %5, %cst {dimension_numbers = #tpu.dot_dimension_numbers<[1], [0], [0], [1], [0, 0, 1, 1], [], []>} : vector<16x8xbf16>, vector<8x64xbf16>, vector<16x64xf32> -> vector<16x64xf32>
    %7 = arith.addf %3, %6 : vector<16x64xf32>
    %c0_6 = arith.constant 0 : index
    %c0_7 = arith.constant 0 : index
    %8 = vector.load %arg7[%c0_6, %c0_7] : memref<16x64xf32, #tpu.memory_space<vmem>>, vector<16x64xf32>
    tpu.vector_store %arg7[%c0_6, %c0_7], %7 {strides = array<i32>} : memref<16x64xf32, #tpu.memory_space<vmem>>, vector<16x64xf32>,
    %c0_i32_8 = arith.constant 0 : i32
    %9 = arith.cmpi eq, %arg2, %c0_i32_8 : i32
    %10 = arith.extui %9 : i1 to i32
    %c0_i32_9 = arith.constant 0 : i32
    %11 = arith.cmpi ne, %10, %c0_i32_9 : i32
    scf.if %11 {
      %c0_10 = arith.constant 0 : index
      %c0_11 = arith.constant 0 : index
      %12 = vector.load %arg7[%c0_10, %c0_11] : memref<16x64xf32, #tpu.memory_space<vmem>>, vector<16x64xf32>
      %c0_12 = arith.constant 0 : index
      %c0_13 = arith.constant 0 : index
      %13 = vector.load %arg5[%c0_12, %c0_13] : memref<1x64xf32, #tpu.memory_space<vmem>>, vector<1x64xf32>
      %14 = vector.broadcast %13 : vector<1x64xf32> to vector<16x64xf32>
      %15 = arith.addf %12, %14 : vector<16x64xf32>
      %16 = arith.truncf %15 : vector<16x64xf32> to vector<16x64xbf16>
      %c0_14 = arith.constant 0 : index
      %c0_15 = arith.constant 0 : index
      %17 = vector.load %arg6[%c0_14, %c0_15] : memref<16x64xbf16, #tpu.memory_space<vmem>>, vector<16x64xbf16>
      tpu.vector_store %arg6[%c0_14, %c0_15], %16 {strides = array<i32>} : memref<16x64xbf16, #tpu.memory_space<vmem>>, vector<16x64xbf16>,
    } else {
    }
    return
  }
  func.func @transform_0(%arg0: i32, %arg1: i32, %arg2: i32) -> (i32, i32) {
    %c0_i32 = arith.constant 0 : i32
    return %arg0, %arg2 : i32, i32
  }
  func.func @transform_1(%arg0: i32, %arg1: i32, %arg2: i32) -> (i32, i32) {
    %c0_i32 = arith.constant 0 : i32
    return %arg2, %arg1 : i32, i32
  }
  func.func @transform_2(%arg0: i32, %arg1: i32, %arg2: i32) -> (i32, i32) {
    %c0_i32 = arith.constant 0 : i32
    %c0_i32_0 = arith.constant 0 : i32
    return %c0_i32, %arg1 : i32, i32
  }
  func.func @transform_3(%arg0: i32, %arg1: i32, %arg2: i32) -> (i32, i32) {
    %c0_i32 = arith.constant 0 : i32
    return %arg0, %arg1 : i32, i32
  }
}

module attributes {stable_mosaic.version = 11 : i64} {
  func.func @_mm_bias_kernel(%arg0: i32, %arg1: i32, %arg2: i32, %arg3: memref<16x64xbf16, #tpu.memory_space<vmem>>, %arg4: memref<64x512xbf16, #tpu.memory_space<vmem>>, %arg5: memref<1x512xf32, #tpu.memory_space<vmem>>, %arg6: memref<16x512xf32, #tpu.memory_space<vmem>>, %arg7: memref<16x512xf32, #tpu.memory_space<vmem>>) attributes {dimension_semantics = [#tpu.dimension_semantics<parallel>, #tpu.dimension_semantics<parallel>, #tpu.dimension_semantics<arbitrary>], iteration_bounds = array<i64: 1, 1, 1>, scalar_prefetch = 0 : i64, scratch_operands = 1 : i64, tpu.core_type = #tpu.core_type<tc>, window_params = [{transform_indices = @transform_0, window_bounds = array<i64: 16, 64>}, {transform_indices = @transform_1, window_bounds = array<i64: 64, 512>}, {transform_indices = @transform_2, window_bounds = array<i64: 1, 512>}, {transform_indices = @transform_3, window_bounds = array<i64: 16, 512>}]} {
    %c0_i32 = arith.constant 0 : i32
    %0 = arith.cmpi eq, %arg2, %c0_i32 : i32
    %1 = arith.extui %0 : i1 to i32
    %c0_i32_0 = arith.constant 0 : i32
    %2 = arith.cmpi ne, %1, %c0_i32_0 : i32
    scf.if %2 {
      %cst_10 = arith.constant 0.000000e+00 : f32
      %12 = vector.broadcast %cst_10 : f32 to vector<16x512xf32>
      %c0_11 = arith.constant 0 : index
      %c0_12 = arith.constant 0 : index
      %13 = vector.load %arg7[%c0_11, %c0_12] : memref<16x512xf32, #tpu.memory_space<vmem>>, vector<16x512xf32>
      tpu.vector_store %arg7[%c0_11, %c0_12], %12 {strides = array<i32>} : memref<16x512xf32, #tpu.memory_space<vmem>>, vector<16x512xf32>,
    } else {
    }
    %c0 = arith.constant 0 : index
    %c0_1 = arith.constant 0 : index
    %3 = vector.load %arg7[%c0, %c0_1] : memref<16x512xf32, #tpu.memory_space<vmem>>, vector<16x512xf32>
    %c0_2 = arith.constant 0 : index
    %c0_3 = arith.constant 0 : index
    %4 = vector.load %arg3[%c0_2, %c0_3] : memref<16x64xbf16, #tpu.memory_space<vmem>>, vector<16x64xbf16>
    %c0_4 = arith.constant 0 : index
    %c0_5 = arith.constant 0 : index
    %5 = vector.load %arg4[%c0_4, %c0_5] : memref<64x512xbf16, #tpu.memory_space<vmem>>, vector<64x512xbf16>
    %cst = arith.constant dense<0.000000e+00> : vector<16x512xf32>
    %6 = tpu.matmul %4, %5, %cst {dimension_numbers = #tpu.dot_dimension_numbers<[1], [0], [0], [1], [0, 0, 1, 1], [], []>} : vector<16x64xbf16>, vector<64x512xbf16>, vector<16x512xf32> -> vector<16x512xf32>
    %7 = arith.addf %3, %6 : vector<16x512xf32>
    %c0_6 = arith.constant 0 : index
    %c0_7 = arith.constant 0 : index
    %8 = vector.load %arg7[%c0_6, %c0_7] : memref<16x512xf32, #tpu.memory_space<vmem>>, vector<16x512xf32>
    tpu.vector_store %arg7[%c0_6, %c0_7], %7 {strides = array<i32>} : memref<16x512xf32, #tpu.memory_space<vmem>>, vector<16x512xf32>,
    %c0_i32_8 = arith.constant 0 : i32
    %9 = arith.cmpi eq, %arg2, %c0_i32_8 : i32
    %10 = arith.extui %9 : i1 to i32
    %c0_i32_9 = arith.constant 0 : i32
    %11 = arith.cmpi ne, %10, %c0_i32_9 : i32
    scf.if %11 {
      %c0_10 = arith.constant 0 : index
      %c0_11 = arith.constant 0 : index
      %12 = vector.load %arg7[%c0_10, %c0_11] : memref<16x512xf32, #tpu.memory_space<vmem>>, vector<16x512xf32>
      %c0_12 = arith.constant 0 : index
      %c0_13 = arith.constant 0 : index
      %13 = vector.load %arg5[%c0_12, %c0_13] : memref<1x512xf32, #tpu.memory_space<vmem>>, vector<1x512xf32>
      %14 = vector.broadcast %13 : vector<1x512xf32> to vector<16x512xf32>
      %15 = arith.addf %12, %14 : vector<16x512xf32>
      %c0_14 = arith.constant 0 : index
      %c0_15 = arith.constant 0 : index
      %16 = vector.load %arg6[%c0_14, %c0_15] : memref<16x512xf32, #tpu.memory_space<vmem>>, vector<16x512xf32>
      tpu.vector_store %arg6[%c0_14, %c0_15], %15 {strides = array<i32>} : memref<16x512xf32, #tpu.memory_space<vmem>>, vector<16x512xf32>,
    } else {
    }
    return
  }
  func.func @transform_0(%arg0: i32, %arg1: i32, %arg2: i32) -> (i32, i32) {
    %c0_i32 = arith.constant 0 : i32
    return %arg0, %arg2 : i32, i32
  }
  func.func @transform_1(%arg0: i32, %arg1: i32, %arg2: i32) -> (i32, i32) {
    %c0_i32 = arith.constant 0 : i32
    return %arg2, %arg1 : i32, i32
  }
  func.func @transform_2(%arg0: i32, %arg1: i32, %arg2: i32) -> (i32, i32) {
    %c0_i32 = arith.constant 0 : i32
    %c0_i32_0 = arith.constant 0 : i32
    return %c0_i32, %arg1 : i32, i32
  }
  func.func @transform_3(%arg0: i32, %arg1: i32, %arg2: i32) -> (i32, i32) {
    %c0_i32 = arith.constant 0 : i32
    return %arg0, %arg1 : i32, i32
  }
}

module attributes {stable_mosaic.version = 11 : i64} {
  func.func @_fused_gn_conv_kernel(%arg0: i32, %arg1: memref<1x8x64xbf16, #tpu.memory_space<vmem>>, %arg2: memref<192x128xbf16, #tpu.memory_space<vmem>>, %arg3: memref<1x128xf32, #tpu.memory_space<vmem>>, %arg4: memref<1x8x128xbf16, #tpu.memory_space<vmem>>) attributes {dimension_semantics = [#tpu.dimension_semantics<parallel>], iteration_bounds = array<i64: 2>, scalar_prefetch = 0 : i64, scratch_operands = 0 : i64, tpu.core_type = #tpu.core_type<tc>, window_params = [{transform_indices = @transform_0, window_bounds = array<i64: 1, 8, 64>}, {pipeline_mode = #tpu.pipeline_mode<synchronous>, transform_indices = @transform_1, window_bounds = array<i64: 192, 128>}, {pipeline_mode = #tpu.pipeline_mode<synchronous>, transform_indices = @transform_2, window_bounds = array<i64: 1, 128>}, {transform_indices = @transform_3, window_bounds = array<i64: 1, 8, 128>}]} {
    %c0 = arith.constant 0 : index
    %c0_0 = arith.constant 0 : index
    %c0_1 = arith.constant 0 : index
    %0 = vector.load %arg1[%c0, %c0_0, %c0_1] : memref<1x8x64xbf16, #tpu.memory_space<vmem>>, vector<1x8x64xbf16>
    %1 = vector.shape_cast %0 : vector<1x8x64xbf16> to vector<8x64xbf16>
    %cst = arith.constant 0.000000e+00 : bf16
    %2 = vector.broadcast %cst : bf16 to vector<1x64xbf16>
    %3 = tpu.concatenate %2, %1, %2 in 0 : vector<1x64xbf16>, vector<8x64xbf16>, vector<1x64xbf16> -> vector<10x64xbf16>
    %4 = vector.extract_strided_slice %3 {offsets = [0, 0], sizes = [8, 64], strides = [1, 1]} : vector<10x64xbf16> to vector<8x64xbf16>
    %5 = vector.extract_strided_slice %3 {offsets = [1, 0], sizes = [8, 64], strides = [1, 1]} : vector<10x64xbf16> to vector<8x64xbf16>
    %6 = vector.extract_strided_slice %3 {offsets = [2, 0], sizes = [8, 64], strides = [1, 1]} : vector<10x64xbf16> to vector<8x64xbf16>
    %7 = tpu.concatenate %4, %5, %6 in 1 : vector<8x64xbf16>, vector<8x64xbf16>, vector<8x64xbf16> -> vector<8x192xbf16>
    %c0_2 = arith.constant 0 : index
    %c0_3 = arith.constant 0 : index
    %8 = vector.load %arg2[%c0_2, %c0_3] : memref<192x128xbf16, #tpu.memory_space<vmem>>, vector<192x128xbf16>
    %cst_4 = arith.constant dense<0.000000e+00> : vector<8x128xf32>
    %9 = tpu.matmul %7, %8, %cst_4 {dimension_numbers = #tpu.dot_dimension_numbers<[1], [0], [0], [1], [0, 0, 1, 1], [], []>} : vector<8x192xbf16>, vector<192x128xbf16>, vector<8x128xf32> -> vector<8x128xf32>
    %c0_5 = arith.constant 0 : index
    %c0_6 = arith.constant 0 : index
    %10 = vector.load %arg3[%c0_5, %c0_6] : memref<1x128xf32, #tpu.memory_space<vmem>>, vector<1x128xf32>
    %11 = vector.broadcast %10 : vector<1x128xf32> to vector<8x128xf32>
    %12 = arith.addf %9, %11 : vector<8x128xf32>
    %13 = arith.truncf %12 : vector<8x128xf32> to vector<8x128xbf16>
    %c0_7 = arith.constant 0 : index
    %c0_8 = arith.constant 0 : index
    %c0_9 = arith.constant 0 : index
    %14 = vector.load %arg4[%c0_7, %c0_8, %c0_9] : memref<1x8x128xbf16, #tpu.memory_space<vmem>>, vector<1x8x128xbf16>
    %15 = vector.shape_cast %14 : vector<1x8x128xbf16> to vector<8x128xbf16>
    %16 = vector.shape_cast %13 : vector<8x128xbf16> to vector<1x8x128xbf16>
    tpu.vector_store %arg4[%c0_7, %c0_8, %c0_9], %16 {strides = array<i32>} : memref<1x8x128xbf16, #tpu.memory_space<vmem>>, vector<1x8x128xbf16>,
    return
  }
  func.func @transform_0(%arg0: i32) -> (i32, i32, i32) {
    %c0_i32 = arith.constant 0 : i32
    %c0_i32_0 = arith.constant 0 : i32
    %c0_i32_1 = arith.constant 0 : i32
    return %arg0, %c0_i32, %c0_i32_0 : i32, i32, i32
  }
  func.func @transform_1(%arg0: i32) -> (i32, i32) {
    %c0_i32 = arith.constant 0 : i32
    %c0_i32_0 = arith.constant 0 : i32
    %c0_i32_1 = arith.constant 0 : i32
    return %c0_i32, %c0_i32_0 : i32, i32
  }
  func.func @transform_2(%arg0: i32) -> (i32, i32) {
    %c0_i32 = arith.constant 0 : i32
    %c0_i32_0 = arith.constant 0 : i32
    %c0_i32_1 = arith.constant 0 : i32
    return %c0_i32, %c0_i32_0 : i32, i32
  }
  func.func @transform_3(%arg0: i32) -> (i32, i32, i32) {
    %c0_i32 = arith.constant 0 : i32
    %c0_i32_0 = arith.constant 0 : i32
    %c0_i32_1 = arith.constant 0 : i32
    return %arg0, %c0_i32, %c0_i32_0 : i32, i32, i32
  }
}

module attributes {stable_mosaic.version = 11 : i64} {
  func.func @_mm_bias_kernel(%arg0: i32, %arg1: i32, %arg2: i32, %arg3: memref<16x128xf32, #tpu.memory_space<vmem>>, %arg4: memref<128x64xbf16, #tpu.memory_space<vmem>>, %arg5: memref<1x64xf32, #tpu.memory_space<vmem>>, %arg6: memref<16x64xf32, #tpu.memory_space<vmem>>, %arg7: memref<16x64xf32, #tpu.memory_space<vmem>>) attributes {dimension_semantics = [#tpu.dimension_semantics<parallel>, #tpu.dimension_semantics<parallel>, #tpu.dimension_semantics<arbitrary>], iteration_bounds = array<i64: 1, 1, 1>, scalar_prefetch = 0 : i64, scratch_operands = 1 : i64, tpu.core_type = #tpu.core_type<tc>, window_params = [{transform_indices = @transform_0, window_bounds = array<i64: 16, 128>}, {transform_indices = @transform_1, window_bounds = array<i64: 128, 64>}, {transform_indices = @transform_2, window_bounds = array<i64: 1, 64>}, {transform_indices = @transform_3, window_bounds = array<i64: 16, 64>}]} {
    %c0_i32 = arith.constant 0 : i32
    %0 = arith.cmpi eq, %arg2, %c0_i32 : i32
    %1 = arith.extui %0 : i1 to i32
    %c0_i32_0 = arith.constant 0 : i32
    %2 = arith.cmpi ne, %1, %c0_i32_0 : i32
    scf.if %2 {
      %cst_10 = arith.constant 0.000000e+00 : f32
      %13 = vector.broadcast %cst_10 : f32 to vector<16x64xf32>
      %c0_11 = arith.constant 0 : index
      %c0_12 = arith.constant 0 : index
      %14 = vector.load %arg7[%c0_11, %c0_12] : memref<16x64xf32, #tpu.memory_space<vmem>>, vector<16x64xf32>
      tpu.vector_store %arg7[%c0_11, %c0_12], %13 {strides = array<i32>} : memref<16x64xf32, #tpu.memory_space<vmem>>, vector<16x64xf32>,
    } else {
    }
    %c0 = arith.constant 0 : index
    %c0_1 = arith.constant 0 : index
    %3 = vector.load %arg7[%c0, %c0_1] : memref<16x64xf32, #tpu.memory_space<vmem>>, vector<16x64xf32>
    %c0_2 = arith.constant 0 : index
    %c0_3 = arith.constant 0 : index
    %4 = vector.load %arg3[%c0_2, %c0_3] : memref<16x128xf32, #tpu.memory_space<vmem>>, vector<16x128xf32>
    %5 = arith.truncf %4 : vector<16x128xf32> to vector<16x128xbf16>
    %c0_4 = arith.constant 0 : index
    %c0_5 = arith.constant 0 : index
    %6 = vector.load %arg4[%c0_4, %c0_5] : memref<128x64xbf16, #tpu.memory_space<vmem>>, vector<128x64xbf16>
    %cst = arith.constant dense<0.000000e+00> : vector<16x64xf32>
    %7 = tpu.matmul %5, %6, %cst {dimension_numbers = #tpu.dot_dimension_numbers<[1], [0], [0], [1], [0, 0, 1, 1], [], []>} : vector<16x128xbf16>, vector<128x64xbf16>, vector<16x64xf32> -> vector<16x64xf32>
    %8 = arith.addf %3, %7 : vector<16x64xf32>
    %c0_6 = arith.constant 0 : index
    %c0_7 = arith.constant 0 : index
    %9 = vector.load %arg7[%c0_6, %c0_7] : memref<16x64xf32, #tpu.memory_space<vmem>>, vector<16x64xf32>
    tpu.vector_store %arg7[%c0_6, %c0_7], %8 {strides = array<i32>} : memref<16x64xf32, #tpu.memory_space<vmem>>, vector<16x64xf32>,
    %c0_i32_8 = arith.constant 0 : i32
    %10 = arith.cmpi eq, %arg2, %c0_i32_8 : i32
    %11 = arith.extui %10 : i1 to i32
    %c0_i32_9 = arith.constant 0 : i32
    %12 = arith.cmpi ne, %11, %c0_i32_9 : i32
    scf.if %12 {
      %c0_10 = arith.constant 0 : index
      %c0_11 = arith.constant 0 : index
      %13 = vector.load %arg7[%c0_10, %c0_11] : memref<16x64xf32, #tpu.memory_space<vmem>>, vector<16x64xf32>
      %c0_12 = arith.constant 0 : index
      %c0_13 = arith.constant 0 : index
      %14 = vector.load %arg5[%c0_12, %c0_13] : memref<1x64xf32, #tpu.memory_space<vmem>>, vector<1x64xf32>
      %15 = vector.broadcast %14 : vector<1x64xf32> to vector<16x64xf32>
      %16 = arith.addf %13, %15 : vector<16x64xf32>
      %c0_14 = arith.constant 0 : index
      %c0_15 = arith.constant 0 : index
      %17 = vector.load %arg6[%c0_14, %c0_15] : memref<16x64xf32, #tpu.memory_space<vmem>>, vector<16x64xf32>
      tpu.vector_store %arg6[%c0_14, %c0_15], %16 {strides = array<i32>} : memref<16x64xf32, #tpu.memory_space<vmem>>, vector<16x64xf32>,
    } else {
    }
    return
  }
  func.func @transform_0(%arg0: i32, %arg1: i32, %arg2: i32) -> (i32, i32) {
    %c0_i32 = arith.constant 0 : i32
    return %arg0, %arg2 : i32, i32
  }
  func.func @transform_1(%arg0: i32, %arg1: i32, %arg2: i32) -> (i32, i32) {
    %c0_i32 = arith.constant 0 : i32
    return %arg2, %arg1 : i32, i32
  }
  func.func @transform_2(%arg0: i32, %arg1: i32, %arg2: i32) -> (i32, i32) {
    %c0_i32 = arith.constant 0 : i32
    %c0_i32_0 = arith.constant 0 : i32
    return %c0_i32, %arg1 : i32, i32
  }
  func.func @transform_3(%arg0: i32, %arg1: i32, %arg2: i32) -> (i32, i32) {
    %c0_i32 = arith.constant 0 : i32
    return %arg0, %arg1 : i32, i32
  }
}

module attributes {stable_mosaic.version = 11 : i64} {
  func.func @_fused_gn_conv_kernel(%arg0: i32, %arg1: memref<1x16x64xbf16, #tpu.memory_space<vmem>>, %arg2: memref<1x64xf32, #tpu.memory_space<vmem>>, %arg3: memref<1x64xf32, #tpu.memory_space<vmem>>, %arg4: memref<64x64xf32, #tpu.memory_space<vmem>>, %arg5: memref<192x64xbf16, #tpu.memory_space<vmem>>, %arg6: memref<1x64xf32, #tpu.memory_space<vmem>>, %arg7: memref<1x16x64xbf16, #tpu.memory_space<vmem>>, %arg8: memref<1x16x64xbf16, #tpu.memory_space<vmem>>) attributes {dimension_semantics = [#tpu.dimension_semantics<parallel>], iteration_bounds = array<i64: 2>, scalar_prefetch = 0 : i64, scratch_operands = 0 : i64, tpu.core_type = #tpu.core_type<tc>, window_params = [{transform_indices = @transform_0, window_bounds = array<i64: 1, 16, 64>}, {pipeline_mode = #tpu.pipeline_mode<synchronous>, transform_indices = @transform_1, window_bounds = array<i64: 1, 64>}, {pipeline_mode = #tpu.pipeline_mode<synchronous>, transform_indices = @transform_2, window_bounds = array<i64: 1, 64>}, {pipeline_mode = #tpu.pipeline_mode<synchronous>, transform_indices = @transform_3, window_bounds = array<i64: 64, 64>}, {pipeline_mode = #tpu.pipeline_mode<synchronous>, transform_indices = @transform_4, window_bounds = array<i64: 192, 64>}, {pipeline_mode = #tpu.pipeline_mode<synchronous>, transform_indices = @transform_5, window_bounds = array<i64: 1, 64>}, {transform_indices = @transform_6, window_bounds = array<i64: 1, 16, 64>}, {transform_indices = @transform_7, window_bounds = array<i64: 1, 16, 64>}]} {
    %c0 = arith.constant 0 : index
    %c0_0 = arith.constant 0 : index
    %c0_1 = arith.constant 0 : index
    %0 = vector.load %arg1[%c0, %c0_0, %c0_1] : memref<1x16x64xbf16, #tpu.memory_space<vmem>>, vector<1x16x64xbf16>
    %1 = vector.shape_cast %0 : vector<1x16x64xbf16> to vector<16x64xbf16>
    %2 = arith.extf %1 : vector<16x64xbf16> to vector<16x64xf32>
    %cst = arith.constant dense<0.000000e+00> : vector<64xf32>
    %3 = vector.multi_reduction <add>, %2, %cst [0] : vector<16x64xf32> to vector<64xf32>
    %4 = vector.shape_cast %3 : vector<64xf32> to vector<1x64xf32>
    %c0_2 = arith.constant 0 : index
    %c0_3 = arith.constant 0 : index
    %5 = vector.load %arg4[%c0_2, %c0_3] : memref<64x64xf32, #tpu.memory_space<vmem>>, vector<64x64xf32>
    %cst_4 = arith.constant dense<0.000000e+00> : vector<1x64xf32>
    %6 = tpu.matmul %4, %5, %cst_4 {dimension_numbers = #tpu.dot_dimension_numbers<[1], [0], [0], [1], [0, 0, 1, 1], [], []>} : vector<1x64xf32>, vector<64x64xf32>, vector<1x64xf32> -> vector<1x64xf32>
    %cst_5 = arith.constant 3.906250e-03 : f32
    %7 = vector.broadcast %cst_5 : f32 to vector<1x64xf32>
    %8 = arith.mulf %6, %7 : vector<1x64xf32>
    %9 = vector.broadcast %8 : vector<1x64xf32> to vector<16x64xf32>
    %10 = arith.subf %2, %9 : vector<16x64xf32>
    %11 = arith.mulf %10, %10 : vector<16x64xf32>
    %cst_6 = arith.constant dense<0.000000e+00> : vector<64xf32>
    %12 = vector.multi_reduction <add>, %11, %cst_6 [0] : vector<16x64xf32> to vector<64xf32>
    %13 = vector.shape_cast %12 : vector<64xf32> to vector<1x64xf32>
    %c0_7 = arith.constant 0 : index
    %c0_8 = arith.constant 0 : index
    %14 = vector.load %arg4[%c0_7, %c0_8] : memref<64x64xf32, #tpu.memory_space<vmem>>, vector<64x64xf32>
    %cst_9 = arith.constant dense<0.000000e+00> : vector<1x64xf32>
    %15 = tpu.matmul %13, %14, %cst_9 {dimension_numbers = #tpu.dot_dimension_numbers<[1], [0], [0], [1], [0, 0, 1, 1], [], []>} : vector<1x64xf32>, vector<64x64xf32>, vector<1x64xf32> -> vector<1x64xf32>
    %cst_10 = arith.constant 3.906250e-03 : f32
    %16 = vector.broadcast %cst_10 : f32 to vector<1x64xf32>
    %17 = arith.mulf %15, %16 : vector<1x64xf32>
    %cst_11 = arith.constant 9.99999974E-6 : f32
    %18 = vector.broadcast %cst_11 : f32 to vector<1x64xf32>
    %19 = arith.addf %17, %18 : vector<1x64xf32>
    %20 = math.rsqrt %19 : vector<1x64xf32>
    %21 = vector.broadcast %20 : vector<1x64xf32> to vector<16x64xf32>
    %22 = arith.mulf %10, %21 : vector<16x64xf32>
    %c0_12 = arith.constant 0 : index
    %c0_13 = arith.constant 0 : index
    %23 = vector.load %arg2[%c0_12, %c0_13] : memref<1x64xf32, #tpu.memory_space<vmem>>, vector<1x64xf32>
    %24 = vector.broadcast %23 : vector<1x64xf32> to vector<16x64xf32>
    %25 = arith.mulf %22, %24 : vector<16x64xf32>
    %c0_14 = arith.constant 0 : index
    %c0_15 = arith.constant 0 : index
    %26 = vector.load %arg3[%c0_14, %c0_15] : memref<1x64xf32, #tpu.memory_space<vmem>>, vector<1x64xf32>
    %27 = vector.broadcast %26 : vector<1x64xf32> to vector<16x64xf32>
    %28 = arith.addf %25, %27 : vector<16x64xf32>
    %cst_16 = arith.constant 0.000000e+00 : f32
    %29 = vector.broadcast %cst_16 : f32 to vector<16x64xf32>
    %30 = arith.maximumf %28, %29 : vector<16x64xf32>
    %31 = arith.truncf %30 : vector<16x64xf32> to vector<16x64xbf16>
    %cst_17 = arith.constant 0.000000e+00 : bf16
    %32 = vector.broadcast %cst_17 : bf16 to vector<1x64xbf16>
    %33 = tpu.concatenate %32, %31, %32 in 0 : vector<1x64xbf16>, vector<16x64xbf16>, vector<1x64xbf16> -> vector<18x64xbf16>
    %34 = vector.extract_strided_slice %33 {offsets = [0, 0], sizes = [16, 64], strides = [1, 1]} : vector<18x64xbf16> to vector<16x64xbf16>
    %35 = vector.extract_strided_slice %33 {offsets = [1, 0], sizes = [16, 64], strides = [1, 1]} : vector<18x64xbf16> to vector<16x64xbf16>
    %36 = vector.extract_strided_slice %33 {offsets = [2, 0], sizes = [16, 64], strides = [1, 1]} : vector<18x64xbf16> to vector<16x64xbf16>
    %37 = tpu.concatenate %34, %35, %36 in 1 : vector<16x64xbf16>, vector<16x64xbf16>, vector<16x64xbf16> -> vector<16x192xbf16>
    %c0_18 = arith.constant 0 : index
    %c0_19 = arith.constant 0 : index
    %38 = vector.load %arg5[%c0_18, %c0_19] : memref<192x64xbf16, #tpu.memory_space<vmem>>, vector<192x64xbf16>
    %cst_20 = arith.constant dense<0.000000e+00> : vector<16x64xf32>
    %39 = tpu.matmul %37, %38, %cst_20 {dimension_numbers = #tpu.dot_dimension_numbers<[1], [0], [0], [1], [0, 0, 1, 1], [], []>} : vector<16x192xbf16>, vector<192x64xbf16>, vector<16x64xf32> -> vector<16x64xf32>
    %c0_21 = arith.constant 0 : index
    %c0_22 = arith.constant 0 : index
    %40 = vector.load %arg6[%c0_21, %c0_22] : memref<1x64xf32, #tpu.memory_space<vmem>>, vector<1x64xf32>
    %41 = vector.broadcast %40 : vector<1x64xf32> to vector<16x64xf32>
    %42 = arith.addf %39, %41 : vector<16x64xf32>
    %c0_23 = arith.constant 0 : index
    %c0_24 = arith.constant 0 : index
    %c0_25 = arith.constant 0 : index
    %43 = vector.load %arg7[%c0_23, %c0_24, %c0_25] : memref<1x16x64xbf16, #tpu.memory_space<vmem>>, vector<1x16x64xbf16>
    %44 = vector.shape_cast %43 : vector<1x16x64xbf16> to vector<16x64xbf16>
    %45 = arith.extf %44 : vector<16x64xbf16> to vector<16x64xf32>
    %46 = arith.addf %42, %45 : vector<16x64xf32>
    %47 = arith.truncf %46 : vector<16x64xf32> to vector<16x64xbf16>
    %c0_26 = arith.constant 0 : index
    %c0_27 = arith.constant 0 : index
    %c0_28 = arith.constant 0 : index
    %48 = vector.load %arg8[%c0_26, %c0_27, %c0_28] : memref<1x16x64xbf16, #tpu.memory_space<vmem>>, vector<1x16x64xbf16>
    %49 = vector.shape_cast %48 : vector<1x16x64xbf16> to vector<16x64xbf16>
    %50 = vector.shape_cast %47 : vector<16x64xbf16> to vector<1x16x64xbf16>
    tpu.vector_store %arg8[%c0_26, %c0_27, %c0_28], %50 {strides = array<i32>} : memref<1x16x64xbf16, #tpu.memory_space<vmem>>, vector<1x16x64xbf16>,
    return
  }
  func.func @transform_0(%arg0: i32) -> (i32, i32, i32) {
    %c0_i32 = arith.constant 0 : i32
    %c0_i32_0 = arith.constant 0 : i32
    %c0_i32_1 = arith.constant 0 : i32
    return %arg0, %c0_i32, %c0_i32_0 : i32, i32, i32
  }
  func.func @transform_1(%arg0: i32) -> (i32, i32) {
    %c0_i32 = arith.constant 0 : i32
    %c0_i32_0 = arith.constant 0 : i32
    %c0_i32_1 = arith.constant 0 : i32
    return %c0_i32, %c0_i32_0 : i32, i32
  }
  func.func @transform_2(%arg0: i32) -> (i32, i32) {
    %c0_i32 = arith.constant 0 : i32
    %c0_i32_0 = arith.constant 0 : i32
    %c0_i32_1 = arith.constant 0 : i32
    return %c0_i32, %c0_i32_0 : i32, i32
  }
  func.func @transform_3(%arg0: i32) -> (i32, i32) {
    %c0_i32 = arith.constant 0 : i32
    %c0_i32_0 = arith.constant 0 : i32
    %c0_i32_1 = arith.constant 0 : i32
    return %c0_i32, %c0_i32_0 : i32, i32
  }
  func.func @transform_4(%arg0: i32) -> (i32, i32) {
    %c0_i32 = arith.constant 0 : i32
    %c0_i32_0 = arith.constant 0 : i32
    %c0_i32_1 = arith.constant 0 : i32
    return %c0_i32, %c0_i32_0 : i32, i32
  }
  func.func @transform_5(%arg0: i32) -> (i32, i32) {
    %c0_i32 = arith.constant 0 : i32
    %c0_i32_0 = arith.constant 0 : i32
    %c0_i32_1 = arith.constant 0 : i32
    return %c0_i32, %c0_i32_0 : i32, i32
  }
  func.func @transform_6(%arg0: i32) -> (i32, i32, i32) {
    %c0_i32 = arith.constant 0 : i32
    %c0_i32_0 = arith.constant 0 : i32
    %c0_i32_1 = arith.constant 0 : i32
    return %arg0, %c0_i32, %c0_i32_0 : i32, i32, i32
  }
  func.func @transform_7(%arg0: i32) -> (i32, i32, i32) {
    %c0_i32 = arith.constant 0 : i32
    %c0_i32_0 = arith.constant 0 : i32
    %c0_i32_1 = arith.constant 0 : i32
    return %arg0, %c0_i32, %c0_i32_0 : i32, i32, i32
  }
}

module attributes {stable_mosaic.version = 11 : i64} {
  func.func @_fused_gn_conv_kernel(%arg0: i32, %arg1: memref<1x16x64xbf16, #tpu.memory_space<vmem>>, %arg2: memref<1x64xf32, #tpu.memory_space<vmem>>, %arg3: memref<1x64xf32, #tpu.memory_space<vmem>>, %arg4: memref<64x64xf32, #tpu.memory_space<vmem>>, %arg5: memref<192x64xbf16, #tpu.memory_space<vmem>>, %arg6: memref<1x64xf32, #tpu.memory_space<vmem>>, %arg7: memref<1x16x64xbf16, #tpu.memory_space<vmem>>) attributes {dimension_semantics = [#tpu.dimension_semantics<parallel>], iteration_bounds = array<i64: 2>, scalar_prefetch = 0 : i64, scratch_operands = 0 : i64, tpu.core_type = #tpu.core_type<tc>, window_params = [{transform_indices = @transform_0, window_bounds = array<i64: 1, 16, 64>}, {pipeline_mode = #tpu.pipeline_mode<synchronous>, transform_indices = @transform_1, window_bounds = array<i64: 1, 64>}, {pipeline_mode = #tpu.pipeline_mode<synchronous>, transform_indices = @transform_2, window_bounds = array<i64: 1, 64>}, {pipeline_mode = #tpu.pipeline_mode<synchronous>, transform_indices = @transform_3, window_bounds = array<i64: 64, 64>}, {pipeline_mode = #tpu.pipeline_mode<synchronous>, transform_indices = @transform_4, window_bounds = array<i64: 192, 64>}, {pipeline_mode = #tpu.pipeline_mode<synchronous>, transform_indices = @transform_5, window_bounds = array<i64: 1, 64>}, {transform_indices = @transform_6, window_bounds = array<i64: 1, 16, 64>}]} {
    %c0 = arith.constant 0 : index
    %c0_0 = arith.constant 0 : index
    %c0_1 = arith.constant 0 : index
    %0 = vector.load %arg1[%c0, %c0_0, %c0_1] : memref<1x16x64xbf16, #tpu.memory_space<vmem>>, vector<1x16x64xbf16>
    %1 = vector.shape_cast %0 : vector<1x16x64xbf16> to vector<16x64xbf16>
    %2 = arith.extf %1 : vector<16x64xbf16> to vector<16x64xf32>
    %cst = arith.constant dense<0.000000e+00> : vector<64xf32>
    %3 = vector.multi_reduction <add>, %2, %cst [0] : vector<16x64xf32> to vector<64xf32>
    %4 = vector.shape_cast %3 : vector<64xf32> to vector<1x64xf32>
    %c0_2 = arith.constant 0 : index
    %c0_3 = arith.constant 0 : index
    %5 = vector.load %arg4[%c0_2, %c0_3] : memref<64x64xf32, #tpu.memory_space<vmem>>, vector<64x64xf32>
    %cst_4 = arith.constant dense<0.000000e+00> : vector<1x64xf32>
    %6 = tpu.matmul %4, %5, %cst_4 {dimension_numbers = #tpu.dot_dimension_numbers<[1], [0], [0], [1], [0, 0, 1, 1], [], []>} : vector<1x64xf32>, vector<64x64xf32>, vector<1x64xf32> -> vector<1x64xf32>
    %cst_5 = arith.constant 3.906250e-03 : f32
    %7 = vector.broadcast %cst_5 : f32 to vector<1x64xf32>
    %8 = arith.mulf %6, %7 : vector<1x64xf32>
    %9 = vector.broadcast %8 : vector<1x64xf32> to vector<16x64xf32>
    %10 = arith.subf %2, %9 : vector<16x64xf32>
    %11 = arith.mulf %10, %10 : vector<16x64xf32>
    %cst_6 = arith.constant dense<0.000000e+00> : vector<64xf32>
    %12 = vector.multi_reduction <add>, %11, %cst_6 [0] : vector<16x64xf32> to vector<64xf32>
    %13 = vector.shape_cast %12 : vector<64xf32> to vector<1x64xf32>
    %c0_7 = arith.constant 0 : index
    %c0_8 = arith.constant 0 : index
    %14 = vector.load %arg4[%c0_7, %c0_8] : memref<64x64xf32, #tpu.memory_space<vmem>>, vector<64x64xf32>
    %cst_9 = arith.constant dense<0.000000e+00> : vector<1x64xf32>
    %15 = tpu.matmul %13, %14, %cst_9 {dimension_numbers = #tpu.dot_dimension_numbers<[1], [0], [0], [1], [0, 0, 1, 1], [], []>} : vector<1x64xf32>, vector<64x64xf32>, vector<1x64xf32> -> vector<1x64xf32>
    %cst_10 = arith.constant 3.906250e-03 : f32
    %16 = vector.broadcast %cst_10 : f32 to vector<1x64xf32>
    %17 = arith.mulf %15, %16 : vector<1x64xf32>
    %cst_11 = arith.constant 9.99999974E-6 : f32
    %18 = vector.broadcast %cst_11 : f32 to vector<1x64xf32>
    %19 = arith.addf %17, %18 : vector<1x64xf32>
    %20 = math.rsqrt %19 : vector<1x64xf32>
    %21 = vector.broadcast %20 : vector<1x64xf32> to vector<16x64xf32>
    %22 = arith.mulf %10, %21 : vector<16x64xf32>
    %c0_12 = arith.constant 0 : index
    %c0_13 = arith.constant 0 : index
    %23 = vector.load %arg2[%c0_12, %c0_13] : memref<1x64xf32, #tpu.memory_space<vmem>>, vector<1x64xf32>
    %24 = vector.broadcast %23 : vector<1x64xf32> to vector<16x64xf32>
    %25 = arith.mulf %22, %24 : vector<16x64xf32>
    %c0_14 = arith.constant 0 : index
    %c0_15 = arith.constant 0 : index
    %26 = vector.load %arg3[%c0_14, %c0_15] : memref<1x64xf32, #tpu.memory_space<vmem>>, vector<1x64xf32>
    %27 = vector.broadcast %26 : vector<1x64xf32> to vector<16x64xf32>
    %28 = arith.addf %25, %27 : vector<16x64xf32>
    %cst_16 = arith.constant 0.000000e+00 : f32
    %29 = vector.broadcast %cst_16 : f32 to vector<16x64xf32>
    %30 = arith.maximumf %28, %29 : vector<16x64xf32>
    %31 = arith.truncf %30 : vector<16x64xf32> to vector<16x64xbf16>
    %cst_17 = arith.constant 0.000000e+00 : bf16
    %32 = vector.broadcast %cst_17 : bf16 to vector<1x64xbf16>
    %33 = tpu.concatenate %32, %31, %32 in 0 : vector<1x64xbf16>, vector<16x64xbf16>, vector<1x64xbf16> -> vector<18x64xbf16>
    %34 = vector.extract_strided_slice %33 {offsets = [0, 0], sizes = [16, 64], strides = [1, 1]} : vector<18x64xbf16> to vector<16x64xbf16>
    %35 = vector.extract_strided_slice %33 {offsets = [1, 0], sizes = [16, 64], strides = [1, 1]} : vector<18x64xbf16> to vector<16x64xbf16>
    %36 = vector.extract_strided_slice %33 {offsets = [2, 0], sizes = [16, 64], strides = [1, 1]} : vector<18x64xbf16> to vector<16x64xbf16>
    %37 = tpu.concatenate %34, %35, %36 in 1 : vector<16x64xbf16>, vector<16x64xbf16>, vector<16x64xbf16> -> vector<16x192xbf16>
    %c0_18 = arith.constant 0 : index
    %c0_19 = arith.constant 0 : index
    %38 = vector.load %arg5[%c0_18, %c0_19] : memref<192x64xbf16, #tpu.memory_space<vmem>>, vector<192x64xbf16>
    %cst_20 = arith.constant dense<0.000000e+00> : vector<16x64xf32>
    %39 = tpu.matmul %37, %38, %cst_20 {dimension_numbers = #tpu.dot_dimension_numbers<[1], [0], [0], [1], [0, 0, 1, 1], [], []>} : vector<16x192xbf16>, vector<192x64xbf16>, vector<16x64xf32> -> vector<16x64xf32>
    %c0_21 = arith.constant 0 : index
    %c0_22 = arith.constant 0 : index
    %40 = vector.load %arg6[%c0_21, %c0_22] : memref<1x64xf32, #tpu.memory_space<vmem>>, vector<1x64xf32>
    %41 = vector.broadcast %40 : vector<1x64xf32> to vector<16x64xf32>
    %42 = arith.addf %39, %41 : vector<16x64xf32>
    %43 = arith.truncf %42 : vector<16x64xf32> to vector<16x64xbf16>
    %c0_23 = arith.constant 0 : index
    %c0_24 = arith.constant 0 : index
    %c0_25 = arith.constant 0 : index
    %44 = vector.load %arg7[%c0_23, %c0_24, %c0_25] : memref<1x16x64xbf16, #tpu.memory_space<vmem>>, vector<1x16x64xbf16>
    %45 = vector.shape_cast %44 : vector<1x16x64xbf16> to vector<16x64xbf16>
    %46 = vector.shape_cast %43 : vector<16x64xbf16> to vector<1x16x64xbf16>
    tpu.vector_store %arg7[%c0_23, %c0_24, %c0_25], %46 {strides = array<i32>} : memref<1x16x64xbf16, #tpu.memory_space<vmem>>, vector<1x16x64xbf16>,
    return
  }
  func.func @transform_0(%arg0: i32) -> (i32, i32, i32) {
    %c0_i32 = arith.constant 0 : i32
    %c0_i32_0 = arith.constant 0 : i32
    %c0_i32_1 = arith.constant 0 : i32
    return %arg0, %c0_i32, %c0_i32_0 : i32, i32, i32
  }
  func.func @transform_1(%arg0: i32) -> (i32, i32) {
    %c0_i32 = arith.constant 0 : i32
    %c0_i32_0 = arith.constant 0 : i32
    %c0_i32_1 = arith.constant 0 : i32
    return %c0_i32, %c0_i32_0 : i32, i32
  }
  func.func @transform_2(%arg0: i32) -> (i32, i32) {
    %c0_i32 = arith.constant 0 : i32
    %c0_i32_0 = arith.constant 0 : i32
    %c0_i32_1 = arith.constant 0 : i32
    return %c0_i32, %c0_i32_0 : i32, i32
  }
  func.func @transform_3(%arg0: i32) -> (i32, i32) {
    %c0_i32 = arith.constant 0 : i32
    %c0_i32_0 = arith.constant 0 : i32
    %c0_i32_1 = arith.constant 0 : i32
    return %c0_i32, %c0_i32_0 : i32, i32
  }
  func.func @transform_4(%arg0: i32) -> (i32, i32) {
    %c0_i32 = arith.constant 0 : i32
    %c0_i32_0 = arith.constant 0 : i32
    %c0_i32_1 = arith.constant 0 : i32
    return %c0_i32, %c0_i32_0 : i32, i32
  }
  func.func @transform_5(%arg0: i32) -> (i32, i32) {
    %c0_i32 = arith.constant 0 : i32
    %c0_i32_0 = arith.constant 0 : i32
    %c0_i32_1 = arith.constant 0 : i32
    return %c0_i32, %c0_i32_0 : i32, i32
  }
  func.func @transform_6(%arg0: i32) -> (i32, i32, i32) {
    %c0_i32 = arith.constant 0 : i32
    %c0_i32_0 = arith.constant 0 : i32
    %c0_i32_1 = arith.constant 0 : i32
    return %arg0, %c0_i32, %c0_i32_0 : i32, i32, i32
  }
}

module attributes {stable_mosaic.version = 11 : i64} {
  func.func @_fused_gn_conv_kernel(%arg0: i32, %arg1: memref<1x16x64xbf16, #tpu.memory_space<vmem>>, %arg2: memref<1x64xf32, #tpu.memory_space<vmem>>, %arg3: memref<1x64xf32, #tpu.memory_space<vmem>>, %arg4: memref<64x64xf32, #tpu.memory_space<vmem>>, %arg5: memref<192x32xbf16, #tpu.memory_space<vmem>>, %arg6: memref<1x32xf32, #tpu.memory_space<vmem>>, %arg7: memref<1x16x32xbf16, #tpu.memory_space<vmem>>) attributes {dimension_semantics = [#tpu.dimension_semantics<parallel>], iteration_bounds = array<i64: 2>, scalar_prefetch = 0 : i64, scratch_operands = 0 : i64, tpu.core_type = #tpu.core_type<tc>, window_params = [{transform_indices = @transform_0, window_bounds = array<i64: 1, 16, 64>}, {pipeline_mode = #tpu.pipeline_mode<synchronous>, transform_indices = @transform_1, window_bounds = array<i64: 1, 64>}, {pipeline_mode = #tpu.pipeline_mode<synchronous>, transform_indices = @transform_2, window_bounds = array<i64: 1, 64>}, {pipeline_mode = #tpu.pipeline_mode<synchronous>, transform_indices = @transform_3, window_bounds = array<i64: 64, 64>}, {pipeline_mode = #tpu.pipeline_mode<synchronous>, transform_indices = @transform_4, window_bounds = array<i64: 192, 32>}, {pipeline_mode = #tpu.pipeline_mode<synchronous>, transform_indices = @transform_5, window_bounds = array<i64: 1, 32>}, {transform_indices = @transform_6, window_bounds = array<i64: 1, 16, 32>}]} {
    %c0 = arith.constant 0 : index
    %c0_0 = arith.constant 0 : index
    %c0_1 = arith.constant 0 : index
    %0 = vector.load %arg1[%c0, %c0_0, %c0_1] : memref<1x16x64xbf16, #tpu.memory_space<vmem>>, vector<1x16x64xbf16>
    %1 = vector.shape_cast %0 : vector<1x16x64xbf16> to vector<16x64xbf16>
    %2 = arith.extf %1 : vector<16x64xbf16> to vector<16x64xf32>
    %cst = arith.constant dense<0.000000e+00> : vector<64xf32>
    %3 = vector.multi_reduction <add>, %2, %cst [0] : vector<16x64xf32> to vector<64xf32>
    %4 = vector.shape_cast %3 : vector<64xf32> to vector<1x64xf32>
    %c0_2 = arith.constant 0 : index
    %c0_3 = arith.constant 0 : index
    %5 = vector.load %arg4[%c0_2, %c0_3] : memref<64x64xf32, #tpu.memory_space<vmem>>, vector<64x64xf32>
    %cst_4 = arith.constant dense<0.000000e+00> : vector<1x64xf32>
    %6 = tpu.matmul %4, %5, %cst_4 {dimension_numbers = #tpu.dot_dimension_numbers<[1], [0], [0], [1], [0, 0, 1, 1], [], []>} : vector<1x64xf32>, vector<64x64xf32>, vector<1x64xf32> -> vector<1x64xf32>
    %cst_5 = arith.constant 3.906250e-03 : f32
    %7 = vector.broadcast %cst_5 : f32 to vector<1x64xf32>
    %8 = arith.mulf %6, %7 : vector<1x64xf32>
    %9 = vector.broadcast %8 : vector<1x64xf32> to vector<16x64xf32>
    %10 = arith.subf %2, %9 : vector<16x64xf32>
    %11 = arith.mulf %10, %10 : vector<16x64xf32>
    %cst_6 = arith.constant dense<0.000000e+00> : vector<64xf32>
    %12 = vector.multi_reduction <add>, %11, %cst_6 [0] : vector<16x64xf32> to vector<64xf32>
    %13 = vector.shape_cast %12 : vector<64xf32> to vector<1x64xf32>
    %c0_7 = arith.constant 0 : index
    %c0_8 = arith.constant 0 : index
    %14 = vector.load %arg4[%c0_7, %c0_8] : memref<64x64xf32, #tpu.memory_space<vmem>>, vector<64x64xf32>
    %cst_9 = arith.constant dense<0.000000e+00> : vector<1x64xf32>
    %15 = tpu.matmul %13, %14, %cst_9 {dimension_numbers = #tpu.dot_dimension_numbers<[1], [0], [0], [1], [0, 0, 1, 1], [], []>} : vector<1x64xf32>, vector<64x64xf32>, vector<1x64xf32> -> vector<1x64xf32>
    %cst_10 = arith.constant 3.906250e-03 : f32
    %16 = vector.broadcast %cst_10 : f32 to vector<1x64xf32>
    %17 = arith.mulf %15, %16 : vector<1x64xf32>
    %cst_11 = arith.constant 9.99999974E-6 : f32
    %18 = vector.broadcast %cst_11 : f32 to vector<1x64xf32>
    %19 = arith.addf %17, %18 : vector<1x64xf32>
    %20 = math.rsqrt %19 : vector<1x64xf32>
    %21 = vector.broadcast %20 : vector<1x64xf32> to vector<16x64xf32>
    %22 = arith.mulf %10, %21 : vector<16x64xf32>
    %c0_12 = arith.constant 0 : index
    %c0_13 = arith.constant 0 : index
    %23 = vector.load %arg2[%c0_12, %c0_13] : memref<1x64xf32, #tpu.memory_space<vmem>>, vector<1x64xf32>
    %24 = vector.broadcast %23 : vector<1x64xf32> to vector<16x64xf32>
    %25 = arith.mulf %22, %24 : vector<16x64xf32>
    %c0_14 = arith.constant 0 : index
    %c0_15 = arith.constant 0 : index
    %26 = vector.load %arg3[%c0_14, %c0_15] : memref<1x64xf32, #tpu.memory_space<vmem>>, vector<1x64xf32>
    %27 = vector.broadcast %26 : vector<1x64xf32> to vector<16x64xf32>
    %28 = arith.addf %25, %27 : vector<16x64xf32>
    %cst_16 = arith.constant 0.000000e+00 : f32
    %29 = vector.broadcast %cst_16 : f32 to vector<16x64xf32>
    %30 = arith.maximumf %28, %29 : vector<16x64xf32>
    %31 = arith.truncf %30 : vector<16x64xf32> to vector<16x64xbf16>
    %cst_17 = arith.constant 0.000000e+00 : bf16
    %32 = vector.broadcast %cst_17 : bf16 to vector<1x64xbf16>
    %33 = tpu.concatenate %32, %31, %32 in 0 : vector<1x64xbf16>, vector<16x64xbf16>, vector<1x64xbf16> -> vector<18x64xbf16>
    %34 = vector.extract_strided_slice %33 {offsets = [0, 0], sizes = [16, 64], strides = [1, 1]} : vector<18x64xbf16> to vector<16x64xbf16>
    %35 = vector.extract_strided_slice %33 {offsets = [1, 0], sizes = [16, 64], strides = [1, 1]} : vector<18x64xbf16> to vector<16x64xbf16>
    %36 = vector.extract_strided_slice %33 {offsets = [2, 0], sizes = [16, 64], strides = [1, 1]} : vector<18x64xbf16> to vector<16x64xbf16>
    %37 = tpu.concatenate %34, %35, %36 in 1 : vector<16x64xbf16>, vector<16x64xbf16>, vector<16x64xbf16> -> vector<16x192xbf16>
    %c0_18 = arith.constant 0 : index
    %c0_19 = arith.constant 0 : index
    %38 = vector.load %arg5[%c0_18, %c0_19] : memref<192x32xbf16, #tpu.memory_space<vmem>>, vector<192x32xbf16>
    %cst_20 = arith.constant dense<0.000000e+00> : vector<16x32xf32>
    %39 = tpu.matmul %37, %38, %cst_20 {dimension_numbers = #tpu.dot_dimension_numbers<[1], [0], [0], [1], [0, 0, 1, 1], [], []>} : vector<16x192xbf16>, vector<192x32xbf16>, vector<16x32xf32> -> vector<16x32xf32>
    %c0_21 = arith.constant 0 : index
    %c0_22 = arith.constant 0 : index
    %40 = vector.load %arg6[%c0_21, %c0_22] : memref<1x32xf32, #tpu.memory_space<vmem>>, vector<1x32xf32>
    %41 = vector.broadcast %40 : vector<1x32xf32> to vector<16x32xf32>
    %42 = arith.addf %39, %41 : vector<16x32xf32>
    %43 = arith.truncf %42 : vector<16x32xf32> to vector<16x32xbf16>
    %c0_23 = arith.constant 0 : index
    %c0_24 = arith.constant 0 : index
    %c0_25 = arith.constant 0 : index
    %44 = vector.load %arg7[%c0_23, %c0_24, %c0_25] : memref<1x16x32xbf16, #tpu.memory_space<vmem>>, vector<1x16x32xbf16>
    %45 = vector.shape_cast %44 : vector<1x16x32xbf16> to vector<16x32xbf16>
    %46 = vector.shape_cast %43 : vector<16x32xbf16> to vector<1x16x32xbf16>
    tpu.vector_store %arg7[%c0_23, %c0_24, %c0_25], %46 {strides = array<i32>} : memref<1x16x32xbf16, #tpu.memory_space<vmem>>, vector<1x16x32xbf16>,
    return
  }
  func.func @transform_0(%arg0: i32) -> (i32, i32, i32) {
    %c0_i32 = arith.constant 0 : i32
    %c0_i32_0 = arith.constant 0 : i32
    %c0_i32_1 = arith.constant 0 : i32
    return %arg0, %c0_i32, %c0_i32_0 : i32, i32, i32
  }
  func.func @transform_1(%arg0: i32) -> (i32, i32) {
    %c0_i32 = arith.constant 0 : i32
    %c0_i32_0 = arith.constant 0 : i32
    %c0_i32_1 = arith.constant 0 : i32
    return %c0_i32, %c0_i32_0 : i32, i32
  }
  func.func @transform_2(%arg0: i32) -> (i32, i32) {
    %c0_i32 = arith.constant 0 : i32
    %c0_i32_0 = arith.constant 0 : i32
    %c0_i32_1 = arith.constant 0 : i32
    return %c0_i32, %c0_i32_0 : i32, i32
  }
  func.func @transform_3(%arg0: i32) -> (i32, i32) {
    %c0_i32 = arith.constant 0 : i32
    %c0_i32_0 = arith.constant 0 : i32
    %c0_i32_1 = arith.constant 0 : i32
    return %c0_i32, %c0_i32_0 : i32, i32
  }
  func.func @transform_4(%arg0: i32) -> (i32, i32) {
    %c0_i32 = arith.constant 0 : i32
    %c0_i32_0 = arith.constant 0 : i32
    %c0_i32_1 = arith.constant 0 : i32
    return %c0_i32, %c0_i32_0 : i32, i32
  }
  func.func @transform_5(%arg0: i32) -> (i32, i32) {
    %c0_i32 = arith.constant 0 : i32
    %c0_i32_0 = arith.constant 0 : i32
    %c0_i32_1 = arith.constant 0 : i32
    return %c0_i32, %c0_i32_0 : i32, i32
  }
  func.func @transform_6(%arg0: i32) -> (i32, i32, i32) {
    %c0_i32 = arith.constant 0 : i32
    %c0_i32_0 = arith.constant 0 : i32
    %c0_i32_1 = arith.constant 0 : i32
    return %arg0, %c0_i32, %c0_i32_0 : i32, i32, i32
  }
}

module attributes {stable_mosaic.version = 11 : i64} {
  func.func @_mm_bias_kernel(%arg0: i32, %arg1: i32, %arg2: i32, %arg3: memref<32x64xbf16, #tpu.memory_space<vmem>>, %arg4: memref<64x32xbf16, #tpu.memory_space<vmem>>, %arg5: memref<1x32xf32, #tpu.memory_space<vmem>>, %arg6: memref<32x32xbf16, #tpu.memory_space<vmem>>, %arg7: memref<32x32xf32, #tpu.memory_space<vmem>>) attributes {dimension_semantics = [#tpu.dimension_semantics<parallel>, #tpu.dimension_semantics<parallel>, #tpu.dimension_semantics<arbitrary>], iteration_bounds = array<i64: 1, 1, 1>, scalar_prefetch = 0 : i64, scratch_operands = 1 : i64, tpu.core_type = #tpu.core_type<tc>, window_params = [{transform_indices = @transform_0, window_bounds = array<i64: 32, 64>}, {transform_indices = @transform_1, window_bounds = array<i64: 64, 32>}, {transform_indices = @transform_2, window_bounds = array<i64: 1, 32>}, {transform_indices = @transform_3, window_bounds = array<i64: 32, 32>}]} {
    %c0_i32 = arith.constant 0 : i32
    %0 = arith.cmpi eq, %arg2, %c0_i32 : i32
    %1 = arith.extui %0 : i1 to i32
    %c0_i32_0 = arith.constant 0 : i32
    %2 = arith.cmpi ne, %1, %c0_i32_0 : i32
    scf.if %2 {
      %cst_10 = arith.constant 0.000000e+00 : f32
      %12 = vector.broadcast %cst_10 : f32 to vector<32x32xf32>
      %c0_11 = arith.constant 0 : index
      %c0_12 = arith.constant 0 : index
      %13 = vector.load %arg7[%c0_11, %c0_12] : memref<32x32xf32, #tpu.memory_space<vmem>>, vector<32x32xf32>
      tpu.vector_store %arg7[%c0_11, %c0_12], %12 {strides = array<i32>} : memref<32x32xf32, #tpu.memory_space<vmem>>, vector<32x32xf32>,
    } else {
    }
    %c0 = arith.constant 0 : index
    %c0_1 = arith.constant 0 : index
    %3 = vector.load %arg7[%c0, %c0_1] : memref<32x32xf32, #tpu.memory_space<vmem>>, vector<32x32xf32>
    %c0_2 = arith.constant 0 : index
    %c0_3 = arith.constant 0 : index
    %4 = vector.load %arg3[%c0_2, %c0_3] : memref<32x64xbf16, #tpu.memory_space<vmem>>, vector<32x64xbf16>
    %c0_4 = arith.constant 0 : index
    %c0_5 = arith.constant 0 : index
    %5 = vector.load %arg4[%c0_4, %c0_5] : memref<64x32xbf16, #tpu.memory_space<vmem>>, vector<64x32xbf16>
    %cst = arith.constant dense<0.000000e+00> : vector<32x32xf32>
    %6 = tpu.matmul %4, %5, %cst {dimension_numbers = #tpu.dot_dimension_numbers<[1], [0], [0], [1], [0, 0, 1, 1], [], []>} : vector<32x64xbf16>, vector<64x32xbf16>, vector<32x32xf32> -> vector<32x32xf32>
    %7 = arith.addf %3, %6 : vector<32x32xf32>
    %c0_6 = arith.constant 0 : index
    %c0_7 = arith.constant 0 : index
    %8 = vector.load %arg7[%c0_6, %c0_7] : memref<32x32xf32, #tpu.memory_space<vmem>>, vector<32x32xf32>
    tpu.vector_store %arg7[%c0_6, %c0_7], %7 {strides = array<i32>} : memref<32x32xf32, #tpu.memory_space<vmem>>, vector<32x32xf32>,
    %c0_i32_8 = arith.constant 0 : i32
    %9 = arith.cmpi eq, %arg2, %c0_i32_8 : i32
    %10 = arith.extui %9 : i1 to i32
    %c0_i32_9 = arith.constant 0 : i32
    %11 = arith.cmpi ne, %10, %c0_i32_9 : i32
    scf.if %11 {
      %c0_10 = arith.constant 0 : index
      %c0_11 = arith.constant 0 : index
      %12 = vector.load %arg7[%c0_10, %c0_11] : memref<32x32xf32, #tpu.memory_space<vmem>>, vector<32x32xf32>
      %c0_12 = arith.constant 0 : index
      %c0_13 = arith.constant 0 : index
      %13 = vector.load %arg5[%c0_12, %c0_13] : memref<1x32xf32, #tpu.memory_space<vmem>>, vector<1x32xf32>
      %14 = vector.broadcast %13 : vector<1x32xf32> to vector<32x32xf32>
      %15 = arith.addf %12, %14 : vector<32x32xf32>
      %16 = arith.truncf %15 : vector<32x32xf32> to vector<32x32xbf16>
      %c0_14 = arith.constant 0 : index
      %c0_15 = arith.constant 0 : index
      %17 = vector.load %arg6[%c0_14, %c0_15] : memref<32x32xbf16, #tpu.memory_space<vmem>>, vector<32x32xbf16>
      tpu.vector_store %arg6[%c0_14, %c0_15], %16 {strides = array<i32>} : memref<32x32xbf16, #tpu.memory_space<vmem>>, vector<32x32xbf16>,
    } else {
    }
    return
  }
  func.func @transform_0(%arg0: i32, %arg1: i32, %arg2: i32) -> (i32, i32) {
    %c0_i32 = arith.constant 0 : i32
    return %arg0, %arg2 : i32, i32
  }
  func.func @transform_1(%arg0: i32, %arg1: i32, %arg2: i32) -> (i32, i32) {
    %c0_i32 = arith.constant 0 : i32
    return %arg2, %arg1 : i32, i32
  }
  func.func @transform_2(%arg0: i32, %arg1: i32, %arg2: i32) -> (i32, i32) {
    %c0_i32 = arith.constant 0 : i32
    %c0_i32_0 = arith.constant 0 : i32
    return %c0_i32, %arg1 : i32, i32
  }
  func.func @transform_3(%arg0: i32, %arg1: i32, %arg2: i32) -> (i32, i32) {
    %c0_i32 = arith.constant 0 : i32
    return %arg0, %arg1 : i32, i32
  }
}

module attributes {stable_mosaic.version = 11 : i64} {
  func.func @_fused_gn_conv_kernel(%arg0: i32, %arg1: memref<1x16x32xbf16, #tpu.memory_space<vmem>>, %arg2: memref<96x64xbf16, #tpu.memory_space<vmem>>, %arg3: memref<1x64xf32, #tpu.memory_space<vmem>>, %arg4: memref<1x16x64xbf16, #tpu.memory_space<vmem>>) attributes {dimension_semantics = [#tpu.dimension_semantics<parallel>], iteration_bounds = array<i64: 2>, scalar_prefetch = 0 : i64, scratch_operands = 0 : i64, tpu.core_type = #tpu.core_type<tc>, window_params = [{transform_indices = @transform_0, window_bounds = array<i64: 1, 16, 32>}, {pipeline_mode = #tpu.pipeline_mode<synchronous>, transform_indices = @transform_1, window_bounds = array<i64: 96, 64>}, {pipeline_mode = #tpu.pipeline_mode<synchronous>, transform_indices = @transform_2, window_bounds = array<i64: 1, 64>}, {transform_indices = @transform_3, window_bounds = array<i64: 1, 16, 64>}]} {
    %c0 = arith.constant 0 : index
    %c0_0 = arith.constant 0 : index
    %c0_1 = arith.constant 0 : index
    %0 = vector.load %arg1[%c0, %c0_0, %c0_1] : memref<1x16x32xbf16, #tpu.memory_space<vmem>>, vector<1x16x32xbf16>
    %1 = vector.shape_cast %0 : vector<1x16x32xbf16> to vector<16x32xbf16>
    %cst = arith.constant 0.000000e+00 : bf16
    %2 = vector.broadcast %cst : bf16 to vector<1x32xbf16>
    %3 = tpu.concatenate %2, %1, %2 in 0 : vector<1x32xbf16>, vector<16x32xbf16>, vector<1x32xbf16> -> vector<18x32xbf16>
    %4 = vector.extract_strided_slice %3 {offsets = [0, 0], sizes = [16, 32], strides = [1, 1]} : vector<18x32xbf16> to vector<16x32xbf16>
    %5 = vector.extract_strided_slice %3 {offsets = [1, 0], sizes = [16, 32], strides = [1, 1]} : vector<18x32xbf16> to vector<16x32xbf16>
    %6 = vector.extract_strided_slice %3 {offsets = [2, 0], sizes = [16, 32], strides = [1, 1]} : vector<18x32xbf16> to vector<16x32xbf16>
    %7 = tpu.concatenate %4, %5, %6 in 1 : vector<16x32xbf16>, vector<16x32xbf16>, vector<16x32xbf16> -> vector<16x96xbf16>
    %c0_2 = arith.constant 0 : index
    %c0_3 = arith.constant 0 : index
    %8 = vector.load %arg2[%c0_2, %c0_3] : memref<96x64xbf16, #tpu.memory_space<vmem>>, vector<96x64xbf16>
    %cst_4 = arith.constant dense<0.000000e+00> : vector<16x64xf32>
    %9 = tpu.matmul %7, %8, %cst_4 {dimension_numbers = #tpu.dot_dimension_numbers<[1], [0], [0], [1], [0, 0, 1, 1], [], []>} : vector<16x96xbf16>, vector<96x64xbf16>, vector<16x64xf32> -> vector<16x64xf32>
    %c0_5 = arith.constant 0 : index
    %c0_6 = arith.constant 0 : index
    %10 = vector.load %arg3[%c0_5, %c0_6] : memref<1x64xf32, #tpu.memory_space<vmem>>, vector<1x64xf32>
    %11 = vector.broadcast %10 : vector<1x64xf32> to vector<16x64xf32>
    %12 = arith.addf %9, %11 : vector<16x64xf32>
    %13 = arith.truncf %12 : vector<16x64xf32> to vector<16x64xbf16>
    %c0_7 = arith.constant 0 : index
    %c0_8 = arith.constant 0 : index
    %c0_9 = arith.constant 0 : index
    %14 = vector.load %arg4[%c0_7, %c0_8, %c0_9] : memref<1x16x64xbf16, #tpu.memory_space<vmem>>, vector<1x16x64xbf16>
    %15 = vector.shape_cast %14 : vector<1x16x64xbf16> to vector<16x64xbf16>
    %16 = vector.shape_cast %13 : vector<16x64xbf16> to vector<1x16x64xbf16>
    tpu.vector_store %arg4[%c0_7, %c0_8, %c0_9], %16 {strides = array<i32>} : memref<1x16x64xbf16, #tpu.memory_space<vmem>>, vector<1x16x64xbf16>,
    return
  }
  func.func @transform_0(%arg0: i32) -> (i32, i32, i32) {
    %c0_i32 = arith.constant 0 : i32
    %c0_i32_0 = arith.constant 0 : i32
    %c0_i32_1 = arith.constant 0 : i32
    return %arg0, %c0_i32, %c0_i32_0 : i32, i32, i32
  }
  func.func @transform_1(%arg0: i32) -> (i32, i32) {
    %c0_i32 = arith.constant 0 : i32
    %c0_i32_0 = arith.constant 0 : i32
    %c0_i32_1 = arith.constant 0 : i32
    return %c0_i32, %c0_i32_0 : i32, i32
  }
  func.func @transform_2(%arg0: i32) -> (i32, i32) {
    %c0_i32 = arith.constant 0 : i32
    %c0_i32_0 = arith.constant 0 : i32
    %c0_i32_1 = arith.constant 0 : i32
    return %c0_i32, %c0_i32_0 : i32, i32
  }
  func.func @transform_3(%arg0: i32) -> (i32, i32, i32) {
    %c0_i32 = arith.constant 0 : i32
    %c0_i32_0 = arith.constant 0 : i32
    %c0_i32_1 = arith.constant 0 : i32
    return %arg0, %c0_i32, %c0_i32_0 : i32, i32, i32
  }
}

module attributes {stable_mosaic.version = 11 : i64} {
  func.func @_fused_gn_conv_kernel(%arg0: i32, %arg1: memref<1x16x32xbf16, #tpu.memory_space<vmem>>, %arg2: memref<1x32xf32, #tpu.memory_space<vmem>>, %arg3: memref<1x32xf32, #tpu.memory_space<vmem>>, %arg4: memref<32x32xf32, #tpu.memory_space<vmem>>, %arg5: memref<96x32xbf16, #tpu.memory_space<vmem>>, %arg6: memref<1x32xf32, #tpu.memory_space<vmem>>, %arg7: memref<1x16x32xbf16, #tpu.memory_space<vmem>>, %arg8: memref<1x16x32xbf16, #tpu.memory_space<vmem>>) attributes {dimension_semantics = [#tpu.dimension_semantics<parallel>], iteration_bounds = array<i64: 2>, scalar_prefetch = 0 : i64, scratch_operands = 0 : i64, tpu.core_type = #tpu.core_type<tc>, window_params = [{transform_indices = @transform_0, window_bounds = array<i64: 1, 16, 32>}, {pipeline_mode = #tpu.pipeline_mode<synchronous>, transform_indices = @transform_1, window_bounds = array<i64: 1, 32>}, {pipeline_mode = #tpu.pipeline_mode<synchronous>, transform_indices = @transform_2, window_bounds = array<i64: 1, 32>}, {pipeline_mode = #tpu.pipeline_mode<synchronous>, transform_indices = @transform_3, window_bounds = array<i64: 32, 32>}, {pipeline_mode = #tpu.pipeline_mode<synchronous>, transform_indices = @transform_4, window_bounds = array<i64: 96, 32>}, {pipeline_mode = #tpu.pipeline_mode<synchronous>, transform_indices = @transform_5, window_bounds = array<i64: 1, 32>}, {transform_indices = @transform_6, window_bounds = array<i64: 1, 16, 32>}, {transform_indices = @transform_7, window_bounds = array<i64: 1, 16, 32>}]} {
    %c0 = arith.constant 0 : index
    %c0_0 = arith.constant 0 : index
    %c0_1 = arith.constant 0 : index
    %0 = vector.load %arg1[%c0, %c0_0, %c0_1] : memref<1x16x32xbf16, #tpu.memory_space<vmem>>, vector<1x16x32xbf16>
    %1 = vector.shape_cast %0 : vector<1x16x32xbf16> to vector<16x32xbf16>
    %2 = arith.extf %1 : vector<16x32xbf16> to vector<16x32xf32>
    %cst = arith.constant dense<0.000000e+00> : vector<32xf32>
    %3 = vector.multi_reduction <add>, %2, %cst [0] : vector<16x32xf32> to vector<32xf32>
    %4 = vector.shape_cast %3 : vector<32xf32> to vector<1x32xf32>
    %c0_2 = arith.constant 0 : index
    %c0_3 = arith.constant 0 : index
    %5 = vector.load %arg4[%c0_2, %c0_3] : memref<32x32xf32, #tpu.memory_space<vmem>>, vector<32x32xf32>
    %cst_4 = arith.constant dense<0.000000e+00> : vector<1x32xf32>
    %6 = tpu.matmul %4, %5, %cst_4 {dimension_numbers = #tpu.dot_dimension_numbers<[1], [0], [0], [1], [0, 0, 1, 1], [], []>} : vector<1x32xf32>, vector<32x32xf32>, vector<1x32xf32> -> vector<1x32xf32>
    %cst_5 = arith.constant 7.812500e-03 : f32
    %7 = vector.broadcast %cst_5 : f32 to vector<1x32xf32>
    %8 = arith.mulf %6, %7 : vector<1x32xf32>
    %9 = vector.broadcast %8 : vector<1x32xf32> to vector<16x32xf32>
    %10 = arith.subf %2, %9 : vector<16x32xf32>
    %11 = arith.mulf %10, %10 : vector<16x32xf32>
    %cst_6 = arith.constant dense<0.000000e+00> : vector<32xf32>
    %12 = vector.multi_reduction <add>, %11, %cst_6 [0] : vector<16x32xf32> to vector<32xf32>
    %13 = vector.shape_cast %12 : vector<32xf32> to vector<1x32xf32>
    %c0_7 = arith.constant 0 : index
    %c0_8 = arith.constant 0 : index
    %14 = vector.load %arg4[%c0_7, %c0_8] : memref<32x32xf32, #tpu.memory_space<vmem>>, vector<32x32xf32>
    %cst_9 = arith.constant dense<0.000000e+00> : vector<1x32xf32>
    %15 = tpu.matmul %13, %14, %cst_9 {dimension_numbers = #tpu.dot_dimension_numbers<[1], [0], [0], [1], [0, 0, 1, 1], [], []>} : vector<1x32xf32>, vector<32x32xf32>, vector<1x32xf32> -> vector<1x32xf32>
    %cst_10 = arith.constant 7.812500e-03 : f32
    %16 = vector.broadcast %cst_10 : f32 to vector<1x32xf32>
    %17 = arith.mulf %15, %16 : vector<1x32xf32>
    %cst_11 = arith.constant 9.99999974E-6 : f32
    %18 = vector.broadcast %cst_11 : f32 to vector<1x32xf32>
    %19 = arith.addf %17, %18 : vector<1x32xf32>
    %20 = math.rsqrt %19 : vector<1x32xf32>
    %21 = vector.broadcast %20 : vector<1x32xf32> to vector<16x32xf32>
    %22 = arith.mulf %10, %21 : vector<16x32xf32>
    %c0_12 = arith.constant 0 : index
    %c0_13 = arith.constant 0 : index
    %23 = vector.load %arg2[%c0_12, %c0_13] : memref<1x32xf32, #tpu.memory_space<vmem>>, vector<1x32xf32>
    %24 = vector.broadcast %23 : vector<1x32xf32> to vector<16x32xf32>
    %25 = arith.mulf %22, %24 : vector<16x32xf32>
    %c0_14 = arith.constant 0 : index
    %c0_15 = arith.constant 0 : index
    %26 = vector.load %arg3[%c0_14, %c0_15] : memref<1x32xf32, #tpu.memory_space<vmem>>, vector<1x32xf32>
    %27 = vector.broadcast %26 : vector<1x32xf32> to vector<16x32xf32>
    %28 = arith.addf %25, %27 : vector<16x32xf32>
    %cst_16 = arith.constant 0.000000e+00 : f32
    %29 = vector.broadcast %cst_16 : f32 to vector<16x32xf32>
    %30 = arith.maximumf %28, %29 : vector<16x32xf32>
    %31 = arith.truncf %30 : vector<16x32xf32> to vector<16x32xbf16>
    %cst_17 = arith.constant 0.000000e+00 : bf16
    %32 = vector.broadcast %cst_17 : bf16 to vector<1x32xbf16>
    %33 = tpu.concatenate %32, %31, %32 in 0 : vector<1x32xbf16>, vector<16x32xbf16>, vector<1x32xbf16> -> vector<18x32xbf16>
    %34 = vector.extract_strided_slice %33 {offsets = [0, 0], sizes = [16, 32], strides = [1, 1]} : vector<18x32xbf16> to vector<16x32xbf16>
    %35 = vector.extract_strided_slice %33 {offsets = [1, 0], sizes = [16, 32], strides = [1, 1]} : vector<18x32xbf16> to vector<16x32xbf16>
    %36 = vector.extract_strided_slice %33 {offsets = [2, 0], sizes = [16, 32], strides = [1, 1]} : vector<18x32xbf16> to vector<16x32xbf16>
    %37 = tpu.concatenate %34, %35, %36 in 1 : vector<16x32xbf16>, vector<16x32xbf16>, vector<16x32xbf16> -> vector<16x96xbf16>
    %c0_18 = arith.constant 0 : index
    %c0_19 = arith.constant 0 : index
    %38 = vector.load %arg5[%c0_18, %c0_19] : memref<96x32xbf16, #tpu.memory_space<vmem>>, vector<96x32xbf16>
    %cst_20 = arith.constant dense<0.000000e+00> : vector<16x32xf32>
    %39 = tpu.matmul %37, %38, %cst_20 {dimension_numbers = #tpu.dot_dimension_numbers<[1], [0], [0], [1], [0, 0, 1, 1], [], []>} : vector<16x96xbf16>, vector<96x32xbf16>, vector<16x32xf32> -> vector<16x32xf32>
    %c0_21 = arith.constant 0 : index
    %c0_22 = arith.constant 0 : index
    %40 = vector.load %arg6[%c0_21, %c0_22] : memref<1x32xf32, #tpu.memory_space<vmem>>, vector<1x32xf32>
    %41 = vector.broadcast %40 : vector<1x32xf32> to vector<16x32xf32>
    %42 = arith.addf %39, %41 : vector<16x32xf32>
    %c0_23 = arith.constant 0 : index
    %c0_24 = arith.constant 0 : index
    %c0_25 = arith.constant 0 : index
    %43 = vector.load %arg7[%c0_23, %c0_24, %c0_25] : memref<1x16x32xbf16, #tpu.memory_space<vmem>>, vector<1x16x32xbf16>
    %44 = vector.shape_cast %43 : vector<1x16x32xbf16> to vector<16x32xbf16>
    %45 = arith.extf %44 : vector<16x32xbf16> to vector<16x32xf32>
    %46 = arith.addf %42, %45 : vector<16x32xf32>
    %47 = arith.truncf %46 : vector<16x32xf32> to vector<16x32xbf16>
    %c0_26 = arith.constant 0 : index
    %c0_27 = arith.constant 0 : index
    %c0_28 = arith.constant 0 : index
    %48 = vector.load %arg8[%c0_26, %c0_27, %c0_28] : memref<1x16x32xbf16, #tpu.memory_space<vmem>>, vector<1x16x32xbf16>
    %49 = vector.shape_cast %48 : vector<1x16x32xbf16> to vector<16x32xbf16>
    %50 = vector.shape_cast %47 : vector<16x32xbf16> to vector<1x16x32xbf16>
    tpu.vector_store %arg8[%c0_26, %c0_27, %c0_28], %50 {strides = array<i32>} : memref<1x16x32xbf16, #tpu.memory_space<vmem>>, vector<1x16x32xbf16>,
    return
  }
  func.func @transform_0(%arg0: i32) -> (i32, i32, i32) {
    %c0_i32 = arith.constant 0 : i32
    %c0_i32_0 = arith.constant 0 : i32
    %c0_i32_1 = arith.constant 0 : i32
    return %arg0, %c0_i32, %c0_i32_0 : i32, i32, i32
  }
  func.func @transform_1(%arg0: i32) -> (i32, i32) {
    %c0_i32 = arith.constant 0 : i32
    %c0_i32_0 = arith.constant 0 : i32
    %c0_i32_1 = arith.constant 0 : i32
    return %c0_i32, %c0_i32_0 : i32, i32
  }
  func.func @transform_2(%arg0: i32) -> (i32, i32) {
    %c0_i32 = arith.constant 0 : i32
    %c0_i32_0 = arith.constant 0 : i32
    %c0_i32_1 = arith.constant 0 : i32
    return %c0_i32, %c0_i32_0 : i32, i32
  }
  func.func @transform_3(%arg0: i32) -> (i32, i32) {
    %c0_i32 = arith.constant 0 : i32
    %c0_i32_0 = arith.constant 0 : i32
    %c0_i32_1 = arith.constant 0 : i32
    return %c0_i32, %c0_i32_0 : i32, i32
  }
  func.func @transform_4(%arg0: i32) -> (i32, i32) {
    %c0_i32 = arith.constant 0 : i32
    %c0_i32_0 = arith.constant 0 : i32
    %c0_i32_1 = arith.constant 0 : i32
    return %c0_i32, %c0_i32_0 : i32, i32
  }
  func.func @transform_5(%arg0: i32) -> (i32, i32) {
    %c0_i32 = arith.constant 0 : i32
    %c0_i32_0 = arith.constant 0 : i32
    %c0_i32_1 = arith.constant 0 : i32
    return %c0_i32, %c0_i32_0 : i32, i32
  }
  func.func @transform_6(%arg0: i32) -> (i32, i32, i32) {
    %c0_i32 = arith.constant 0 : i32
    %c0_i32_0 = arith.constant 0 : i32
    %c0_i32_1 = arith.constant 0 : i32
    return %arg0, %c0_i32, %c0_i32_0 : i32, i32, i32
  }
  func.func @transform_7(%arg0: i32) -> (i32, i32, i32) {
    %c0_i32 = arith.constant 0 : i32
    %c0_i32_0 = arith.constant 0 : i32
    %c0_i32_1 = arith.constant 0 : i32
    return %arg0, %c0_i32, %c0_i32_0 : i32, i32, i32
  }
}

module attributes {stable_mosaic.version = 11 : i64} {
  func.func @_fused_gn_conv_kernel(%arg0: i32, %arg1: memref<1x32x32xbf16, #tpu.memory_space<vmem>>, %arg2: memref<1x32xf32, #tpu.memory_space<vmem>>, %arg3: memref<1x32xf32, #tpu.memory_space<vmem>>, %arg4: memref<32x32xf32, #tpu.memory_space<vmem>>, %arg5: memref<96x32xbf16, #tpu.memory_space<vmem>>, %arg6: memref<1x32xf32, #tpu.memory_space<vmem>>, %arg7: memref<1x32x32xbf16, #tpu.memory_space<vmem>>) attributes {dimension_semantics = [#tpu.dimension_semantics<parallel>], iteration_bounds = array<i64: 2>, scalar_prefetch = 0 : i64, scratch_operands = 0 : i64, tpu.core_type = #tpu.core_type<tc>, window_params = [{transform_indices = @transform_0, window_bounds = array<i64: 1, 32, 32>}, {pipeline_mode = #tpu.pipeline_mode<synchronous>, transform_indices = @transform_1, window_bounds = array<i64: 1, 32>}, {pipeline_mode = #tpu.pipeline_mode<synchronous>, transform_indices = @transform_2, window_bounds = array<i64: 1, 32>}, {pipeline_mode = #tpu.pipeline_mode<synchronous>, transform_indices = @transform_3, window_bounds = array<i64: 32, 32>}, {pipeline_mode = #tpu.pipeline_mode<synchronous>, transform_indices = @transform_4, window_bounds = array<i64: 96, 32>}, {pipeline_mode = #tpu.pipeline_mode<synchronous>, transform_indices = @transform_5, window_bounds = array<i64: 1, 32>}, {transform_indices = @transform_6, window_bounds = array<i64: 1, 32, 32>}]} {
    %c0 = arith.constant 0 : index
    %c0_0 = arith.constant 0 : index
    %c0_1 = arith.constant 0 : index
    %0 = vector.load %arg1[%c0, %c0_0, %c0_1] : memref<1x32x32xbf16, #tpu.memory_space<vmem>>, vector<1x32x32xbf16>
    %1 = vector.shape_cast %0 : vector<1x32x32xbf16> to vector<32x32xbf16>
    %2 = arith.extf %1 : vector<32x32xbf16> to vector<32x32xf32>
    %cst = arith.constant dense<0.000000e+00> : vector<32xf32>
    %3 = vector.multi_reduction <add>, %2, %cst [0] : vector<32x32xf32> to vector<32xf32>
    %4 = vector.shape_cast %3 : vector<32xf32> to vector<1x32xf32>
    %c0_2 = arith.constant 0 : index
    %c0_3 = arith.constant 0 : index
    %5 = vector.load %arg4[%c0_2, %c0_3] : memref<32x32xf32, #tpu.memory_space<vmem>>, vector<32x32xf32>
    %cst_4 = arith.constant dense<0.000000e+00> : vector<1x32xf32>
    %6 = tpu.matmul %4, %5, %cst_4 {dimension_numbers = #tpu.dot_dimension_numbers<[1], [0], [0], [1], [0, 0, 1, 1], [], []>} : vector<1x32xf32>, vector<32x32xf32>, vector<1x32xf32> -> vector<1x32xf32>
    %cst_5 = arith.constant 3.906250e-03 : f32
    %7 = vector.broadcast %cst_5 : f32 to vector<1x32xf32>
    %8 = arith.mulf %6, %7 : vector<1x32xf32>
    %9 = vector.broadcast %8 : vector<1x32xf32> to vector<32x32xf32>
    %10 = arith.subf %2, %9 : vector<32x32xf32>
    %11 = arith.mulf %10, %10 : vector<32x32xf32>
    %cst_6 = arith.constant dense<0.000000e+00> : vector<32xf32>
    %12 = vector.multi_reduction <add>, %11, %cst_6 [0] : vector<32x32xf32> to vector<32xf32>
    %13 = vector.shape_cast %12 : vector<32xf32> to vector<1x32xf32>
    %c0_7 = arith.constant 0 : index
    %c0_8 = arith.constant 0 : index
    %14 = vector.load %arg4[%c0_7, %c0_8] : memref<32x32xf32, #tpu.memory_space<vmem>>, vector<32x32xf32>
    %cst_9 = arith.constant dense<0.000000e+00> : vector<1x32xf32>
    %15 = tpu.matmul %13, %14, %cst_9 {dimension_numbers = #tpu.dot_dimension_numbers<[1], [0], [0], [1], [0, 0, 1, 1], [], []>} : vector<1x32xf32>, vector<32x32xf32>, vector<1x32xf32> -> vector<1x32xf32>
    %cst_10 = arith.constant 3.906250e-03 : f32
    %16 = vector.broadcast %cst_10 : f32 to vector<1x32xf32>
    %17 = arith.mulf %15, %16 : vector<1x32xf32>
    %cst_11 = arith.constant 9.99999974E-6 : f32
    %18 = vector.broadcast %cst_11 : f32 to vector<1x32xf32>
    %19 = arith.addf %17, %18 : vector<1x32xf32>
    %20 = math.rsqrt %19 : vector<1x32xf32>
    %21 = vector.broadcast %20 : vector<1x32xf32> to vector<32x32xf32>
    %22 = arith.mulf %10, %21 : vector<32x32xf32>
    %c0_12 = arith.constant 0 : index
    %c0_13 = arith.constant 0 : index
    %23 = vector.load %arg2[%c0_12, %c0_13] : memref<1x32xf32, #tpu.memory_space<vmem>>, vector<1x32xf32>
    %24 = vector.broadcast %23 : vector<1x32xf32> to vector<32x32xf32>
    %25 = arith.mulf %22, %24 : vector<32x32xf32>
    %c0_14 = arith.constant 0 : index
    %c0_15 = arith.constant 0 : index
    %26 = vector.load %arg3[%c0_14, %c0_15] : memref<1x32xf32, #tpu.memory_space<vmem>>, vector<1x32xf32>
    %27 = vector.broadcast %26 : vector<1x32xf32> to vector<32x32xf32>
    %28 = arith.addf %25, %27 : vector<32x32xf32>
    %cst_16 = arith.constant 0.000000e+00 : f32
    %29 = vector.broadcast %cst_16 : f32 to vector<32x32xf32>
    %30 = arith.maximumf %28, %29 : vector<32x32xf32>
    %31 = arith.truncf %30 : vector<32x32xf32> to vector<32x32xbf16>
    %cst_17 = arith.constant 0.000000e+00 : bf16
    %32 = vector.broadcast %cst_17 : bf16 to vector<1x32xbf16>
    %33 = tpu.concatenate %32, %31, %32 in 0 : vector<1x32xbf16>, vector<32x32xbf16>, vector<1x32xbf16> -> vector<34x32xbf16>
    %34 = vector.extract_strided_slice %33 {offsets = [0, 0], sizes = [32, 32], strides = [1, 1]} : vector<34x32xbf16> to vector<32x32xbf16>
    %35 = vector.extract_strided_slice %33 {offsets = [1, 0], sizes = [32, 32], strides = [1, 1]} : vector<34x32xbf16> to vector<32x32xbf16>
    %36 = vector.extract_strided_slice %33 {offsets = [2, 0], sizes = [32, 32], strides = [1, 1]} : vector<34x32xbf16> to vector<32x32xbf16>
    %37 = tpu.concatenate %34, %35, %36 in 1 : vector<32x32xbf16>, vector<32x32xbf16>, vector<32x32xbf16> -> vector<32x96xbf16>
    %c0_18 = arith.constant 0 : index
    %c0_19 = arith.constant 0 : index
    %38 = vector.load %arg5[%c0_18, %c0_19] : memref<96x32xbf16, #tpu.memory_space<vmem>>, vector<96x32xbf16>
    %cst_20 = arith.constant dense<0.000000e+00> : vector<32x32xf32>
    %39 = tpu.matmul %37, %38, %cst_20 {dimension_numbers = #tpu.dot_dimension_numbers<[1], [0], [0], [1], [0, 0, 1, 1], [], []>} : vector<32x96xbf16>, vector<96x32xbf16>, vector<32x32xf32> -> vector<32x32xf32>
    %c0_21 = arith.constant 0 : index
    %c0_22 = arith.constant 0 : index
    %40 = vector.load %arg6[%c0_21, %c0_22] : memref<1x32xf32, #tpu.memory_space<vmem>>, vector<1x32xf32>
    %41 = vector.broadcast %40 : vector<1x32xf32> to vector<32x32xf32>
    %42 = arith.addf %39, %41 : vector<32x32xf32>
    %43 = arith.truncf %42 : vector<32x32xf32> to vector<32x32xbf16>
    %c0_23 = arith.constant 0 : index
    %c0_24 = arith.constant 0 : index
    %c0_25 = arith.constant 0 : index
    %44 = vector.load %arg7[%c0_23, %c0_24, %c0_25] : memref<1x32x32xbf16, #tpu.memory_space<vmem>>, vector<1x32x32xbf16>
    %45 = vector.shape_cast %44 : vector<1x32x32xbf16> to vector<32x32xbf16>
    %46 = vector.shape_cast %43 : vector<32x32xbf16> to vector<1x32x32xbf16>
    tpu.vector_store %arg7[%c0_23, %c0_24, %c0_25], %46 {strides = array<i32>} : memref<1x32x32xbf16, #tpu.memory_space<vmem>>, vector<1x32x32xbf16>,
    return
  }
  func.func @transform_0(%arg0: i32) -> (i32, i32, i32) {
    %c0_i32 = arith.constant 0 : i32
    %c0_i32_0 = arith.constant 0 : i32
    %c0_i32_1 = arith.constant 0 : i32
    return %arg0, %c0_i32, %c0_i32_0 : i32, i32, i32
  }
  func.func @transform_1(%arg0: i32) -> (i32, i32) {
    %c0_i32 = arith.constant 0 : i32
    %c0_i32_0 = arith.constant 0 : i32
    %c0_i32_1 = arith.constant 0 : i32
    return %c0_i32, %c0_i32_0 : i32, i32
  }
  func.func @transform_2(%arg0: i32) -> (i32, i32) {
    %c0_i32 = arith.constant 0 : i32
    %c0_i32_0 = arith.constant 0 : i32
    %c0_i32_1 = arith.constant 0 : i32
    return %c0_i32, %c0_i32_0 : i32, i32
  }
  func.func @transform_3(%arg0: i32) -> (i32, i32) {
    %c0_i32 = arith.constant 0 : i32
    %c0_i32_0 = arith.constant 0 : i32
    %c0_i32_1 = arith.constant 0 : i32
    return %c0_i32, %c0_i32_0 : i32, i32
  }
  func.func @transform_4(%arg0: i32) -> (i32, i32) {
    %c0_i32 = arith.constant 0 : i32
    %c0_i32_0 = arith.constant 0 : i32
    %c0_i32_1 = arith.constant 0 : i32
    return %c0_i32, %c0_i32_0 : i32, i32
  }
  func.func @transform_5(%arg0: i32) -> (i32, i32) {
    %c0_i32 = arith.constant 0 : i32
    %c0_i32_0 = arith.constant 0 : i32
    %c0_i32_1 = arith.constant 0 : i32
    return %c0_i32, %c0_i32_0 : i32, i32
  }
  func.func @transform_6(%arg0: i32) -> (i32, i32, i32) {
    %c0_i32 = arith.constant 0 : i32
    %c0_i32_0 = arith.constant 0 : i32
    %c0_i32_1 = arith.constant 0 : i32
    return %arg0, %c0_i32, %c0_i32_0 : i32, i32, i32
  }
}

module attributes {stable_mosaic.version = 11 : i64} {
  func.func @_fused_gn_conv_kernel(%arg0: i32, %arg1: memref<1x32x32xbf16, #tpu.memory_space<vmem>>, %arg2: memref<1x32xf32, #tpu.memory_space<vmem>>, %arg3: memref<1x32xf32, #tpu.memory_space<vmem>>, %arg4: memref<32x32xf32, #tpu.memory_space<vmem>>, %arg5: memref<96x32xbf16, #tpu.memory_space<vmem>>, %arg6: memref<1x32xf32, #tpu.memory_space<vmem>>, %arg7: memref<1x32x32xbf16, #tpu.memory_space<vmem>>, %arg8: memref<1x32x32xbf16, #tpu.memory_space<vmem>>) attributes {dimension_semantics = [#tpu.dimension_semantics<parallel>], iteration_bounds = array<i64: 2>, scalar_prefetch = 0 : i64, scratch_operands = 0 : i64, tpu.core_type = #tpu.core_type<tc>, window_params = [{transform_indices = @transform_0, window_bounds = array<i64: 1, 32, 32>}, {pipeline_mode = #tpu.pipeline_mode<synchronous>, transform_indices = @transform_1, window_bounds = array<i64: 1, 32>}, {pipeline_mode = #tpu.pipeline_mode<synchronous>, transform_indices = @transform_2, window_bounds = array<i64: 1, 32>}, {pipeline_mode = #tpu.pipeline_mode<synchronous>, transform_indices = @transform_3, window_bounds = array<i64: 32, 32>}, {pipeline_mode = #tpu.pipeline_mode<synchronous>, transform_indices = @transform_4, window_bounds = array<i64: 96, 32>}, {pipeline_mode = #tpu.pipeline_mode<synchronous>, transform_indices = @transform_5, window_bounds = array<i64: 1, 32>}, {transform_indices = @transform_6, window_bounds = array<i64: 1, 32, 32>}, {transform_indices = @transform_7, window_bounds = array<i64: 1, 32, 32>}]} {
    %c0 = arith.constant 0 : index
    %c0_0 = arith.constant 0 : index
    %c0_1 = arith.constant 0 : index
    %0 = vector.load %arg1[%c0, %c0_0, %c0_1] : memref<1x32x32xbf16, #tpu.memory_space<vmem>>, vector<1x32x32xbf16>
    %1 = vector.shape_cast %0 : vector<1x32x32xbf16> to vector<32x32xbf16>
    %2 = arith.extf %1 : vector<32x32xbf16> to vector<32x32xf32>
    %cst = arith.constant dense<0.000000e+00> : vector<32xf32>
    %3 = vector.multi_reduction <add>, %2, %cst [0] : vector<32x32xf32> to vector<32xf32>
    %4 = vector.shape_cast %3 : vector<32xf32> to vector<1x32xf32>
    %c0_2 = arith.constant 0 : index
    %c0_3 = arith.constant 0 : index
    %5 = vector.load %arg4[%c0_2, %c0_3] : memref<32x32xf32, #tpu.memory_space<vmem>>, vector<32x32xf32>
    %cst_4 = arith.constant dense<0.000000e+00> : vector<1x32xf32>
    %6 = tpu.matmul %4, %5, %cst_4 {dimension_numbers = #tpu.dot_dimension_numbers<[1], [0], [0], [1], [0, 0, 1, 1], [], []>} : vector<1x32xf32>, vector<32x32xf32>, vector<1x32xf32> -> vector<1x32xf32>
    %cst_5 = arith.constant 3.906250e-03 : f32
    %7 = vector.broadcast %cst_5 : f32 to vector<1x32xf32>
    %8 = arith.mulf %6, %7 : vector<1x32xf32>
    %9 = vector.broadcast %8 : vector<1x32xf32> to vector<32x32xf32>
    %10 = arith.subf %2, %9 : vector<32x32xf32>
    %11 = arith.mulf %10, %10 : vector<32x32xf32>
    %cst_6 = arith.constant dense<0.000000e+00> : vector<32xf32>
    %12 = vector.multi_reduction <add>, %11, %cst_6 [0] : vector<32x32xf32> to vector<32xf32>
    %13 = vector.shape_cast %12 : vector<32xf32> to vector<1x32xf32>
    %c0_7 = arith.constant 0 : index
    %c0_8 = arith.constant 0 : index
    %14 = vector.load %arg4[%c0_7, %c0_8] : memref<32x32xf32, #tpu.memory_space<vmem>>, vector<32x32xf32>
    %cst_9 = arith.constant dense<0.000000e+00> : vector<1x32xf32>
    %15 = tpu.matmul %13, %14, %cst_9 {dimension_numbers = #tpu.dot_dimension_numbers<[1], [0], [0], [1], [0, 0, 1, 1], [], []>} : vector<1x32xf32>, vector<32x32xf32>, vector<1x32xf32> -> vector<1x32xf32>
    %cst_10 = arith.constant 3.906250e-03 : f32
    %16 = vector.broadcast %cst_10 : f32 to vector<1x32xf32>
    %17 = arith.mulf %15, %16 : vector<1x32xf32>
    %cst_11 = arith.constant 9.99999974E-6 : f32
    %18 = vector.broadcast %cst_11 : f32 to vector<1x32xf32>
    %19 = arith.addf %17, %18 : vector<1x32xf32>
    %20 = math.rsqrt %19 : vector<1x32xf32>
    %21 = vector.broadcast %20 : vector<1x32xf32> to vector<32x32xf32>
    %22 = arith.mulf %10, %21 : vector<32x32xf32>
    %c0_12 = arith.constant 0 : index
    %c0_13 = arith.constant 0 : index
    %23 = vector.load %arg2[%c0_12, %c0_13] : memref<1x32xf32, #tpu.memory_space<vmem>>, vector<1x32xf32>
    %24 = vector.broadcast %23 : vector<1x32xf32> to vector<32x32xf32>
    %25 = arith.mulf %22, %24 : vector<32x32xf32>
    %c0_14 = arith.constant 0 : index
    %c0_15 = arith.constant 0 : index
    %26 = vector.load %arg3[%c0_14, %c0_15] : memref<1x32xf32, #tpu.memory_space<vmem>>, vector<1x32xf32>
    %27 = vector.broadcast %26 : vector<1x32xf32> to vector<32x32xf32>
    %28 = arith.addf %25, %27 : vector<32x32xf32>
    %cst_16 = arith.constant 0.000000e+00 : f32
    %29 = vector.broadcast %cst_16 : f32 to vector<32x32xf32>
    %30 = arith.maximumf %28, %29 : vector<32x32xf32>
    %31 = arith.truncf %30 : vector<32x32xf32> to vector<32x32xbf16>
    %cst_17 = arith.constant 0.000000e+00 : bf16
    %32 = vector.broadcast %cst_17 : bf16 to vector<1x32xbf16>
    %33 = tpu.concatenate %32, %31, %32 in 0 : vector<1x32xbf16>, vector<32x32xbf16>, vector<1x32xbf16> -> vector<34x32xbf16>
    %34 = vector.extract_strided_slice %33 {offsets = [0, 0], sizes = [32, 32], strides = [1, 1]} : vector<34x32xbf16> to vector<32x32xbf16>
    %35 = vector.extract_strided_slice %33 {offsets = [1, 0], sizes = [32, 32], strides = [1, 1]} : vector<34x32xbf16> to vector<32x32xbf16>
    %36 = vector.extract_strided_slice %33 {offsets = [2, 0], sizes = [32, 32], strides = [1, 1]} : vector<34x32xbf16> to vector<32x32xbf16>
    %37 = tpu.concatenate %34, %35, %36 in 1 : vector<32x32xbf16>, vector<32x32xbf16>, vector<32x32xbf16> -> vector<32x96xbf16>
    %c0_18 = arith.constant 0 : index
    %c0_19 = arith.constant 0 : index
    %38 = vector.load %arg5[%c0_18, %c0_19] : memref<96x32xbf16, #tpu.memory_space<vmem>>, vector<96x32xbf16>
    %cst_20 = arith.constant dense<0.000000e+00> : vector<32x32xf32>
    %39 = tpu.matmul %37, %38, %cst_20 {dimension_numbers = #tpu.dot_dimension_numbers<[1], [0], [0], [1], [0, 0, 1, 1], [], []>} : vector<32x96xbf16>, vector<96x32xbf16>, vector<32x32xf32> -> vector<32x32xf32>
    %c0_21 = arith.constant 0 : index
    %c0_22 = arith.constant 0 : index
    %40 = vector.load %arg6[%c0_21, %c0_22] : memref<1x32xf32, #tpu.memory_space<vmem>>, vector<1x32xf32>
    %41 = vector.broadcast %40 : vector<1x32xf32> to vector<32x32xf32>
    %42 = arith.addf %39, %41 : vector<32x32xf32>
    %c0_23 = arith.constant 0 : index
    %c0_24 = arith.constant 0 : index
    %c0_25 = arith.constant 0 : index
    %43 = vector.load %arg7[%c0_23, %c0_24, %c0_25] : memref<1x32x32xbf16, #tpu.memory_space<vmem>>, vector<1x32x32xbf16>
    %44 = vector.shape_cast %43 : vector<1x32x32xbf16> to vector<32x32xbf16>
    %45 = arith.extf %44 : vector<32x32xbf16> to vector<32x32xf32>
    %46 = arith.addf %42, %45 : vector<32x32xf32>
    %47 = arith.truncf %46 : vector<32x32xf32> to vector<32x32xbf16>
    %c0_26 = arith.constant 0 : index
    %c0_27 = arith.constant 0 : index
    %c0_28 = arith.constant 0 : index
    %48 = vector.load %arg8[%c0_26, %c0_27, %c0_28] : memref<1x32x32xbf16, #tpu.memory_space<vmem>>, vector<1x32x32xbf16>
    %49 = vector.shape_cast %48 : vector<1x32x32xbf16> to vector<32x32xbf16>
    %50 = vector.shape_cast %47 : vector<32x32xbf16> to vector<1x32x32xbf16>
    tpu.vector_store %arg8[%c0_26, %c0_27, %c0_28], %50 {strides = array<i32>} : memref<1x32x32xbf16, #tpu.memory_space<vmem>>, vector<1x32x32xbf16>,
    return
  }
  func.func @transform_0(%arg0: i32) -> (i32, i32, i32) {
    %c0_i32 = arith.constant 0 : i32
    %c0_i32_0 = arith.constant 0 : i32
    %c0_i32_1 = arith.constant 0 : i32
    return %arg0, %c0_i32, %c0_i32_0 : i32, i32, i32
  }
  func.func @transform_1(%arg0: i32) -> (i32, i32) {
    %c0_i32 = arith.constant 0 : i32
    %c0_i32_0 = arith.constant 0 : i32
    %c0_i32_1 = arith.constant 0 : i32
    return %c0_i32, %c0_i32_0 : i32, i32
  }
  func.func @transform_2(%arg0: i32) -> (i32, i32) {
    %c0_i32 = arith.constant 0 : i32
    %c0_i32_0 = arith.constant 0 : i32
    %c0_i32_1 = arith.constant 0 : i32
    return %c0_i32, %c0_i32_0 : i32, i32
  }
  func.func @transform_3(%arg0: i32) -> (i32, i32) {
    %c0_i32 = arith.constant 0 : i32
    %c0_i32_0 = arith.constant 0 : i32
    %c0_i32_1 = arith.constant 0 : i32
    return %c0_i32, %c0_i32_0 : i32, i32
  }
  func.func @transform_4(%arg0: i32) -> (i32, i32) {
    %c0_i32 = arith.constant 0 : i32
    %c0_i32_0 = arith.constant 0 : i32
    %c0_i32_1 = arith.constant 0 : i32
    return %c0_i32, %c0_i32_0 : i32, i32
  }
  func.func @transform_5(%arg0: i32) -> (i32, i32) {
    %c0_i32 = arith.constant 0 : i32
    %c0_i32_0 = arith.constant 0 : i32
    %c0_i32_1 = arith.constant 0 : i32
    return %c0_i32, %c0_i32_0 : i32, i32
  }
  func.func @transform_6(%arg0: i32) -> (i32, i32, i32) {
    %c0_i32 = arith.constant 0 : i32
    %c0_i32_0 = arith.constant 0 : i32
    %c0_i32_1 = arith.constant 0 : i32
    return %arg0, %c0_i32, %c0_i32_0 : i32, i32, i32
  }
  func.func @transform_7(%arg0: i32) -> (i32, i32, i32) {
    %c0_i32 = arith.constant 0 : i32
    %c0_i32_0 = arith.constant 0 : i32
    %c0_i32_1 = arith.constant 0 : i32
    return %arg0, %c0_i32, %c0_i32_0 : i32, i32, i32
  }
}

module attributes {stable_mosaic.version = 11 : i64} {
  func.func @_mm_bias_kernel(%arg0: i32, %arg1: i32, %arg2: i32, %arg3: memref<64x32xbf16, #tpu.memory_space<vmem>>, %arg4: memref<32x2xbf16, #tpu.memory_space<vmem>>, %arg5: memref<1x2xf32, #tpu.memory_space<vmem>>, %arg6: memref<64x2xf32, #tpu.memory_space<vmem>>, %arg7: memref<64x2xf32, #tpu.memory_space<vmem>>) attributes {dimension_semantics = [#tpu.dimension_semantics<parallel>, #tpu.dimension_semantics<parallel>, #tpu.dimension_semantics<arbitrary>], iteration_bounds = array<i64: 1, 1, 1>, scalar_prefetch = 0 : i64, scratch_operands = 1 : i64, tpu.core_type = #tpu.core_type<tc>, window_params = [{transform_indices = @transform_0, window_bounds = array<i64: 64, 32>}, {transform_indices = @transform_1, window_bounds = array<i64: 32, 2>}, {transform_indices = @transform_2, window_bounds = array<i64: 1, 2>}, {transform_indices = @transform_3, window_bounds = array<i64: 64, 2>}]} {
    %c0_i32 = arith.constant 0 : i32
    %0 = arith.cmpi eq, %arg2, %c0_i32 : i32
    %1 = arith.extui %0 : i1 to i32
    %c0_i32_0 = arith.constant 0 : i32
    %2 = arith.cmpi ne, %1, %c0_i32_0 : i32
    scf.if %2 {
      %cst_10 = arith.constant 0.000000e+00 : f32
      %12 = vector.broadcast %cst_10 : f32 to vector<64x2xf32>
      %c0_11 = arith.constant 0 : index
      %c0_12 = arith.constant 0 : index
      %13 = vector.load %arg7[%c0_11, %c0_12] : memref<64x2xf32, #tpu.memory_space<vmem>>, vector<64x2xf32>
      tpu.vector_store %arg7[%c0_11, %c0_12], %12 {strides = array<i32>} : memref<64x2xf32, #tpu.memory_space<vmem>>, vector<64x2xf32>,
    } else {
    }
    %c0 = arith.constant 0 : index
    %c0_1 = arith.constant 0 : index
    %3 = vector.load %arg7[%c0, %c0_1] : memref<64x2xf32, #tpu.memory_space<vmem>>, vector<64x2xf32>
    %c0_2 = arith.constant 0 : index
    %c0_3 = arith.constant 0 : index
    %4 = vector.load %arg3[%c0_2, %c0_3] : memref<64x32xbf16, #tpu.memory_space<vmem>>, vector<64x32xbf16>
    %c0_4 = arith.constant 0 : index
    %c0_5 = arith.constant 0 : index
    %5 = vector.load %arg4[%c0_4, %c0_5] : memref<32x2xbf16, #tpu.memory_space<vmem>>, vector<32x2xbf16>
    %cst = arith.constant dense<0.000000e+00> : vector<64x2xf32>
    %6 = tpu.matmul %4, %5, %cst {dimension_numbers = #tpu.dot_dimension_numbers<[1], [0], [0], [1], [0, 0, 1, 1], [], []>} : vector<64x32xbf16>, vector<32x2xbf16>, vector<64x2xf32> -> vector<64x2xf32>
    %7 = arith.addf %3, %6 : vector<64x2xf32>
    %c0_6 = arith.constant 0 : index
    %c0_7 = arith.constant 0 : index
    %8 = vector.load %arg7[%c0_6, %c0_7] : memref<64x2xf32, #tpu.memory_space<vmem>>, vector<64x2xf32>
    tpu.vector_store %arg7[%c0_6, %c0_7], %7 {strides = array<i32>} : memref<64x2xf32, #tpu.memory_space<vmem>>, vector<64x2xf32>,
    %c0_i32_8 = arith.constant 0 : i32
    %9 = arith.cmpi eq, %arg2, %c0_i32_8 : i32
    %10 = arith.extui %9 : i1 to i32
    %c0_i32_9 = arith.constant 0 : i32
    %11 = arith.cmpi ne, %10, %c0_i32_9 : i32
    scf.if %11 {
      %c0_10 = arith.constant 0 : index
      %c0_11 = arith.constant 0 : index
      %12 = vector.load %arg7[%c0_10, %c0_11] : memref<64x2xf32, #tpu.memory_space<vmem>>, vector<64x2xf32>
      %c0_12 = arith.constant 0 : index
      %c0_13 = arith.constant 0 : index
      %13 = vector.load %arg5[%c0_12, %c0_13] : memref<1x2xf32, #tpu.memory_space<vmem>>, vector<1x2xf32>
      %14 = vector.broadcast %13 : vector<1x2xf32> to vector<64x2xf32>
      %15 = arith.addf %12, %14 : vector<64x2xf32>
      %c0_14 = arith.constant 0 : index
      %c0_15 = arith.constant 0 : index
      %16 = vector.load %arg6[%c0_14, %c0_15] : memref<64x2xf32, #tpu.memory_space<vmem>>, vector<64x2xf32>
      tpu.vector_store %arg6[%c0_14, %c0_15], %15 {strides = array<i32>} : memref<64x2xf32, #tpu.memory_space<vmem>>, vector<64x2xf32>,
    } else {
    }
    return
  }
  func.func @transform_0(%arg0: i32, %arg1: i32, %arg2: i32) -> (i32, i32) {
    %c0_i32 = arith.constant 0 : i32
    return %arg0, %arg2 : i32, i32
  }
  func.func @transform_1(%arg0: i32, %arg1: i32, %arg2: i32) -> (i32, i32) {
    %c0_i32 = arith.constant 0 : i32
    return %arg2, %arg1 : i32, i32
  }
  func.func @transform_2(%arg0: i32, %arg1: i32, %arg2: i32) -> (i32, i32) {
    %c0_i32 = arith.constant 0 : i32
    %c0_i32_0 = arith.constant 0 : i32
    return %c0_i32, %arg1 : i32, i32
  }
  func.func @transform_3(%arg0: i32, %arg1: i32, %arg2: i32) -> (i32, i32) {
    %c0_i32 = arith.constant 0 : i32
    return %arg0, %arg1 : i32, i32
  }
}

</mosaic_0001>

<llo_original>
// kernel: custom-call.4
$region0: #{custom-call.4}
  %s0 = inlined_call_operand.vmem [shape: f32[8,2,64], index: 0, kind: output, shape index: {}]

// kernel: custom-call
$region0: #{custom-call}
  %s0 = inlined_call_operand.vmem [shape: bf16[2,64], index: 0, kind: output, shape index: {}]

// kernel: custom-call.1
$region0: #{custom-call.1}
  %s0 = inlined_call_operand.vmem [shape: f32[2,64], index: 0, kind: output, shape index: {}]

// kernel: _lambda_.18
$region0: #{_lambda_.18}
  #allocation0 [shape = 'u32[]', space=smem, size = 0x4, offset = 0x4, fixed_abs, tag = 'smem constant byte address 0x4 - core index']
  #allocation1 [shape = 'u32[72,128]{1,0:T(1,128)}', space=vmem, size = 0x9000, scoped, tag = 'internal scratch']
  %s0 = inlined_call_operand.vmem [shape: bf16[2,8,64], index: 0, kind: input, shape index: {}]
  %s1 = inlined_call_operand.vmem [shape: bf16[192,128], index: 1, kind: input, shape index: {}]
  %s2 = inlined_call_operand.vmem [shape: f32[1,128], index: 2, kind: input, shape index: {}]
  %s3 = inlined_call_operand.vmem [shape: bf16[2,8,128], index: 3, kind: output, shape index: {}]
  %s4 = sld [smem:[#allocation0]]
  $region45: #{_lambda_.18} parent=0
    _
  %s6 = ssub.s32 1, %s4
  %s7 = scalar_select 0, %s6, %s4
  loop: start=0, step=1, limit=4
  $region2: #{_lambda_.18} parent=0 // loop_pre_header
    _
  $region3: #{_lambda_.18} parent=0 // loop_header
    %s9 = sphi 0, %s13
    %p10 = scmp.ge.s32.totalorder %s9, 4
    %s19 = sphi 0, %s21
    %s22 = sphi 0, %s19
    %s23 = sphi 0, %s22
    %s39 = sphi 0, %s23
    %s43 = sphi 0, %s43
    %s45 = sphi 0, %s43
    %s46 = sphi 0, %s45
    %s60 = sphi 0, %s46
    %s64 = sphi 0, %s64
    %s66 = sphi 0, %s64
    %s67 = sphi 0, %s66
    %s81 = sphi 0, %s67
    %s87 = sphi 0, %s89
    %s90 = sphi 0, %s87
    %s91 = sphi 0, %s90
    %s107 = sphi 0, %s91
  $region4: #{_lambda_.18} parent=0 // loop_header_branch
    %12 = sbr.rel (%p10) target = $region8
  $region5: #{_lambda_.18} parent=0 // loop_body
    %s14 = ssub.s32 %s9, 1
    %s15 = ssub.s32 %s9, 2
    %s16 = sadd.s32 %s9, 1
    %s17 = ssub.s32 %s9, %s16
    %p18 = scmp.eq.s32.totalorder %s17, 0
    %s20 = sadd.s32 %s19, 1
    %s21 = scalar_select %p18, %s19, %s20
    %p24 = pneg %p18
    %p25 = scmp.eq.s32.totalorder %s9, 1
    %p26 = por %p24, %p25
    %p27 = scmp.ne.s32.totalorder %s19, %s22
    %p28 = scmp.eq.s32.totalorder %s9, 0
    %p29 = por %p27, %p28
    %p30 = scmp.ne.s32.totalorder %s19, %s22
    %p31 = scmp.eq.s32.totalorder %s14, 1
    %p32 = por %p30, %p31
    %p33 = scmp.ne.s32.totalorder %s22, %s23
    %p34 = scmp.eq.s32.totalorder %s14, 0
    %p35 = por %p33, %p34
    %p36 = scmp.ne.s32.totalorder %s22, %s23
    %p37 = scmp.eq.s32.totalorder %s15, 1
    %p38 = por %p36, %p37
    %p40 = scmp.ne.s32.totalorder %s23, %s39
    %p41 = scmp.eq.s32.totalorder %s15, 0
    %p42 = por %p40, %p41
    %s44 = sadd.s32 %s43, 1
    %p47 = scmp.eq.s32.totalorder %s9, 1
    %p48 = scmp.ne.s32.totalorder %s43, %s45
    %p49 = scmp.eq.s32.totalorder %s9, 0
    %p50 = por %p48, %p49
    %p51 = scmp.ne.s32.totalorder %s43, %s45
    %p52 = scmp.eq.s32.totalorder %s14, 1
    %p53 = por %p51, %p52
    %p54 = scmp.ne.s32.totalorder %s45, %s46
    %p55 = scmp.eq.s32.totalorder %s14, 0
    %p56 = por %p54, %p55
    %p57 = scmp.ne.s32.totalorder %s45, %s46
    %p58 = scmp.eq.s32.totalorder %s15, 1
    %p59 = por %p57, %p58
    %p61 = scmp.ne.s32.totalorder %s46, %s60
    %p62 = scmp.eq.s32.totalorder %s15, 0
    %p63 = por %p61, %p62
    %s65 = sadd.s32 %s64, 1
    %p68 = scmp.eq.s32.totalorder %s9, 1
    %p69 = scmp.ne.s32.totalorder %s64, %s66
    %p70 = scmp.eq.s32.totalorder %s9, 0
    %p71 = por %p69, %p70
    %p72 = scmp.ne.s32.totalorder %s64, %s66
    %p73 = scmp.eq.s32.totalorder %s14, 1
    %p74 = por %p72, %p73
    %p75 = scmp.ne.s32.totalorder %s66, %s67
    %p76 = scmp.eq.s32.totalorder %s14, 0
    %p77 = por %p75, %p76
    %p78 = scmp.ne.s32.totalorder %s66, %s67
    %p79 = scmp.eq.s32.totalorder %s15, 1
    %p80 = por %p78, %p79
    %p82 = scmp.ne.s32.totalorder %s67, %s81
    %p83 = scmp.eq.s32.totalorder %s15, 0
    %p84 = por %p82, %p83
    %s85 = ssub.s32 %s9, %s16
    %p86 = scmp.eq.s32.totalorder %s85, 0
    %s88 = sadd.s32 %s87, 1
    %s89 = scalar_select %p86, %s87, %s88
    %p92 = pneg %p86
    %p93 = scmp.eq.s32.totalorder %s9, 1
    %p94 = por %p92, %p93
    %p95 = scmp.ne.s32.totalorder %s87, %s90
    %p96 = scmp.eq.s32.totalorder %s9, 0
    %p97 = por %p95, %p96
    %p98 = scmp.ne.s32.totalorder %s87, %s90
    %p99 = scmp.eq.s32.totalorder %s14, 1
    %p100 = por %p98, %p99
    %p101 = scmp.ne.s32.totalorder %s90, %s91
    %p102 = scmp.eq.s32.totalorder %s14, 0
    %p103 = por %p101, %p102
    %p104 = scmp.ne.s32.totalorder %s90, %s91
    %p105 = scmp.eq.s32.totalorder %s15, 1
    %p106 = por %p104, %p105
    %p108 = scmp.ne.s32.totalorder %s91, %s107
    %p109 = scmp.eq.s32.totalorder %s15, 0
    %p110 = por %p108, %p109
    %p111 = scmp.le.s32.totalorder 1, %s9
    %p112 = scmp.lt.s32.totalorder %s9, 3
    %p113 = pnand %p111, %p112
    %p114 = pneg %p113
    // Predicated region
    $region9: #{_lambda_.18} parent=5 // pred_check
      _
    $region10: #{_lambda_.18} parent=5 // pred_check_branch
      %116 = sbr.rel (%p113) target = $region12
    $region11: #{_lambda_.18} parent=5 // pred_region
      %s117 = ssub.s32 %s9, 1
      // Predicated region
      $region13: #{_lambda_.18} parent=11 // pred_check
        %p118 = pneg %p56
      $region14: #{_lambda_.18} parent=11 // pred_check_branch
        %120 = sbr.rel (%p118) target = $region16
      $region15: #{_lambda_.18} parent=11 // pred_region
        _
      $region16: #{_lambda_.18} parent=11 // pred_fallthru
        _
      // Predicated region
      $region17: #{_lambda_.18} parent=11 // pred_check
        %p121 = pneg %p77
      $region18: #{_lambda_.18} parent=11 // pred_check_branch
        %123 = sbr.rel (%p121) target = $region20
      $region19: #{_lambda_.18} parent=11 // pred_region
        _
      $region20: #{_lambda_.18} parent=11 // pred_fallthru
        _
    $region12: #{_lambda_.18} parent=5 // pred_fallthru
      _
    %p124 = scmp.lt.s32.totalorder %s9, 2
    // Predicated region
    $region21: #{_lambda_.18} parent=5 // pred_check
      %p125 = pneg %p124
    $region22: #{_lambda_.18} parent=5 // pred_check_branch
      %127 = sbr.rel (%p125) target = $region24
    $region23: #{_lambda_.18} parent=5 // pred_region
      // Predicated region
      $region25: #{_lambda_.18} parent=23 // pred_check
        %p128 = pneg %p29
      $region26: #{_lambda_.18} parent=23 // pred_check_branch
        %130 = sbr.rel (%p128) target = $region28
      $region27: #{_lambda_.18} parent=23 // pred_region
        %p131 = scmp.lt.s32.totalorder %s9, 1
        %s132 = scalar_select %p131, %s9, 1
        %s133 = smul.addr %s132, 4
        %s134 = scalar_lea.vmem %s0, %s133
      $region28: #{_lambda_.18} parent=23 // pred_fallthru
        _
    $region24: #{_lambda_.18} parent=5 // pred_fallthru
      _
    %p135 = scmp.le.s32.totalorder 1, %s9
    %p136 = scmp.lt.s32.totalorder %s9, 3
    %p137 = pnand %p135, %p136
    %p138 = pneg %p137
    // Predicated region
    $region29: #{_lambda_.18} parent=5 // pred_check
      _
    $region30: #{_lambda_.18} parent=5 // pred_check_branch
      %140 = sbr.rel (%p137) target = $region32
    $region31: #{_lambda_.18} parent=5 // pred_region
      %s141 = ssub.s32 %s9, 1
      %p142 = scmp.lt.s32.totalorder %s14, 1
      %s143 = scalar_select %p142, %s14, 1
      %s144 = smul.addr %s143, 4
      %s145 = scalar_lea.vmem %s0, %s144
      %p146 = pneg %p35
      %p147 = pneg %p32
      %p148 = pneg %p56
      %p149 = pneg %p53
      %p150 = pneg %p77
      %p151 = pneg %p74
      %p152 = pneg %p103
      %p153 = pneg %p100
      %p154 = scmp.lt.s32.totalorder %s14, 1
      %s155 = scalar_select %p154, %s14, 1
      %s156 = smul.addr %s155, 4
      %s157 = scalar_lea.vmem %s3, %s156
      %p158 = scmp.lt.s32.totalorder %s14, 1
      %s159 = scalar_select %p158, %s14, 1
      %s160 = smul.addr %s159, 4
      %s161 = scalar_lea.vmem %s0, %s160
      %p162 = scmp.lt.s32.totalorder %s14, 1
      %s163 = scalar_select %p162, %s14, 1
      %s164 = smul.addr %s163, 4
      %s165 = scalar_lea.vmem %s3, %s164
      %v167 = vld [vmem:[%s161] sm:$0xf]
      %v169 = vunpack.c.l.b16 %v167
      %v170 = vpack.c.b16 %v169, %v169
      %v172 = vshrl.u32 %v170, 16
      %v174 = vrot.slane %v172, 7
      %v175 = vshll.u32 %v170, 16
      %v177 = vor.u32 %v174, %v175
      %vm179 = vcmask 1040384
      %vm180 = vsmask.f32 256
      %vm181 = vmand %vm179, %vm180
      %v182 = vsel %vm181, 0, %v177
      %vm183 = vcmask 1044480
      %vm184 = vsmask.f32 4352
      %vm185 = vmand %vm183, %vm184
      %v186 = vsel %vm185, %v182, 0
      %v188 = vshrl.u32 %v186, 16
      %v190 = vshll.u32 %v186, 16
      %v192 = vrot.slane %v190, 1
      %v193 = vor.u32 %v188, %v192
      %194 = vrot.lane.b32.xlu0 %v193, 64
      %v195 = vpop.permute.xlu0 %194
      %v197 = vrot.slane %v186, 1
      %vm198 = vcmask 523264
      %v200 = vsel %vm198, %v186, %v195
      %v202 = vld [vmem:[%s1] sm:$0xf]
      %v203 = vld [vmem:[%s1 + $0x4] sm:$0xf]
      %v204 = vld [vmem:[%s1 + $0x8] sm:$0xf]
      %v205 = vld [vmem:[%s1 + $0xc] sm:$0xf]
      %v206 = vld [vmem:[%s1 + $0x10] sm:$0xf]
      %v207 = vld [vmem:[%s1 + $0x14] sm:$0xf]
      %v208 = vld [vmem:[%s1 + $0x18] sm:$0xf]
      %v209 = vld [vmem:[%s1 + $0x1c] sm:$0xf]
      %v210 = vld [vmem:[%s1 + $0x20] sm:$0xf]
      %v211 = vld [vmem:[%s1 + $0x24] sm:$0xf]
      %v212 = vld [vmem:[%s1 + $0x28] sm:$0xf]
      %v213 = vld [vmem:[%s1 + $0x2c] sm:$0xf]
      %v214 = vld [vmem:[%s1 + $0x30] sm:$0xf]
      %v215 = vld [vmem:[%s1 + $0x34] sm:$0xf]
      %v216 = vld [vmem:[%s1 + $0x38] sm:$0xf]
      %v217 = vld [vmem:[%s1 + $0x3c] sm:$0xf]
      %v218 = vld [vmem:[%s1 + $0x40] sm:$0xf]
      %v219 = vld [vmem:[%s1 + $0x44] sm:$0xf]
      %v220 = vld [vmem:[%s1 + $0x48] sm:$0xf]
      %v221 = vld [vmem:[%s1 + $0x4c] sm:$0xf]
      %v222 = vld [vmem:[%s1 + $0x50] sm:$0xf]
      %v223 = vld [vmem:[%s1 + $0x54] sm:$0xf]
      %v224 = vld [vmem:[%s1 + $0x58] sm:$0xf]
      %v225 = vld [vmem:[%s1 + $0x5c] sm:$0xf]
      %v226 = vld [vmem:[%s2] sm:$0x1]
      %v228 = vperm.slane %v226, 0
      %v254 = vunpack.c.l.b16 %v202
      %v255 = vunpack.c.l.b16 %v203
      %v256 = vunpack.c.l.b16 %v204
      %v257 = vunpack.c.l.b16 %v205
      %v258 = vunpack.c.l.b16 %v206
      %v259 = vunpack.c.l.b16 %v207
      %v260 = vunpack.c.l.b16 %v208
      %v261 = vunpack.c.l.b16 %v209
      %v262 = vunpack.c.l.b16 %v210
      %v263 = vunpack.c.l.b16 %v211
      %v264 = vunpack.c.l.b16 %v212
      %v265 = vunpack.c.l.b16 %v213
      %v266 = vunpack.c.l.b16 %v214
      %v267 = vunpack.c.l.b16 %v215
      %v268 = vunpack.c.l.b16 %v216
      %v269 = vunpack.c.l.b16 %v217
      %v270 = vunpack.c.l.b16 %v218
      %v271 = vunpack.c.l.b16 %v219
      %v272 = vunpack.c.l.b16 %v220
      %v273 = vunpack.c.l.b16 %v221
      %v274 = vunpack.c.l.b16 %v222
      %v275 = vunpack.c.l.b16 %v223
      %v276 = vunpack.c.l.b16 %v224
      %v277 = vunpack.c.l.b16 %v225
      %v278 = vpack.c.b16 %v255, %v254
      %v279 = vpack.c.b16 %v257, %v256
      %v280 = vpack.c.b16 %v259, %v258
      %v281 = vpack.c.b16 %v261, %v260
      %v282 = vpack.c.b16 %v263, %v262
      %v283 = vpack.c.b16 %v265, %v264
      %v284 = vpack.c.b16 %v267, %v266
      %v285 = vpack.c.b16 %v269, %v268
      %v286 = vpack.c.b16 %v271, %v270
      %v287 = vpack.c.b16 %v273, %v272
      %v288 = vpack.c.b16 %v275, %v274
      %v289 = vpack.c.b16 %v277, %v276
      %v303 = vsel %vm198, %v197, 0
      %305 = vmatpush.bf16.msra.mxu0 %v285
      %306 = vmatpush.bf16.msra.mxu0 %v284
      %307 = vmatpush.bf16.msra.mxu0 %v283
      %308 = vmatpush.bf16.msra.mxu0 %v282
      %309 = vmatpush.bf16.msra.mxu0 %v281
      %310 = vmatpush.bf16.msra.mxu0 %v280
      %311 = vmatpush.bf16.msra.mxu0 %v279
      %312 = vmatpush.bf16.msra.mxu0 %v278
      %313 = vmatmul.bf16.gmra.mxu0 %v200
      %v314 = vpop.f32.mrf.mxu0
      %v315 = vadd.f32 %v228, %v314
      %v316 = vpop.f32.mrf.mxu0
      %317 = vdwg.mxu0
      %318 = vmatpush.bf16.msra.mxu0 0
      %319 = vmatpush.bf16.msra.mxu0 0
      %320 = vmatpush.bf16.msra.mxu0 0
      %321 = vmatpush.bf16.msra.mxu0 0
      %322 = vmatpush.bf16.msra.mxu0 %v289
      %323 = vmatpush.bf16.msra.mxu0 %v288
      %324 = vmatpush.bf16.msra.mxu0 %v287
      %325 = vmatpush.bf16.msra.mxu0 %v286
      %326 = vmatmul.bf16.gmra.mxu0 %v303
      %v327 = vpop.f32.mrf.mxu0
      %v328 = vadd.f32 %v315, %v327
      %v329 = vpop.f32.mrf.mxu0
      %330 = vdwg.mxu0
      %v331 = vpack.c.bf16 %v328, %v328
      %332 = vst [vmem:[%s165] sm:$0xf] %v331
      %p333 = scmp.lt.s32.totalorder %s14, 1
      %s334 = scalar_select %p333, %s14, 1
      %s335 = smul.addr %s334, 4
      %s336 = scalar_lea.vmem %s3, %s335
      // Predicated region
      $region33: #{_lambda_.18} parent=31 // pred_check
        %p337 = pneg %p100
      $region34: #{_lambda_.18} parent=31 // pred_check_branch
        %339 = sbr.rel (%p337) target = $region36
      $region35: #{_lambda_.18} parent=31 // pred_region
        _
      $region36: #{_lambda_.18} parent=31 // pred_fallthru
        _
    $region32: #{_lambda_.18} parent=5 // pred_fallthru
      _
    %p340 = scmp.le.s32.totalorder 2, %s9
    // Predicated region
    $region37: #{_lambda_.18} parent=5 // pred_check
      %p341 = pneg %p340
    $region38: #{_lambda_.18} parent=5 // pred_check_branch
      %343 = sbr.rel (%p341) target = $region40
    $region39: #{_lambda_.18} parent=5 // pred_region
      %s344 = ssub.s32 %s9, 2
      // Predicated region
      $region41: #{_lambda_.18} parent=39 // pred_check
        %p345 = pneg %p106
      $region42: #{_lambda_.18} parent=39 // pred_check_branch
        %347 = sbr.rel (%p345) target = $region44
      $region43: #{_lambda_.18} parent=39 // pred_region
        %p348 = scmp.lt.s32.totalorder %s15, 1
        %s349 = scalar_select %p348, %s15, 1
        %s350 = smul.addr %s349, 4
        %s351 = scalar_lea.vmem %s3, %s350
      $region44: #{_lambda_.18} parent=39 // pred_fallthru
        _
    $region40: #{_lambda_.18} parent=5 // pred_fallthru
      _
  $region6: #{_lambda_.18} parent=0 // loop_footer
    %s13 = sadd.s32 1, %s9
  $region7: #{_lambda_.18} parent=0 // loop_footer_branch
    %8 = sbr.rel target = $region3
  $region8: #{_lambda_.18} parent=0 // loop_exit
    _

// kernel: _lambda_.15
$region0: #{_lambda_.15}
  #allocation0 [shape = 'u32[]', space=smem, size = 0x4, offset = 0x4, fixed_abs, tag = 'smem constant byte address 0x4 - core index']
  #allocation1 [shape = 'u32[72,128]{1,0:T(1,128)}', space=vmem, size = 0x9000, scoped, tag = 'internal scratch']
  #allocation2 [shape = 'f32[16,64]{1,0:T(8,128)}', space=vmem, size = 0x2000, scoped, tag = 'scratch operand']
  %s0 = inlined_call_operand.vmem [shape: bf16[16,8], index: 0, kind: input, shape index: {}]
  %s1 = inlined_call_operand.vmem [shape: bf16[8,64], index: 1, kind: input, shape index: {}]
  %s2 = inlined_call_operand.vmem [shape: f32[1,64], index: 2, kind: input, shape index: {}]
  %s3 = inlined_call_operand.vmem [shape: bf16[16,64], index: 3, kind: output, shape index: {}]
  %s4 = sld [smem:[#allocation0]]
  $region30: #{_lambda_.15} parent=0
    _
  %s6 = ssub.s32 1, %s4
  %s7 = scalar_select 0, %s6, %s4
  // Predicated region
  $region2: #{_lambda_.15} parent=0 // pred_check
    _
  $region3: #{_lambda_.15} parent=0 // pred_check_branch
    %9 = sbr.rel (0) target = $region5
  $region4: #{_lambda_.15} parent=0 // pred_region
    _
  $region5: #{_lambda_.15} parent=0 // pred_fallthru
    _
  // Predicated region
  $region6: #{_lambda_.15} parent=0 // pred_check
    _
  $region7: #{_lambda_.15} parent=0 // pred_check_branch
    %11 = sbr.rel (0) target = $region9
  $region8: #{_lambda_.15} parent=0 // pred_region
    _
  $region9: #{_lambda_.15} parent=0 // pred_fallthru
    _
  // Predicated region
  $region10: #{_lambda_.15} parent=0 // pred_check
    _
  $region11: #{_lambda_.15} parent=0 // pred_check_branch
    %13 = sbr.rel (0) target = $region13
  $region12: #{_lambda_.15} parent=0 // pred_region
    _
  $region13: #{_lambda_.15} parent=0 // pred_fallthru
    _
  %p15 = scmp.eq.s32.totalorder 0, 0
  // Predicated region
  $region14: #{_lambda_.15} parent=0 // pred_check
    %p16 = pneg %p15
  $region15: #{_lambda_.15} parent=0 // pred_check_branch
    %18 = sbr.rel (%p16) target = $region17
  $region16: #{_lambda_.15} parent=0 // pred_region
    %vm19 = vcmask 523264
    %20 = vst.msk [vmem:[#allocation2] sm:$0xff] %vm19, 0.0
    %21 = vst.msk [vmem:[#allocation2 + $0x8] sm:$0xff] %vm19, 0.0
  $region17: #{_lambda_.15} parent=0 // pred_fallthru
    _
  %v22 = vld [vmem:[#allocation2] sm:$0xff]
  %v23 = vld [vmem:[#allocation2 + $0x8] sm:$0xff]
  %v24 = vld [vmem:[%s0] sm:$0xf]
  %v25 = vld [vmem:[%s0 + $0x4] sm:$0xf]
  %v26 = vld [vmem:[%s1] sm:$0xf]
  %v29 = vunpack.c.l.b16 %v24
  %v30 = vunpack.c.l.b16 %v25
  %v31 = vpack.c.b16 %v30, %v29
  %vm32 = vcmask 64512
  %v34 = vsel %vm32, %v31, 0
  %vm36 = vcmask 1043456
  %v38 = vsel %vm36, %v26, 0
  %40 = vmatpush.bf16.msra.mxu0 0
  %41 = vmatpush.bf16.msra.mxu0 0
  %42 = vmatpush.bf16.msra.mxu0 0
  %43 = vmatpush.bf16.msra.mxu0 0
  %44 = vmatpush.bf16.msra.mxu0 0
  %45 = vmatpush.bf16.msra.mxu0 0
  %46 = vmatpush.bf16.msra.mxu0 0
  %47 = vmatpush.bf16.msra.mxu0 %v38
  %48 = vmatmul.bf16.gmra.mxu0 %v34
  %v49 = vpop.f32.mrf.mxu0
  %v50 = vadd.f32 0.0, %v49
  %v51 = vpop.f32.mrf.mxu0
  %v52 = vadd.f32 0.0, %v51
  %53 = vdwg.mxu0
  %v54 = vadd.f32 %v22, %v50
  %v55 = vadd.f32 %v23, %v52
  %vm56 = vcmask 523264
  %57 = vst.msk [vmem:[#allocation2] sm:$0xff] %vm56, %v54
  %58 = vst.msk [vmem:[#allocation2 + $0x8] sm:$0xff] %vm56, %v55
  // Predicated region
  $region18: #{_lambda_.15} parent=0 // pred_check
    %p59 = pneg %p15
  $region19: #{_lambda_.15} parent=0 // pred_check_branch
    %61 = sbr.rel (%p59) target = $region21
  $region20: #{_lambda_.15} parent=0 // pred_region
    %v62 = vld [vmem:[#allocation2] sm:$0xff]
    %v63 = vld [vmem:[#allocation2 + $0x8] sm:$0xff]
    %v64 = vld [vmem:[%s2] sm:$0x1]
    %v66 = vperm.slane %v64, 0
    %v68 = vadd.f32 %v62, %v66
    %v69 = vadd.f32 %v63, %v66
    %v70 = vpack.c.bf16 %v68, %v68
    %v71 = vpack.c.bf16 %v69, %v69
    %vm72 = vcmask 519168
    %73 = vst.msk [vmem:[%s3] sm:$0xf] %vm72, %v70
    %74 = vst.msk [vmem:[%s3 + $0x4] sm:$0xf] %vm72, %v71
  $region21: #{_lambda_.15} parent=0 // pred_fallthru
    _
  // Predicated region
  $region22: #{_lambda_.15} parent=0 // pred_check
    _
  $region23: #{_lambda_.15} parent=0 // pred_check_branch
    %76 = sbr.rel (0) target = $region25
  $region24: #{_lambda_.15} parent=0 // pred_region
    _
  $region25: #{_lambda_.15} parent=0 // pred_fallthru
    _
  // Predicated region
  $region26: #{_lambda_.15} parent=0 // pred_check
    _
  $region27: #{_lambda_.15} parent=0 // pred_check_branch
    %78 = sbr.rel (0) target = $region29
  $region28: #{_lambda_.15} parent=0 // pred_region
    _
  $region29: #{_lambda_.15} parent=0 // pred_fallthru
    _

// kernel: _lambda_.16
$region0: #{_lambda_.16}
  #allocation0 [shape = 'u32[]', space=smem, size = 0x4, offset = 0x4, fixed_abs, tag = 'smem constant byte address 0x4 - core index']
  #allocation1 [shape = 'u32[72,128]{1,0:T(1,128)}', space=vmem, size = 0x9000, scoped, tag = 'internal scratch']
  #allocation2 [shape = 'f32[16,512]{1,0:T(8,128)}', space=vmem, size = 0x8000, scoped, tag = 'scratch operand']
  %s0 = inlined_call_operand.vmem [shape: bf16[16,64], index: 0, kind: input, shape index: {}]
  %s1 = inlined_call_operand.hbm [shape: bf16[64,512], index: 1, kind: input, shape index: {}]
  %s2 = inlined_call_operand.vmem [shape: f32[1,512], index: 2, kind: input, shape index: {}]
  %s3 = inlined_call_operand.vmem [shape: f32[16,512], index: 3, kind: output, shape index: {}]
  %s4 = sld [smem:[#allocation0]]
  $region34: #{_lambda_.16} parent=0
    _
  %s6 = ssub.s32 1, %s4
  %s7 = scalar_select 0, %s6, %s4
  $region1: #{_lambda_.16} parent=0
    #allocation3 [shape = 'u8[65536]{0}', space=vmem, size = 0x10000, scoped, tag = 'input window, operand 1, single buffered']
    #allocation4 [shape = 's32[1]{0}', space=sflag, size = 0x4, scoped, tag = 'scoped memory for _lambda_.16']
    %8 = vsyncpa [#allocation4], 0
    // Predicated region
    $region2: #{_lambda_.16} parent=1 // pred_check
      _
    $region3: #{_lambda_.16} parent=1 // pred_check_branch
      %10 = sbr.rel (0) target = $region5
    $region4: #{_lambda_.16} parent=1 // pred_region
      _
    $region5: #{_lambda_.16} parent=1 // pred_fallthru
      _
    // Predicated region
    $region6: #{_lambda_.16} parent=1 // pred_check
      _
    $region7: #{_lambda_.16} parent=1 // pred_check_branch
      %12 = sbr.rel (0) target = $region9
    $region8: #{_lambda_.16} parent=1 // pred_region
      %14 = vsyncadd [#allocation4], 0
      %s15 = sshll.u32 %s1, 4
      %s16 = int_to_ptr.hbm [resolvable:$true] %s15
      %s17 = sshll.u32 [#allocation3], 4
      %s18 = int_to_ptr.vmem [resolvable:$true] %s17
      %23 = dma.hbm_to_vmem [thread:$0]  %s16, 2048, %s18, [#allocation4], 256, 256, 16
    $region9: #{_lambda_.16} parent=1 // pred_fallthru
      _
    // Predicated region
    $region10: #{_lambda_.16} parent=1 // pred_check
      _
    $region11: #{_lambda_.16} parent=1 // pred_check_branch
      %25 = sbr.rel (0) target = $region13
    $region12: #{_lambda_.16} parent=1 // pred_region
      _
    $region13: #{_lambda_.16} parent=1 // pred_fallthru
      _
    // Predicated region
    $region14: #{_lambda_.16} parent=1 // pred_check
      _
    $region15: #{_lambda_.16} parent=1 // pred_check_branch
      %27 = sbr.rel (0) target = $region17
    $region16: #{_lambda_.16} parent=1 // pred_region
      %29 = dma.done [#allocation4], 2048
    $region17: #{_lambda_.16} parent=1 // pred_fallthru
      _
    %p31 = scmp.eq.s32.totalorder 0, 0
    // Predicated region
    $region18: #{_lambda_.16} parent=1 // pred_check
      %p32 = pneg %p31
    $region19: #{_lambda_.16} parent=1 // pred_check_branch
      %34 = sbr.rel (%p32) target = $region21
    $region20: #{_lambda_.16} parent=1 // pred_region
      %35 = vst [vmem:[#allocation2] sm:$0xff] 0.0
      %36 = vst [vmem:[#allocation2 + $0x8] sm:$0xff] 0.0
      %37 = vst [vmem:[#allocation2 + $0x10] sm:$0xff] 0.0
      %38 = vst [vmem:[#allocation2 + $0x18] sm:$0xff] 0.0
      %39 = vst [vmem:[#allocation2 + $0x20] sm:$0xff] 0.0
      %40 = vst [vmem:[#allocation2 + $0x28] sm:$0xff] 0.0
      %41 = vst [vmem:[#allocation2 + $0x30] sm:$0xff] 0.0
      %42 = vst [vmem:[#allocation2 + $0x38] sm:$0xff] 0.0
    $region21: #{_lambda_.16} parent=1 // pred_fallthru
      _
    %v43 = vld [vmem:[#allocation2] sm:$0xff]
    %v44 = vld [vmem:[#allocation2 + $0x8] sm:$0xff]
    %v45 = vld [vmem:[#allocation2 + $0x10] sm:$0xff]
    %v46 = vld [vmem:[#allocation2 + $0x18] sm:$0xff]
    %v47 = vld [vmem:[#allocation2 + $0x20] sm:$0xff]
    %v48 = vld [vmem:[#allocation2 + $0x28] sm:$0xff]
    %v49 = vld [vmem:[#allocation2 + $0x30] sm:$0xff]
    %v50 = vld [vmem:[#allocation2 + $0x38] sm:$0xff]
    %v51 = vld [vmem:[%s0] sm:$0xf]
    %v52 = vld [vmem:[%s0 + $0x4] sm:$0xf]
    %v53 = vld [vmem:[#allocation3] sm:$0xff]
    %v54 = vld [vmem:[#allocation3 + $0x8] sm:$0xff]
    %v55 = vld [vmem:[#allocation3 + $0x10] sm:$0xff]
    %v56 = vld [vmem:[#allocation3 + $0x18] sm:$0xff]
    %v57 = vld [vmem:[#allocation3 + $0x20] sm:$0xff]
    %v58 = vld [vmem:[#allocation3 + $0x28] sm:$0xff]
    %v59 = vld [vmem:[#allocation3 + $0x30] sm:$0xff]
    %v60 = vld [vmem:[#allocation3 + $0x38] sm:$0xff]
    %v61 = vld [vmem:[#allocation3 + $0x40] sm:$0xff]
    %v62 = vld [vmem:[#allocation3 + $0x48] sm:$0xff]
    %v63 = vld [vmem:[#allocation3 + $0x50] sm:$0xff]
    %v64 = vld [vmem:[#allocation3 + $0x58] sm:$0xff]
    %v65 = vld [vmem:[#allocation3 + $0x60] sm:$0xff]
    %v66 = vld [vmem:[#allocation3 + $0x68] sm:$0xff]
    %v67 = vld [vmem:[#allocation3 + $0x70] sm:$0xff]
    %v68 = vld [vmem:[#allocation3 + $0x78] sm:$0xff]
    %v71 = vunpack.c.l.b16 %v51
    %v72 = vunpack.c.l.b16 %v52
    %v73 = vpack.c.b16 %v72, %v71
    %v90 = vunpack.c.l.b16 %v53
    %v91 = vunpack.c.h.b16 %v53
    %v92 = vunpack.c.l.b16 %v54
    %v93 = vunpack.c.h.b16 %v54
    %v94 = vunpack.c.l.b16 %v55
    %v95 = vunpack.c.h.b16 %v55
    %v96 = vunpack.c.l.b16 %v56
    %v97 = vunpack.c.h.b16 %v56
    %v98 = vunpack.c.l.b16 %v57
    %v99 = vunpack.c.h.b16 %v57
    %v100 = vunpack.c.l.b16 %v58
    %v101 = vunpack.c.h.b16 %v58
    %v102 = vunpack.c.l.b16 %v59
    %v103 = vunpack.c.h.b16 %v59
    %v104 = vunpack.c.l.b16 %v60
    %v105 = vunpack.c.h.b16 %v60
    %v106 = vunpack.c.l.b16 %v61
    %v107 = vunpack.c.h.b16 %v61
    %v108 = vunpack.c.l.b16 %v62
    %v109 = vunpack.c.h.b16 %v62
    %v110 = vunpack.c.l.b16 %v63
    %v111 = vunpack.c.h.b16 %v63
    %v112 = vunpack.c.l.b16 %v64
    %v113 = vunpack.c.h.b16 %v64
    %v114 = vunpack.c.l.b16 %v65
    %v115 = vunpack.c.h.b16 %v65
    %v116 = vunpack.c.l.b16 %v66
    %v117 = vunpack.c.h.b16 %v66
    %v118 = vunpack.c.l.b16 %v67
    %v119 = vunpack.c.h.b16 %v67
    %v120 = vunpack.c.l.b16 %v68
    %v121 = vunpack.c.h.b16 %v68
    %v122 = vpack.c.b16 %v94, %v90
    %v123 = vpack.c.b16 %v95, %v91
    %v124 = vpack.c.b16 %v96, %v92
    %v125 = vpack.c.b16 %v97, %v93
    %v126 = vpack.c.b16 %v102, %v98
    %v127 = vpack.c.b16 %v103, %v99
    %v128 = vpack.c.b16 %v104, %v100
    %v129 = vpack.c.b16 %v105, %v101
    %v130 = vpack.c.b16 %v110, %v106
    %v131 = vpack.c.b16 %v111, %v107
    %v132 = vpack.c.b16 %v112, %v108
    %v133 = vpack.c.b16 %v113, %v109
    %v134 = vpack.c.b16 %v118, %v114
    %v135 = vpack.c.b16 %v119, %v115
    %v136 = vpack.c.b16 %v120, %v116
    %v137 = vpack.c.b16 %v121, %v117
    %vm154 = vcmask 523264
    %v156 = vsel %vm154, %v73, 0
    %158 = vmatpush.bf16.msra.mxu0 0
    %159 = vmatpush.bf16.msra.mxu0 0
    %160 = vmatpush.bf16.msra.mxu0 0
    %161 = vmatpush.bf16.msra.mxu0 0
    %162 = vmatpush.bf16.msra.mxu0 %v134
    %163 = vmatpush.bf16.msra.mxu0 %v130
    %164 = vmatpush.bf16.msra.mxu0 %v126
    %165 = vmatpush.bf16.msra.mxu0 %v122
    %166 = vmatmul.bf16.gmra.mxu0 %v156
    %v167 = vpop.f32.mrf.mxu0
    %v168 = vadd.f32 0.0, %v167
    %v169 = vpop.f32.mrf.mxu0
    %v170 = vadd.f32 0.0, %v169
    %171 = vdwg.mxu0
    %172 = vmatpush.bf16.msra.mxu0 0
    %173 = vmatpush.bf16.msra.mxu0 0
    %174 = vmatpush.bf16.msra.mxu0 0
    %175 = vmatpush.bf16.msra.mxu0 0
    %176 = vmatpush.bf16.msra.mxu0 %v135
    %177 = vmatpush.bf16.msra.mxu0 %v131
    %178 = vmatpush.bf16.msra.mxu0 %v127
    %179 = vmatpush.bf16.msra.mxu0 %v123
    %180 = vmatmul.bf16.gmra.mxu0 %v156
    %v181 = vpop.f32.mrf.mxu0
    %v182 = vadd.f32 0.0, %v181
    %v183 = vpop.f32.mrf.mxu0
    %v184 = vadd.f32 0.0, %v183
    %185 = vdwg.mxu0
    %186 = vmatpush.bf16.msra.mxu0 0
    %187 = vmatpush.bf16.msra.mxu0 0
    %188 = vmatpush.bf16.msra.mxu0 0
    %189 = vmatpush.bf16.msra.mxu0 0
    %190 = vmatpush.bf16.msra.mxu0 %v136
    %191 = vmatpush.bf16.msra.mxu0 %v132
    %192 = vmatpush.bf16.msra.mxu0 %v128
    %193 = vmatpush.bf16.msra.mxu0 %v124
    %194 = vmatmul.bf16.gmra.mxu0 %v156
    %v195 = vpop.f32.mrf.mxu0
    %v196 = vadd.f32 0.0, %v195
    %v197 = vpop.f32.mrf.mxu0
    %v198 = vadd.f32 0.0, %v197
    %199 = vdwg.mxu0
    %200 = vmatpush.bf16.msra.mxu0 0
    %201 = vmatpush.bf16.msra.mxu0 0
    %202 = vmatpush.bf16.msra.mxu0 0
    %203 = vmatpush.bf16.msra.mxu0 0
    %204 = vmatpush.bf16.msra.mxu0 %v137
    %205 = vmatpush.bf16.msra.mxu0 %v133
    %206 = vmatpush.bf16.msra.mxu0 %v129
    %207 = vmatpush.bf16.msra.mxu0 %v125
    %208 = vmatmul.bf16.gmra.mxu0 %v156
    %v209 = vpop.f32.mrf.mxu0
    %v210 = vadd.f32 0.0, %v209
    %v211 = vpop.f32.mrf.mxu0
    %v212 = vadd.f32 0.0, %v211
    %213 = vdwg.mxu0
    %v214 = vadd.f32 %v43, %v168
    %v215 = vadd.f32 %v44, %v182
    %v216 = vadd.f32 %v45, %v196
    %v217 = vadd.f32 %v46, %v210
    %v218 = vadd.f32 %v47, %v170
    %v219 = vadd.f32 %v48, %v184
    %v220 = vadd.f32 %v49, %v198
    %v221 = vadd.f32 %v50, %v212
    %222 = vst [vmem:[#allocation2] sm:$0xff] %v214
    %223 = vst [vmem:[#allocation2 + $0x8] sm:$0xff] %v215
    %224 = vst [vmem:[#allocation2 + $0x10] sm:$0xff] %v216
    %225 = vst [vmem:[#allocation2 + $0x18] sm:$0xff] %v217
    %226 = vst [vmem:[#allocation2 + $0x20] sm:$0xff] %v218
    %227 = vst [vmem:[#allocation2 + $0x28] sm:$0xff] %v219
    %228 = vst [vmem:[#allocation2 + $0x30] sm:$0xff] %v220
    %229 = vst [vmem:[#allocation2 + $0x38] sm:$0xff] %v221
    // Predicated region
    $region22: #{_lambda_.16} parent=1 // pred_check
      %p230 = pneg %p31
    $region23: #{_lambda_.16} parent=1 // pred_check_branch
      %232 = sbr.rel (%p230) target = $region25
    $region24: #{_lambda_.16} parent=1 // pred_region
      %v233 = vld [vmem:[#allocation2] sm:$0xff]
      %v234 = vld [vmem:[#allocation2 + $0x8] sm:$0xff]
      %v235 = vld [vmem:[#allocation2 + $0x10] sm:$0xff]
      %v236 = vld [vmem:[#allocation2 + $0x18] sm:$0xff]
      %v237 = vld [vmem:[#allocation2 + $0x20] sm:$0xff]
      %v238 = vld [vmem:[#allocation2 + $0x28] sm:$0xff]
      %v239 = vld [vmem:[#allocation2 + $0x30] sm:$0xff]
      %v240 = vld [vmem:[#allocation2 + $0x38] sm:$0xff]
      %v241 = vld [vmem:[%s2] sm:$0xf]
      %v243 = vperm.slane %v241, 0
      %v244 = vperm.slane %v241, 1
      %v245 = vperm.slane %v241, 2
      %v246 = vperm.slane %v241, 3
      %v251 = vadd.f32 %v233, %v243
      %v252 = vadd.f32 %v234, %v244
      %v253 = vadd.f32 %v235, %v245
      %v254 = vadd.f32 %v236, %v246
      %v255 = vadd.f32 %v237, %v243
      %v256 = vadd.f32 %v238, %v244
      %v257 = vadd.f32 %v239, %v245
      %v258 = vadd.f32 %v240, %v246
      %259 = vst [vmem:[%s3] sm:$0xff] %v251
      %260 = vst [vmem:[%s3 + $0x8] sm:$0xff] %v252
      %261 = vst [vmem:[%s3 + $0x10] sm:$0xff] %v253
      %262 = vst [vmem:[%s3 + $0x18] sm:$0xff] %v254
      %263 = vst [vmem:[%s3 + $0x20] sm:$0xff] %v255
      %264 = vst [vmem:[%s3 + $0x28] sm:$0xff] %v256
      %265 = vst [vmem:[%s3 + $0x30] sm:$0xff] %v257
      %266 = vst [vmem:[%s3 + $0x38] sm:$0xff] %v258
    $region25: #{_lambda_.16} parent=1 // pred_fallthru
      _
    // Predicated region
    $region26: #{_lambda_.16} parent=1 // pred_check
      _
    $region27: #{_lambda_.16} parent=1 // pred_check_branch
      %268 = sbr.rel (0) target = $region29
    $region28: #{_lambda_.16} parent=1 // pred_region
      _
    $region29: #{_lambda_.16} parent=1 // pred_fallthru
      _
    // Predicated region
    $region30: #{_lambda_.16} parent=1 // pred_check
      _
    $region31: #{_lambda_.16} parent=1 // pred_check_branch
      %270 = sbr.rel (0) target = $region33
    $region32: #{_lambda_.16} parent=1 // pred_region
      _
    $region33: #{_lambda_.16} parent=1 // pred_fallthru
      _
    %271 = vsyncpa [#allocation4], 1

// kernel: _lambda_.17
$region0: #{_lambda_.17}
  #allocation0 [shape = 'u32[]', space=smem, size = 0x4, offset = 0x4, fixed_abs, tag = 'smem constant byte address 0x4 - core index']
  #allocation1 [shape = 'u32[72,128]{1,0:T(1,128)}', space=vmem, size = 0x9000, scoped, tag = 'internal scratch']
  #allocation2 [shape = 'f32[16,64]{1,0:T(8,128)}', space=vmem, size = 0x2000, scoped, tag = 'scratch operand']
  %s0 = inlined_call_operand.vmem [shape: f32[16,128], index: 0, kind: input, shape index: {}]
  %s1 = inlined_call_operand.vmem [shape: bf16[128,64], index: 1, kind: input, shape index: {}]
  %s2 = inlined_call_operand.vmem [shape: f32[1,64], index: 2, kind: input, shape index: {}]
  %s3 = inlined_call_operand.vmem [shape: f32[16,64], index: 3, kind: output, shape index: {}]
  %s4 = sld [smem:[#allocation0]]
  $region30: #{_lambda_.17} parent=0
    _
  %s6 = ssub.s32 1, %s4
  %s7 = scalar_select 0, %s6, %s4
  // Predicated region
  $region2: #{_lambda_.17} parent=0 // pred_check
    _
  $region3: #{_lambda_.17} parent=0 // pred_check_branch
    %9 = sbr.rel (0) target = $region5
  $region4: #{_lambda_.17} parent=0 // pred_region
    _
  $region5: #{_lambda_.17} parent=0 // pred_fallthru
    _
  // Predicated region
  $region6: #{_lambda_.17} parent=0 // pred_check
    _
  $region7: #{_lambda_.17} parent=0 // pred_check_branch
    %11 = sbr.rel (0) target = $region9
  $region8: #{_lambda_.17} parent=0 // pred_region
    _
  $region9: #{_lambda_.17} parent=0 // pred_fallthru
    _
  // Predicated region
  $region10: #{_lambda_.17} parent=0 // pred_check
    _
  $region11: #{_lambda_.17} parent=0 // pred_check_branch
    %13 = sbr.rel (0) target = $region13
  $region12: #{_lambda_.17} parent=0 // pred_region
    _
  $region13: #{_lambda_.17} parent=0 // pred_fallthru
    _
  %p14 = scmp.eq.s32.totalorder 0, 0
  // Predicated region
  $region14: #{_lambda_.17} parent=0 // pred_check
    %p15 = pneg %p14
  $region15: #{_lambda_.17} parent=0 // pred_check_branch
    %17 = sbr.rel (%p15) target = $region17
  $region16: #{_lambda_.17} parent=0 // pred_region
    %vm18 = vcmask 523264
    %19 = vst.msk [vmem:[#allocation2] sm:$0xff] %vm18, 0.0
    %20 = vst.msk [vmem:[#allocation2 + $0x8] sm:$0xff] %vm18, 0.0
  $region17: #{_lambda_.17} parent=0 // pred_fallthru
    _
  %v21 = vld [vmem:[#allocation2] sm:$0xff]
  %v22 = vld [vmem:[#allocation2 + $0x8] sm:$0xff]
  %v23 = vld [vmem:[%s0] sm:$0xff]
  %v24 = vld [vmem:[%s0 + $0x8] sm:$0xff]
  %v25 = vpack.c.bf16 %v24, %v23
  %v26 = vld [vmem:[%s1] sm:$0xf]
  %v27 = vld [vmem:[%s1 + $0x4] sm:$0xf]
  %v28 = vld [vmem:[%s1 + $0x8] sm:$0xf]
  %v29 = vld [vmem:[%s1 + $0xc] sm:$0xf]
  %v30 = vld [vmem:[%s1 + $0x10] sm:$0xf]
  %v31 = vld [vmem:[%s1 + $0x14] sm:$0xf]
  %v32 = vld [vmem:[%s1 + $0x18] sm:$0xf]
  %v33 = vld [vmem:[%s1 + $0x1c] sm:$0xf]
  %v34 = vld [vmem:[%s1 + $0x20] sm:$0xf]
  %v35 = vld [vmem:[%s1 + $0x24] sm:$0xf]
  %v36 = vld [vmem:[%s1 + $0x28] sm:$0xf]
  %v37 = vld [vmem:[%s1 + $0x2c] sm:$0xf]
  %v38 = vld [vmem:[%s1 + $0x30] sm:$0xf]
  %v39 = vld [vmem:[%s1 + $0x34] sm:$0xf]
  %v40 = vld [vmem:[%s1 + $0x38] sm:$0xf]
  %v41 = vld [vmem:[%s1 + $0x3c] sm:$0xf]
  %v58 = vunpack.c.l.b16 %v26
  %v59 = vunpack.c.l.b16 %v27
  %v60 = vunpack.c.l.b16 %v28
  %v61 = vunpack.c.l.b16 %v29
  %v62 = vunpack.c.l.b16 %v30
  %v63 = vunpack.c.l.b16 %v31
  %v64 = vunpack.c.l.b16 %v32
  %v65 = vunpack.c.l.b16 %v33
  %v66 = vunpack.c.l.b16 %v34
  %v67 = vunpack.c.l.b16 %v35
  %v68 = vunpack.c.l.b16 %v36
  %v69 = vunpack.c.l.b16 %v37
  %v70 = vunpack.c.l.b16 %v38
  %v71 = vunpack.c.l.b16 %v39
  %v72 = vunpack.c.l.b16 %v40
  %v73 = vunpack.c.l.b16 %v41
  %v74 = vpack.c.b16 %v59, %v58
  %v75 = vpack.c.b16 %v61, %v60
  %v76 = vpack.c.b16 %v63, %v62
  %v77 = vpack.c.b16 %v65, %v64
  %v78 = vpack.c.b16 %v67, %v66
  %v79 = vpack.c.b16 %v69, %v68
  %v80 = vpack.c.b16 %v71, %v70
  %v81 = vpack.c.b16 %v73, %v72
  %90 = vmatpush.bf16.msra.mxu0 %v81
  %91 = vmatpush.bf16.msra.mxu0 %v80
  %92 = vmatpush.bf16.msra.mxu0 %v79
  %93 = vmatpush.bf16.msra.mxu0 %v78
  %94 = vmatpush.bf16.msra.mxu0 %v77
  %95 = vmatpush.bf16.msra.mxu0 %v76
  %96 = vmatpush.bf16.msra.mxu0 %v75
  %97 = vmatpush.bf16.msra.mxu0 %v74
  %98 = vmatmul.bf16.gmra.mxu0 %v25
  %v99 = vpop.f32.mrf.mxu0
  %v100 = vadd.f32 0.0, %v99
  %v101 = vpop.f32.mrf.mxu0
  %v102 = vadd.f32 0.0, %v101
  %103 = vdwg.mxu0
  %v104 = vadd.f32 %v21, %v100
  %v105 = vadd.f32 %v22, %v102
  %vm106 = vcmask 523264
  %107 = vst.msk [vmem:[#allocation2] sm:$0xff] %vm106, %v104
  %108 = vst.msk [vmem:[#allocation2 + $0x8] sm:$0xff] %vm106, %v105
  // Predicated region
  $region18: #{_lambda_.17} parent=0 // pred_check
    %p109 = pneg %p14
  $region19: #{_lambda_.17} parent=0 // pred_check_branch
    %111 = sbr.rel (%p109) target = $region21
  $region20: #{_lambda_.17} parent=0 // pred_region
    %v112 = vld [vmem:[#allocation2] sm:$0xff]
    %v113 = vld [vmem:[#allocation2 + $0x8] sm:$0xff]
    %v114 = vld [vmem:[%s2] sm:$0x1]
    %v116 = vperm.slane %v114, 0
    %v118 = vadd.f32 %v112, %v116
    %v119 = vadd.f32 %v113, %v116
    %120 = vst.msk [vmem:[%s3] sm:$0xff] %vm106, %v118
    %121 = vst.msk [vmem:[%s3 + $0x8] sm:$0xff] %vm106, %v119
  $region21: #{_lambda_.17} parent=0 // pred_fallthru
    _
  // Predicated region
  $region22: #{_lambda_.17} parent=0 // pred_check
    _
  $region23: #{_lambda_.17} parent=0 // pred_check_branch
    %123 = sbr.rel (0) target = $region25
  $region24: #{_lambda_.17} parent=0 // pred_region
    _
  $region25: #{_lambda_.17} parent=0 // pred_fallthru
    _
  // Predicated region
  $region26: #{_lambda_.17} parent=0 // pred_check
    _
  $region27: #{_lambda_.17} parent=0 // pred_check_branch
    %125 = sbr.rel (0) target = $region29
  $region28: #{_lambda_.17} parent=0 // pred_region
    _
  $region29: #{_lambda_.17} parent=0 // pred_fallthru
    _

// kernel: _lambda_.19
$region0: #{_lambda_.19}
  #allocation0 [shape = 'u32[]', space=smem, size = 0x4, offset = 0x4, fixed_abs, tag = 'smem constant byte address 0x4 - core index']
  #allocation1 [shape = 'u32[72,128]{1,0:T(1,128)}', space=vmem, size = 0x9000, scoped, tag = 'internal scratch']
  %s0 = inlined_call_operand.vmem [shape: bf16[2,16,64], index: 0, kind: input, shape index: {}]
  %s1 = inlined_call_operand.vmem [shape: f32[1,64], index: 1, kind: input, shape index: {}]
  %s2 = inlined_call_operand.vmem [shape: f32[1,64], index: 2, kind: input, shape index: {}]
  %s3 = inlined_call_operand.vmem [shape: f32[64,64], index: 3, kind: input, shape index: {}]
  %s4 = inlined_call_operand.vmem [shape: bf16[192,64], index: 4, kind: input, shape index: {}]
  %s5 = inlined_call_operand.hbm [shape: f32[1,64], index: 5, kind: input, shape index: {}]
  %s6 = inlined_call_operand.vmem [shape: bf16[2,16,64], index: 6, kind: output, shape index: {}]
  %s7 = sld [smem:[#allocation0]]
  $region61: #{_lambda_.19} parent=0
    _
  %s9 = ssub.s32 1, %s7
  %s10 = scalar_select 0, %s9, %s7
  $region1: #{_lambda_.19} parent=0
    #allocation2 [shape = 'u8[512]{0}', space=vmem, size = 0x400, scoped, tag = 'input window, operand 5, single buffered']
    #allocation3 [shape = 's32[2]{0}', space=sflag, size = 0x8, scoped, tag = 'scoped memory for _lambda_.19']
    %11 = vsyncpa [#allocation3], 0
    loop: start=0, step=1, limit=4
    $region2: #{_lambda_.19} parent=1 // loop_pre_header
      _
    $region3: #{_lambda_.19} parent=1 // loop_header
      %s13 = sphi 0, %s17
      %p14 = scmp.ge.s32.totalorder %s13, 4
      %s23 = sphi 0, %s25
      %s26 = sphi 0, %s23
      %s27 = sphi 0, %s26
      %s43 = sphi 0, %s27
      %s47 = sphi 0, %s47
      %s49 = sphi 0, %s47
      %s50 = sphi 0, %s49
      %s64 = sphi 0, %s50
      %s68 = sphi 0, %s68
      %s70 = sphi 0, %s68
      %s71 = sphi 0, %s70
      %s85 = sphi 0, %s71
      %s89 = sphi 0, %s89
      %s91 = sphi 0, %s89
      %s92 = sphi 0, %s91
      %s106 = sphi 0, %s92
      %s110 = sphi 0, %s110
      %s112 = sphi 0, %s110
      %s113 = sphi 0, %s112
      %s127 = sphi 0, %s113
      %s131 = sphi 0, %s131
      %s133 = sphi 0, %s131
      %s134 = sphi 0, %s133
      %s148 = sphi 0, %s134
      %s154 = sphi 0, %s156
      %s157 = sphi 0, %s154
      %s158 = sphi 0, %s157
      %s174 = sphi 0, %s158
    $region4: #{_lambda_.19} parent=1 // loop_header_branch
      %16 = sbr.rel (%p14) target = $region8
    $region5: #{_lambda_.19} parent=1 // loop_body
      %s18 = ssub.s32 %s13, 1
      %s19 = ssub.s32 %s13, 2
      %s20 = sadd.s32 %s13, 1
      %s21 = ssub.s32 %s13, %s20
      %p22 = scmp.eq.s32.totalorder %s21, 0
      %s24 = sadd.s32 %s23, 1
      %s25 = scalar_select %p22, %s23, %s24
      %p28 = pneg %p22
      %p29 = scmp.eq.s32.totalorder %s13, 1
      %p30 = por %p28, %p29
      %p31 = scmp.ne.s32.totalorder %s23, %s26
      %p32 = scmp.eq.s32.totalorder %s13, 0
      %p33 = por %p31, %p32
      %p34 = scmp.ne.s32.totalorder %s23, %s26
      %p35 = scmp.eq.s32.totalorder %s18, 1
      %p36 = por %p34, %p35
      %p37 = scmp.ne.s32.totalorder %s26, %s27
      %p38 = scmp.eq.s32.totalorder %s18, 0
      %p39 = por %p37, %p38
      %p40 = scmp.ne.s32.totalorder %s26, %s27
      %p41 = scmp.eq.s32.totalorder %s19, 1
      %p42 = por %p40, %p41
      %p44 = scmp.ne.s32.totalorder %s27, %s43
      %p45 = scmp.eq.s32.totalorder %s19, 0
      %p46 = por %p44, %p45
      %s48 = sadd.s32 %s47, 1
      %p51 = scmp.eq.s32.totalorder %s13, 1
      %p52 = scmp.ne.s32.totalorder %s47, %s49
      %p53 = scmp.eq.s32.totalorder %s13, 0
      %p54 = por %p52, %p53
      %p55 = scmp.ne.s32.totalorder %s47, %s49
      %p56 = scmp.eq.s32.totalorder %s18, 1
      %p57 = por %p55, %p56
      %p58 = scmp.ne.s32.totalorder %s49, %s50
      %p59 = scmp.eq.s32.totalorder %s18, 0
      %p60 = por %p58, %p59
      %p61 = scmp.ne.s32.totalorder %s49, %s50
      %p62 = scmp.eq.s32.totalorder %s19, 1
      %p63 = por %p61, %p62
      %p65 = scmp.ne.s32.totalorder %s50, %s64
      %p66 = scmp.eq.s32.totalorder %s19, 0
      %p67 = por %p65, %p66
      %s69 = sadd.s32 %s68, 1
      %p72 = scmp.eq.s32.totalorder %s13, 1
      %p73 = scmp.ne.s32.totalorder %s68, %s70
      %p74 = scmp.eq.s32.totalorder %s13, 0
      %p75 = por %p73, %p74
      %p76 = scmp.ne.s32.totalorder %s68, %s70
      %p77 = scmp.eq.s32.totalorder %s18, 1
      %p78 = por %p76, %p77
      %p79 = scmp.ne.s32.totalorder %s70, %s71
      %p80 = scmp.eq.s32.totalorder %s18, 0
      %p81 = por %p79, %p80
      %p82 = scmp.ne.s32.totalorder %s70, %s71
      %p83 = scmp.eq.s32.totalorder %s19, 1
      %p84 = por %p82, %p83
      %p86 = scmp.ne.s32.totalorder %s71, %s85
      %p87 = scmp.eq.s32.totalorder %s19, 0
      %p88 = por %p86, %p87
      %s90 = sadd.s32 %s89, 1
      %p93 = scmp.eq.s32.totalorder %s13, 1
      %p94 = scmp.ne.s32.totalorder %s89, %s91
      %p95 = scmp.eq.s32.totalorder %s13, 0
      %p96 = por %p94, %p95
      %p97 = scmp.ne.s32.totalorder %s89, %s91
      %p98 = scmp.eq.s32.totalorder %s18, 1
      %p99 = por %p97, %p98
      %p100 = scmp.ne.s32.totalorder %s91, %s92
      %p101 = scmp.eq.s32.totalorder %s18, 0
      %p102 = por %p100, %p101
      %p103 = scmp.ne.s32.totalorder %s91, %s92
      %p104 = scmp.eq.s32.totalorder %s19, 1
      %p105 = por %p103, %p104
      %p107 = scmp.ne.s32.totalorder %s92, %s106
      %p108 = scmp.eq.s32.totalorder %s19, 0
      %p109 = por %p107, %p108
      %s111 = sadd.s32 %s110, 1
      %p114 = scmp.eq.s32.totalorder %s13, 1
      %p115 = scmp.ne.s32.totalorder %s110, %s112
      %p116 = scmp.eq.s32.totalorder %s13, 0
      %p117 = por %p115, %p116
      %p118 = scmp.ne.s32.totalorder %s110, %s112
      %p119 = scmp.eq.s32.totalorder %s18, 1
      %p120 = por %p118, %p119
      %p121 = scmp.ne.s32.totalorder %s112, %s113
      %p122 = scmp.eq.s32.totalorder %s18, 0
      %p123 = por %p121, %p122
      %p124 = scmp.ne.s32.totalorder %s112, %s113
      %p125 = scmp.eq.s32.totalorder %s19, 1
      %p126 = por %p124, %p125
      %p128 = scmp.ne.s32.totalorder %s113, %s127
      %p129 = scmp.eq.s32.totalorder %s19, 0
      %p130 = por %p128, %p129
      %s132 = sadd.s32 %s131, 1
      %p135 = scmp.eq.s32.totalorder %s13, 1
      %p136 = scmp.ne.s32.totalorder %s131, %s133
      %p137 = scmp.eq.s32.totalorder %s13, 0
      %p138 = por %p136, %p137
      %p139 = scmp.ne.s32.totalorder %s131, %s133
      %p140 = scmp.eq.s32.totalorder %s18, 1
      %p141 = por %p139, %p140
      %p142 = scmp.ne.s32.totalorder %s133, %s134
      %p143 = scmp.eq.s32.totalorder %s18, 0
      %p144 = por %p142, %p143
      %p145 = scmp.ne.s32.totalorder %s133, %s134
      %p146 = scmp.eq.s32.totalorder %s19, 1
      %p147 = por %p145, %p146
      %p149 = scmp.ne.s32.totalorder %s134, %s148
      %p150 = scmp.eq.s32.totalorder %s19, 0
      %p151 = por %p149, %p150
      %s152 = ssub.s32 %s13, %s20
      %p153 = scmp.eq.s32.totalorder %s152, 0
      %s155 = sadd.s32 %s154, 1
      %s156 = scalar_select %p153, %s154, %s155
      %p159 = pneg %p153
      %p160 = scmp.eq.s32.totalorder %s13, 1
      %p161 = por %p159, %p160
      %p162 = scmp.ne.s32.totalorder %s154, %s157
      %p163 = scmp.eq.s32.totalorder %s13, 0
      %p164 = por %p162, %p163
      %p165 = scmp.ne.s32.totalorder %s154, %s157
      %p166 = scmp.eq.s32.totalorder %s18, 1
      %p167 = por %p165, %p166
      %p168 = scmp.ne.s32.totalorder %s157, %s158
      %p169 = scmp.eq.s32.totalorder %s18, 0
      %p170 = por %p168, %p169
      %p171 = scmp.ne.s32.totalorder %s157, %s158
      %p172 = scmp.eq.s32.totalorder %s19, 1
      %p173 = por %p171, %p172
      %p175 = scmp.ne.s32.totalorder %s158, %s174
      %p176 = scmp.eq.s32.totalorder %s19, 0
      %p177 = por %p175, %p176
      %p178 = scmp.le.s32.totalorder 1, %s13
      %p179 = scmp.lt.s32.totalorder %s13, 3
      %p180 = pnand %p178, %p179
      %p181 = pneg %p180
      // Predicated region
      $region9: #{_lambda_.19} parent=5 // pred_check
        _
      $region10: #{_lambda_.19} parent=5 // pred_check_branch
        %183 = sbr.rel (%p180) target = $region12
      $region11: #{_lambda_.19} parent=5 // pred_region
        %s184 = ssub.s32 %s13, 1
        // Predicated region
        $region13: #{_lambda_.19} parent=11 // pred_check
          %p185 = pneg %p60
        $region14: #{_lambda_.19} parent=11 // pred_check_branch
          %187 = sbr.rel (%p185) target = $region16
        $region15: #{_lambda_.19} parent=11 // pred_region
          _
        $region16: #{_lambda_.19} parent=11 // pred_fallthru
          _
        // Predicated region
        $region17: #{_lambda_.19} parent=11 // pred_check
          %p188 = pneg %p81
        $region18: #{_lambda_.19} parent=11 // pred_check_branch
          %190 = sbr.rel (%p188) target = $region20
        $region19: #{_lambda_.19} parent=11 // pred_region
          _
        $region20: #{_lambda_.19} parent=11 // pred_fallthru
          _
        // Predicated region
        $region21: #{_lambda_.19} parent=11 // pred_check
          %p191 = pneg %p102
        $region22: #{_lambda_.19} parent=11 // pred_check_branch
          %193 = sbr.rel (%p191) target = $region24
        $region23: #{_lambda_.19} parent=11 // pred_region
          _
        $region24: #{_lambda_.19} parent=11 // pred_fallthru
          _
        // Predicated region
        $region25: #{_lambda_.19} parent=11 // pred_check
          %p194 = pneg %p123
        $region26: #{_lambda_.19} parent=11 // pred_check_branch
          %196 = sbr.rel (%p194) target = $region28
        $region27: #{_lambda_.19} parent=11 // pred_region
          _
        $region28: #{_lambda_.19} parent=11 // pred_fallthru
          _
        // Predicated region
        $region29: #{_lambda_.19} parent=11 // pred_check
          %p197 = pneg %p144
        $region30: #{_lambda_.19} parent=11 // pred_check_branch
          %199 = sbr.rel (%p197) target = $region32
        $region31: #{_lambda_.19} parent=11 // pred_region
          %201 = vsyncadd [#allocation3], 0
          %s203 = sshll.u32 %s5, 4
          %s204 = int_to_ptr.hbm [resolvable:$true] %s203
          %s205 = sshll.u32 [#allocation2], 4
          %s206 = int_to_ptr.vmem [resolvable:$true] %s205
          %208 = dma.hbm_to_vmem [thread:$0]  %s204, 16, %s206, [#allocation3]
        $region32: #{_lambda_.19} parent=11 // pred_fallthru
          _
      $region12: #{_lambda_.19} parent=5 // pred_fallthru
        _
      %p209 = scmp.lt.s32.totalorder %s13, 2
      // Predicated region
      $region33: #{_lambda_.19} parent=5 // pred_check
        %p210 = pneg %p209
      $region34: #{_lambda_.19} parent=5 // pred_check_branch
        %212 = sbr.rel (%p210) target = $region36
      $region35: #{_lambda_.19} parent=5 // pred_region
        // Predicated region
        $region37: #{_lambda_.19} parent=35 // pred_check
          %p213 = pneg %p33
        $region38: #{_lambda_.19} parent=35 // pred_check_branch
          %215 = sbr.rel (%p213) target = $region40
        $region39: #{_lambda_.19} parent=35 // pred_region
          %p216 = scmp.lt.s32.totalorder %s13, 1
          %s217 = scalar_select %p216, %s13, 1
          %s218 = smul.addr %s217, 2
          %s219 = smul.addr %s218, 4
          %s220 = scalar_lea.vmem %s0, %s219
        $region40: #{_lambda_.19} parent=35 // pred_fallthru
          _
      $region36: #{_lambda_.19} parent=5 // pred_fallthru
        _
      %p221 = scmp.le.s32.totalorder 1, %s13
      %p222 = scmp.lt.s32.totalorder %s13, 3
      %p223 = pnand %p221, %p222
      %p224 = pneg %p223
      // Predicated region
      $region41: #{_lambda_.19} parent=5 // pred_check
        _
      $region42: #{_lambda_.19} parent=5 // pred_check_branch
        %226 = sbr.rel (%p223) target = $region44
      $region43: #{_lambda_.19} parent=5 // pred_region
        %s227 = ssub.s32 %s13, 1
        // Predicated region
        $region45: #{_lambda_.19} parent=43 // pred_check
          %p228 = pneg %p144
        $region46: #{_lambda_.19} parent=43 // pred_check_branch
          %230 = sbr.rel (%p228) target = $region48
        $region47: #{_lambda_.19} parent=43 // pred_region
          %232 = dma.done [#allocation3], 16
        $region48: #{_lambda_.19} parent=43 // pred_fallthru
          _
        %p233 = scmp.lt.s32.totalorder %s18, 1
        %s234 = scalar_select %p233, %s18, 1
        %s235 = smul.addr %s234, 2
        %s236 = smul.addr %s235, 4
        %s237 = scalar_lea.vmem %s0, %s236
        %p238 = pneg %p39
        %p239 = pneg %p36
        %p240 = pneg %p60
        %p241 = pneg %p57
        %p242 = pneg %p81
        %p243 = pneg %p78
        %p244 = pneg %p102
        %p245 = pneg %p99
        %p246 = pneg %p123
        %p247 = pneg %p120
        %p248 = pneg %p144
        %p249 = pneg %p141
        %p250 = pneg %p170
        %p251 = pneg %p167
        %p252 = scmp.lt.s32.totalorder %s18, 1
        %s253 = scalar_select %p252, %s18, 1
        %s254 = smul.addr %s253, 2
        %s255 = smul.addr %s254, 4
        %s256 = scalar_lea.vmem %s6, %s255
        %p257 = scmp.lt.s32.totalorder %s18, 1
        %s258 = scalar_select %p257, %s18, 1
        %s259 = smul.addr %s258, 2
        %s260 = smul.addr %s259, 4
        %s261 = scalar_lea.vmem %s0, %s260
        %p262 = scmp.lt.s32.totalorder %s18, 1
        %s263 = scalar_select %p262, %s18, 1
        %s264 = smul.addr %s263, 2
        %s265 = smul.addr %s264, 4
        %s266 = scalar_lea.vmem %s6, %s265
        %v268 = vld [vmem:[%s261] sm:$0xf]
        %v269 = vld [vmem:[%s261 + $0x4] sm:$0xf]
        %v270 = vunpack.c.l.bf16 %v268
        %v271 = vunpack.c.l.bf16 %v269
        %vm272 = vcmask 523264
        %v273 = vsel %vm272, %v270, 0.0
        %v274 = vsel %vm272, %v271, 0.0
        %v275 = vadd.f32 %v273, %v274
        %v276 = vrot.slane %v275, 4
        %v277 = vadd.f32 %v275, %v276
        %v278 = vrot.slane %v277, 2
        %v279 = vadd.f32 %v277, %v278
        %v280 = vrot.slane %v279, 1
        %v281 = vadd.f32 %v279, %v280
        %v282 = vld [vmem:[%s3] sm:$0xff]
        %v283 = vld [vmem:[%s3 + $0x8] sm:$0xff]
        %v284 = vld [vmem:[%s3 + $0x10] sm:$0xff]
        %v285 = vld [vmem:[%s3 + $0x18] sm:$0xff]
        %v286 = vld [vmem:[%s3 + $0x20] sm:$0xff]
        %v287 = vld [vmem:[%s3 + $0x28] sm:$0xff]
        %v288 = vld [vmem:[%s3 + $0x30] sm:$0xff]
        %v289 = vld [vmem:[%s3 + $0x38] sm:$0xff]
        %v291 = vsel %vm272, %v281, 0
        %293 = vmatpush.msra.mxu0 0.0
        %294 = vmatpush.msra.mxu0 0.0
        %295 = vmatpush.msra.mxu0 0.0
        %296 = vmatpush.msra.mxu0 0.0
        %297 = vmatpush.msra.mxu0 0.0
        %298 = vmatpush.msra.mxu0 0.0
        %299 = vmatpush.msra.mxu0 0.0
        %300 = vmatpush.msra.mxu0 0.0
        %301 = vmatpush.msra.mxu0 %v289
        %302 = vmatpush.msra.mxu0 %v288
        %303 = vmatpush.msra.mxu0 %v287
        %304 = vmatpush.msra.mxu0 %v286
        %305 = vmatpush.msra.mxu0 %v285
        %306 = vmatpush.msra.mxu0 %v284
        %307 = vmatpush.msra.mxu0 %v283
        %308 = vmatpush.msra.mxu0 %v282
        %309 = vmatmul.f32.gmra.mxu0 %v291
        %v310 = vpop.f32.mrf.mxu0
        %v311 = vadd.f32 0.0, %v310
        %312 = vdwg.mxu0
        %v313 = vmul.f32 %v311, 0.00390625
        %v314 = vperm.slane %v313, 0
        %v315 = vsub.f32 %v270, %v314
        %v316 = vsub.f32 %v271, %v314
        %v317 = vmul.f32 %v315, %v315
        %v318 = vmul.f32 %v316, %v316
        %v319 = vsel %vm272, %v317, 0.0
        %v320 = vsel %vm272, %v318, 0.0
        %v321 = vadd.f32 %v319, %v320
        %v322 = vrot.slane %v321, 4
        %v323 = vadd.f32 %v321, %v322
        %v324 = vrot.slane %v323, 2
        %v325 = vadd.f32 %v323, %v324
        %v326 = vrot.slane %v325, 1
        %v327 = vadd.f32 %v325, %v326
        %v329 = vsel %vm272, %v327, 0
        %331 = vmatpush.msra.mxu0 0.0
        %332 = vmatpush.msra.mxu0 0.0
        %333 = vmatpush.msra.mxu0 0.0
        %334 = vmatpush.msra.mxu0 0.0
        %335 = vmatpush.msra.mxu0 0.0
        %336 = vmatpush.msra.mxu0 0.0
        %337 = vmatpush.msra.mxu0 0.0
        %338 = vmatpush.msra.mxu0 0.0
        %339 = vmatpush.msra.mxu0 %v289
        %340 = vmatpush.msra.mxu0 %v288
        %341 = vmatpush.msra.mxu0 %v287
        %342 = vmatpush.msra.mxu0 %v286
        %343 = vmatpush.msra.mxu0 %v285
        %344 = vmatpush.msra.mxu0 %v284
        %345 = vmatpush.msra.mxu0 %v283
        %346 = vmatpush.msra.mxu0 %v282
        %347 = vmatmul.f32.gmra.mxu0 %v329
        %v348 = vpop.f32.mrf.mxu0
        %v349 = vadd.f32 0.0, %v348
        %350 = vdwg.mxu0
        %v351 = vmul.f32 %v349, 0.00390625
        %v352 = vadd.f32 %v351, 1e-05
        %v353 = vrsqrt.pop %v352
        %v354 = vmul.f32 %v353, %v352
        %v355 = vmul.f32 %v354, %v353
        %v356 = vmul.f32 0.5, %v355
        %v357 = vsub.f32 1.5, %v356
        %v358 = vmul.f32 %v353, %v357
        %vm359 = vweird.f32 %v352
        %vm360 = vweird.f32 %v353
        %vm361 = vmor %vm359, %vm360
        %v362 = vsel %vm361, %v353, %v358
        %v363 = vperm.slane %v362, 0
        %v364 = vmul.f32 %v315, %v363
        %v365 = vmul.f32 %v316, %v363
        %v366 = vld [vmem:[%s1] sm:$0x1]
        %v368 = vperm.slane %v366, 0
        %v370 = vmul.f32 %v364, %v368
        %v371 = vmul.f32 %v365, %v368
        %v372 = vld [vmem:[%s2] sm:$0x1]
        %v374 = vperm.slane %v372, 0
        %v376 = vadd.f32 %v370, %v374
        %v377 = vadd.f32 %v371, %v374
        %v378 = vmax.f32 %v376, 0.0
        %v379 = vmax.f32 %v377, 0.0
        %v380 = vpack.c.bf16 %v378, %v378
        %v381 = vpack.c.bf16 %v379, %v379
        %v384 = vunpack.c.l.b16 %v380
        %v385 = vunpack.c.l.b16 %v381
        %v386 = vpack.c.b16 %v385, %v384
        %v388 = vshrl.u32 %v386, 16
        %v390 = vrot.slane %v388, 7
        %v391 = vshll.u32 %v386, 16
        %v393 = vor.u32 %v390, %v391
        %vm396 = vcmask 1040384
        %vm397 = vsmask.f32 256
        %vm398 = vmand %vm396, %vm397
        %v399 = vsel %vm398, 0, %v393
        %v400 = vsel %vm398, %v390, 0
        %vm401 = vsmask.f32 7424
        %v403 = vshrl.u32 %v399, 16
        %v405 = vshll.u32 %v399, 16
        %v407 = vrot.slane %v405, 1
        %v408 = vor.u32 %v403, %v407
        %v410 = vshll.u32 %v400, 16
        %v412 = vrot.slane %v410, 1
        %v413 = vsel %vm401, %v408, %v412
        %414 = vrot.lane.b32.xlu0 %v413, 64
        %v415 = vpop.permute.xlu0 %414
        %vm418 = vcmask 1046528
        %v419 = vrot.slane %v399, 1
        %v420 = vrot.slane %v400, 1
        %v421 = vsel %vm418, %v419, %v420
        %v423 = vsel %vm272, %v399, %v415
        %v425 = vld [vmem:[%s4] sm:$0xf]
        %v426 = vld [vmem:[%s4 + $0x4] sm:$0xf]
        %v427 = vld [vmem:[%s4 + $0x8] sm:$0xf]
        %v428 = vld [vmem:[%s4 + $0xc] sm:$0xf]
        %v429 = vld [vmem:[%s4 + $0x10] sm:$0xf]
        %v430 = vld [vmem:[%s4 + $0x14] sm:$0xf]
        %v431 = vld [vmem:[%s4 + $0x18] sm:$0xf]
        %v432 = vld [vmem:[%s4 + $0x1c] sm:$0xf]
        %v433 = vld [vmem:[%s4 + $0x20] sm:$0xf]
        %v434 = vld [vmem:[%s4 + $0x24] sm:$0xf]
        %v435 = vld [vmem:[%s4 + $0x28] sm:$0xf]
        %v436 = vld [vmem:[%s4 + $0x2c] sm:$0xf]
        %v437 = vld [vmem:[%s4 + $0x30] sm:$0xf]
        %v438 = vld [vmem:[%s4 + $0x34] sm:$0xf]
        %v439 = vld [vmem:[%s4 + $0x38] sm:$0xf]
        %v440 = vld [vmem:[%s4 + $0x3c] sm:$0xf]
        %v441 = vld [vmem:[%s4 + $0x40] sm:$0xf]
        %v442 = vld [vmem:[%s4 + $0x44] sm:$0xf]
        %v443 = vld [vmem:[%s4 + $0x48] sm:$0xf]
        %v444 = vld [vmem:[%s4 + $0x4c] sm:$0xf]
        %v445 = vld [vmem:[%s4 + $0x50] sm:$0xf]
        %v446 = vld [vmem:[%s4 + $0x54] sm:$0xf]
        %v447 = vld [vmem:[%s4 + $0x58] sm:$0xf]
        %v448 = vld [vmem:[%s4 + $0x5c] sm:$0xf]
        %v449 = vld [vmem:[#allocation2] sm:$0x1]
        %v451 = vperm.slane %v449, 0
        %v477 = vunpack.c.l.b16 %v425
        %v478 = vunpack.c.l.b16 %v426
        %v479 = vunpack.c.l.b16 %v427
        %v480 = vunpack.c.l.b16 %v428
        %v481 = vunpack.c.l.b16 %v429
        %v482 = vunpack.c.l.b16 %v430
        %v483 = vunpack.c.l.b16 %v431
        %v484 = vunpack.c.l.b16 %v432
        %v485 = vunpack.c.l.b16 %v433
        %v486 = vunpack.c.l.b16 %v434
        %v487 = vunpack.c.l.b16 %v435
        %v488 = vunpack.c.l.b16 %v436
        %v489 = vunpack.c.l.b16 %v437
        %v490 = vunpack.c.l.b16 %v438
        %v491 = vunpack.c.l.b16 %v439
        %v492 = vunpack.c.l.b16 %v440
        %v493 = vunpack.c.l.b16 %v441
        %v494 = vunpack.c.l.b16 %v442
        %v495 = vunpack.c.l.b16 %v443
        %v496 = vunpack.c.l.b16 %v444
        %v497 = vunpack.c.l.b16 %v445
        %v498 = vunpack.c.l.b16 %v446
        %v499 = vunpack.c.l.b16 %v447
        %v500 = vunpack.c.l.b16 %v448
        %v501 = vpack.c.b16 %v478, %v477
        %v502 = vpack.c.b16 %v480, %v479
        %v503 = vpack.c.b16 %v482, %v481
        %v504 = vpack.c.b16 %v484, %v483
        %v505 = vpack.c.b16 %v486, %v485
        %v506 = vpack.c.b16 %v488, %v487
        %v507 = vpack.c.b16 %v490, %v489
        %v508 = vpack.c.b16 %v492, %v491
        %v509 = vpack.c.b16 %v494, %v493
        %v510 = vpack.c.b16 %v496, %v495
        %v511 = vpack.c.b16 %v498, %v497
        %v512 = vpack.c.b16 %v500, %v499
        %v526 = vsel %vm272, %v421, 0
        %528 = vmatpush.bf16.msra.mxu0 %v508
        %529 = vmatpush.bf16.msra.mxu0 %v507
        %530 = vmatpush.bf16.msra.mxu0 %v506
        %531 = vmatpush.bf16.msra.mxu0 %v505
        %532 = vmatpush.bf16.msra.mxu0 %v504
        %533 = vmatpush.bf16.msra.mxu0 %v503
        %534 = vmatpush.bf16.msra.mxu0 %v502
        %535 = vmatpush.bf16.msra.mxu0 %v501
        %536 = vmatmul.bf16.gmra.mxu0 %v423
        %v537 = vpop.f32.mrf.mxu0
        %v538 = vadd.f32 %v451, %v537
        %v539 = vpop.f32.mrf.mxu0
        %v540 = vadd.f32 %v451, %v539
        %541 = vdwg.mxu0
        %542 = vmatpush.bf16.msra.mxu0 0
        %543 = vmatpush.bf16.msra.mxu0 0
        %544 = vmatpush.bf16.msra.mxu0 0
        %545 = vmatpush.bf16.msra.mxu0 0
        %546 = vmatpush.bf16.msra.mxu0 %v512
        %547 = vmatpush.bf16.msra.mxu0 %v511
        %548 = vmatpush.bf16.msra.mxu0 %v510
        %549 = vmatpush.bf16.msra.mxu0 %v509
        %550 = vmatmul.bf16.gmra.mxu0 %v526
        %v551 = vpop.f32.mrf.mxu0
        %v552 = vadd.f32 %v538, %v551
        %v553 = vpop.f32.mrf.mxu0
        %v554 = vadd.f32 %v540, %v553
        %555 = vdwg.mxu0
        %v556 = vpack.c.bf16 %v552, %v552
        %v557 = vpack.c.bf16 %v554, %v554
        %vm558 = vcmask 519168
        %559 = vst.msk [vmem:[%s266] sm:$0xf] %vm558, %v556
        %560 = vst.msk [vmem:[%s266 + $0x4] sm:$0xf] %vm558, %v557
        %p561 = scmp.lt.s32.totalorder %s18, 1
        %s562 = scalar_select %p561, %s18, 1
        %s563 = smul.addr %s562, 2
        %s564 = smul.addr %s563, 4
        %s565 = scalar_lea.vmem %s6, %s564
        // Predicated region
        $region49: #{_lambda_.19} parent=43 // pred_check
          %p566 = pneg %p167
        $region50: #{_lambda_.19} parent=43 // pred_check_branch
          %568 = sbr.rel (%p566) target = $region52
        $region51: #{_lambda_.19} parent=43 // pred_region
          _
        $region52: #{_lambda_.19} parent=43 // pred_fallthru
          _
      $region44: #{_lambda_.19} parent=5 // pred_fallthru
        _
      %p569 = scmp.le.s32.totalorder 2, %s13
      // Predicated region
      $region53: #{_lambda_.19} parent=5 // pred_check
        %p570 = pneg %p569
      $region54: #{_lambda_.19} parent=5 // pred_check_branch
        %572 = sbr.rel (%p570) target = $region56
      $region55: #{_lambda_.19} parent=5 // pred_region
        %s573 = ssub.s32 %s13, 2
        // Predicated region
        $region57: #{_lambda_.19} parent=55 // pred_check
          %p574 = pneg %p173
        $region58: #{_lambda_.19} parent=55 // pred_check_branch
          %576 = sbr.rel (%p574) target = $region60
        $region59: #{_lambda_.19} parent=55 // pred_region
          %p577 = scmp.lt.s32.totalorder %s19, 1
          %s578 = scalar_select %p577, %s19, 1
          %s579 = smul.addr %s578, 2
          %s580 = smul.addr %s579, 4
          %s581 = scalar_lea.vmem %s6, %s580
        $region60: #{_lambda_.19} parent=55 // pred_fallthru
          _
      $region56: #{_lambda_.19} parent=5 // pred_fallthru
        _
    $region6: #{_lambda_.19} parent=1 // loop_footer
      %s17 = sadd.s32 1, %s13
    $region7: #{_lambda_.19} parent=1 // loop_footer_branch
      %12 = sbr.rel target = $region3
    $region8: #{_lambda_.19} parent=1 // loop_exit
      _
    %582 = vsyncpa [#allocation3], 1
    %s583 = scalar_lea.sflag [#allocation3], 1
    %584 = vsyncpa %s583, 1

// kernel: _lambda_.20
$region0: #{_lambda_.20}
  #allocation0 [shape = 'u32[]', space=smem, size = 0x4, offset = 0x4, fixed_abs, tag = 'smem constant byte address 0x4 - core index']
  #allocation1 [shape = 'u32[72,128]{1,0:T(1,128)}', space=vmem, size = 0x9000, scoped, tag = 'internal scratch']
  %s0 = inlined_call_operand.vmem [shape: bf16[2,16,64], index: 0, kind: input, shape index: {}]
  %s1 = inlined_call_operand.vmem [shape: f32[1,64], index: 1, kind: input, shape index: {}]
  %s2 = inlined_call_operand.vmem [shape: f32[1,64], index: 2, kind: input, shape index: {}]
  %s3 = inlined_call_operand.vmem [shape: f32[64,64], index: 3, kind: input, shape index: {}]
  %s4 = inlined_call_operand.vmem [shape: bf16[192,64], index: 4, kind: input, shape index: {}]
  %s5 = inlined_call_operand.hbm [shape: f32[1,64], index: 5, kind: input, shape index: {}]
  %s6 = inlined_call_operand.vmem [shape: bf16[2,16,64], index: 6, kind: input, shape index: {}]
  %s7 = inlined_call_operand.vmem [shape: bf16[2,16,64], index: 7, kind: output, shape index: {}]
  %s8 = sld [smem:[#allocation0]]
  $region65: #{_lambda_.20} parent=0
    _
  %s10 = ssub.s32 1, %s8
  %s11 = scalar_select 0, %s10, %s8
  $region1: #{_lambda_.20} parent=0
    #allocation2 [shape = 'u8[512]{0}', space=vmem, size = 0x400, scoped, tag = 'input window, operand 5, single buffered']
    #allocation3 [shape = 's32[2]{0}', space=sflag, size = 0x8, scoped, tag = 'scoped memory for _lambda_.20']
    %12 = vsyncpa [#allocation3], 0
    loop: start=0, step=1, limit=4
    $region2: #{_lambda_.20} parent=1 // loop_pre_header
      _
    $region3: #{_lambda_.20} parent=1 // loop_header
      %s14 = sphi 0, %s18
      %p15 = scmp.ge.s32.totalorder %s14, 4
      %s24 = sphi 0, %s26
      %s27 = sphi 0, %s24
      %s28 = sphi 0, %s27
      %s44 = sphi 0, %s28
      %s48 = sphi 0, %s48
      %s50 = sphi 0, %s48
      %s51 = sphi 0, %s50
      %s65 = sphi 0, %s51
      %s69 = sphi 0, %s69
      %s71 = sphi 0, %s69
      %s72 = sphi 0, %s71
      %s86 = sphi 0, %s72
      %s90 = sphi 0, %s90
      %s92 = sphi 0, %s90
      %s93 = sphi 0, %s92
      %s107 = sphi 0, %s93
      %s111 = sphi 0, %s111
      %s113 = sphi 0, %s111
      %s114 = sphi 0, %s113
      %s128 = sphi 0, %s114
      %s132 = sphi 0, %s132
      %s134 = sphi 0, %s132
      %s135 = sphi 0, %s134
      %s149 = sphi 0, %s135
      %s155 = sphi 0, %s157
      %s158 = sphi 0, %s155
      %s159 = sphi 0, %s158
      %s175 = sphi 0, %s159
      %s181 = sphi 0, %s183
      %s184 = sphi 0, %s181
      %s185 = sphi 0, %s184
      %s201 = sphi 0, %s185
    $region4: #{_lambda_.20} parent=1 // loop_header_branch
      %17 = sbr.rel (%p15) target = $region8
    $region5: #{_lambda_.20} parent=1 // loop_body
      %s19 = ssub.s32 %s14, 1
      %s20 = ssub.s32 %s14, 2
      %s21 = sadd.s32 %s14, 1
      %s22 = ssub.s32 %s14, %s21
      %p23 = scmp.eq.s32.totalorder %s22, 0
      %s25 = sadd.s32 %s24, 1
      %s26 = scalar_select %p23, %s24, %s25
      %p29 = pneg %p23
      %p30 = scmp.eq.s32.totalorder %s14, 1
      %p31 = por %p29, %p30
      %p32 = scmp.ne.s32.totalorder %s24, %s27
      %p33 = scmp.eq.s32.totalorder %s14, 0
      %p34 = por %p32, %p33
      %p35 = scmp.ne.s32.totalorder %s24, %s27
      %p36 = scmp.eq.s32.totalorder %s19, 1
      %p37 = por %p35, %p36
      %p38 = scmp.ne.s32.totalorder %s27, %s28
      %p39 = scmp.eq.s32.totalorder %s19, 0
      %p40 = por %p38, %p39
      %p41 = scmp.ne.s32.totalorder %s27, %s28
      %p42 = scmp.eq.s32.totalorder %s20, 1
      %p43 = por %p41, %p42
      %p45 = scmp.ne.s32.totalorder %s28, %s44
      %p46 = scmp.eq.s32.totalorder %s20, 0
      %p47 = por %p45, %p46
      %s49 = sadd.s32 %s48, 1
      %p52 = scmp.eq.s32.totalorder %s14, 1
      %p53 = scmp.ne.s32.totalorder %s48, %s50
      %p54 = scmp.eq.s32.totalorder %s14, 0
      %p55 = por %p53, %p54
      %p56 = scmp.ne.s32.totalorder %s48, %s50
      %p57 = scmp.eq.s32.totalorder %s19, 1
      %p58 = por %p56, %p57
      %p59 = scmp.ne.s32.totalorder %s50, %s51
      %p60 = scmp.eq.s32.totalorder %s19, 0
      %p61 = por %p59, %p60
      %p62 = scmp.ne.s32.totalorder %s50, %s51
      %p63 = scmp.eq.s32.totalorder %s20, 1
      %p64 = por %p62, %p63
      %p66 = scmp.ne.s32.totalorder %s51, %s65
      %p67 = scmp.eq.s32.totalorder %s20, 0
      %p68 = por %p66, %p67
      %s70 = sadd.s32 %s69, 1
      %p73 = scmp.eq.s32.totalorder %s14, 1
      %p74 = scmp.ne.s32.totalorder %s69, %s71
      %p75 = scmp.eq.s32.totalorder %s14, 0
      %p76 = por %p74, %p75
      %p77 = scmp.ne.s32.totalorder %s69, %s71
      %p78 = scmp.eq.s32.totalorder %s19, 1
      %p79 = por %p77, %p78
      %p80 = scmp.ne.s32.totalorder %s71, %s72
      %p81 = scmp.eq.s32.totalorder %s19, 0
      %p82 = por %p80, %p81
      %p83 = scmp.ne.s32.totalorder %s71, %s72
      %p84 = scmp.eq.s32.totalorder %s20, 1
      %p85 = por %p83, %p84
      %p87 = scmp.ne.s32.totalorder %s72, %s86
      %p88 = scmp.eq.s32.totalorder %s20, 0
      %p89 = por %p87, %p88
      %s91 = sadd.s32 %s90, 1
      %p94 = scmp.eq.s32.totalorder %s14, 1
      %p95 = scmp.ne.s32.totalorder %s90, %s92
      %p96 = scmp.eq.s32.totalorder %s14, 0
      %p97 = por %p95, %p96
      %p98 = scmp.ne.s32.totalorder %s90, %s92
      %p99 = scmp.eq.s32.totalorder %s19, 1
      %p100 = por %p98, %p99
      %p101 = scmp.ne.s32.totalorder %s92, %s93
      %p102 = scmp.eq.s32.totalorder %s19, 0
      %p103 = por %p101, %p102
      %p104 = scmp.ne.s32.totalorder %s92, %s93
      %p105 = scmp.eq.s32.totalorder %s20, 1
      %p106 = por %p104, %p105
      %p108 = scmp.ne.s32.totalorder %s93, %s107
      %p109 = scmp.eq.s32.totalorder %s20, 0
      %p110 = por %p108, %p109
      %s112 = sadd.s32 %s111, 1
      %p115 = scmp.eq.s32.totalorder %s14, 1
      %p116 = scmp.ne.s32.totalorder %s111, %s113
      %p117 = scmp.eq.s32.totalorder %s14, 0
      %p118 = por %p116, %p117
      %p119 = scmp.ne.s32.totalorder %s111, %s113
      %p120 = scmp.eq.s32.totalorder %s19, 1
      %p121 = por %p119, %p120
      %p122 = scmp.ne.s32.totalorder %s113, %s114
      %p123 = scmp.eq.s32.totalorder %s19, 0
      %p124 = por %p122, %p123
      %p125 = scmp.ne.s32.totalorder %s113, %s114
      %p126 = scmp.eq.s32.totalorder %s20, 1
      %p127 = por %p125, %p126
      %p129 = scmp.ne.s32.totalorder %s114, %s128
      %p130 = scmp.eq.s32.totalorder %s20, 0
      %p131 = por %p129, %p130
      %s133 = sadd.s32 %s132, 1
      %p136 = scmp.eq.s32.totalorder %s14, 1
      %p137 = scmp.ne.s32.totalorder %s132, %s134
      %p138 = scmp.eq.s32.totalorder %s14, 0
      %p139 = por %p137, %p138
      %p140 = scmp.ne.s32.totalorder %s132, %s134
      %p141 = scmp.eq.s32.totalorder %s19, 1
      %p142 = por %p140, %p141
      %p143 = scmp.ne.s32.totalorder %s134, %s135
      %p144 = scmp.eq.s32.totalorder %s19, 0
      %p145 = por %p143, %p144
      %p146 = scmp.ne.s32.totalorder %s134, %s135
      %p147 = scmp.eq.s32.totalorder %s20, 1
      %p148 = por %p146, %p147
      %p150 = scmp.ne.s32.totalorder %s135, %s149
      %p151 = scmp.eq.s32.totalorder %s20, 0
      %p152 = por %p150, %p151
      %s153 = ssub.s32 %s14, %s21
      %p154 = scmp.eq.s32.totalorder %s153, 0
      %s156 = sadd.s32 %s155, 1
      %s157 = scalar_select %p154, %s155, %s156
      %p160 = pneg %p154
      %p161 = scmp.eq.s32.totalorder %s14, 1
      %p162 = por %p160, %p161
      %p163 = scmp.ne.s32.totalorder %s155, %s158
      %p164 = scmp.eq.s32.totalorder %s14, 0
      %p165 = por %p163, %p164
      %p166 = scmp.ne.s32.totalorder %s155, %s158
      %p167 = scmp.eq.s32.totalorder %s19, 1
      %p168 = por %p166, %p167
      %p169 = scmp.ne.s32.totalorder %s158, %s159
      %p170 = scmp.eq.s32.totalorder %s19, 0
      %p171 = por %p169, %p170
      %p172 = scmp.ne.s32.totalorder %s158, %s159
      %p173 = scmp.eq.s32.totalorder %s20, 1
      %p174 = por %p172, %p173
      %p176 = scmp.ne.s32.totalorder %s159, %s175
      %p177 = scmp.eq.s32.totalorder %s20, 0
      %p178 = por %p176, %p177
      %s179 = ssub.s32 %s14, %s21
      %p180 = scmp.eq.s32.totalorder %s179, 0
      %s182 = sadd.s32 %s181, 1
      %s183 = scalar_select %p180, %s181, %s182
      %p186 = pneg %p180
      %p187 = scmp.eq.s32.totalorder %s14, 1
      %p188 = por %p186, %p187
      %p189 = scmp.ne.s32.totalorder %s181, %s184
      %p190 = scmp.eq.s32.totalorder %s14, 0
      %p191 = por %p189, %p190
      %p192 = scmp.ne.s32.totalorder %s181, %s184
      %p193 = scmp.eq.s32.totalorder %s19, 1
      %p194 = por %p192, %p193
      %p195 = scmp.ne.s32.totalorder %s184, %s185
      %p196 = scmp.eq.s32.totalorder %s19, 0
      %p197 = por %p195, %p196
      %p198 = scmp.ne.s32.totalorder %s184, %s185
      %p199 = scmp.eq.s32.totalorder %s20, 1
      %p200 = por %p198, %p199
      %p202 = scmp.ne.s32.totalorder %s185, %s201
      %p203 = scmp.eq.s32.totalorder %s20, 0
      %p204 = por %p202, %p203
      %p205 = scmp.le.s32.totalorder 1, %s14
      %p206 = scmp.lt.s32.totalorder %s14, 3
      %p207 = pnand %p205, %p206
      %p208 = pneg %p207
      // Predicated region
      $region9: #{_lambda_.20} parent=5 // pred_check
        _
      $region10: #{_lambda_.20} parent=5 // pred_check_branch
        %210 = sbr.rel (%p207) target = $region12
      $region11: #{_lambda_.20} parent=5 // pred_region
        %s211 = ssub.s32 %s14, 1
        // Predicated region
        $region13: #{_lambda_.20} parent=11 // pred_check
          %p212 = pneg %p61
        $region14: #{_lambda_.20} parent=11 // pred_check_branch
          %214 = sbr.rel (%p212) target = $region16
        $region15: #{_lambda_.20} parent=11 // pred_region
          _
        $region16: #{_lambda_.20} parent=11 // pred_fallthru
          _
        // Predicated region
        $region17: #{_lambda_.20} parent=11 // pred_check
          %p215 = pneg %p82
        $region18: #{_lambda_.20} parent=11 // pred_check_branch
          %217 = sbr.rel (%p215) target = $region20
        $region19: #{_lambda_.20} parent=11 // pred_region
          _
        $region20: #{_lambda_.20} parent=11 // pred_fallthru
          _
        // Predicated region
        $region21: #{_lambda_.20} parent=11 // pred_check
          %p218 = pneg %p103
        $region22: #{_lambda_.20} parent=11 // pred_check_branch
          %220 = sbr.rel (%p218) target = $region24
        $region23: #{_lambda_.20} parent=11 // pred_region
          _
        $region24: #{_lambda_.20} parent=11 // pred_fallthru
          _
        // Predicated region
        $region25: #{_lambda_.20} parent=11 // pred_check
          %p221 = pneg %p124
        $region26: #{_lambda_.20} parent=11 // pred_check_branch
          %223 = sbr.rel (%p221) target = $region28
        $region27: #{_lambda_.20} parent=11 // pred_region
          _
        $region28: #{_lambda_.20} parent=11 // pred_fallthru
          _
        // Predicated region
        $region29: #{_lambda_.20} parent=11 // pred_check
          %p224 = pneg %p145
        $region30: #{_lambda_.20} parent=11 // pred_check_branch
          %226 = sbr.rel (%p224) target = $region32
        $region31: #{_lambda_.20} parent=11 // pred_region
          %228 = vsyncadd [#allocation3], 0
          %s230 = sshll.u32 %s5, 4
          %s231 = int_to_ptr.hbm [resolvable:$true] %s230
          %s232 = sshll.u32 [#allocation2], 4
          %s233 = int_to_ptr.vmem [resolvable:$true] %s232
          %235 = dma.hbm_to_vmem [thread:$0]  %s231, 16, %s233, [#allocation3]
        $region32: #{_lambda_.20} parent=11 // pred_fallthru
          _
      $region12: #{_lambda_.20} parent=5 // pred_fallthru
        _
      %p236 = scmp.lt.s32.totalorder %s14, 2
      // Predicated region
      $region33: #{_lambda_.20} parent=5 // pred_check
        %p237 = pneg %p236
      $region34: #{_lambda_.20} parent=5 // pred_check_branch
        %239 = sbr.rel (%p237) target = $region36
      $region35: #{_lambda_.20} parent=5 // pred_region
        // Predicated region
        $region37: #{_lambda_.20} parent=35 // pred_check
          %p240 = pneg %p34
        $region38: #{_lambda_.20} parent=35 // pred_check_branch
          %242 = sbr.rel (%p240) target = $region40
        $region39: #{_lambda_.20} parent=35 // pred_region
          %p243 = scmp.lt.s32.totalorder %s14, 1
          %s244 = scalar_select %p243, %s14, 1
          %s245 = smul.addr %s244, 2
          %s246 = smul.addr %s245, 4
          %s247 = scalar_lea.vmem %s0, %s246
        $region40: #{_lambda_.20} parent=35 // pred_fallthru
          _
        // Predicated region
        $region41: #{_lambda_.20} parent=35 // pred_check
          %p248 = pneg %p165
        $region42: #{_lambda_.20} parent=35 // pred_check_branch
          %250 = sbr.rel (%p248) target = $region44
        $region43: #{_lambda_.20} parent=35 // pred_region
          %p251 = scmp.lt.s32.totalorder %s14, 1
          %s252 = scalar_select %p251, %s14, 1
          %s253 = smul.addr %s252, 2
          %s254 = smul.addr %s253, 4
          %s255 = scalar_lea.vmem %s6, %s254
        $region44: #{_lambda_.20} parent=35 // pred_fallthru
          _
      $region36: #{_lambda_.20} parent=5 // pred_fallthru
        _
      %p256 = scmp.le.s32.totalorder 1, %s14
      %p257 = scmp.lt.s32.totalorder %s14, 3
      %p258 = pnand %p256, %p257
      %p259 = pneg %p258
      // Predicated region
      $region45: #{_lambda_.20} parent=5 // pred_check
        _
      $region46: #{_lambda_.20} parent=5 // pred_check_branch
        %261 = sbr.rel (%p258) target = $region48
      $region47: #{_lambda_.20} parent=5 // pred_region
        %s262 = ssub.s32 %s14, 1
        // Predicated region
        $region49: #{_lambda_.20} parent=47 // pred_check
          %p263 = pneg %p145
        $region50: #{_lambda_.20} parent=47 // pred_check_branch
          %265 = sbr.rel (%p263) target = $region52
        $region51: #{_lambda_.20} parent=47 // pred_region
          %267 = dma.done [#allocation3], 16
        $region52: #{_lambda_.20} parent=47 // pred_fallthru
          _
        %p268 = scmp.lt.s32.totalorder %s19, 1
        %s269 = scalar_select %p268, %s19, 1
        %s270 = smul.addr %s269, 2
        %s271 = smul.addr %s270, 4
        %s272 = scalar_lea.vmem %s0, %s271
        %p273 = pneg %p40
        %p274 = pneg %p37
        %p275 = pneg %p61
        %p276 = pneg %p58
        %p277 = pneg %p82
        %p278 = pneg %p79
        %p279 = pneg %p103
        %p280 = pneg %p100
        %p281 = pneg %p124
        %p282 = pneg %p121
        %p283 = pneg %p145
        %p284 = pneg %p142
        %p285 = scmp.lt.s32.totalorder %s19, 1
        %s286 = scalar_select %p285, %s19, 1
        %s287 = smul.addr %s286, 2
        %s288 = smul.addr %s287, 4
        %s289 = scalar_lea.vmem %s6, %s288
        %p290 = pneg %p171
        %p291 = pneg %p168
        %p292 = pneg %p197
        %p293 = pneg %p194
        %p294 = scmp.lt.s32.totalorder %s19, 1
        %s295 = scalar_select %p294, %s19, 1
        %s296 = smul.addr %s295, 2
        %s297 = smul.addr %s296, 4
        %s298 = scalar_lea.vmem %s7, %s297
        %p299 = scmp.lt.s32.totalorder %s19, 1
        %s300 = scalar_select %p299, %s19, 1
        %s301 = smul.addr %s300, 2
        %s302 = smul.addr %s301, 4
        %s303 = scalar_lea.vmem %s0, %s302
        %p304 = scmp.lt.s32.totalorder %s19, 1
        %s305 = scalar_select %p304, %s19, 1
        %s306 = smul.addr %s305, 2
        %s307 = smul.addr %s306, 4
        %s308 = scalar_lea.vmem %s6, %s307
        %p309 = scmp.lt.s32.totalorder %s19, 1
        %s310 = scalar_select %p309, %s19, 1
        %s311 = smul.addr %s310, 2
        %s312 = smul.addr %s311, 4
        %s313 = scalar_lea.vmem %s7, %s312
        %v315 = vld [vmem:[%s303] sm:$0xf]
        %v316 = vld [vmem:[%s303 + $0x4] sm:$0xf]
        %v317 = vunpack.c.l.bf16 %v315
        %v318 = vunpack.c.l.bf16 %v316
        %vm319 = vcmask 523264
        %v320 = vsel %vm319, %v317, 0.0
        %v321 = vsel %vm319, %v318, 0.0
        %v322 = vadd.f32 %v320, %v321
        %v323 = vrot.slane %v322, 4
        %v324 = vadd.f32 %v322, %v323
        %v325 = vrot.slane %v324, 2
        %v326 = vadd.f32 %v324, %v325
        %v327 = vrot.slane %v326, 1
        %v328 = vadd.f32 %v326, %v327
        %v329 = vld [vmem:[%s3] sm:$0xff]
        %v330 = vld [vmem:[%s3 + $0x8] sm:$0xff]
        %v331 = vld [vmem:[%s3 + $0x10] sm:$0xff]
        %v332 = vld [vmem:[%s3 + $0x18] sm:$0xff]
        %v333 = vld [vmem:[%s3 + $0x20] sm:$0xff]
        %v334 = vld [vmem:[%s3 + $0x28] sm:$0xff]
        %v335 = vld [vmem:[%s3 + $0x30] sm:$0xff]
        %v336 = vld [vmem:[%s3 + $0x38] sm:$0xff]
        %v338 = vsel %vm319, %v328, 0
        %340 = vmatpush.msra.mxu0 0.0
        %341 = vmatpush.msra.mxu0 0.0
        %342 = vmatpush.msra.mxu0 0.0
        %343 = vmatpush.msra.mxu0 0.0
        %344 = vmatpush.msra.mxu0 0.0
        %345 = vmatpush.msra.mxu0 0.0
        %346 = vmatpush.msra.mxu0 0.0
        %347 = vmatpush.msra.mxu0 0.0
        %348 = vmatpush.msra.mxu0 %v336
        %349 = vmatpush.msra.mxu0 %v335
        %350 = vmatpush.msra.mxu0 %v334
        %351 = vmatpush.msra.mxu0 %v333
        %352 = vmatpush.msra.mxu0 %v332
        %353 = vmatpush.msra.mxu0 %v331
        %354 = vmatpush.msra.mxu0 %v330
        %355 = vmatpush.msra.mxu0 %v329
        %356 = vmatmul.f32.gmra.mxu0 %v338
        %v357 = vpop.f32.mrf.mxu0
        %v358 = vadd.f32 0.0, %v357
        %359 = vdwg.mxu0
        %v360 = vmul.f32 %v358, 0.00390625
        %v361 = vperm.slane %v360, 0
        %v362 = vsub.f32 %v317, %v361
        %v363 = vsub.f32 %v318, %v361
        %v364 = vmul.f32 %v362, %v362
        %v365 = vmul.f32 %v363, %v363
        %v366 = vsel %vm319, %v364, 0.0
        %v367 = vsel %vm319, %v365, 0.0
        %v368 = vadd.f32 %v366, %v367
        %v369 = vrot.slane %v368, 4
        %v370 = vadd.f32 %v368, %v369
        %v371 = vrot.slane %v370, 2
        %v372 = vadd.f32 %v370, %v371
        %v373 = vrot.slane %v372, 1
        %v374 = vadd.f32 %v372, %v373
        %v376 = vsel %vm319, %v374, 0
        %378 = vmatpush.msra.mxu0 0.0
        %379 = vmatpush.msra.mxu0 0.0
        %380 = vmatpush.msra.mxu0 0.0
        %381 = vmatpush.msra.mxu0 0.0
        %382 = vmatpush.msra.mxu0 0.0
        %383 = vmatpush.msra.mxu0 0.0
        %384 = vmatpush.msra.mxu0 0.0
        %385 = vmatpush.msra.mxu0 0.0
        %386 = vmatpush.msra.mxu0 %v336
        %387 = vmatpush.msra.mxu0 %v335
        %388 = vmatpush.msra.mxu0 %v334
        %389 = vmatpush.msra.mxu0 %v333
        %390 = vmatpush.msra.mxu0 %v332
        %391 = vmatpush.msra.mxu0 %v331
        %392 = vmatpush.msra.mxu0 %v330
        %393 = vmatpush.msra.mxu0 %v329
        %394 = vmatmul.f32.gmra.mxu0 %v376
        %v395 = vpop.f32.mrf.mxu0
        %v396 = vadd.f32 0.0, %v395
        %397 = vdwg.mxu0
        %v398 = vmul.f32 %v396, 0.00390625
        %v399 = vadd.f32 %v398, 1e-05
        %v400 = vrsqrt.pop %v399
        %v401 = vmul.f32 %v400, %v399
        %v402 = vmul.f32 %v401, %v400
        %v403 = vmul.f32 0.5, %v402
        %v404 = vsub.f32 1.5, %v403
        %v405 = vmul.f32 %v400, %v404
        %vm406 = vweird.f32 %v399
        %vm407 = vweird.f32 %v400
        %vm408 = vmor %vm406, %vm407
        %v409 = vsel %vm408, %v400, %v405
        %v410 = vperm.slane %v409, 0
        %v411 = vmul.f32 %v362, %v410
        %v412 = vmul.f32 %v363, %v410
        %v413 = vld [vmem:[%s1] sm:$0x1]
        %v415 = vperm.slane %v413, 0
        %v417 = vmul.f32 %v411, %v415
        %v418 = vmul.f32 %v412, %v415
        %v419 = vld [vmem:[%s2] sm:$0x1]
        %v421 = vperm.slane %v419, 0
        %v423 = vadd.f32 %v417, %v421
        %v424 = vadd.f32 %v418, %v421
        %v425 = vmax.f32 %v423, 0.0
        %v426 = vmax.f32 %v424, 0.0
        %v427 = vpack.c.bf16 %v425, %v425
        %v428 = vpack.c.bf16 %v426, %v426
        %v431 = vunpack.c.l.b16 %v427
        %v432 = vunpack.c.l.b16 %v428
        %v433 = vpack.c.b16 %v432, %v431
        %v435 = vshrl.u32 %v433, 16
        %v437 = vrot.slane %v435, 7
        %v438 = vshll.u32 %v433, 16
        %v440 = vor.u32 %v437, %v438
        %vm443 = vcmask 1040384
        %vm444 = vsmask.f32 256
        %vm445 = vmand %vm443, %vm444
        %v446 = vsel %vm445, 0, %v440
        %v447 = vsel %vm445, %v437, 0
        %vm448 = vsmask.f32 7424
        %v450 = vshrl.u32 %v446, 16
        %v452 = vshll.u32 %v446, 16
        %v454 = vrot.slane %v452, 1
        %v455 = vor.u32 %v450, %v454
        %v457 = vshll.u32 %v447, 16
        %v459 = vrot.slane %v457, 1
        %v460 = vsel %vm448, %v455, %v459
        %461 = vrot.lane.b32.xlu0 %v460, 64
        %v462 = vpop.permute.xlu0 %461
        %vm465 = vcmask 1046528
        %v466 = vrot.slane %v446, 1
        %v467 = vrot.slane %v447, 1
        %v468 = vsel %vm465, %v466, %v467
        %v470 = vsel %vm319, %v446, %v462
        %v472 = vld [vmem:[%s4] sm:$0xf]
        %v473 = vld [vmem:[%s4 + $0x4] sm:$0xf]
        %v474 = vld [vmem:[%s4 + $0x8] sm:$0xf]
        %v475 = vld [vmem:[%s4 + $0xc] sm:$0xf]
        %v476 = vld [vmem:[%s4 + $0x10] sm:$0xf]
        %v477 = vld [vmem:[%s4 + $0x14] sm:$0xf]
        %v478 = vld [vmem:[%s4 + $0x18] sm:$0xf]
        %v479 = vld [vmem:[%s4 + $0x1c] sm:$0xf]
        %v480 = vld [vmem:[%s4 + $0x20] sm:$0xf]
        %v481 = vld [vmem:[%s4 + $0x24] sm:$0xf]
        %v482 = vld [vmem:[%s4 + $0x28] sm:$0xf]
        %v483 = vld [vmem:[%s4 + $0x2c] sm:$0xf]
        %v484 = vld [vmem:[%s4 + $0x30] sm:$0xf]
        %v485 = vld [vmem:[%s4 + $0x34] sm:$0xf]
        %v486 = vld [vmem:[%s4 + $0x38] sm:$0xf]
        %v487 = vld [vmem:[%s4 + $0x3c] sm:$0xf]
        %v488 = vld [vmem:[%s4 + $0x40] sm:$0xf]
        %v489 = vld [vmem:[%s4 + $0x44] sm:$0xf]
        %v490 = vld [vmem:[%s4 + $0x48] sm:$0xf]
        %v491 = vld [vmem:[%s4 + $0x4c] sm:$0xf]
        %v492 = vld [vmem:[%s4 + $0x50] sm:$0xf]
        %v493 = vld [vmem:[%s4 + $0x54] sm:$0xf]
        %v494 = vld [vmem:[%s4 + $0x58] sm:$0xf]
        %v495 = vld [vmem:[%s4 + $0x5c] sm:$0xf]
        %v496 = vld [vmem:[#allocation2] sm:$0x1]
        %v498 = vperm.slane %v496, 0
        %v524 = vunpack.c.l.b16 %v472
        %v525 = vunpack.c.l.b16 %v473
        %v526 = vunpack.c.l.b16 %v474
        %v527 = vunpack.c.l.b16 %v475
        %v528 = vunpack.c.l.b16 %v476
        %v529 = vunpack.c.l.b16 %v477
        %v530 = vunpack.c.l.b16 %v478
        %v531 = vunpack.c.l.b16 %v479
        %v532 = vunpack.c.l.b16 %v480
        %v533 = vunpack.c.l.b16 %v481
        %v534 = vunpack.c.l.b16 %v482
        %v535 = vunpack.c.l.b16 %v483
        %v536 = vunpack.c.l.b16 %v484
        %v537 = vunpack.c.l.b16 %v485
        %v538 = vunpack.c.l.b16 %v486
        %v539 = vunpack.c.l.b16 %v487
        %v540 = vunpack.c.l.b16 %v488
        %v541 = vunpack.c.l.b16 %v489
        %v542 = vunpack.c.l.b16 %v490
        %v543 = vunpack.c.l.b16 %v491
        %v544 = vunpack.c.l.b16 %v492
        %v545 = vunpack.c.l.b16 %v493
        %v546 = vunpack.c.l.b16 %v494
        %v547 = vunpack.c.l.b16 %v495
        %v548 = vpack.c.b16 %v525, %v524
        %v549 = vpack.c.b16 %v527, %v526
        %v550 = vpack.c.b16 %v529, %v528
        %v551 = vpack.c.b16 %v531, %v530
        %v552 = vpack.c.b16 %v533, %v532
        %v553 = vpack.c.b16 %v535, %v534
        %v554 = vpack.c.b16 %v537, %v536
        %v555 = vpack.c.b16 %v539, %v538
        %v556 = vpack.c.b16 %v541, %v540
        %v557 = vpack.c.b16 %v543, %v542
        %v558 = vpack.c.b16 %v545, %v544
        %v559 = vpack.c.b16 %v547, %v546
        %v573 = vsel %vm319, %v468, 0
        %575 = vmatpush.bf16.msra.mxu0 %v555
        %576 = vmatpush.bf16.msra.mxu0 %v554
        %577 = vmatpush.bf16.msra.mxu0 %v553
        %578 = vmatpush.bf16.msra.mxu0 %v552
        %579 = vmatpush.bf16.msra.mxu0 %v551
        %580 = vmatpush.bf16.msra.mxu0 %v550
        %581 = vmatpush.bf16.msra.mxu0 %v549
        %582 = vmatpush.bf16.msra.mxu0 %v548
        %583 = vmatmul.bf16.gmra.mxu0 %v470
        %v584 = vpop.f32.mrf.mxu0
        %v585 = vadd.f32 %v498, %v584
        %v586 = vpop.f32.mrf.mxu0
        %v587 = vadd.f32 %v498, %v586
        %588 = vdwg.mxu0
        %589 = vmatpush.bf16.msra.mxu0 0
        %590 = vmatpush.bf16.msra.mxu0 0
        %591 = vmatpush.bf16.msra.mxu0 0
        %592 = vmatpush.bf16.msra.mxu0 0
        %593 = vmatpush.bf16.msra.mxu0 %v559
        %594 = vmatpush.bf16.msra.mxu0 %v558
        %595 = vmatpush.bf16.msra.mxu0 %v557
        %596 = vmatpush.bf16.msra.mxu0 %v556
        %597 = vmatmul.bf16.gmra.mxu0 %v573
        %v598 = vpop.f32.mrf.mxu0
        %v599 = vadd.f32 %v585, %v598
        %v600 = vpop.f32.mrf.mxu0
        %v601 = vadd.f32 %v587, %v600
        %602 = vdwg.mxu0
        %v603 = vld [vmem:[%s308] sm:$0xf]
        %v604 = vld [vmem:[%s308 + $0x4] sm:$0xf]
        %v605 = vunpack.c.l.bf16 %v603
        %v606 = vunpack.c.l.bf16 %v604
        %v607 = vadd.f32 %v599, %v605
        %v608 = vadd.f32 %v601, %v606
        %v609 = vpack.c.bf16 %v607, %v607
        %v610 = vpack.c.bf16 %v608, %v608
        %vm611 = vcmask 519168
        %612 = vst.msk [vmem:[%s313] sm:$0xf] %vm611, %v609
        %613 = vst.msk [vmem:[%s313 + $0x4] sm:$0xf] %vm611, %v610
        %p614 = scmp.lt.s32.totalorder %s19, 1
        %s615 = scalar_select %p614, %s19, 1
        %s616 = smul.addr %s615, 2
        %s617 = smul.addr %s616, 4
        %s618 = scalar_lea.vmem %s7, %s617
        // Predicated region
        $region53: #{_lambda_.20} parent=47 // pred_check
          %p619 = pneg %p194
        $region54: #{_lambda_.20} parent=47 // pred_check_branch
          %621 = sbr.rel (%p619) target = $region56
        $region55: #{_lambda_.20} parent=47 // pred_region
          _
        $region56: #{_lambda_.20} parent=47 // pred_fallthru
          _
      $region48: #{_lambda_.20} parent=5 // pred_fallthru
        _
      %p622 = scmp.le.s32.totalorder 2, %s14
      // Predicated region
      $region57: #{_lambda_.20} parent=5 // pred_check
        %p623 = pneg %p622
      $region58: #{_lambda_.20} parent=5 // pred_check_branch
        %625 = sbr.rel (%p623) target = $region60
      $region59: #{_lambda_.20} parent=5 // pred_region
        %s626 = ssub.s32 %s14, 2
        // Predicated region
        $region61: #{_lambda_.20} parent=59 // pred_check
          %p627 = pneg %p200
        $region62: #{_lambda_.20} parent=59 // pred_check_branch
          %629 = sbr.rel (%p627) target = $region64
        $region63: #{_lambda_.20} parent=59 // pred_region
          %p630 = scmp.lt.s32.totalorder %s20, 1
          %s631 = scalar_select %p630, %s20, 1
          %s632 = smul.addr %s631, 2
          %s633 = smul.addr %s632, 4
          %s634 = scalar_lea.vmem %s7, %s633
        $region64: #{_lambda_.20} parent=59 // pred_fallthru
          _
      $region60: #{_lambda_.20} parent=5 // pred_fallthru
        _
    $region6: #{_lambda_.20} parent=1 // loop_footer
      %s18 = sadd.s32 1, %s14
    $region7: #{_lambda_.20} parent=1 // loop_footer_branch
      %13 = sbr.rel target = $region3
    $region8: #{_lambda_.20} parent=1 // loop_exit
      _
    %635 = vsyncpa [#allocation3], 1
    %s636 = scalar_lea.sflag [#allocation3], 1
    %637 = vsyncpa %s636, 1

// kernel: _lambda_.21
$region0: #{_lambda_.21}
  #allocation0 [shape = 'u32[]', space=smem, size = 0x4, offset = 0x4, fixed_abs, tag = 'smem constant byte address 0x4 - core index']
  #allocation1 [shape = 'u32[72,128]{1,0:T(1,128)}', space=vmem, size = 0x9000, scoped, tag = 'internal scratch']
  %s0 = inlined_call_operand.vmem [shape: bf16[2,16,64], index: 0, kind: input, shape index: {}]
  %s1 = inlined_call_operand.vmem [shape: f32[1,64], index: 1, kind: input, shape index: {}]
  %s2 = inlined_call_operand.vmem [shape: f32[1,64], index: 2, kind: input, shape index: {}]
  %s3 = inlined_call_operand.vmem [shape: f32[64,64], index: 3, kind: input, shape index: {}]
  %s4 = inlined_call_operand.vmem [shape: bf16[192,32], index: 4, kind: input, shape index: {}]
  %s5 = inlined_call_operand.hbm [shape: f32[1,32], index: 5, kind: input, shape index: {}]
  %s6 = inlined_call_operand.vmem [shape: bf16[2,16,32], index: 6, kind: output, shape index: {}]
  %s7 = sld [smem:[#allocation0]]
  $region61: #{_lambda_.21} parent=0
    _
  %s9 = ssub.s32 1, %s7
  %s10 = scalar_select 0, %s9, %s7
  $region1: #{_lambda_.21} parent=0
    #allocation2 [shape = 'u8[512]{0}', space=vmem, size = 0x400, scoped, tag = 'input window, operand 5, single buffered']
    #allocation3 [shape = 's32[2]{0}', space=sflag, size = 0x8, scoped, tag = 'scoped memory for _lambda_.21']
    %11 = vsyncpa [#allocation3], 0
    loop: start=0, step=1, limit=4
    $region2: #{_lambda_.21} parent=1 // loop_pre_header
      _
    $region3: #{_lambda_.21} parent=1 // loop_header
      %s13 = sphi 0, %s17
      %p14 = scmp.ge.s32.totalorder %s13, 4
      %s23 = sphi 0, %s25
      %s26 = sphi 0, %s23
      %s27 = sphi 0, %s26
      %s43 = sphi 0, %s27
      %s47 = sphi 0, %s47
      %s49 = sphi 0, %s47
      %s50 = sphi 0, %s49
      %s64 = sphi 0, %s50
      %s68 = sphi 0, %s68
      %s70 = sphi 0, %s68
      %s71 = sphi 0, %s70
      %s85 = sphi 0, %s71
      %s89 = sphi 0, %s89
      %s91 = sphi 0, %s89
      %s92 = sphi 0, %s91
      %s106 = sphi 0, %s92
      %s110 = sphi 0, %s110
      %s112 = sphi 0, %s110
      %s113 = sphi 0, %s112
      %s127 = sphi 0, %s113
      %s131 = sphi 0, %s131
      %s133 = sphi 0, %s131
      %s134 = sphi 0, %s133
      %s148 = sphi 0, %s134
      %s154 = sphi 0, %s156
      %s157 = sphi 0, %s154
      %s158 = sphi 0, %s157
      %s174 = sphi 0, %s158
    $region4: #{_lambda_.21} parent=1 // loop_header_branch
      %16 = sbr.rel (%p14) target = $region8
    $region5: #{_lambda_.21} parent=1 // loop_body
      %s18 = ssub.s32 %s13, 1
      %s19 = ssub.s32 %s13, 2
      %s20 = sadd.s32 %s13, 1
      %s21 = ssub.s32 %s13, %s20
      %p22 = scmp.eq.s32.totalorder %s21, 0
      %s24 = sadd.s32 %s23, 1
      %s25 = scalar_select %p22, %s23, %s24
      %p28 = pneg %p22
      %p29 = scmp.eq.s32.totalorder %s13, 1
      %p30 = por %p28, %p29
      %p31 = scmp.ne.s32.totalorder %s23, %s26
      %p32 = scmp.eq.s32.totalorder %s13, 0
      %p33 = por %p31, %p32
      %p34 = scmp.ne.s32.totalorder %s23, %s26
      %p35 = scmp.eq.s32.totalorder %s18, 1
      %p36 = por %p34, %p35
      %p37 = scmp.ne.s32.totalorder %s26, %s27
      %p38 = scmp.eq.s32.totalorder %s18, 0
      %p39 = por %p37, %p38
      %p40 = scmp.ne.s32.totalorder %s26, %s27
      %p41 = scmp.eq.s32.totalorder %s19, 1
      %p42 = por %p40, %p41
      %p44 = scmp.ne.s32.totalorder %s27, %s43
      %p45 = scmp.eq.s32.totalorder %s19, 0
      %p46 = por %p44, %p45
      %s48 = sadd.s32 %s47, 1
      %p51 = scmp.eq.s32.totalorder %s13, 1
      %p52 = scmp.ne.s32.totalorder %s47, %s49
      %p53 = scmp.eq.s32.totalorder %s13, 0
      %p54 = por %p52, %p53
      %p55 = scmp.ne.s32.totalorder %s47, %s49
      %p56 = scmp.eq.s32.totalorder %s18, 1
      %p57 = por %p55, %p56
      %p58 = scmp.ne.s32.totalorder %s49, %s50
      %p59 = scmp.eq.s32.totalorder %s18, 0
      %p60 = por %p58, %p59
      %p61 = scmp.ne.s32.totalorder %s49, %s50
      %p62 = scmp.eq.s32.totalorder %s19, 1
      %p63 = por %p61, %p62
      %p65 = scmp.ne.s32.totalorder %s50, %s64
      %p66 = scmp.eq.s32.totalorder %s19, 0
      %p67 = por %p65, %p66
      %s69 = sadd.s32 %s68, 1
      %p72 = scmp.eq.s32.totalorder %s13, 1
      %p73 = scmp.ne.s32.totalorder %s68, %s70
      %p74 = scmp.eq.s32.totalorder %s13, 0
      %p75 = por %p73, %p74
      %p76 = scmp.ne.s32.totalorder %s68, %s70
      %p77 = scmp.eq.s32.totalorder %s18, 1
      %p78 = por %p76, %p77
      %p79 = scmp.ne.s32.totalorder %s70, %s71
      %p80 = scmp.eq.s32.totalorder %s18, 0
      %p81 = por %p79, %p80
      %p82 = scmp.ne.s32.totalorder %s70, %s71
      %p83 = scmp.eq.s32.totalorder %s19, 1
      %p84 = por %p82, %p83
      %p86 = scmp.ne.s32.totalorder %s71, %s85
      %p87 = scmp.eq.s32.totalorder %s19, 0
      %p88 = por %p86, %p87
      %s90 = sadd.s32 %s89, 1
      %p93 = scmp.eq.s32.totalorder %s13, 1
      %p94 = scmp.ne.s32.totalorder %s89, %s91
      %p95 = scmp.eq.s32.totalorder %s13, 0
      %p96 = por %p94, %p95
      %p97 = scmp.ne.s32.totalorder %s89, %s91
      %p98 = scmp.eq.s32.totalorder %s18, 1
      %p99 = por %p97, %p98
      %p100 = scmp.ne.s32.totalorder %s91, %s92
      %p101 = scmp.eq.s32.totalorder %s18, 0
      %p102 = por %p100, %p101
      %p103 = scmp.ne.s32.totalorder %s91, %s92
      %p104 = scmp.eq.s32.totalorder %s19, 1
      %p105 = por %p103, %p104
      %p107 = scmp.ne.s32.totalorder %s92, %s106
      %p108 = scmp.eq.s32.totalorder %s19, 0
      %p109 = por %p107, %p108
      %s111 = sadd.s32 %s110, 1
      %p114 = scmp.eq.s32.totalorder %s13, 1
      %p115 = scmp.ne.s32.totalorder %s110, %s112
      %p116 = scmp.eq.s32.totalorder %s13, 0
      %p117 = por %p115, %p116
      %p118 = scmp.ne.s32.totalorder %s110, %s112
      %p119 = scmp.eq.s32.totalorder %s18, 1
      %p120 = por %p118, %p119
      %p121 = scmp.ne.s32.totalorder %s112, %s113
      %p122 = scmp.eq.s32.totalorder %s18, 0
      %p123 = por %p121, %p122
      %p124 = scmp.ne.s32.totalorder %s112, %s113
      %p125 = scmp.eq.s32.totalorder %s19, 1
      %p126 = por %p124, %p125
      %p128 = scmp.ne.s32.totalorder %s113, %s127
      %p129 = scmp.eq.s32.totalorder %s19, 0
      %p130 = por %p128, %p129
      %s132 = sadd.s32 %s131, 1
      %p135 = scmp.eq.s32.totalorder %s13, 1
      %p136 = scmp.ne.s32.totalorder %s131, %s133
      %p137 = scmp.eq.s32.totalorder %s13, 0
      %p138 = por %p136, %p137
      %p139 = scmp.ne.s32.totalorder %s131, %s133
      %p140 = scmp.eq.s32.totalorder %s18, 1
      %p141 = por %p139, %p140
      %p142 = scmp.ne.s32.totalorder %s133, %s134
      %p143 = scmp.eq.s32.totalorder %s18, 0
      %p144 = por %p142, %p143
      %p145 = scmp.ne.s32.totalorder %s133, %s134
      %p146 = scmp.eq.s32.totalorder %s19, 1
      %p147 = por %p145, %p146
      %p149 = scmp.ne.s32.totalorder %s134, %s148
      %p150 = scmp.eq.s32.totalorder %s19, 0
      %p151 = por %p149, %p150
      %s152 = ssub.s32 %s13, %s20
      %p153 = scmp.eq.s32.totalorder %s152, 0
      %s155 = sadd.s32 %s154, 1
      %s156 = scalar_select %p153, %s154, %s155
      %p159 = pneg %p153
      %p160 = scmp.eq.s32.totalorder %s13, 1
      %p161 = por %p159, %p160
      %p162 = scmp.ne.s32.totalorder %s154, %s157
      %p163 = scmp.eq.s32.totalorder %s13, 0
      %p164 = por %p162, %p163
      %p165 = scmp.ne.s32.totalorder %s154, %s157
      %p166 = scmp.eq.s32.totalorder %s18, 1
      %p167 = por %p165, %p166
      %p168 = scmp.ne.s32.totalorder %s157, %s158
      %p169 = scmp.eq.s32.totalorder %s18, 0
      %p170 = por %p168, %p169
      %p171 = scmp.ne.s32.totalorder %s157, %s158
      %p172 = scmp.eq.s32.totalorder %s19, 1
      %p173 = por %p171, %p172
      %p175 = scmp.ne.s32.totalorder %s158, %s174
      %p176 = scmp.eq.s32.totalorder %s19, 0
      %p177 = por %p175, %p176
      %p178 = scmp.le.s32.totalorder 1, %s13
      %p179 = scmp.lt.s32.totalorder %s13, 3
      %p180 = pnand %p178, %p179
      %p181 = pneg %p180
      // Predicated region
      $region9: #{_lambda_.21} parent=5 // pred_check
        _
      $region10: #{_lambda_.21} parent=5 // pred_check_branch
        %183 = sbr.rel (%p180) target = $region12
      $region11: #{_lambda_.21} parent=5 // pred_region
        %s184 = ssub.s32 %s13, 1
        // Predicated region
        $region13: #{_lambda_.21} parent=11 // pred_check
          %p185 = pneg %p60
        $region14: #{_lambda_.21} parent=11 // pred_check_branch
          %187 = sbr.rel (%p185) target = $region16
        $region15: #{_lambda_.21} parent=11 // pred_region
          _
        $region16: #{_lambda_.21} parent=11 // pred_fallthru
          _
        // Predicated region
        $region17: #{_lambda_.21} parent=11 // pred_check
          %p188 = pneg %p81
        $region18: #{_lambda_.21} parent=11 // pred_check_branch
          %190 = sbr.rel (%p188) target = $region20
        $region19: #{_lambda_.21} parent=11 // pred_region
          _
        $region20: #{_lambda_.21} parent=11 // pred_fallthru
          _
        // Predicated region
        $region21: #{_lambda_.21} parent=11 // pred_check
          %p191 = pneg %p102
        $region22: #{_lambda_.21} parent=11 // pred_check_branch
          %193 = sbr.rel (%p191) target = $region24
        $region23: #{_lambda_.21} parent=11 // pred_region
          _
        $region24: #{_lambda_.21} parent=11 // pred_fallthru
          _
        // Predicated region
        $region25: #{_lambda_.21} parent=11 // pred_check
          %p194 = pneg %p123
        $region26: #{_lambda_.21} parent=11 // pred_check_branch
          %196 = sbr.rel (%p194) target = $region28
        $region27: #{_lambda_.21} parent=11 // pred_region
          _
        $region28: #{_lambda_.21} parent=11 // pred_fallthru
          _
        // Predicated region
        $region29: #{_lambda_.21} parent=11 // pred_check
          %p197 = pneg %p144
        $region30: #{_lambda_.21} parent=11 // pred_check_branch
          %199 = sbr.rel (%p197) target = $region32
        $region31: #{_lambda_.21} parent=11 // pred_region
          %201 = vsyncadd [#allocation3], 0
          %s203 = sshll.u32 %s5, 4
          %s204 = int_to_ptr.hbm [resolvable:$true] %s203
          %s205 = sshll.u32 [#allocation2], 4
          %s206 = int_to_ptr.vmem [resolvable:$true] %s205
          %208 = dma.hbm_to_vmem [thread:$0]  %s204, 16, %s206, [#allocation3]
        $region32: #{_lambda_.21} parent=11 // pred_fallthru
          _
      $region12: #{_lambda_.21} parent=5 // pred_fallthru
        _
      %p209 = scmp.lt.s32.totalorder %s13, 2
      // Predicated region
      $region33: #{_lambda_.21} parent=5 // pred_check
        %p210 = pneg %p209
      $region34: #{_lambda_.21} parent=5 // pred_check_branch
        %212 = sbr.rel (%p210) target = $region36
      $region35: #{_lambda_.21} parent=5 // pred_region
        // Predicated region
        $region37: #{_lambda_.21} parent=35 // pred_check
          %p213 = pneg %p33
        $region38: #{_lambda_.21} parent=35 // pred_check_branch
          %215 = sbr.rel (%p213) target = $region40
        $region39: #{_lambda_.21} parent=35 // pred_region
          %p216 = scmp.lt.s32.totalorder %s13, 1
          %s217 = scalar_select %p216, %s13, 1
          %s218 = smul.addr %s217, 2
          %s219 = smul.addr %s218, 4
          %s220 = scalar_lea.vmem %s0, %s219
        $region40: #{_lambda_.21} parent=35 // pred_fallthru
          _
      $region36: #{_lambda_.21} parent=5 // pred_fallthru
        _
      %p221 = scmp.le.s32.totalorder 1, %s13
      %p222 = scmp.lt.s32.totalorder %s13, 3
      %p223 = pnand %p221, %p222
      %p224 = pneg %p223
      // Predicated region
      $region41: #{_lambda_.21} parent=5 // pred_check
        _
      $region42: #{_lambda_.21} parent=5 // pred_check_branch
        %226 = sbr.rel (%p223) target = $region44
      $region43: #{_lambda_.21} parent=5 // pred_region
        %s227 = ssub.s32 %s13, 1
        // Predicated region
        $region45: #{_lambda_.21} parent=43 // pred_check
          %p228 = pneg %p144
        $region46: #{_lambda_.21} parent=43 // pred_check_branch
          %230 = sbr.rel (%p228) target = $region48
        $region47: #{_lambda_.21} parent=43 // pred_region
          %232 = dma.done [#allocation3], 16
        $region48: #{_lambda_.21} parent=43 // pred_fallthru
          _
        %p233 = scmp.lt.s32.totalorder %s18, 1
        %s234 = scalar_select %p233, %s18, 1
        %s235 = smul.addr %s234, 2
        %s236 = smul.addr %s235, 4
        %s237 = scalar_lea.vmem %s0, %s236
        %p238 = pneg %p39
        %p239 = pneg %p36
        %p240 = pneg %p60
        %p241 = pneg %p57
        %p242 = pneg %p81
        %p243 = pneg %p78
        %p244 = pneg %p102
        %p245 = pneg %p99
        %p246 = pneg %p123
        %p247 = pneg %p120
        %p248 = pneg %p144
        %p249 = pneg %p141
        %p250 = pneg %p170
        %p251 = pneg %p167
        %p252 = scmp.lt.s32.totalorder %s18, 1
        %s253 = scalar_select %p252, %s18, 1
        %s254 = smul.addr %s253, 2
        %s255 = smul.addr %s254, 4
        %s256 = scalar_lea.vmem %s6, %s255
        %p257 = scmp.lt.s32.totalorder %s18, 1
        %s258 = scalar_select %p257, %s18, 1
        %s259 = smul.addr %s258, 2
        %s260 = smul.addr %s259, 4
        %s261 = scalar_lea.vmem %s0, %s260
        %p262 = scmp.lt.s32.totalorder %s18, 1
        %s263 = scalar_select %p262, %s18, 1
        %s264 = smul.addr %s263, 2
        %s265 = smul.addr %s264, 4
        %s266 = scalar_lea.vmem %s6, %s265
        %v268 = vld [vmem:[%s261] sm:$0xf]
        %v269 = vld [vmem:[%s261 + $0x4] sm:$0xf]
        %v270 = vunpack.c.l.bf16 %v268
        %v271 = vunpack.c.l.bf16 %v269
        %vm272 = vcmask 523264
        %v273 = vsel %vm272, %v270, 0.0
        %v274 = vsel %vm272, %v271, 0.0
        %v275 = vadd.f32 %v273, %v274
        %v276 = vrot.slane %v275, 4
        %v277 = vadd.f32 %v275, %v276
        %v278 = vrot.slane %v277, 2
        %v279 = vadd.f32 %v277, %v278
        %v280 = vrot.slane %v279, 1
        %v281 = vadd.f32 %v279, %v280
        %v282 = vld [vmem:[%s3] sm:$0xff]
        %v283 = vld [vmem:[%s3 + $0x8] sm:$0xff]
        %v284 = vld [vmem:[%s3 + $0x10] sm:$0xff]
        %v285 = vld [vmem:[%s3 + $0x18] sm:$0xff]
        %v286 = vld [vmem:[%s3 + $0x20] sm:$0xff]
        %v287 = vld [vmem:[%s3 + $0x28] sm:$0xff]
        %v288 = vld [vmem:[%s3 + $0x30] sm:$0xff]
        %v289 = vld [vmem:[%s3 + $0x38] sm:$0xff]
        %v291 = vsel %vm272, %v281, 0
        %293 = vmatpush.msra.mxu0 0.0
        %294 = vmatpush.msra.mxu0 0.0
        %295 = vmatpush.msra.mxu0 0.0
        %296 = vmatpush.msra.mxu0 0.0
        %297 = vmatpush.msra.mxu0 0.0
        %298 = vmatpush.msra.mxu0 0.0
        %299 = vmatpush.msra.mxu0 0.0
        %300 = vmatpush.msra.mxu0 0.0
        %301 = vmatpush.msra.mxu0 %v289
        %302 = vmatpush.msra.mxu0 %v288
        %303 = vmatpush.msra.mxu0 %v287
        %304 = vmatpush.msra.mxu0 %v286
        %305 = vmatpush.msra.mxu0 %v285
        %306 = vmatpush.msra.mxu0 %v284
        %307 = vmatpush.msra.mxu0 %v283
        %308 = vmatpush.msra.mxu0 %v282
        %309 = vmatmul.f32.gmra.mxu0 %v291
        %v310 = vpop.f32.mrf.mxu0
        %v311 = vadd.f32 0.0, %v310
        %312 = vdwg.mxu0
        %v313 = vmul.f32 %v311, 0.00390625
        %v314 = vperm.slane %v313, 0
        %v315 = vsub.f32 %v270, %v314
        %v316 = vsub.f32 %v271, %v314
        %v317 = vmul.f32 %v315, %v315
        %v318 = vmul.f32 %v316, %v316
        %v319 = vsel %vm272, %v317, 0.0
        %v320 = vsel %vm272, %v318, 0.0
        %v321 = vadd.f32 %v319, %v320
        %v322 = vrot.slane %v321, 4
        %v323 = vadd.f32 %v321, %v322
        %v324 = vrot.slane %v323, 2
        %v325 = vadd.f32 %v323, %v324
        %v326 = vrot.slane %v325, 1
        %v327 = vadd.f32 %v325, %v326
        %v329 = vsel %vm272, %v327, 0
        %331 = vmatpush.msra.mxu0 0.0
        %332 = vmatpush.msra.mxu0 0.0
        %333 = vmatpush.msra.mxu0 0.0
        %334 = vmatpush.msra.mxu0 0.0
        %335 = vmatpush.msra.mxu0 0.0
        %336 = vmatpush.msra.mxu0 0.0
        %337 = vmatpush.msra.mxu0 0.0
        %338 = vmatpush.msra.mxu0 0.0
        %339 = vmatpush.msra.mxu0 %v289
        %340 = vmatpush.msra.mxu0 %v288
        %341 = vmatpush.msra.mxu0 %v287
        %342 = vmatpush.msra.mxu0 %v286
        %343 = vmatpush.msra.mxu0 %v285
        %344 = vmatpush.msra.mxu0 %v284
        %345 = vmatpush.msra.mxu0 %v283
        %346 = vmatpush.msra.mxu0 %v282
        %347 = vmatmul.f32.gmra.mxu0 %v329
        %v348 = vpop.f32.mrf.mxu0
        %v349 = vadd.f32 0.0, %v348
        %350 = vdwg.mxu0
        %v351 = vmul.f32 %v349, 0.00390625
        %v352 = vadd.f32 %v351, 1e-05
        %v353 = vrsqrt.pop %v352
        %v354 = vmul.f32 %v353, %v352
        %v355 = vmul.f32 %v354, %v353
        %v356 = vmul.f32 0.5, %v355
        %v357 = vsub.f32 1.5, %v356
        %v358 = vmul.f32 %v353, %v357
        %vm359 = vweird.f32 %v352
        %vm360 = vweird.f32 %v353
        %vm361 = vmor %vm359, %vm360
        %v362 = vsel %vm361, %v353, %v358
        %v363 = vperm.slane %v362, 0
        %v364 = vmul.f32 %v315, %v363
        %v365 = vmul.f32 %v316, %v363
        %v366 = vld [vmem:[%s1] sm:$0x1]
        %v368 = vperm.slane %v366, 0
        %v370 = vmul.f32 %v364, %v368
        %v371 = vmul.f32 %v365, %v368
        %v372 = vld [vmem:[%s2] sm:$0x1]
        %v374 = vperm.slane %v372, 0
        %v376 = vadd.f32 %v370, %v374
        %v377 = vadd.f32 %v371, %v374
        %v378 = vmax.f32 %v376, 0.0
        %v379 = vmax.f32 %v377, 0.0
        %v380 = vpack.c.bf16 %v378, %v378
        %v381 = vpack.c.bf16 %v379, %v379
        %v384 = vunpack.c.l.b16 %v380
        %v385 = vunpack.c.l.b16 %v381
        %v386 = vpack.c.b16 %v385, %v384
        %v388 = vshrl.u32 %v386, 16
        %v390 = vrot.slane %v388, 7
        %v391 = vshll.u32 %v386, 16
        %v393 = vor.u32 %v390, %v391
        %vm396 = vcmask 1040384
        %vm397 = vsmask.f32 256
        %vm398 = vmand %vm396, %vm397
        %v399 = vsel %vm398, 0, %v393
        %v400 = vsel %vm398, %v390, 0
        %vm401 = vsmask.f32 7424
        %v403 = vshrl.u32 %v399, 16
        %v405 = vshll.u32 %v399, 16
        %v407 = vrot.slane %v405, 1
        %v408 = vor.u32 %v403, %v407
        %v410 = vshll.u32 %v400, 16
        %v412 = vrot.slane %v410, 1
        %v413 = vsel %vm401, %v408, %v412
        %414 = vrot.lane.b32.xlu0 %v413, 64
        %v415 = vpop.permute.xlu0 %414
        %vm418 = vcmask 1046528
        %v419 = vrot.slane %v399, 1
        %v420 = vrot.slane %v400, 1
        %v421 = vsel %vm418, %v419, %v420
        %v423 = vsel %vm272, %v399, %v415
        %v425 = vld [vmem:[%s4] sm:$0xf]
        %v426 = vld [vmem:[%s4 + $0x4] sm:$0xf]
        %v427 = vld [vmem:[%s4 + $0x8] sm:$0xf]
        %v428 = vld [vmem:[%s4 + $0xc] sm:$0xf]
        %v429 = vld [vmem:[%s4 + $0x10] sm:$0xf]
        %v430 = vld [vmem:[%s4 + $0x14] sm:$0xf]
        %v431 = vld [vmem:[%s4 + $0x18] sm:$0xf]
        %v432 = vld [vmem:[%s4 + $0x1c] sm:$0xf]
        %v433 = vld [vmem:[%s4 + $0x20] sm:$0xf]
        %v434 = vld [vmem:[%s4 + $0x24] sm:$0xf]
        %v435 = vld [vmem:[%s4 + $0x28] sm:$0xf]
        %v436 = vld [vmem:[%s4 + $0x2c] sm:$0xf]
        %v437 = vld [vmem:[%s4 + $0x30] sm:$0xf]
        %v438 = vld [vmem:[%s4 + $0x34] sm:$0xf]
        %v439 = vld [vmem:[%s4 + $0x38] sm:$0xf]
        %v440 = vld [vmem:[%s4 + $0x3c] sm:$0xf]
        %v441 = vld [vmem:[%s4 + $0x40] sm:$0xf]
        %v442 = vld [vmem:[%s4 + $0x44] sm:$0xf]
        %v443 = vld [vmem:[%s4 + $0x48] sm:$0xf]
        %v444 = vld [vmem:[%s4 + $0x4c] sm:$0xf]
        %v445 = vld [vmem:[%s4 + $0x50] sm:$0xf]
        %v446 = vld [vmem:[%s4 + $0x54] sm:$0xf]
        %v447 = vld [vmem:[%s4 + $0x58] sm:$0xf]
        %v448 = vld [vmem:[%s4 + $0x5c] sm:$0xf]
        %v449 = vld [vmem:[#allocation2] sm:$0x1]
        %v451 = vperm.slane %v449, 0
        %v477 = vunpack.c.l.b16 %v425
        %v478 = vunpack.c.l.b16 %v426
        %v479 = vunpack.c.l.b16 %v427
        %v480 = vunpack.c.l.b16 %v428
        %v481 = vunpack.c.l.b16 %v429
        %v482 = vunpack.c.l.b16 %v430
        %v483 = vunpack.c.l.b16 %v431
        %v484 = vunpack.c.l.b16 %v432
        %v485 = vunpack.c.l.b16 %v433
        %v486 = vunpack.c.l.b16 %v434
        %v487 = vunpack.c.l.b16 %v435
        %v488 = vunpack.c.l.b16 %v436
        %v489 = vunpack.c.l.b16 %v437
        %v490 = vunpack.c.l.b16 %v438
        %v491 = vunpack.c.l.b16 %v439
        %v492 = vunpack.c.l.b16 %v440
        %v493 = vunpack.c.l.b16 %v441
        %v494 = vunpack.c.l.b16 %v442
        %v495 = vunpack.c.l.b16 %v443
        %v496 = vunpack.c.l.b16 %v444
        %v497 = vunpack.c.l.b16 %v445
        %v498 = vunpack.c.l.b16 %v446
        %v499 = vunpack.c.l.b16 %v447
        %v500 = vunpack.c.l.b16 %v448
        %v501 = vpack.c.b16 %v478, %v477
        %v502 = vpack.c.b16 %v480, %v479
        %v503 = vpack.c.b16 %v482, %v481
        %v504 = vpack.c.b16 %v484, %v483
        %v505 = vpack.c.b16 %v486, %v485
        %v506 = vpack.c.b16 %v488, %v487
        %v507 = vpack.c.b16 %v490, %v489
        %v508 = vpack.c.b16 %v492, %v491
        %v509 = vpack.c.b16 %v494, %v493
        %v510 = vpack.c.b16 %v496, %v495
        %v511 = vpack.c.b16 %v498, %v497
        %v512 = vpack.c.b16 %v500, %v499
        %v526 = vsel %vm272, %v421, 0
        %528 = vmatpush.bf16.msra.mxu0 %v508
        %529 = vmatpush.bf16.msra.mxu0 %v507
        %530 = vmatpush.bf16.msra.mxu0 %v506
        %531 = vmatpush.bf16.msra.mxu0 %v505
        %532 = vmatpush.bf16.msra.mxu0 %v504
        %533 = vmatpush.bf16.msra.mxu0 %v503
        %534 = vmatpush.bf16.msra.mxu0 %v502
        %535 = vmatpush.bf16.msra.mxu0 %v501
        %536 = vmatmul.bf16.gmra.mxu0 %v423
        %v537 = vpop.f32.mrf.mxu0
        %v538 = vadd.f32 %v451, %v537
        %v539 = vpop.f32.mrf.mxu0
        %v540 = vadd.f32 %v451, %v539
        %541 = vdwg.mxu0
        %542 = vmatpush.bf16.msra.mxu0 0
        %543 = vmatpush.bf16.msra.mxu0 0
        %544 = vmatpush.bf16.msra.mxu0 0
        %545 = vmatpush.bf16.msra.mxu0 0
        %546 = vmatpush.bf16.msra.mxu0 %v512
        %547 = vmatpush.bf16.msra.mxu0 %v511
        %548 = vmatpush.bf16.msra.mxu0 %v510
        %549 = vmatpush.bf16.msra.mxu0 %v509
        %550 = vmatmul.bf16.gmra.mxu0 %v526
        %v551 = vpop.f32.mrf.mxu0
        %v552 = vadd.f32 %v538, %v551
        %v553 = vpop.f32.mrf.mxu0
        %v554 = vadd.f32 %v540, %v553
        %555 = vdwg.mxu0
        %v556 = vpack.c.bf16 %v552, %v552
        %v557 = vpack.c.bf16 %v554, %v554
        %vm558 = vcmask 257024
        %559 = vst.msk [vmem:[%s266] sm:$0xf] %vm558, %v556
        %560 = vst.msk [vmem:[%s266 + $0x4] sm:$0xf] %vm558, %v557
        %p561 = scmp.lt.s32.totalorder %s18, 1
        %s562 = scalar_select %p561, %s18, 1
        %s563 = smul.addr %s562, 2
        %s564 = smul.addr %s563, 4
        %s565 = scalar_lea.vmem %s6, %s564
        // Predicated region
        $region49: #{_lambda_.21} parent=43 // pred_check
          %p566 = pneg %p167
        $region50: #{_lambda_.21} parent=43 // pred_check_branch
          %568 = sbr.rel (%p566) target = $region52
        $region51: #{_lambda_.21} parent=43 // pred_region
          _
        $region52: #{_lambda_.21} parent=43 // pred_fallthru
          _
      $region44: #{_lambda_.21} parent=5 // pred_fallthru
        _
      %p569 = scmp.le.s32.totalorder 2, %s13
      // Predicated region
      $region53: #{_lambda_.21} parent=5 // pred_check
        %p570 = pneg %p569
      $region54: #{_lambda_.21} parent=5 // pred_check_branch
        %572 = sbr.rel (%p570) target = $region56
      $region55: #{_lambda_.21} parent=5 // pred_region
        %s573 = ssub.s32 %s13, 2
        // Predicated region
        $region57: #{_lambda_.21} parent=55 // pred_check
          %p574 = pneg %p173
        $region58: #{_lambda_.21} parent=55 // pred_check_branch
          %576 = sbr.rel (%p574) target = $region60
        $region59: #{_lambda_.21} parent=55 // pred_region
          %p577 = scmp.lt.s32.totalorder %s19, 1
          %s578 = scalar_select %p577, %s19, 1
          %s579 = smul.addr %s578, 2
          %s580 = smul.addr %s579, 4
          %s581 = scalar_lea.vmem %s6, %s580
        $region60: #{_lambda_.21} parent=55 // pred_fallthru
          _
      $region56: #{_lambda_.21} parent=5 // pred_fallthru
        _
    $region6: #{_lambda_.21} parent=1 // loop_footer
      %s17 = sadd.s32 1, %s13
    $region7: #{_lambda_.21} parent=1 // loop_footer_branch
      %12 = sbr.rel target = $region3
    $region8: #{_lambda_.21} parent=1 // loop_exit
      _
    %582 = vsyncpa [#allocation3], 1
    %s583 = scalar_lea.sflag [#allocation3], 1
    %584 = vsyncpa %s583, 1

// kernel: _lambda_.22
$region0: #{_lambda_.22}
  #allocation0 [shape = 'u32[]', space=smem, size = 0x4, offset = 0x4, fixed_abs, tag = 'smem constant byte address 0x4 - core index']
  #allocation1 [shape = 'u32[72,128]{1,0:T(1,128)}', space=vmem, size = 0x9000, scoped, tag = 'internal scratch']
  #allocation2 [shape = 'f32[32,32]{1,0:T(8,128)}', space=vmem, size = 0x4000, scoped, tag = 'scratch operand']
  %s0 = inlined_call_operand.vmem [shape: bf16[32,64], index: 0, kind: input, shape index: {}]
  %s1 = inlined_call_operand.hbm [shape: bf16[64,32], index: 1, kind: input, shape index: {}]
  %s2 = inlined_call_operand.hbm [shape: f32[1,32], index: 2, kind: input, shape index: {}]
  %s3 = inlined_call_operand.vmem [shape: bf16[32,32], index: 3, kind: output, shape index: {}]
  %s4 = sld [smem:[#allocation0]]
  $region38: #{_lambda_.22} parent=0
    _
  %s6 = ssub.s32 1, %s4
  %s7 = scalar_select 0, %s6, %s4
  $region1: #{_lambda_.22} parent=0
    #allocation3 [shape = 'u8[16384]{0}', space=vmem, size = 0x4000, scoped, tag = 'input window, operand 1, single buffered']
    #allocation4 [shape = 's32[1]{0}', space=sflag, size = 0x4, scoped, tag = 'scoped memory for _lambda_.22']
    #allocation5 [shape = 'u8[512]{0}', space=vmem, size = 0x400, scoped, tag = 'input window, operand 2, single buffered']
    #allocation6 [shape = 's32[1]{0}', space=sflag, size = 0x4, scoped, tag = 'scoped memory for _lambda_.22']
    %8 = vsyncpa [#allocation4], 0
    %9 = vsyncpa [#allocation6], 0
    // Predicated region
    $region2: #{_lambda_.22} parent=1 // pred_check
      _
    $region3: #{_lambda_.22} parent=1 // pred_check_branch
      %11 = sbr.rel (0) target = $region5
    $region4: #{_lambda_.22} parent=1 // pred_region
      _
    $region5: #{_lambda_.22} parent=1 // pred_fallthru
      _
    // Predicated region
    $region6: #{_lambda_.22} parent=1 // pred_check
      _
    $region7: #{_lambda_.22} parent=1 // pred_check_branch
      %13 = sbr.rel (0) target = $region9
    $region8: #{_lambda_.22} parent=1 // pred_region
      %15 = vsyncadd [#allocation4], 0
      %s16 = sshll.u32 %s1, 4
      %s17 = int_to_ptr.hbm [resolvable:$true] %s16
      %s18 = sshll.u32 [#allocation3], 4
      %s19 = int_to_ptr.vmem [resolvable:$true] %s18
      %24 = dma.hbm_to_vmem [thread:$0]  %s17, 512, %s19, [#allocation4], 64, 64, 4
    $region9: #{_lambda_.22} parent=1 // pred_fallthru
      _
    // Predicated region
    $region10: #{_lambda_.22} parent=1 // pred_check
      _
    $region11: #{_lambda_.22} parent=1 // pred_check_branch
      %26 = sbr.rel (0) target = $region13
    $region12: #{_lambda_.22} parent=1 // pred_region
      %28 = vsyncadd [#allocation6], 0
      %s30 = sshll.u32 %s2, 4
      %s31 = int_to_ptr.hbm [resolvable:$true] %s30
      %s32 = sshll.u32 [#allocation5], 4
      %s33 = int_to_ptr.vmem [resolvable:$true] %s32
      %35 = dma.hbm_to_vmem [thread:$0]  %s31, 16, %s33, [#allocation6]
    $region13: #{_lambda_.22} parent=1 // pred_fallthru
      _
    // Predicated region
    $region14: #{_lambda_.22} parent=1 // pred_check
      _
    $region15: #{_lambda_.22} parent=1 // pred_check_branch
      %37 = sbr.rel (0) target = $region17
    $region16: #{_lambda_.22} parent=1 // pred_region
      %39 = dma.done [#allocation4], 512
    $region17: #{_lambda_.22} parent=1 // pred_fallthru
      _
    // Predicated region
    $region18: #{_lambda_.22} parent=1 // pred_check
      _
    $region19: #{_lambda_.22} parent=1 // pred_check_branch
      %41 = sbr.rel (0) target = $region21
    $region20: #{_lambda_.22} parent=1 // pred_region
      %43 = dma.done [#allocation6], 16
    $region21: #{_lambda_.22} parent=1 // pred_fallthru
      _
    %p45 = scmp.eq.s32.totalorder 0, 0
    // Predicated region
    $region22: #{_lambda_.22} parent=1 // pred_check
      %p46 = pneg %p45
    $region23: #{_lambda_.22} parent=1 // pred_check_branch
      %48 = sbr.rel (%p46) target = $region25
    $region24: #{_lambda_.22} parent=1 // pred_region
      %vm49 = vcmask 261120
      %50 = vst.msk [vmem:[#allocation2] sm:$0xff] %vm49, 0.0
      %51 = vst.msk [vmem:[#allocation2 + $0x8] sm:$0xff] %vm49, 0.0
      %52 = vst.msk [vmem:[#allocation2 + $0x10] sm:$0xff] %vm49, 0.0
      %53 = vst.msk [vmem:[#allocation2 + $0x18] sm:$0xff] %vm49, 0.0
    $region25: #{_lambda_.22} parent=1 // pred_fallthru
      _
    %v54 = vld [vmem:[#allocation2] sm:$0xff]
    %v55 = vld [vmem:[#allocation2 + $0x8] sm:$0xff]
    %v56 = vld [vmem:[#allocation2 + $0x10] sm:$0xff]
    %v57 = vld [vmem:[#allocation2 + $0x18] sm:$0xff]
    %v58 = vld [vmem:[%s0] sm:$0xf]
    %v59 = vld [vmem:[%s0 + $0x4] sm:$0xf]
    %v60 = vld [vmem:[%s0 + $0x8] sm:$0xf]
    %v61 = vld [vmem:[%s0 + $0xc] sm:$0xf]
    %v62 = vld [vmem:[#allocation3] sm:$0xf]
    %v63 = vld [vmem:[#allocation3 + $0x4] sm:$0xf]
    %v64 = vld [vmem:[#allocation3 + $0x8] sm:$0xf]
    %v65 = vld [vmem:[#allocation3 + $0xc] sm:$0xf]
    %v66 = vld [vmem:[#allocation3 + $0x10] sm:$0xf]
    %v67 = vld [vmem:[#allocation3 + $0x14] sm:$0xf]
    %v68 = vld [vmem:[#allocation3 + $0x18] sm:$0xf]
    %v69 = vld [vmem:[#allocation3 + $0x1c] sm:$0xf]
    %v74 = vunpack.c.l.b16 %v58
    %v75 = vunpack.c.l.b16 %v59
    %v76 = vunpack.c.l.b16 %v60
    %v77 = vunpack.c.l.b16 %v61
    %v78 = vpack.c.b16 %v75, %v74
    %v79 = vpack.c.b16 %v77, %v76
    %v88 = vunpack.c.l.b16 %v62
    %v89 = vunpack.c.l.b16 %v63
    %v90 = vunpack.c.l.b16 %v64
    %v91 = vunpack.c.l.b16 %v65
    %v92 = vunpack.c.l.b16 %v66
    %v93 = vunpack.c.l.b16 %v67
    %v94 = vunpack.c.l.b16 %v68
    %v95 = vunpack.c.l.b16 %v69
    %v96 = vpack.c.b16 %v89, %v88
    %v97 = vpack.c.b16 %v91, %v90
    %v98 = vpack.c.b16 %v93, %v92
    %v99 = vpack.c.b16 %v95, %v94
    %vm104 = vcmask 523264
    %v106 = vsel %vm104, %v78, 0
    %v109 = vsel %vm104, %v79, 0
    %111 = vmatpush.bf16.msra.mxu0 0
    %112 = vmatpush.bf16.msra.mxu0 0
    %113 = vmatpush.bf16.msra.mxu0 0
    %114 = vmatpush.bf16.msra.mxu0 0
    %115 = vmatpush.bf16.msra.mxu0 %v99
    %116 = vmatpush.bf16.msra.mxu0 %v98
    %117 = vmatpush.bf16.msra.mxu0 %v97
    %118 = vmatpush.bf16.msra.mxu0 %v96
    %119 = vmatmul.bf16.gmra.mxu0 %v106
    %v120 = vpop.f32.mrf.mxu0
    %v121 = vadd.f32 0.0, %v120
    %v122 = vpop.f32.mrf.mxu0
    %v123 = vadd.f32 0.0, %v122
    %124 = vmatmul.bf16.gmra.mxu0 %v109
    %v125 = vpop.f32.mrf.mxu0
    %v126 = vadd.f32 0.0, %v125
    %v127 = vpop.f32.mrf.mxu0
    %v128 = vadd.f32 0.0, %v127
    %129 = vdwg.mxu0
    %v130 = vadd.f32 %v54, %v121
    %v131 = vadd.f32 %v55, %v123
    %v132 = vadd.f32 %v56, %v126
    %v133 = vadd.f32 %v57, %v128
    %vm134 = vcmask 261120
    %135 = vst.msk [vmem:[#allocation2] sm:$0xff] %vm134, %v130
    %136 = vst.msk [vmem:[#allocation2 + $0x8] sm:$0xff] %vm134, %v131
    %137 = vst.msk [vmem:[#allocation2 + $0x10] sm:$0xff] %vm134, %v132
    %138 = vst.msk [vmem:[#allocation2 + $0x18] sm:$0xff] %vm134, %v133
    // Predicated region
    $region26: #{_lambda_.22} parent=1 // pred_check
      %p139 = pneg %p45
    $region27: #{_lambda_.22} parent=1 // pred_check_branch
      %141 = sbr.rel (%p139) target = $region29
    $region28: #{_lambda_.22} parent=1 // pred_region
      %v142 = vld [vmem:[#allocation2] sm:$0xff]
      %v143 = vld [vmem:[#allocation2 + $0x8] sm:$0xff]
      %v144 = vld [vmem:[#allocation2 + $0x10] sm:$0xff]
      %v145 = vld [vmem:[#allocation2 + $0x18] sm:$0xff]
      %v146 = vld [vmem:[#allocation5] sm:$0x1]
      %v148 = vperm.slane %v146, 0
      %v150 = vadd.f32 %v142, %v148
      %v151 = vadd.f32 %v143, %v148
      %v152 = vadd.f32 %v144, %v148
      %v153 = vadd.f32 %v145, %v148
      %v154 = vpack.c.bf16 %v150, %v150
      %v155 = vpack.c.bf16 %v151, %v151
      %v156 = vpack.c.bf16 %v152, %v152
      %v157 = vpack.c.bf16 %v153, %v153
      %vm158 = vcmask 257024
      %159 = vst.msk [vmem:[%s3] sm:$0xf] %vm158, %v154
      %160 = vst.msk [vmem:[%s3 + $0x4] sm:$0xf] %vm158, %v155
      %161 = vst.msk [vmem:[%s3 + $0x8] sm:$0xf] %vm158, %v156
      %162 = vst.msk [vmem:[%s3 + $0xc] sm:$0xf] %vm158, %v157
    $region29: #{_lambda_.22} parent=1 // pred_fallthru
      _
    // Predicated region
    $region30: #{_lambda_.22} parent=1 // pred_check
      _
    $region31: #{_lambda_.22} parent=1 // pred_check_branch
      %164 = sbr.rel (0) target = $region33
    $region32: #{_lambda_.22} parent=1 // pred_region
      _
    $region33: #{_lambda_.22} parent=1 // pred_fallthru
      _
    // Predicated region
    $region34: #{_lambda_.22} parent=1 // pred_check
      _
    $region35: #{_lambda_.22} parent=1 // pred_check_branch
      %166 = sbr.rel (0) target = $region37
    $region36: #{_lambda_.22} parent=1 // pred_region
      _
    $region37: #{_lambda_.22} parent=1 // pred_fallthru
      _
    %167 = vsyncpa [#allocation4], 1
    %168 = vsyncpa [#allocation6], 1

// kernel: _lambda_.24
$region0: #{_lambda_.24}
  #allocation0 [shape = 'u32[]', space=smem, size = 0x4, offset = 0x4, fixed_abs, tag = 'smem constant byte address 0x4 - core index']
  #allocation1 [shape = 'u32[72,128]{1,0:T(1,128)}', space=vmem, size = 0x9000, scoped, tag = 'internal scratch']
  %s0 = inlined_call_operand.vmem [shape: bf16[2,16,32], index: 0, kind: input, shape index: {}]
  %s1 = inlined_call_operand.hbm [shape: bf16[96,64], index: 1, kind: input, shape index: {}]
  %s2 = inlined_call_operand.hbm [shape: f32[1,64], index: 2, kind: input, shape index: {}]
  %s3 = inlined_call_operand.vmem [shape: bf16[2,16,64], index: 3, kind: output, shape index: {}]
  %s4 = sld [smem:[#allocation0]]
  $region53: #{_lambda_.24} parent=0
    _
  %s6 = ssub.s32 1, %s4
  %s7 = scalar_select 0, %s6, %s4
  $region1: #{_lambda_.24} parent=0
    #allocation2 [shape = 'u8[24576]{0}', space=vmem, size = 0x6000, scoped, tag = 'input window, operand 1, single buffered']
    #allocation3 [shape = 's32[2]{0}', space=sflag, size = 0x8, scoped, tag = 'scoped memory for _lambda_.24']
    #allocation4 [shape = 'u8[512]{0}', space=vmem, size = 0x400, scoped, tag = 'input window, operand 2, single buffered']
    #allocation5 [shape = 's32[1]{0}', space=sflag, size = 0x4, scoped, tag = 'scoped memory for _lambda_.24']
    %8 = vsyncpa [#allocation3], 0
    %9 = vsyncpa [#allocation5], 0
    loop: start=0, step=1, limit=4
    $region2: #{_lambda_.24} parent=1 // loop_pre_header
      _
    $region3: #{_lambda_.24} parent=1 // loop_header
      %s11 = sphi 0, %s15
      %p12 = scmp.ge.s32.totalorder %s11, 4
      %s21 = sphi 0, %s23
      %s24 = sphi 0, %s21
      %s25 = sphi 0, %s24
      %s41 = sphi 0, %s25
      %s45 = sphi 0, %s45
      %s47 = sphi 0, %s45
      %s48 = sphi 0, %s47
      %s62 = sphi 0, %s48
      %s66 = sphi 0, %s66
      %s68 = sphi 0, %s66
      %s69 = sphi 0, %s68
      %s83 = sphi 0, %s69
      %s89 = sphi 0, %s91
      %s92 = sphi 0, %s89
      %s93 = sphi 0, %s92
      %s109 = sphi 0, %s93
    $region4: #{_lambda_.24} parent=1 // loop_header_branch
      %14 = sbr.rel (%p12) target = $region8
    $region5: #{_lambda_.24} parent=1 // loop_body
      %s16 = ssub.s32 %s11, 1
      %s17 = ssub.s32 %s11, 2
      %s18 = sadd.s32 %s11, 1
      %s19 = ssub.s32 %s11, %s18
      %p20 = scmp.eq.s32.totalorder %s19, 0
      %s22 = sadd.s32 %s21, 1
      %s23 = scalar_select %p20, %s21, %s22
      %p26 = pneg %p20
      %p27 = scmp.eq.s32.totalorder %s11, 1
      %p28 = por %p26, %p27
      %p29 = scmp.ne.s32.totalorder %s21, %s24
      %p30 = scmp.eq.s32.totalorder %s11, 0
      %p31 = por %p29, %p30
      %p32 = scmp.ne.s32.totalorder %s21, %s24
      %p33 = scmp.eq.s32.totalorder %s16, 1
      %p34 = por %p32, %p33
      %p35 = scmp.ne.s32.totalorder %s24, %s25
      %p36 = scmp.eq.s32.totalorder %s16, 0
      %p37 = por %p35, %p36
      %p38 = scmp.ne.s32.totalorder %s24, %s25
      %p39 = scmp.eq.s32.totalorder %s17, 1
      %p40 = por %p38, %p39
      %p42 = scmp.ne.s32.totalorder %s25, %s41
      %p43 = scmp.eq.s32.totalorder %s17, 0
      %p44 = por %p42, %p43
      %s46 = sadd.s32 %s45, 1
      %p49 = scmp.eq.s32.totalorder %s11, 1
      %p50 = scmp.ne.s32.totalorder %s45, %s47
      %p51 = scmp.eq.s32.totalorder %s11, 0
      %p52 = por %p50, %p51
      %p53 = scmp.ne.s32.totalorder %s45, %s47
      %p54 = scmp.eq.s32.totalorder %s16, 1
      %p55 = por %p53, %p54
      %p56 = scmp.ne.s32.totalorder %s47, %s48
      %p57 = scmp.eq.s32.totalorder %s16, 0
      %p58 = por %p56, %p57
      %p59 = scmp.ne.s32.totalorder %s47, %s48
      %p60 = scmp.eq.s32.totalorder %s17, 1
      %p61 = por %p59, %p60
      %p63 = scmp.ne.s32.totalorder %s48, %s62
      %p64 = scmp.eq.s32.totalorder %s17, 0
      %p65 = por %p63, %p64
      %s67 = sadd.s32 %s66, 1
      %p70 = scmp.eq.s32.totalorder %s11, 1
      %p71 = scmp.ne.s32.totalorder %s66, %s68
      %p72 = scmp.eq.s32.totalorder %s11, 0
      %p73 = por %p71, %p72
      %p74 = scmp.ne.s32.totalorder %s66, %s68
      %p75 = scmp.eq.s32.totalorder %s16, 1
      %p76 = por %p74, %p75
      %p77 = scmp.ne.s32.totalorder %s68, %s69
      %p78 = scmp.eq.s32.totalorder %s16, 0
      %p79 = por %p77, %p78
      %p80 = scmp.ne.s32.totalorder %s68, %s69
      %p81 = scmp.eq.s32.totalorder %s17, 1
      %p82 = por %p80, %p81
      %p84 = scmp.ne.s32.totalorder %s69, %s83
      %p85 = scmp.eq.s32.totalorder %s17, 0
      %p86 = por %p84, %p85
      %s87 = ssub.s32 %s11, %s18
      %p88 = scmp.eq.s32.totalorder %s87, 0
      %s90 = sadd.s32 %s89, 1
      %s91 = scalar_select %p88, %s89, %s90
      %p94 = pneg %p88
      %p95 = scmp.eq.s32.totalorder %s11, 1
      %p96 = por %p94, %p95
      %p97 = scmp.ne.s32.totalorder %s89, %s92
      %p98 = scmp.eq.s32.totalorder %s11, 0
      %p99 = por %p97, %p98
      %p100 = scmp.ne.s32.totalorder %s89, %s92
      %p101 = scmp.eq.s32.totalorder %s16, 1
      %p102 = por %p100, %p101
      %p103 = scmp.ne.s32.totalorder %s92, %s93
      %p104 = scmp.eq.s32.totalorder %s16, 0
      %p105 = por %p103, %p104
      %p106 = scmp.ne.s32.totalorder %s92, %s93
      %p107 = scmp.eq.s32.totalorder %s17, 1
      %p108 = por %p106, %p107
      %p110 = scmp.ne.s32.totalorder %s93, %s109
      %p111 = scmp.eq.s32.totalorder %s17, 0
      %p112 = por %p110, %p111
      %p113 = scmp.le.s32.totalorder 1, %s11
      %p114 = scmp.lt.s32.totalorder %s11, 3
      %p115 = pnand %p113, %p114
      %p116 = pneg %p115
      // Predicated region
      $region9: #{_lambda_.24} parent=5 // pred_check
        _
      $region10: #{_lambda_.24} parent=5 // pred_check_branch
        %118 = sbr.rel (%p115) target = $region12
      $region11: #{_lambda_.24} parent=5 // pred_region
        %s119 = ssub.s32 %s11, 1
        // Predicated region
        $region13: #{_lambda_.24} parent=11 // pred_check
          %p120 = pneg %p58
        $region14: #{_lambda_.24} parent=11 // pred_check_branch
          %122 = sbr.rel (%p120) target = $region16
        $region15: #{_lambda_.24} parent=11 // pred_region
          %124 = vsyncadd [#allocation3], 0
          %s125 = sshll.u32 %s1, 4
          %s126 = int_to_ptr.hbm [resolvable:$true] %s125
          %s127 = sshll.u32 [#allocation2], 4
          %s128 = int_to_ptr.vmem [resolvable:$true] %s127
          %133 = dma.hbm_to_vmem [thread:$0]  %s126, 768, %s128, [#allocation3], 64, 64, 4
        $region16: #{_lambda_.24} parent=11 // pred_fallthru
          _
        // Predicated region
        $region17: #{_lambda_.24} parent=11 // pred_check
          %p134 = pneg %p79
        $region18: #{_lambda_.24} parent=11 // pred_check_branch
          %136 = sbr.rel (%p134) target = $region20
        $region19: #{_lambda_.24} parent=11 // pred_region
          %138 = vsyncadd [#allocation5], 0
          %s140 = sshll.u32 %s2, 4
          %s141 = int_to_ptr.hbm [resolvable:$true] %s140
          %s142 = sshll.u32 [#allocation4], 4
          %s143 = int_to_ptr.vmem [resolvable:$true] %s142
          %145 = dma.hbm_to_vmem [thread:$0]  %s141, 16, %s143, [#allocation5]
        $region20: #{_lambda_.24} parent=11 // pred_fallthru
          _
      $region12: #{_lambda_.24} parent=5 // pred_fallthru
        _
      %p146 = scmp.lt.s32.totalorder %s11, 2
      // Predicated region
      $region21: #{_lambda_.24} parent=5 // pred_check
        %p147 = pneg %p146
      $region22: #{_lambda_.24} parent=5 // pred_check_branch
        %149 = sbr.rel (%p147) target = $region24
      $region23: #{_lambda_.24} parent=5 // pred_region
        // Predicated region
        $region25: #{_lambda_.24} parent=23 // pred_check
          %p150 = pneg %p31
        $region26: #{_lambda_.24} parent=23 // pred_check_branch
          %152 = sbr.rel (%p150) target = $region28
        $region27: #{_lambda_.24} parent=23 // pred_region
          %p153 = scmp.lt.s32.totalorder %s11, 1
          %s154 = scalar_select %p153, %s11, 1
          %s155 = smul.addr %s154, 2
          %s156 = smul.addr %s155, 4
          %s157 = scalar_lea.vmem %s0, %s156
        $region28: #{_lambda_.24} parent=23 // pred_fallthru
          _
      $region24: #{_lambda_.24} parent=5 // pred_fallthru
        _
      %p158 = scmp.le.s32.totalorder 1, %s11
      %p159 = scmp.lt.s32.totalorder %s11, 3
      %p160 = pnand %p158, %p159
      %p161 = pneg %p160
      // Predicated region
      $region29: #{_lambda_.24} parent=5 // pred_check
        _
      $region30: #{_lambda_.24} parent=5 // pred_check_branch
        %163 = sbr.rel (%p160) target = $region32
      $region31: #{_lambda_.24} parent=5 // pred_region
        %s164 = ssub.s32 %s11, 1
        // Predicated region
        $region33: #{_lambda_.24} parent=31 // pred_check
          %p165 = pneg %p58
        $region34: #{_lambda_.24} parent=31 // pred_check_branch
          %167 = sbr.rel (%p165) target = $region36
        $region35: #{_lambda_.24} parent=31 // pred_region
          %169 = dma.done [#allocation3], 768
        $region36: #{_lambda_.24} parent=31 // pred_fallthru
          _
        // Predicated region
        $region37: #{_lambda_.24} parent=31 // pred_check
          %p170 = pneg %p79
        $region38: #{_lambda_.24} parent=31 // pred_check_branch
          %172 = sbr.rel (%p170) target = $region40
        $region39: #{_lambda_.24} parent=31 // pred_region
          %174 = dma.done [#allocation5], 16
        $region40: #{_lambda_.24} parent=31 // pred_fallthru
          _
        %p175 = scmp.lt.s32.totalorder %s16, 1
        %s176 = scalar_select %p175, %s16, 1
        %s177 = smul.addr %s176, 2
        %s178 = smul.addr %s177, 4
        %s179 = scalar_lea.vmem %s0, %s178
        %p180 = pneg %p37
        %p181 = pneg %p34
        %p182 = pneg %p58
        %p183 = pneg %p55
        %p184 = pneg %p79
        %p185 = pneg %p76
        %p186 = pneg %p105
        %p187 = pneg %p102
        %p188 = scmp.lt.s32.totalorder %s16, 1
        %s189 = scalar_select %p188, %s16, 1
        %s190 = smul.addr %s189, 2
        %s191 = smul.addr %s190, 4
        %s192 = scalar_lea.vmem %s3, %s191
        %p193 = scmp.lt.s32.totalorder %s16, 1
        %s194 = scalar_select %p193, %s16, 1
        %s195 = smul.addr %s194, 2
        %s196 = smul.addr %s195, 4
        %s197 = scalar_lea.vmem %s0, %s196
        %p198 = scmp.lt.s32.totalorder %s16, 1
        %s199 = scalar_select %p198, %s16, 1
        %s200 = smul.addr %s199, 2
        %s201 = smul.addr %s200, 4
        %s202 = scalar_lea.vmem %s3, %s201
        %v204 = vld [vmem:[%s197] sm:$0xf]
        %v205 = vld [vmem:[%s197 + $0x4] sm:$0xf]
        %v208 = vunpack.c.l.b16 %v204
        %v209 = vunpack.c.l.b16 %v205
        %v210 = vpack.c.b16 %v209, %v208
        %v212 = vshrl.u32 %v210, 16
        %v214 = vrot.slane %v212, 7
        %v215 = vshll.u32 %v210, 16
        %v217 = vor.u32 %v214, %v215
        %vm220 = vcmask 1040384
        %vm221 = vsmask.f32 256
        %vm222 = vmand %vm220, %vm221
        %v223 = vsel %vm222, 0, %v217
        %v224 = vsel %vm222, %v214, 0
        %vm225 = vsmask.f32 7424
        %v227 = vshrl.u32 %v223, 16
        %v229 = vshll.u32 %v223, 16
        %v231 = vrot.slane %v229, 1
        %v232 = vor.u32 %v227, %v231
        %v234 = vshll.u32 %v224, 16
        %v236 = vrot.slane %v234, 1
        %v237 = vsel %vm225, %v232, %v236
        %238 = vrot.lane.b32.xlu0 %v237, 32
        %v239 = vpop.permute.xlu0 %238
        %vm242 = vcmask 1046528
        %v243 = vrot.slane %v223, 1
        %v244 = vrot.slane %v224, 1
        %v245 = vsel %vm242, %v243, %v244
        %246 = vrot.lane.b32.xlu0 %v245, 64
        %v247 = vpop.permute.xlu0 %246
        %vm248 = vcmask 261120
        %v250 = vsel %vm248, %v223, %v239
        %vm251 = vcmask 523264
        %v253 = vsel %vm251, %v250, %v247
        %v254 = vld [vmem:[#allocation2] sm:$0xf]
        %v255 = vld [vmem:[#allocation2 + $0x4] sm:$0xf]
        %v256 = vld [vmem:[#allocation2 + $0x8] sm:$0xf]
        %v257 = vld [vmem:[#allocation2 + $0xc] sm:$0xf]
        %v258 = vld [vmem:[#allocation2 + $0x10] sm:$0xf]
        %v259 = vld [vmem:[#allocation2 + $0x14] sm:$0xf]
        %v260 = vld [vmem:[#allocation2 + $0x18] sm:$0xf]
        %v261 = vld [vmem:[#allocation2 + $0x1c] sm:$0xf]
        %v262 = vld [vmem:[#allocation2 + $0x20] sm:$0xf]
        %v263 = vld [vmem:[#allocation2 + $0x24] sm:$0xf]
        %v264 = vld [vmem:[#allocation2 + $0x28] sm:$0xf]
        %v265 = vld [vmem:[#allocation2 + $0x2c] sm:$0xf]
        %v266 = vld [vmem:[#allocation4] sm:$0x1]
        %v268 = vperm.slane %v266, 0
        %v282 = vunpack.c.l.b16 %v254
        %v283 = vunpack.c.l.b16 %v255
        %v284 = vunpack.c.l.b16 %v256
        %v285 = vunpack.c.l.b16 %v257
        %v286 = vunpack.c.l.b16 %v258
        %v287 = vunpack.c.l.b16 %v259
        %v288 = vunpack.c.l.b16 %v260
        %v289 = vunpack.c.l.b16 %v261
        %v290 = vunpack.c.l.b16 %v262
        %v291 = vunpack.c.l.b16 %v263
        %v292 = vunpack.c.l.b16 %v264
        %v293 = vunpack.c.l.b16 %v265
        %v294 = vpack.c.b16 %v283, %v282
        %v295 = vpack.c.b16 %v285, %v284
        %v296 = vpack.c.b16 %v287, %v286
        %v297 = vpack.c.b16 %v289, %v288
        %v298 = vpack.c.b16 %v291, %v290
        %v299 = vpack.c.b16 %v293, %v292
        %vm306 = vcmask 785408
        %v307 = vsel %vm306, %v253, 0
        %309 = vmatpush.bf16.msra.mxu0 0
        %310 = vmatpush.bf16.msra.mxu0 0
        %311 = vmatpush.bf16.msra.mxu0 %v299
        %312 = vmatpush.bf16.msra.mxu0 %v298
        %313 = vmatpush.bf16.msra.mxu0 %v297
        %314 = vmatpush.bf16.msra.mxu0 %v296
        %315 = vmatpush.bf16.msra.mxu0 %v295
        %316 = vmatpush.bf16.msra.mxu0 %v294
        %317 = vmatmul.bf16.gmra.mxu0 %v307
        %v318 = vpop.f32.mrf.mxu0
        %v319 = vadd.f32 %v268, %v318
        %v320 = vpop.f32.mrf.mxu0
        %v321 = vadd.f32 %v268, %v320
        %322 = vdwg.mxu0
        %v323 = vpack.c.bf16 %v319, %v319
        %v324 = vpack.c.bf16 %v321, %v321
        %vm325 = vcmask 519168
        %326 = vst.msk [vmem:[%s202] sm:$0xf] %vm325, %v323
        %327 = vst.msk [vmem:[%s202 + $0x4] sm:$0xf] %vm325, %v324
        %p328 = scmp.lt.s32.totalorder %s16, 1
        %s329 = scalar_select %p328, %s16, 1
        %s330 = smul.addr %s329, 2
        %s331 = smul.addr %s330, 4
        %s332 = scalar_lea.vmem %s3, %s331
        // Predicated region
        $region41: #{_lambda_.24} parent=31 // pred_check
          %p333 = pneg %p102
        $region42: #{_lambda_.24} parent=31 // pred_check_branch
          %335 = sbr.rel (%p333) target = $region44
        $region43: #{_lambda_.24} parent=31 // pred_region
          _
        $region44: #{_lambda_.24} parent=31 // pred_fallthru
          _
      $region32: #{_lambda_.24} parent=5 // pred_fallthru
        _
      %p336 = scmp.le.s32.totalorder 2, %s11
      // Predicated region
      $region45: #{_lambda_.24} parent=5 // pred_check
        %p337 = pneg %p336
      $region46: #{_lambda_.24} parent=5 // pred_check_branch
        %339 = sbr.rel (%p337) target = $region48
      $region47: #{_lambda_.24} parent=5 // pred_region
        %s340 = ssub.s32 %s11, 2
        // Predicated region
        $region49: #{_lambda_.24} parent=47 // pred_check
          %p341 = pneg %p108
        $region50: #{_lambda_.24} parent=47 // pred_check_branch
          %343 = sbr.rel (%p341) target = $region52
        $region51: #{_lambda_.24} parent=47 // pred_region
          %p344 = scmp.lt.s32.totalorder %s17, 1
          %s345 = scalar_select %p344, %s17, 1
          %s346 = smul.addr %s345, 2
          %s347 = smul.addr %s346, 4
          %s348 = scalar_lea.vmem %s3, %s347
        $region52: #{_lambda_.24} parent=47 // pred_fallthru
          _
      $region48: #{_lambda_.24} parent=5 // pred_fallthru
        _
    $region6: #{_lambda_.24} parent=1 // loop_footer
      %s15 = sadd.s32 1, %s11
    $region7: #{_lambda_.24} parent=1 // loop_footer_branch
      %10 = sbr.rel target = $region3
    $region8: #{_lambda_.24} parent=1 // loop_exit
      _
    %349 = vsyncpa [#allocation3], 1
    %s350 = scalar_lea.sflag [#allocation3], 1
    %351 = vsyncpa %s350, 1
    %352 = vsyncpa [#allocation5], 1

// kernel: _lambda_.23
$region0: #{_lambda_.23}
  #allocation0 [shape = 'u32[]', space=smem, size = 0x4, offset = 0x4, fixed_abs, tag = 'smem constant byte address 0x4 - core index']
  #allocation1 [shape = 'u32[72,128]{1,0:T(1,128)}', space=vmem, size = 0x9000, scoped, tag = 'internal scratch']
  %s0 = inlined_call_operand.vmem [shape: bf16[2,16,32], index: 0, kind: input, shape index: {}]
  %s1 = inlined_call_operand.vmem [shape: f32[1,32], index: 1, kind: input, shape index: {}]
  %s2 = inlined_call_operand.vmem [shape: f32[1,32], index: 2, kind: input, shape index: {}]
  %s3 = inlined_call_operand.hbm [shape: f32[32,32], index: 3, kind: input, shape index: {}]
  %s4 = inlined_call_operand.hbm [shape: bf16[96,32], index: 4, kind: input, shape index: {}]
  %s5 = inlined_call_operand.hbm [shape: f32[1,32], index: 5, kind: input, shape index: {}]
  %s6 = inlined_call_operand.vmem [shape: bf16[2,16,32], index: 6, kind: input, shape index: {}]
  %s7 = inlined_call_operand.vmem [shape: bf16[2,16,32], index: 7, kind: output, shape index: {}]
  %s8 = sld [smem:[#allocation0]]
  $region73: #{_lambda_.23} parent=0
    _
  %s10 = ssub.s32 1, %s8
  %s11 = scalar_select 0, %s10, %s8
  $region1: #{_lambda_.23} parent=0
    #allocation2 [shape = 'u8[16384]{0}', space=vmem, size = 0x4000, scoped, tag = 'input window, operand 3, single buffered']
    #allocation3 [shape = 's32[2]{0}', space=sflag, size = 0x8, scoped, tag = 'scoped memory for _lambda_.23']
    #allocation4 [shape = 'u8[24576]{0}', space=vmem, size = 0x6000, scoped, tag = 'input window, operand 4, single buffered']
    #allocation5 [shape = 's32[1]{0}', space=sflag, size = 0x4, scoped, tag = 'scoped memory for _lambda_.23']
    #allocation6 [shape = 'u8[512]{0}', space=vmem, size = 0x400, scoped, tag = 'input window, operand 5, single buffered']
    %12 = vsyncpa [#allocation3], 0
    %13 = vsyncpa [#allocation5], 0
    loop: start=0, step=1, limit=4
    $region2: #{_lambda_.23} parent=1 // loop_pre_header
      _
    $region3: #{_lambda_.23} parent=1 // loop_header
      %s15 = sphi 0, %s19
      %p16 = scmp.ge.s32.totalorder %s15, 4
      %s25 = sphi 0, %s27
      %s28 = sphi 0, %s25
      %s29 = sphi 0, %s28
      %s45 = sphi 0, %s29
      %s49 = sphi 0, %s49
      %s51 = sphi 0, %s49
      %s52 = sphi 0, %s51
      %s66 = sphi 0, %s52
      %s70 = sphi 0, %s70
      %s72 = sphi 0, %s70
      %s73 = sphi 0, %s72
      %s87 = sphi 0, %s73
      %s91 = sphi 0, %s91
      %s93 = sphi 0, %s91
      %s94 = sphi 0, %s93
      %s108 = sphi 0, %s94
      %s112 = sphi 0, %s112
      %s114 = sphi 0, %s112
      %s115 = sphi 0, %s114
      %s129 = sphi 0, %s115
      %s133 = sphi 0, %s133
      %s135 = sphi 0, %s133
      %s136 = sphi 0, %s135
      %s150 = sphi 0, %s136
      %s156 = sphi 0, %s158
      %s159 = sphi 0, %s156
      %s160 = sphi 0, %s159
      %s176 = sphi 0, %s160
      %s182 = sphi 0, %s184
      %s185 = sphi 0, %s182
      %s186 = sphi 0, %s185
      %s202 = sphi 0, %s186
    $region4: #{_lambda_.23} parent=1 // loop_header_branch
      %18 = sbr.rel (%p16) target = $region8
    $region5: #{_lambda_.23} parent=1 // loop_body
      %s20 = ssub.s32 %s15, 1
      %s21 = ssub.s32 %s15, 2
      %s22 = sadd.s32 %s15, 1
      %s23 = ssub.s32 %s15, %s22
      %p24 = scmp.eq.s32.totalorder %s23, 0
      %s26 = sadd.s32 %s25, 1
      %s27 = scalar_select %p24, %s25, %s26
      %p30 = pneg %p24
      %p31 = scmp.eq.s32.totalorder %s15, 1
      %p32 = por %p30, %p31
      %p33 = scmp.ne.s32.totalorder %s25, %s28
      %p34 = scmp.eq.s32.totalorder %s15, 0
      %p35 = por %p33, %p34
      %p36 = scmp.ne.s32.totalorder %s25, %s28
      %p37 = scmp.eq.s32.totalorder %s20, 1
      %p38 = por %p36, %p37
      %p39 = scmp.ne.s32.totalorder %s28, %s29
      %p40 = scmp.eq.s32.totalorder %s20, 0
      %p41 = por %p39, %p40
      %p42 = scmp.ne.s32.totalorder %s28, %s29
      %p43 = scmp.eq.s32.totalorder %s21, 1
      %p44 = por %p42, %p43
      %p46 = scmp.ne.s32.totalorder %s29, %s45
      %p47 = scmp.eq.s32.totalorder %s21, 0
      %p48 = por %p46, %p47
      %s50 = sadd.s32 %s49, 1
      %p53 = scmp.eq.s32.totalorder %s15, 1
      %p54 = scmp.ne.s32.totalorder %s49, %s51
      %p55 = scmp.eq.s32.totalorder %s15, 0
      %p56 = por %p54, %p55
      %p57 = scmp.ne.s32.totalorder %s49, %s51
      %p58 = scmp.eq.s32.totalorder %s20, 1
      %p59 = por %p57, %p58
      %p60 = scmp.ne.s32.totalorder %s51, %s52
      %p61 = scmp.eq.s32.totalorder %s20, 0
      %p62 = por %p60, %p61
      %p63 = scmp.ne.s32.totalorder %s51, %s52
      %p64 = scmp.eq.s32.totalorder %s21, 1
      %p65 = por %p63, %p64
      %p67 = scmp.ne.s32.totalorder %s52, %s66
      %p68 = scmp.eq.s32.totalorder %s21, 0
      %p69 = por %p67, %p68
      %s71 = sadd.s32 %s70, 1
      %p74 = scmp.eq.s32.totalorder %s15, 1
      %p75 = scmp.ne.s32.totalorder %s70, %s72
      %p76 = scmp.eq.s32.totalorder %s15, 0
      %p77 = por %p75, %p76
      %p78 = scmp.ne.s32.totalorder %s70, %s72
      %p79 = scmp.eq.s32.totalorder %s20, 1
      %p80 = por %p78, %p79
      %p81 = scmp.ne.s32.totalorder %s72, %s73
      %p82 = scmp.eq.s32.totalorder %s20, 0
      %p83 = por %p81, %p82
      %p84 = scmp.ne.s32.totalorder %s72, %s73
      %p85 = scmp.eq.s32.totalorder %s21, 1
      %p86 = por %p84, %p85
      %p88 = scmp.ne.s32.totalorder %s73, %s87
      %p89 = scmp.eq.s32.totalorder %s21, 0
      %p90 = por %p88, %p89
      %s92 = sadd.s32 %s91, 1
      %p95 = scmp.eq.s32.totalorder %s15, 1
      %p96 = scmp.ne.s32.totalorder %s91, %s93
      %p97 = scmp.eq.s32.totalorder %s15, 0
      %p98 = por %p96, %p97
      %p99 = scmp.ne.s32.totalorder %s91, %s93
      %p100 = scmp.eq.s32.totalorder %s20, 1
      %p101 = por %p99, %p100
      %p102 = scmp.ne.s32.totalorder %s93, %s94
      %p103 = scmp.eq.s32.totalorder %s20, 0
      %p104 = por %p102, %p103
      %p105 = scmp.ne.s32.totalorder %s93, %s94
      %p106 = scmp.eq.s32.totalorder %s21, 1
      %p107 = por %p105, %p106
      %p109 = scmp.ne.s32.totalorder %s94, %s108
      %p110 = scmp.eq.s32.totalorder %s21, 0
      %p111 = por %p109, %p110
      %s113 = sadd.s32 %s112, 1
      %p116 = scmp.eq.s32.totalorder %s15, 1
      %p117 = scmp.ne.s32.totalorder %s112, %s114
      %p118 = scmp.eq.s32.totalorder %s15, 0
      %p119 = por %p117, %p118
      %p120 = scmp.ne.s32.totalorder %s112, %s114
      %p121 = scmp.eq.s32.totalorder %s20, 1
      %p122 = por %p120, %p121
      %p123 = scmp.ne.s32.totalorder %s114, %s115
      %p124 = scmp.eq.s32.totalorder %s20, 0
      %p125 = por %p123, %p124
      %p126 = scmp.ne.s32.totalorder %s114, %s115
      %p127 = scmp.eq.s32.totalorder %s21, 1
      %p128 = por %p126, %p127
      %p130 = scmp.ne.s32.totalorder %s115, %s129
      %p131 = scmp.eq.s32.totalorder %s21, 0
      %p132 = por %p130, %p131
      %s134 = sadd.s32 %s133, 1
      %p137 = scmp.eq.s32.totalorder %s15, 1
      %p138 = scmp.ne.s32.totalorder %s133, %s135
      %p139 = scmp.eq.s32.totalorder %s15, 0
      %p140 = por %p138, %p139
      %p141 = scmp.ne.s32.totalorder %s133, %s135
      %p142 = scmp.eq.s32.totalorder %s20, 1
      %p143 = por %p141, %p142
      %p144 = scmp.ne.s32.totalorder %s135, %s136
      %p145 = scmp.eq.s32.totalorder %s20, 0
      %p146 = por %p144, %p145
      %p147 = scmp.ne.s32.totalorder %s135, %s136
      %p148 = scmp.eq.s32.totalorder %s21, 1
      %p149 = por %p147, %p148
      %p151 = scmp.ne.s32.totalorder %s136, %s150
      %p152 = scmp.eq.s32.totalorder %s21, 0
      %p153 = por %p151, %p152
      %s154 = ssub.s32 %s15, %s22
      %p155 = scmp.eq.s32.totalorder %s154, 0
      %s157 = sadd.s32 %s156, 1
      %s158 = scalar_select %p155, %s156, %s157
      %p161 = pneg %p155
      %p162 = scmp.eq.s32.totalorder %s15, 1
      %p163 = por %p161, %p162
      %p164 = scmp.ne.s32.totalorder %s156, %s159
      %p165 = scmp.eq.s32.totalorder %s15, 0
      %p166 = por %p164, %p165
      %p167 = scmp.ne.s32.totalorder %s156, %s159
      %p168 = scmp.eq.s32.totalorder %s20, 1
      %p169 = por %p167, %p168
      %p170 = scmp.ne.s32.totalorder %s159, %s160
      %p171 = scmp.eq.s32.totalorder %s20, 0
      %p172 = por %p170, %p171
      %p173 = scmp.ne.s32.totalorder %s159, %s160
      %p174 = scmp.eq.s32.totalorder %s21, 1
      %p175 = por %p173, %p174
      %p177 = scmp.ne.s32.totalorder %s160, %s176
      %p178 = scmp.eq.s32.totalorder %s21, 0
      %p179 = por %p177, %p178
      %s180 = ssub.s32 %s15, %s22
      %p181 = scmp.eq.s32.totalorder %s180, 0
      %s183 = sadd.s32 %s182, 1
      %s184 = scalar_select %p181, %s182, %s183
      %p187 = pneg %p181
      %p188 = scmp.eq.s32.totalorder %s15, 1
      %p189 = por %p187, %p188
      %p190 = scmp.ne.s32.totalorder %s182, %s185
      %p191 = scmp.eq.s32.totalorder %s15, 0
      %p192 = por %p190, %p191
      %p193 = scmp.ne.s32.totalorder %s182, %s185
      %p194 = scmp.eq.s32.totalorder %s20, 1
      %p195 = por %p193, %p194
      %p196 = scmp.ne.s32.totalorder %s185, %s186
      %p197 = scmp.eq.s32.totalorder %s20, 0
      %p198 = por %p196, %p197
      %p199 = scmp.ne.s32.totalorder %s185, %s186
      %p200 = scmp.eq.s32.totalorder %s21, 1
      %p201 = por %p199, %p200
      %p203 = scmp.ne.s32.totalorder %s186, %s202
      %p204 = scmp.eq.s32.totalorder %s21, 0
      %p205 = por %p203, %p204
      %p206 = scmp.le.s32.totalorder 1, %s15
      %p207 = scmp.lt.s32.totalorder %s15, 3
      %p208 = pnand %p206, %p207
      %p209 = pneg %p208
      // Predicated region
      $region9: #{_lambda_.23} parent=5 // pred_check
        _
      $region10: #{_lambda_.23} parent=5 // pred_check_branch
        %211 = sbr.rel (%p208) target = $region12
      $region11: #{_lambda_.23} parent=5 // pred_region
        %s212 = ssub.s32 %s15, 1
        // Predicated region
        $region13: #{_lambda_.23} parent=11 // pred_check
          %p213 = pneg %p62
        $region14: #{_lambda_.23} parent=11 // pred_check_branch
          %215 = sbr.rel (%p213) target = $region16
        $region15: #{_lambda_.23} parent=11 // pred_region
          _
        $region16: #{_lambda_.23} parent=11 // pred_fallthru
          _
        // Predicated region
        $region17: #{_lambda_.23} parent=11 // pred_check
          %p216 = pneg %p83
        $region18: #{_lambda_.23} parent=11 // pred_check_branch
          %218 = sbr.rel (%p216) target = $region20
        $region19: #{_lambda_.23} parent=11 // pred_region
          _
        $region20: #{_lambda_.23} parent=11 // pred_fallthru
          _
        // Predicated region
        $region21: #{_lambda_.23} parent=11 // pred_check
          %p219 = pneg %p104
        $region22: #{_lambda_.23} parent=11 // pred_check_branch
          %221 = sbr.rel (%p219) target = $region24
        $region23: #{_lambda_.23} parent=11 // pred_region
          %223 = vsyncadd [#allocation3], 0
          %s224 = sshll.u32 %s3, 4
          %s225 = int_to_ptr.hbm [resolvable:$true] %s224
          %s226 = sshll.u32 [#allocation2], 4
          %s227 = int_to_ptr.vmem [resolvable:$true] %s226
          %232 = dma.hbm_to_vmem [thread:$0]  %s225, 512, %s227, [#allocation3], 128, 128, 8
        $region24: #{_lambda_.23} parent=11 // pred_fallthru
          _
        // Predicated region
        $region25: #{_lambda_.23} parent=11 // pred_check
          %p233 = pneg %p125
        $region26: #{_lambda_.23} parent=11 // pred_check_branch
          %235 = sbr.rel (%p233) target = $region28
        $region27: #{_lambda_.23} parent=11 // pred_region
          %237 = vsyncadd [#allocation5], 0
          %s238 = sshll.u32 %s4, 4
          %s239 = int_to_ptr.hbm [resolvable:$true] %s238
          %s240 = sshll.u32 [#allocation4], 4
          %s241 = int_to_ptr.vmem [resolvable:$true] %s240
          %246 = dma.hbm_to_vmem [thread:$0]  %s239, 768, %s241, [#allocation5], 64, 64, 4
        $region28: #{_lambda_.23} parent=11 // pred_fallthru
          _
        // Predicated region
        $region29: #{_lambda_.23} parent=11 // pred_check
          %p247 = pneg %p146
        $region30: #{_lambda_.23} parent=11 // pred_check_branch
          %249 = sbr.rel (%p247) target = $region32
        $region31: #{_lambda_.23} parent=11 // pred_region
          %251 = vsyncadd [#allocation5], 0
          %s253 = sshll.u32 %s5, 4
          %s254 = int_to_ptr.hbm [resolvable:$true] %s253
          %s255 = sshll.u32 [#allocation6], 4
          %s256 = int_to_ptr.vmem [resolvable:$true] %s255
          %258 = dma.hbm_to_vmem [thread:$0]  %s254, 16, %s256, [#allocation5]
        $region32: #{_lambda_.23} parent=11 // pred_fallthru
          _
      $region12: #{_lambda_.23} parent=5 // pred_fallthru
        _
      %p259 = scmp.lt.s32.totalorder %s15, 2
      // Predicated region
      $region33: #{_lambda_.23} parent=5 // pred_check
        %p260 = pneg %p259
      $region34: #{_lambda_.23} parent=5 // pred_check_branch
        %262 = sbr.rel (%p260) target = $region36
      $region35: #{_lambda_.23} parent=5 // pred_region
        // Predicated region
        $region37: #{_lambda_.23} parent=35 // pred_check
          %p263 = pneg %p35
        $region38: #{_lambda_.23} parent=35 // pred_check_branch
          %265 = sbr.rel (%p263) target = $region40
        $region39: #{_lambda_.23} parent=35 // pred_region
          %p266 = scmp.lt.s32.totalorder %s15, 1
          %s267 = scalar_select %p266, %s15, 1
          %s268 = smul.addr %s267, 2
          %s269 = smul.addr %s268, 4
          %s270 = scalar_lea.vmem %s0, %s269
        $region40: #{_lambda_.23} parent=35 // pred_fallthru
          _
        // Predicated region
        $region41: #{_lambda_.23} parent=35 // pred_check
          %p271 = pneg %p166
        $region42: #{_lambda_.23} parent=35 // pred_check_branch
          %273 = sbr.rel (%p271) target = $region44
        $region43: #{_lambda_.23} parent=35 // pred_region
          %p274 = scmp.lt.s32.totalorder %s15, 1
          %s275 = scalar_select %p274, %s15, 1
          %s276 = smul.addr %s275, 2
          %s277 = smul.addr %s276, 4
          %s278 = scalar_lea.vmem %s6, %s277
        $region44: #{_lambda_.23} parent=35 // pred_fallthru
          _
      $region36: #{_lambda_.23} parent=5 // pred_fallthru
        _
      %p279 = scmp.le.s32.totalorder 1, %s15
      %p280 = scmp.lt.s32.totalorder %s15, 3
      %p281 = pnand %p279, %p280
      %p282 = pneg %p281
      // Predicated region
      $region45: #{_lambda_.23} parent=5 // pred_check
        _
      $region46: #{_lambda_.23} parent=5 // pred_check_branch
        %284 = sbr.rel (%p281) target = $region48
      $region47: #{_lambda_.23} parent=5 // pred_region
        %s285 = ssub.s32 %s15, 1
        // Predicated region
        $region49: #{_lambda_.23} parent=47 // pred_check
          %p286 = pneg %p104
        $region50: #{_lambda_.23} parent=47 // pred_check_branch
          %288 = sbr.rel (%p286) target = $region52
        $region51: #{_lambda_.23} parent=47 // pred_region
          %290 = dma.done [#allocation3], 512
        $region52: #{_lambda_.23} parent=47 // pred_fallthru
          _
        // Predicated region
        $region53: #{_lambda_.23} parent=47 // pred_check
          %p291 = pneg %p125
        $region54: #{_lambda_.23} parent=47 // pred_check_branch
          %293 = sbr.rel (%p291) target = $region56
        $region55: #{_lambda_.23} parent=47 // pred_region
          %295 = dma.done [#allocation5], 768
        $region56: #{_lambda_.23} parent=47 // pred_fallthru
          _
        // Predicated region
        $region57: #{_lambda_.23} parent=47 // pred_check
          %p296 = pneg %p146
        $region58: #{_lambda_.23} parent=47 // pred_check_branch
          %298 = sbr.rel (%p296) target = $region60
        $region59: #{_lambda_.23} parent=47 // pred_region
          %300 = dma.done [#allocation5], 16
        $region60: #{_lambda_.23} parent=47 // pred_fallthru
          _
        %p301 = scmp.lt.s32.totalorder %s20, 1
        %s302 = scalar_select %p301, %s20, 1
        %s303 = smul.addr %s302, 2
        %s304 = smul.addr %s303, 4
        %s305 = scalar_lea.vmem %s0, %s304
        %p306 = pneg %p41
        %p307 = pneg %p38
        %p308 = pneg %p62
        %p309 = pneg %p59
        %p310 = pneg %p83
        %p311 = pneg %p80
        %p312 = pneg %p104
        %p313 = pneg %p101
        %p314 = pneg %p125
        %p315 = pneg %p122
        %p316 = pneg %p146
        %p317 = pneg %p143
        %p318 = scmp.lt.s32.totalorder %s20, 1
        %s319 = scalar_select %p318, %s20, 1
        %s320 = smul.addr %s319, 2
        %s321 = smul.addr %s320, 4
        %s322 = scalar_lea.vmem %s6, %s321
        %p323 = pneg %p172
        %p324 = pneg %p169
        %p325 = pneg %p198
        %p326 = pneg %p195
        %p327 = scmp.lt.s32.totalorder %s20, 1
        %s328 = scalar_select %p327, %s20, 1
        %s329 = smul.addr %s328, 2
        %s330 = smul.addr %s329, 4
        %s331 = scalar_lea.vmem %s7, %s330
        %p332 = scmp.lt.s32.totalorder %s20, 1
        %s333 = scalar_select %p332, %s20, 1
        %s334 = smul.addr %s333, 2
        %s335 = smul.addr %s334, 4
        %s336 = scalar_lea.vmem %s0, %s335
        %p337 = scmp.lt.s32.totalorder %s20, 1
        %s338 = scalar_select %p337, %s20, 1
        %s339 = smul.addr %s338, 2
        %s340 = smul.addr %s339, 4
        %s341 = scalar_lea.vmem %s6, %s340
        %p342 = scmp.lt.s32.totalorder %s20, 1
        %s343 = scalar_select %p342, %s20, 1
        %s344 = smul.addr %s343, 2
        %s345 = smul.addr %s344, 4
        %s346 = scalar_lea.vmem %s7, %s345
        %v348 = vld [vmem:[%s336] sm:$0xf]
        %v349 = vld [vmem:[%s336 + $0x4] sm:$0xf]
        %v350 = vunpack.c.l.bf16 %v348
        %v351 = vunpack.c.l.bf16 %v349
        %vm352 = vcmask 261120
        %v353 = vsel %vm352, %v350, 0.0
        %v354 = vsel %vm352, %v351, 0.0
        %v355 = vadd.f32 %v353, %v354
        %v356 = vrot.slane %v355, 4
        %v357 = vadd.f32 %v355, %v356
        %v358 = vrot.slane %v357, 2
        %v359 = vadd.f32 %v357, %v358
        %v360 = vrot.slane %v359, 1
        %v361 = vadd.f32 %v359, %v360
        %v362 = vld [vmem:[#allocation2] sm:$0xff]
        %v363 = vld [vmem:[#allocation2 + $0x8] sm:$0xff]
        %v364 = vld [vmem:[#allocation2 + $0x10] sm:$0xff]
        %v365 = vld [vmem:[#allocation2 + $0x18] sm:$0xff]
        %v367 = vsel %vm352, %v361, 0
        %369 = vmatpush.msra.mxu0 0.0
        %370 = vmatpush.msra.mxu0 0.0
        %371 = vmatpush.msra.mxu0 0.0
        %372 = vmatpush.msra.mxu0 0.0
        %373 = vmatpush.msra.mxu0 0.0
        %374 = vmatpush.msra.mxu0 0.0
        %375 = vmatpush.msra.mxu0 0.0
        %376 = vmatpush.msra.mxu0 0.0
        %377 = vmatpush.msra.mxu0 0.0
        %378 = vmatpush.msra.mxu0 0.0
        %379 = vmatpush.msra.mxu0 0.0
        %380 = vmatpush.msra.mxu0 0.0
        %381 = vmatpush.msra.mxu0 %v365
        %382 = vmatpush.msra.mxu0 %v364
        %383 = vmatpush.msra.mxu0 %v363
        %384 = vmatpush.msra.mxu0 %v362
        %385 = vmatmul.f32.gmra.mxu0 %v367
        %v386 = vpop.f32.mrf.mxu0
        %v387 = vadd.f32 0.0, %v386
        %388 = vdwg.mxu0
        %v389 = vmul.f32 %v387, 0.0078125
        %v390 = vperm.slane %v389, 0
        %v391 = vsub.f32 %v350, %v390
        %v392 = vsub.f32 %v351, %v390
        %v393 = vmul.f32 %v391, %v391
        %v394 = vmul.f32 %v392, %v392
        %v395 = vsel %vm352, %v393, 0.0
        %v396 = vsel %vm352, %v394, 0.0
        %v397 = vadd.f32 %v395, %v396
        %v398 = vrot.slane %v397, 4
        %v399 = vadd.f32 %v397, %v398
        %v400 = vrot.slane %v399, 2
        %v401 = vadd.f32 %v399, %v400
        %v402 = vrot.slane %v401, 1
        %v403 = vadd.f32 %v401, %v402
        %v405 = vsel %vm352, %v403, 0
        %407 = vmatpush.msra.mxu0 0.0
        %408 = vmatpush.msra.mxu0 0.0
        %409 = vmatpush.msra.mxu0 0.0
        %410 = vmatpush.msra.mxu0 0.0
        %411 = vmatpush.msra.mxu0 0.0
        %412 = vmatpush.msra.mxu0 0.0
        %413 = vmatpush.msra.mxu0 0.0
        %414 = vmatpush.msra.mxu0 0.0
        %415 = vmatpush.msra.mxu0 0.0
        %416 = vmatpush.msra.mxu0 0.0
        %417 = vmatpush.msra.mxu0 0.0
        %418 = vmatpush.msra.mxu0 0.0
        %419 = vmatpush.msra.mxu0 %v365
        %420 = vmatpush.msra.mxu0 %v364
        %421 = vmatpush.msra.mxu0 %v363
        %422 = vmatpush.msra.mxu0 %v362
        %423 = vmatmul.f32.gmra.mxu0 %v405
        %v424 = vpop.f32.mrf.mxu0
        %v425 = vadd.f32 0.0, %v424
        %426 = vdwg.mxu0
        %v427 = vmul.f32 %v425, 0.0078125
        %v428 = vadd.f32 %v427, 1e-05
        %v429 = vrsqrt.pop %v428
        %v430 = vmul.f32 %v429, %v428
        %v431 = vmul.f32 %v430, %v429
        %v432 = vmul.f32 0.5, %v431
        %v433 = vsub.f32 1.5, %v432
        %v434 = vmul.f32 %v429, %v433
        %vm435 = vweird.f32 %v428
        %vm436 = vweird.f32 %v429
        %vm437 = vmor %vm435, %vm436
        %v438 = vsel %vm437, %v429, %v434
        %v439 = vperm.slane %v438, 0
        %v440 = vmul.f32 %v391, %v439
        %v441 = vmul.f32 %v392, %v439
        %v442 = vld [vmem:[%s1] sm:$0x1]
        %v444 = vperm.slane %v442, 0
        %v446 = vmul.f32 %v440, %v444
        %v447 = vmul.f32 %v441, %v444
        %v448 = vld [vmem:[%s2] sm:$0x1]
        %v450 = vperm.slane %v448, 0
        %v452 = vadd.f32 %v446, %v450
        %v453 = vadd.f32 %v447, %v450
        %v454 = vmax.f32 %v452, 0.0
        %v455 = vmax.f32 %v453, 0.0
        %v456 = vpack.c.bf16 %v454, %v454
        %v457 = vpack.c.bf16 %v455, %v455
        %v460 = vunpack.c.l.b16 %v456
        %v461 = vunpack.c.l.b16 %v457
        %v462 = vpack.c.b16 %v461, %v460
        %v464 = vshrl.u32 %v462, 16
        %v466 = vrot.slane %v464, 7
        %v467 = vshll.u32 %v462, 16
        %v469 = vor.u32 %v466, %v467
        %vm472 = vcmask 1040384
        %vm473 = vsmask.f32 256
        %vm474 = vmand %vm472, %vm473
        %v475 = vsel %vm474, 0, %v469
        %v476 = vsel %vm474, %v466, 0
        %vm477 = vsmask.f32 7424
        %v479 = vshrl.u32 %v475, 16
        %v481 = vshll.u32 %v475, 16
        %v483 = vrot.slane %v481, 1
        %v484 = vor.u32 %v479, %v483
        %v486 = vshll.u32 %v476, 16
        %v488 = vrot.slane %v486, 1
        %v489 = vsel %vm477, %v484, %v488
        %490 = vrot.lane.b32.xlu0 %v489, 32
        %v491 = vpop.permute.xlu0 %490
        %vm494 = vcmask 1046528
        %v495 = vrot.slane %v475, 1
        %v496 = vrot.slane %v476, 1
        %v497 = vsel %vm494, %v495, %v496
        %498 = vrot.lane.b32.xlu0 %v497, 64
        %v499 = vpop.permute.xlu0 %498
        %v501 = vsel %vm352, %v475, %v491
        %vm502 = vcmask 523264
        %v504 = vsel %vm502, %v501, %v499
        %v505 = vld [vmem:[#allocation4] sm:$0xf]
        %v506 = vld [vmem:[#allocation4 + $0x4] sm:$0xf]
        %v507 = vld [vmem:[#allocation4 + $0x8] sm:$0xf]
        %v508 = vld [vmem:[#allocation4 + $0xc] sm:$0xf]
        %v509 = vld [vmem:[#allocation4 + $0x10] sm:$0xf]
        %v510 = vld [vmem:[#allocation4 + $0x14] sm:$0xf]
        %v511 = vld [vmem:[#allocation4 + $0x18] sm:$0xf]
        %v512 = vld [vmem:[#allocation4 + $0x1c] sm:$0xf]
        %v513 = vld [vmem:[#allocation4 + $0x20] sm:$0xf]
        %v514 = vld [vmem:[#allocation4 + $0x24] sm:$0xf]
        %v515 = vld [vmem:[#allocation4 + $0x28] sm:$0xf]
        %v516 = vld [vmem:[#allocation4 + $0x2c] sm:$0xf]
        %v517 = vld [vmem:[#allocation6] sm:$0x1]
        %v519 = vperm.slane %v517, 0
        %v533 = vunpack.c.l.b16 %v505
        %v534 = vunpack.c.l.b16 %v506
        %v535 = vunpack.c.l.b16 %v507
        %v536 = vunpack.c.l.b16 %v508
        %v537 = vunpack.c.l.b16 %v509
        %v538 = vunpack.c.l.b16 %v510
        %v539 = vunpack.c.l.b16 %v511
        %v540 = vunpack.c.l.b16 %v512
        %v541 = vunpack.c.l.b16 %v513
        %v542 = vunpack.c.l.b16 %v514
        %v543 = vunpack.c.l.b16 %v515
        %v544 = vunpack.c.l.b16 %v516
        %v545 = vpack.c.b16 %v534, %v533
        %v546 = vpack.c.b16 %v536, %v535
        %v547 = vpack.c.b16 %v538, %v537
        %v548 = vpack.c.b16 %v540, %v539
        %v549 = vpack.c.b16 %v542, %v541
        %v550 = vpack.c.b16 %v544, %v543
        %vm557 = vcmask 785408
        %v558 = vsel %vm557, %v504, 0
        %560 = vmatpush.bf16.msra.mxu0 0
        %561 = vmatpush.bf16.msra.mxu0 0
        %562 = vmatpush.bf16.msra.mxu0 %v550
        %563 = vmatpush.bf16.msra.mxu0 %v549
        %564 = vmatpush.bf16.msra.mxu0 %v548
        %565 = vmatpush.bf16.msra.mxu0 %v547
        %566 = vmatpush.bf16.msra.mxu0 %v546
        %567 = vmatpush.bf16.msra.mxu0 %v545
        %568 = vmatmul.bf16.gmra.mxu0 %v558
        %v569 = vpop.f32.mrf.mxu0
        %v570 = vadd.f32 %v519, %v569
        %v571 = vpop.f32.mrf.mxu0
        %v572 = vadd.f32 %v519, %v571
        %573 = vdwg.mxu0
        %v574 = vld [vmem:[%s341] sm:$0xf]
        %v575 = vld [vmem:[%s341 + $0x4] sm:$0xf]
        %v576 = vunpack.c.l.bf16 %v574
        %v577 = vunpack.c.l.bf16 %v575
        %v578 = vadd.f32 %v570, %v576
        %v579 = vadd.f32 %v572, %v577
        %v580 = vpack.c.bf16 %v578, %v578
        %v581 = vpack.c.bf16 %v579, %v579
        %vm582 = vcmask 257024
        %583 = vst.msk [vmem:[%s346] sm:$0xf] %vm582, %v580
        %584 = vst.msk [vmem:[%s346 + $0x4] sm:$0xf] %vm582, %v581
        %p585 = scmp.lt.s32.totalorder %s20, 1
        %s586 = scalar_select %p585, %s20, 1
        %s587 = smul.addr %s586, 2
        %s588 = smul.addr %s587, 4
        %s589 = scalar_lea.vmem %s7, %s588
        // Predicated region
        $region61: #{_lambda_.23} parent=47 // pred_check
          %p590 = pneg %p195
        $region62: #{_lambda_.23} parent=47 // pred_check_branch
          %592 = sbr.rel (%p590) target = $region64
        $region63: #{_lambda_.23} parent=47 // pred_region
          _
        $region64: #{_lambda_.23} parent=47 // pred_fallthru
          _
      $region48: #{_lambda_.23} parent=5 // pred_fallthru
        _
      %p593 = scmp.le.s32.totalorder 2, %s15
      // Predicated region
      $region65: #{_lambda_.23} parent=5 // pred_check
        %p594 = pneg %p593
      $region66: #{_lambda_.23} parent=5 // pred_check_branch
        %596 = sbr.rel (%p594) target = $region68
      $region67: #{_lambda_.23} parent=5 // pred_region
        %s597 = ssub.s32 %s15, 2
        // Predicated region
        $region69: #{_lambda_.23} parent=67 // pred_check
          %p598 = pneg %p201
        $region70: #{_lambda_.23} parent=67 // pred_check_branch
          %600 = sbr.rel (%p598) target = $region72
        $region71: #{_lambda_.23} parent=67 // pred_region
          %p601 = scmp.lt.s32.totalorder %s21, 1
          %s602 = scalar_select %p601, %s21, 1
          %s603 = smul.addr %s602, 2
          %s604 = smul.addr %s603, 4
          %s605 = scalar_lea.vmem %s7, %s604
        $region72: #{_lambda_.23} parent=67 // pred_fallthru
          _
      $region68: #{_lambda_.23} parent=5 // pred_fallthru
        _
    $region6: #{_lambda_.23} parent=1 // loop_footer
      %s19 = sadd.s32 1, %s15
    $region7: #{_lambda_.23} parent=1 // loop_footer_branch
      %14 = sbr.rel target = $region3
    $region8: #{_lambda_.23} parent=1 // loop_exit
      _
    %606 = vsyncpa [#allocation3], 1
    %s607 = scalar_lea.sflag [#allocation3], 1
    %608 = vsyncpa %s607, 1
    %609 = vsyncpa [#allocation5], 1

// kernel: _lambda_.25
$region0: #{_lambda_.25}
  #allocation0 [shape = 'u32[]', space=smem, size = 0x4, offset = 0x4, fixed_abs, tag = 'smem constant byte address 0x4 - core index']
  #allocation1 [shape = 'u32[72,128]{1,0:T(1,128)}', space=vmem, size = 0x9000, scoped, tag = 'internal scratch']
  %s0 = inlined_call_operand.vmem [shape: bf16[2,32,32], index: 0, kind: input, shape index: {}]
  %s1 = inlined_call_operand.vmem [shape: f32[1,32], index: 1, kind: input, shape index: {}]
  %s2 = inlined_call_operand.vmem [shape: f32[1,32], index: 2, kind: input, shape index: {}]
  %s3 = inlined_call_operand.hbm [shape: f32[32,32], index: 3, kind: input, shape index: {}]
  %s4 = inlined_call_operand.vmem [shape: bf16[96,32], index: 4, kind: input, shape index: {}]
  %s5 = inlined_call_operand.hbm [shape: f32[1,32], index: 5, kind: input, shape index: {}]
  %s6 = inlined_call_operand.vmem [shape: bf16[2,32,32], index: 6, kind: output, shape index: {}]
  %s7 = sld [smem:[#allocation0]]
  $region65: #{_lambda_.25} parent=0
    _
  %s9 = ssub.s32 1, %s7
  %s10 = scalar_select 0, %s9, %s7
  $region1: #{_lambda_.25} parent=0
    #allocation2 [shape = 'u8[16384]{0}', space=vmem, size = 0x4000, scoped, tag = 'input window, operand 3, single buffered']
    #allocation3 [shape = 's32[2]{0}', space=sflag, size = 0x8, scoped, tag = 'scoped memory for _lambda_.25']
    #allocation4 [shape = 'u8[512]{0}', space=vmem, size = 0x400, scoped, tag = 'input window, operand 5, single buffered']
    #allocation5 [shape = 's32[1]{0}', space=sflag, size = 0x4, scoped, tag = 'scoped memory for _lambda_.25']
    %11 = vsyncpa [#allocation3], 0
    %12 = vsyncpa [#allocation5], 0
    loop: start=0, step=1, limit=4
    $region2: #{_lambda_.25} parent=1 // loop_pre_header
      _
    $region3: #{_lambda_.25} parent=1 // loop_header
      %s14 = sphi 0, %s18
      %p15 = scmp.ge.s32.totalorder %s14, 4
      %s24 = sphi 0, %s26
      %s27 = sphi 0, %s24
      %s28 = sphi 0, %s27
      %s44 = sphi 0, %s28
      %s48 = sphi 0, %s48
      %s50 = sphi 0, %s48
      %s51 = sphi 0, %s50
      %s65 = sphi 0, %s51
      %s69 = sphi 0, %s69
      %s71 = sphi 0, %s69
      %s72 = sphi 0, %s71
      %s86 = sphi 0, %s72
      %s90 = sphi 0, %s90
      %s92 = sphi 0, %s90
      %s93 = sphi 0, %s92
      %s107 = sphi 0, %s93
      %s111 = sphi 0, %s111
      %s113 = sphi 0, %s111
      %s114 = sphi 0, %s113
      %s128 = sphi 0, %s114
      %s132 = sphi 0, %s132
      %s134 = sphi 0, %s132
      %s135 = sphi 0, %s134
      %s149 = sphi 0, %s135
      %s155 = sphi 0, %s157
      %s158 = sphi 0, %s155
      %s159 = sphi 0, %s158
      %s175 = sphi 0, %s159
    $region4: #{_lambda_.25} parent=1 // loop_header_branch
      %17 = sbr.rel (%p15) target = $region8
    $region5: #{_lambda_.25} parent=1 // loop_body
      %s19 = ssub.s32 %s14, 1
      %s20 = ssub.s32 %s14, 2
      %s21 = sadd.s32 %s14, 1
      %s22 = ssub.s32 %s14, %s21
      %p23 = scmp.eq.s32.totalorder %s22, 0
      %s25 = sadd.s32 %s24, 1
      %s26 = scalar_select %p23, %s24, %s25
      %p29 = pneg %p23
      %p30 = scmp.eq.s32.totalorder %s14, 1
      %p31 = por %p29, %p30
      %p32 = scmp.ne.s32.totalorder %s24, %s27
      %p33 = scmp.eq.s32.totalorder %s14, 0
      %p34 = por %p32, %p33
      %p35 = scmp.ne.s32.totalorder %s24, %s27
      %p36 = scmp.eq.s32.totalorder %s19, 1
      %p37 = por %p35, %p36
      %p38 = scmp.ne.s32.totalorder %s27, %s28
      %p39 = scmp.eq.s32.totalorder %s19, 0
      %p40 = por %p38, %p39
      %p41 = scmp.ne.s32.totalorder %s27, %s28
      %p42 = scmp.eq.s32.totalorder %s20, 1
      %p43 = por %p41, %p42
      %p45 = scmp.ne.s32.totalorder %s28, %s44
      %p46 = scmp.eq.s32.totalorder %s20, 0
      %p47 = por %p45, %p46
      %s49 = sadd.s32 %s48, 1
      %p52 = scmp.eq.s32.totalorder %s14, 1
      %p53 = scmp.ne.s32.totalorder %s48, %s50
      %p54 = scmp.eq.s32.totalorder %s14, 0
      %p55 = por %p53, %p54
      %p56 = scmp.ne.s32.totalorder %s48, %s50
      %p57 = scmp.eq.s32.totalorder %s19, 1
      %p58 = por %p56, %p57
      %p59 = scmp.ne.s32.totalorder %s50, %s51
      %p60 = scmp.eq.s32.totalorder %s19, 0
      %p61 = por %p59, %p60
      %p62 = scmp.ne.s32.totalorder %s50, %s51
      %p63 = scmp.eq.s32.totalorder %s20, 1
      %p64 = por %p62, %p63
      %p66 = scmp.ne.s32.totalorder %s51, %s65
      %p67 = scmp.eq.s32.totalorder %s20, 0
      %p68 = por %p66, %p67
      %s70 = sadd.s32 %s69, 1
      %p73 = scmp.eq.s32.totalorder %s14, 1
      %p74 = scmp.ne.s32.totalorder %s69, %s71
      %p75 = scmp.eq.s32.totalorder %s14, 0
      %p76 = por %p74, %p75
      %p77 = scmp.ne.s32.totalorder %s69, %s71
      %p78 = scmp.eq.s32.totalorder %s19, 1
      %p79 = por %p77, %p78
      %p80 = scmp.ne.s32.totalorder %s71, %s72
      %p81 = scmp.eq.s32.totalorder %s19, 0
      %p82 = por %p80, %p81
      %p83 = scmp.ne.s32.totalorder %s71, %s72
      %p84 = scmp.eq.s32.totalorder %s20, 1
      %p85 = por %p83, %p84
      %p87 = scmp.ne.s32.totalorder %s72, %s86
      %p88 = scmp.eq.s32.totalorder %s20, 0
      %p89 = por %p87, %p88
      %s91 = sadd.s32 %s90, 1
      %p94 = scmp.eq.s32.totalorder %s14, 1
      %p95 = scmp.ne.s32.totalorder %s90, %s92
      %p96 = scmp.eq.s32.totalorder %s14, 0
      %p97 = por %p95, %p96
      %p98 = scmp.ne.s32.totalorder %s90, %s92
      %p99 = scmp.eq.s32.totalorder %s19, 1
      %p100 = por %p98, %p99
      %p101 = scmp.ne.s32.totalorder %s92, %s93
      %p102 = scmp.eq.s32.totalorder %s19, 0
      %p103 = por %p101, %p102
      %p104 = scmp.ne.s32.totalorder %s92, %s93
      %p105 = scmp.eq.s32.totalorder %s20, 1
      %p106 = por %p104, %p105
      %p108 = scmp.ne.s32.totalorder %s93, %s107
      %p109 = scmp.eq.s32.totalorder %s20, 0
      %p110 = por %p108, %p109
      %s112 = sadd.s32 %s111, 1
      %p115 = scmp.eq.s32.totalorder %s14, 1
      %p116 = scmp.ne.s32.totalorder %s111, %s113
      %p117 = scmp.eq.s32.totalorder %s14, 0
      %p118 = por %p116, %p117
      %p119 = scmp.ne.s32.totalorder %s111, %s113
      %p120 = scmp.eq.s32.totalorder %s19, 1
      %p121 = por %p119, %p120
      %p122 = scmp.ne.s32.totalorder %s113, %s114
      %p123 = scmp.eq.s32.totalorder %s19, 0
      %p124 = por %p122, %p123
      %p125 = scmp.ne.s32.totalorder %s113, %s114
      %p126 = scmp.eq.s32.totalorder %s20, 1
      %p127 = por %p125, %p126
      %p129 = scmp.ne.s32.totalorder %s114, %s128
      %p130 = scmp.eq.s32.totalorder %s20, 0
      %p131 = por %p129, %p130
      %s133 = sadd.s32 %s132, 1
      %p136 = scmp.eq.s32.totalorder %s14, 1
      %p137 = scmp.ne.s32.totalorder %s132, %s134
      %p138 = scmp.eq.s32.totalorder %s14, 0
      %p139 = por %p137, %p138
      %p140 = scmp.ne.s32.totalorder %s132, %s134
      %p141 = scmp.eq.s32.totalorder %s19, 1
      %p142 = por %p140, %p141
      %p143 = scmp.ne.s32.totalorder %s134, %s135
      %p144 = scmp.eq.s32.totalorder %s19, 0
      %p145 = por %p143, %p144
      %p146 = scmp.ne.s32.totalorder %s134, %s135
      %p147 = scmp.eq.s32.totalorder %s20, 1
      %p148 = por %p146, %p147
      %p150 = scmp.ne.s32.totalorder %s135, %s149
      %p151 = scmp.eq.s32.totalorder %s20, 0
      %p152 = por %p150, %p151
      %s153 = ssub.s32 %s14, %s21
      %p154 = scmp.eq.s32.totalorder %s153, 0
      %s156 = sadd.s32 %s155, 1
      %s157 = scalar_select %p154, %s155, %s156
      %p160 = pneg %p154
      %p161 = scmp.eq.s32.totalorder %s14, 1
      %p162 = por %p160, %p161
      %p163 = scmp.ne.s32.totalorder %s155, %s158
      %p164 = scmp.eq.s32.totalorder %s14, 0
      %p165 = por %p163, %p164
      %p166 = scmp.ne.s32.totalorder %s155, %s158
      %p167 = scmp.eq.s32.totalorder %s19, 1
      %p168 = por %p166, %p167
      %p169 = scmp.ne.s32.totalorder %s158, %s159
      %p170 = scmp.eq.s32.totalorder %s19, 0
      %p171 = por %p169, %p170
      %p172 = scmp.ne.s32.totalorder %s158, %s159
      %p173 = scmp.eq.s32.totalorder %s20, 1
      %p174 = por %p172, %p173
      %p176 = scmp.ne.s32.totalorder %s159, %s175
      %p177 = scmp.eq.s32.totalorder %s20, 0
      %p178 = por %p176, %p177
      %p179 = scmp.le.s32.totalorder 1, %s14
      %p180 = scmp.lt.s32.totalorder %s14, 3
      %p181 = pnand %p179, %p180
      %p182 = pneg %p181
      // Predicated region
      $region9: #{_lambda_.25} parent=5 // pred_check
        _
      $region10: #{_lambda_.25} parent=5 // pred_check_branch
        %184 = sbr.rel (%p181) target = $region12
      $region11: #{_lambda_.25} parent=5 // pred_region
        %s185 = ssub.s32 %s14, 1
        // Predicated region
        $region13: #{_lambda_.25} parent=11 // pred_check
          %p186 = pneg %p61
        $region14: #{_lambda_.25} parent=11 // pred_check_branch
          %188 = sbr.rel (%p186) target = $region16
        $region15: #{_lambda_.25} parent=11 // pred_region
          _
        $region16: #{_lambda_.25} parent=11 // pred_fallthru
          _
        // Predicated region
        $region17: #{_lambda_.25} parent=11 // pred_check
          %p189 = pneg %p82
        $region18: #{_lambda_.25} parent=11 // pred_check_branch
          %191 = sbr.rel (%p189) target = $region20
        $region19: #{_lambda_.25} parent=11 // pred_region
          _
        $region20: #{_lambda_.25} parent=11 // pred_fallthru
          _
        // Predicated region
        $region21: #{_lambda_.25} parent=11 // pred_check
          %p192 = pneg %p103
        $region22: #{_lambda_.25} parent=11 // pred_check_branch
          %194 = sbr.rel (%p192) target = $region24
        $region23: #{_lambda_.25} parent=11 // pred_region
          %196 = vsyncadd [#allocation3], 0
          %s197 = sshll.u32 %s3, 4
          %s198 = int_to_ptr.hbm [resolvable:$true] %s197
          %s199 = sshll.u32 [#allocation2], 4
          %s200 = int_to_ptr.vmem [resolvable:$true] %s199
          %205 = dma.hbm_to_vmem [thread:$0]  %s198, 512, %s200, [#allocation3], 128, 128, 8
        $region24: #{_lambda_.25} parent=11 // pred_fallthru
          _
        // Predicated region
        $region25: #{_lambda_.25} parent=11 // pred_check
          %p206 = pneg %p124
        $region26: #{_lambda_.25} parent=11 // pred_check_branch
          %208 = sbr.rel (%p206) target = $region28
        $region27: #{_lambda_.25} parent=11 // pred_region
          _
        $region28: #{_lambda_.25} parent=11 // pred_fallthru
          _
        // Predicated region
        $region29: #{_lambda_.25} parent=11 // pred_check
          %p209 = pneg %p145
        $region30: #{_lambda_.25} parent=11 // pred_check_branch
          %211 = sbr.rel (%p209) target = $region32
        $region31: #{_lambda_.25} parent=11 // pred_region
          %213 = vsyncadd [#allocation5], 0
          %s215 = sshll.u32 %s5, 4
          %s216 = int_to_ptr.hbm [resolvable:$true] %s215
          %s217 = sshll.u32 [#allocation4], 4
          %s218 = int_to_ptr.vmem [resolvable:$true] %s217
          %220 = dma.hbm_to_vmem [thread:$0]  %s216, 16, %s218, [#allocation5]
        $region32: #{_lambda_.25} parent=11 // pred_fallthru
          _
      $region12: #{_lambda_.25} parent=5 // pred_fallthru
        _
      %p221 = scmp.lt.s32.totalorder %s14, 2
      // Predicated region
      $region33: #{_lambda_.25} parent=5 // pred_check
        %p222 = pneg %p221
      $region34: #{_lambda_.25} parent=5 // pred_check_branch
        %224 = sbr.rel (%p222) target = $region36
      $region35: #{_lambda_.25} parent=5 // pred_region
        // Predicated region
        $region37: #{_lambda_.25} parent=35 // pred_check
          %p225 = pneg %p34
        $region38: #{_lambda_.25} parent=35 // pred_check_branch
          %227 = sbr.rel (%p225) target = $region40
        $region39: #{_lambda_.25} parent=35 // pred_region
          %p228 = scmp.lt.s32.totalorder %s14, 1
          %s229 = scalar_select %p228, %s14, 1
          %s230 = smul.addr %s229, 4
          %s231 = smul.addr %s230, 4
          %s232 = scalar_lea.vmem %s0, %s231
        $region40: #{_lambda_.25} parent=35 // pred_fallthru
          _
      $region36: #{_lambda_.25} parent=5 // pred_fallthru
        _
      %p233 = scmp.le.s32.totalorder 1, %s14
      %p234 = scmp.lt.s32.totalorder %s14, 3
      %p235 = pnand %p233, %p234
      %p236 = pneg %p235
      // Predicated region
      $region41: #{_lambda_.25} parent=5 // pred_check
        _
      $region42: #{_lambda_.25} parent=5 // pred_check_branch
        %238 = sbr.rel (%p235) target = $region44
      $region43: #{_lambda_.25} parent=5 // pred_region
        %s239 = ssub.s32 %s14, 1
        // Predicated region
        $region45: #{_lambda_.25} parent=43 // pred_check
          %p240 = pneg %p103
        $region46: #{_lambda_.25} parent=43 // pred_check_branch
          %242 = sbr.rel (%p240) target = $region48
        $region47: #{_lambda_.25} parent=43 // pred_region
          %244 = dma.done [#allocation3], 512
        $region48: #{_lambda_.25} parent=43 // pred_fallthru
          _
        // Predicated region
        $region49: #{_lambda_.25} parent=43 // pred_check
          %p245 = pneg %p145
        $region50: #{_lambda_.25} parent=43 // pred_check_branch
          %247 = sbr.rel (%p245) target = $region52
        $region51: #{_lambda_.25} parent=43 // pred_region
          %249 = dma.done [#allocation5], 16
        $region52: #{_lambda_.25} parent=43 // pred_fallthru
          _
        %p250 = scmp.lt.s32.totalorder %s19, 1
        %s251 = scalar_select %p250, %s19, 1
        %s252 = smul.addr %s251, 4
        %s253 = smul.addr %s252, 4
        %s254 = scalar_lea.vmem %s0, %s253
        %p255 = pneg %p40
        %p256 = pneg %p37
        %p257 = pneg %p61
        %p258 = pneg %p58
        %p259 = pneg %p82
        %p260 = pneg %p79
        %p261 = pneg %p103
        %p262 = pneg %p100
        %p263 = pneg %p124
        %p264 = pneg %p121
        %p265 = pneg %p145
        %p266 = pneg %p142
        %p267 = pneg %p171
        %p268 = pneg %p168
        %p269 = scmp.lt.s32.totalorder %s19, 1
        %s270 = scalar_select %p269, %s19, 1
        %s271 = smul.addr %s270, 4
        %s272 = smul.addr %s271, 4
        %s273 = scalar_lea.vmem %s6, %s272
        %p274 = scmp.lt.s32.totalorder %s19, 1
        %s275 = scalar_select %p274, %s19, 1
        %s276 = smul.addr %s275, 4
        %s277 = smul.addr %s276, 4
        %s278 = scalar_lea.vmem %s0, %s277
        %p279 = scmp.lt.s32.totalorder %s19, 1
        %s280 = scalar_select %p279, %s19, 1
        %s281 = smul.addr %s280, 4
        %s282 = smul.addr %s281, 4
        %s283 = scalar_lea.vmem %s6, %s282
        %v285 = vld [vmem:[%s278] sm:$0xf]
        %v286 = vld [vmem:[%s278 + $0x4] sm:$0xf]
        %v287 = vld [vmem:[%s278 + $0x8] sm:$0xf]
        %v288 = vld [vmem:[%s278 + $0xc] sm:$0xf]
        %v289 = vunpack.c.l.bf16 %v285
        %v290 = vunpack.c.l.bf16 %v286
        %v291 = vunpack.c.l.bf16 %v287
        %v292 = vunpack.c.l.bf16 %v288
        %vm293 = vcmask 261120
        %v294 = vsel %vm293, %v289, 0.0
        %v295 = vsel %vm293, %v290, 0.0
        %v296 = vadd.f32 %v294, %v295
        %v297 = vsel %vm293, %v291, 0.0
        %v298 = vadd.f32 %v296, %v297
        %v299 = vsel %vm293, %v292, 0.0
        %v300 = vadd.f32 %v298, %v299
        %v301 = vrot.slane %v300, 4
        %v302 = vadd.f32 %v300, %v301
        %v303 = vrot.slane %v302, 2
        %v304 = vadd.f32 %v302, %v303
        %v305 = vrot.slane %v304, 1
        %v306 = vadd.f32 %v304, %v305
        %v307 = vld [vmem:[#allocation2] sm:$0xff]
        %v308 = vld [vmem:[#allocation2 + $0x8] sm:$0xff]
        %v309 = vld [vmem:[#allocation2 + $0x10] sm:$0xff]
        %v310 = vld [vmem:[#allocation2 + $0x18] sm:$0xff]
        %v312 = vsel %vm293, %v306, 0
        %314 = vmatpush.msra.mxu0 0.0
        %315 = vmatpush.msra.mxu0 0.0
        %316 = vmatpush.msra.mxu0 0.0
        %317 = vmatpush.msra.mxu0 0.0
        %318 = vmatpush.msra.mxu0 0.0
        %319 = vmatpush.msra.mxu0 0.0
        %320 = vmatpush.msra.mxu0 0.0
        %321 = vmatpush.msra.mxu0 0.0
        %322 = vmatpush.msra.mxu0 0.0
        %323 = vmatpush.msra.mxu0 0.0
        %324 = vmatpush.msra.mxu0 0.0
        %325 = vmatpush.msra.mxu0 0.0
        %326 = vmatpush.msra.mxu0 %v310
        %327 = vmatpush.msra.mxu0 %v309
        %328 = vmatpush.msra.mxu0 %v308
        %329 = vmatpush.msra.mxu0 %v307
        %330 = vmatmul.f32.gmra.mxu0 %v312
        %v331 = vpop.f32.mrf.mxu0
        %v332 = vadd.f32 0.0, %v331
        %333 = vdwg.mxu0
        %v334 = vmul.f32 %v332, 0.00390625
        %v335 = vperm.slane %v334, 0
        %v336 = vsub.f32 %v289, %v335
        %v337 = vsub.f32 %v290, %v335
        %v338 = vsub.f32 %v291, %v335
        %v339 = vsub.f32 %v292, %v335
        %v340 = vmul.f32 %v336, %v336
        %v341 = vmul.f32 %v337, %v337
        %v342 = vmul.f32 %v338, %v338
        %v343 = vmul.f32 %v339, %v339
        %v344 = vsel %vm293, %v340, 0.0
        %v345 = vsel %vm293, %v341, 0.0
        %v346 = vadd.f32 %v344, %v345
        %v347 = vsel %vm293, %v342, 0.0
        %v348 = vadd.f32 %v346, %v347
        %v349 = vsel %vm293, %v343, 0.0
        %v350 = vadd.f32 %v348, %v349
        %v351 = vrot.slane %v350, 4
        %v352 = vadd.f32 %v350, %v351
        %v353 = vrot.slane %v352, 2
        %v354 = vadd.f32 %v352, %v353
        %v355 = vrot.slane %v354, 1
        %v356 = vadd.f32 %v354, %v355
        %v358 = vsel %vm293, %v356, 0
        %360 = vmatpush.msra.mxu0 0.0
        %361 = vmatpush.msra.mxu0 0.0
        %362 = vmatpush.msra.mxu0 0.0
        %363 = vmatpush.msra.mxu0 0.0
        %364 = vmatpush.msra.mxu0 0.0
        %365 = vmatpush.msra.mxu0 0.0
        %366 = vmatpush.msra.mxu0 0.0
        %367 = vmatpush.msra.mxu0 0.0
        %368 = vmatpush.msra.mxu0 0.0
        %369 = vmatpush.msra.mxu0 0.0
        %370 = vmatpush.msra.mxu0 0.0
        %371 = vmatpush.msra.mxu0 0.0
        %372 = vmatpush.msra.mxu0 %v310
        %373 = vmatpush.msra.mxu0 %v309
        %374 = vmatpush.msra.mxu0 %v308
        %375 = vmatpush.msra.mxu0 %v307
        %376 = vmatmul.f32.gmra.mxu0 %v358
        %v377 = vpop.f32.mrf.mxu0
        %v378 = vadd.f32 0.0, %v377
        %379 = vdwg.mxu0
        %v380 = vmul.f32 %v378, 0.00390625
        %v381 = vadd.f32 %v380, 1e-05
        %v382 = vrsqrt.pop %v381
        %v383 = vmul.f32 %v382, %v381
        %v384 = vmul.f32 %v383, %v382
        %v385 = vmul.f32 0.5, %v384
        %v386 = vsub.f32 1.5, %v385
        %v387 = vmul.f32 %v382, %v386
        %vm388 = vweird.f32 %v381
        %vm389 = vweird.f32 %v382
        %vm390 = vmor %vm388, %vm389
        %v391 = vsel %vm390, %v382, %v387
        %v392 = vperm.slane %v391, 0
        %v393 = vmul.f32 %v336, %v392
        %v394 = vmul.f32 %v337, %v392
        %v395 = vmul.f32 %v338, %v392
        %v396 = vmul.f32 %v339, %v392
        %v397 = vld [vmem:[%s1] sm:$0x1]
        %v399 = vperm.slane %v397, 0
        %v401 = vmul.f32 %v393, %v399
        %v402 = vmul.f32 %v394, %v399
        %v403 = vmul.f32 %v395, %v399
        %v404 = vmul.f32 %v396, %v399
        %v405 = vld [vmem:[%s2] sm:$0x1]
        %v407 = vperm.slane %v405, 0
        %v409 = vadd.f32 %v401, %v407
        %v410 = vadd.f32 %v402, %v407
        %v411 = vadd.f32 %v403, %v407
        %v412 = vadd.f32 %v404, %v407
        %v413 = vmax.f32 %v409, 0.0
        %v414 = vmax.f32 %v410, 0.0
        %v415 = vmax.f32 %v411, 0.0
        %v416 = vmax.f32 %v412, 0.0
        %v417 = vpack.c.bf16 %v413, %v413
        %v418 = vpack.c.bf16 %v414, %v414
        %v419 = vpack.c.bf16 %v415, %v415
        %v420 = vpack.c.bf16 %v416, %v416
        %v425 = vunpack.c.l.b16 %v417
        %v426 = vunpack.c.l.b16 %v418
        %v427 = vunpack.c.l.b16 %v419
        %v428 = vunpack.c.l.b16 %v420
        %v429 = vpack.c.b16 %v426, %v425
        %v430 = vpack.c.b16 %v428, %v427
        %vm431 = vsmask.f32 256
        %v433 = vshrl.u32 %v429, 16
        %v435 = vrot.slane %v433, 7
        %v436 = vshll.u32 %v429, 16
        %v438 = vor.u32 %v435, %v436
        %v440 = vshrl.u32 %v430, 16
        %v442 = vrot.slane %v440, 7
        %v443 = vshll.u32 %v430, 16
        %v445 = vor.u32 %v442, %v443
        %v446 = vsel %vm431, %v435, %v445
        %vm449 = vcmask 1040384
        %vm450 = vmand %vm449, %vm431
        %v451 = vsel %vm450, 0, %v438
        %v452 = vsel %vm450, %v442, 0
        %vm453 = vsmask.f32 7424
        %v455 = vshrl.u32 %v451, 16
        %v457 = vshll.u32 %v451, 16
        %v459 = vrot.slane %v457, 1
        %v460 = vor.u32 %v455, %v459
        %v462 = vshll.u32 %v446, 16
        %v464 = vrot.slane %v462, 1
        %v465 = vsel %vm453, %v460, %v464
        %v466 = vshrl.u32 %v446, 16
        %v468 = vor.u32 %v466, %v464
        %v470 = vshll.u32 %v452, 16
        %v472 = vrot.slane %v470, 1
        %v473 = vsel %vm453, %v468, %v472
        %474 = vrot.lane.b32.xlu0 %v465, 32
        %v475 = vpop.permute.xlu0 %474
        %476 = vrot.lane.b32.xlu0 %v473, 32
        %v477 = vpop.permute.xlu0 %476
        %vm480 = vcmask 1046528
        %v481 = vrot.slane %v451, 1
        %v482 = vrot.slane %v446, 1
        %v483 = vsel %vm480, %v481, %v482
        %v484 = vrot.slane %v452, 1
        %v485 = vsel %vm480, %v482, %v484
        %486 = vrot.lane.b32.xlu0 %v483, 64
        %v487 = vpop.permute.xlu0 %486
        %488 = vrot.lane.b32.xlu0 %v485, 64
        %v489 = vpop.permute.xlu0 %488
        %v491 = vsel %vm293, %v451, %v475
        %v493 = vsel %vm293, %v446, %v477
        %vm494 = vcmask 523264
        %v496 = vsel %vm494, %v491, %v487
        %v498 = vsel %vm494, %v493, %v489
        %v499 = vld [vmem:[%s4] sm:$0xf]
        %v500 = vld [vmem:[%s4 + $0x4] sm:$0xf]
        %v501 = vld [vmem:[%s4 + $0x8] sm:$0xf]
        %v502 = vld [vmem:[%s4 + $0xc] sm:$0xf]
        %v503 = vld [vmem:[%s4 + $0x10] sm:$0xf]
        %v504 = vld [vmem:[%s4 + $0x14] sm:$0xf]
        %v505 = vld [vmem:[%s4 + $0x18] sm:$0xf]
        %v506 = vld [vmem:[%s4 + $0x1c] sm:$0xf]
        %v507 = vld [vmem:[%s4 + $0x20] sm:$0xf]
        %v508 = vld [vmem:[%s4 + $0x24] sm:$0xf]
        %v509 = vld [vmem:[%s4 + $0x28] sm:$0xf]
        %v510 = vld [vmem:[%s4 + $0x2c] sm:$0xf]
        %v511 = vld [vmem:[#allocation4] sm:$0x1]
        %v513 = vperm.slane %v511, 0
        %v527 = vunpack.c.l.b16 %v499
        %v528 = vunpack.c.l.b16 %v500
        %v529 = vunpack.c.l.b16 %v501
        %v530 = vunpack.c.l.b16 %v502
        %v531 = vunpack.c.l.b16 %v503
        %v532 = vunpack.c.l.b16 %v504
        %v533 = vunpack.c.l.b16 %v505
        %v534 = vunpack.c.l.b16 %v506
        %v535 = vunpack.c.l.b16 %v507
        %v536 = vunpack.c.l.b16 %v508
        %v537 = vunpack.c.l.b16 %v509
        %v538 = vunpack.c.l.b16 %v510
        %v539 = vpack.c.b16 %v528, %v527
        %v540 = vpack.c.b16 %v530, %v529
        %v541 = vpack.c.b16 %v532, %v531
        %v542 = vpack.c.b16 %v534, %v533
        %v543 = vpack.c.b16 %v536, %v535
        %v544 = vpack.c.b16 %v538, %v537
        %vm551 = vcmask 785408
        %v552 = vsel %vm551, %v496, 0
        %v554 = vsel %vm551, %v498, 0
        %556 = vmatpush.bf16.msra.mxu0 0
        %557 = vmatpush.bf16.msra.mxu0 0
        %558 = vmatpush.bf16.msra.mxu0 %v544
        %559 = vmatpush.bf16.msra.mxu0 %v543
        %560 = vmatpush.bf16.msra.mxu0 %v542
        %561 = vmatpush.bf16.msra.mxu0 %v541
        %562 = vmatpush.bf16.msra.mxu0 %v540
        %563 = vmatpush.bf16.msra.mxu0 %v539
        %564 = vmatmul.bf16.gmra.mxu0 %v552
        %v565 = vpop.f32.mrf.mxu0
        %v566 = vadd.f32 %v513, %v565
        %v567 = vpop.f32.mrf.mxu0
        %v568 = vadd.f32 %v513, %v567
        %569 = vmatmul.bf16.gmra.mxu0 %v554
        %v570 = vpop.f32.mrf.mxu0
        %v571 = vadd.f32 %v513, %v570
        %v572 = vpop.f32.mrf.mxu0
        %v573 = vadd.f32 %v513, %v572
        %574 = vdwg.mxu0
        %v575 = vpack.c.bf16 %v566, %v566
        %v576 = vpack.c.bf16 %v568, %v568
        %v577 = vpack.c.bf16 %v571, %v571
        %v578 = vpack.c.bf16 %v573, %v573
        %vm579 = vcmask 257024
        %580 = vst.msk [vmem:[%s283] sm:$0xf] %vm579, %v575
        %581 = vst.msk [vmem:[%s283 + $0x4] sm:$0xf] %vm579, %v576
        %582 = vst.msk [vmem:[%s283 + $0x8] sm:$0xf] %vm579, %v577
        %583 = vst.msk [vmem:[%s283 + $0xc] sm:$0xf] %vm579, %v578
        %p584 = scmp.lt.s32.totalorder %s19, 1
        %s585 = scalar_select %p584, %s19, 1
        %s586 = smul.addr %s585, 4
        %s587 = smul.addr %s586, 4
        %s588 = scalar_lea.vmem %s6, %s587
        // Predicated region
        $region53: #{_lambda_.25} parent=43 // pred_check
          %p589 = pneg %p168
        $region54: #{_lambda_.25} parent=43 // pred_check_branch
          %591 = sbr.rel (%p589) target = $region56
        $region55: #{_lambda_.25} parent=43 // pred_region
          _
        $region56: #{_lambda_.25} parent=43 // pred_fallthru
          _
      $region44: #{_lambda_.25} parent=5 // pred_fallthru
        _
      %p592 = scmp.le.s32.totalorder 2, %s14
      // Predicated region
      $region57: #{_lambda_.25} parent=5 // pred_check
        %p593 = pneg %p592
      $region58: #{_lambda_.25} parent=5 // pred_check_branch
        %595 = sbr.rel (%p593) target = $region60
      $region59: #{_lambda_.25} parent=5 // pred_region
        %s596 = ssub.s32 %s14, 2
        // Predicated region
        $region61: #{_lambda_.25} parent=59 // pred_check
          %p597 = pneg %p174
        $region62: #{_lambda_.25} parent=59 // pred_check_branch
          %599 = sbr.rel (%p597) target = $region64
        $region63: #{_lambda_.25} parent=59 // pred_region
          %p600 = scmp.lt.s32.totalorder %s20, 1
          %s601 = scalar_select %p600, %s20, 1
          %s602 = smul.addr %s601, 4
          %s603 = smul.addr %s602, 4
          %s604 = scalar_lea.vmem %s6, %s603
        $region64: #{_lambda_.25} parent=59 // pred_fallthru
          _
      $region60: #{_lambda_.25} parent=5 // pred_fallthru
        _
    $region6: #{_lambda_.25} parent=1 // loop_footer
      %s18 = sadd.s32 1, %s14
    $region7: #{_lambda_.25} parent=1 // loop_footer_branch
      %13 = sbr.rel target = $region3
    $region8: #{_lambda_.25} parent=1 // loop_exit
      _
    %605 = vsyncpa [#allocation3], 1
    %s606 = scalar_lea.sflag [#allocation3], 1
    %607 = vsyncpa %s606, 1
    %608 = vsyncpa [#allocation5], 1

// kernel: _lambda_.26
$region0: #{_lambda_.26}
  #allocation0 [shape = 'u32[]', space=smem, size = 0x4, offset = 0x4, fixed_abs, tag = 'smem constant byte address 0x4 - core index']
  #allocation1 [shape = 'u32[72,128]{1,0:T(1,128)}', space=vmem, size = 0x9000, scoped, tag = 'internal scratch']
  %s0 = inlined_call_operand.vmem [shape: bf16[2,32,32], index: 0, kind: input, shape index: {}]
  %s1 = inlined_call_operand.vmem [shape: f32[1,32], index: 1, kind: input, shape index: {}]
  %s2 = inlined_call_operand.vmem [shape: f32[1,32], index: 2, kind: input, shape index: {}]
  %s3 = inlined_call_operand.hbm [shape: f32[32,32], index: 3, kind: input, shape index: {}]
  %s4 = inlined_call_operand.vmem [shape: bf16[96,32], index: 4, kind: input, shape index: {}]
  %s5 = inlined_call_operand.hbm [shape: f32[1,32], index: 5, kind: input, shape index: {}]
  %s6 = inlined_call_operand.vmem [shape: bf16[2,32,32], index: 6, kind: input, shape index: {}]
  %s7 = inlined_call_operand.vmem [shape: bf16[2,32,32], index: 7, kind: output, shape index: {}]
  %s8 = sld [smem:[#allocation0]]
  $region69: #{_lambda_.26} parent=0
    _
  %s10 = ssub.s32 1, %s8
  %s11 = scalar_select 0, %s10, %s8
  $region1: #{_lambda_.26} parent=0
    #allocation2 [shape = 'u8[16384]{0}', space=vmem, size = 0x4000, scoped, tag = 'input window, operand 3, single buffered']
    #allocation3 [shape = 's32[2]{0}', space=sflag, size = 0x8, scoped, tag = 'scoped memory for _lambda_.26']
    #allocation4 [shape = 'u8[512]{0}', space=vmem, size = 0x400, scoped, tag = 'input window, operand 5, single buffered']
    #allocation5 [shape = 's32[1]{0}', space=sflag, size = 0x4, scoped, tag = 'scoped memory for _lambda_.26']
    %12 = vsyncpa [#allocation3], 0
    %13 = vsyncpa [#allocation5], 0
    loop: start=0, step=1, limit=4
    $region2: #{_lambda_.26} parent=1 // loop_pre_header
      _
    $region3: #{_lambda_.26} parent=1 // loop_header
      %s15 = sphi 0, %s19
      %p16 = scmp.ge.s32.totalorder %s15, 4
      %s25 = sphi 0, %s27
      %s28 = sphi 0, %s25
      %s29 = sphi 0, %s28
      %s45 = sphi 0, %s29
      %s49 = sphi 0, %s49
      %s51 = sphi 0, %s49
      %s52 = sphi 0, %s51
      %s66 = sphi 0, %s52
      %s70 = sphi 0, %s70
      %s72 = sphi 0, %s70
      %s73 = sphi 0, %s72
      %s87 = sphi 0, %s73
      %s91 = sphi 0, %s91
      %s93 = sphi 0, %s91
      %s94 = sphi 0, %s93
      %s108 = sphi 0, %s94
      %s112 = sphi 0, %s112
      %s114 = sphi 0, %s112
      %s115 = sphi 0, %s114
      %s129 = sphi 0, %s115
      %s133 = sphi 0, %s133
      %s135 = sphi 0, %s133
      %s136 = sphi 0, %s135
      %s150 = sphi 0, %s136
      %s156 = sphi 0, %s158
      %s159 = sphi 0, %s156
      %s160 = sphi 0, %s159
      %s176 = sphi 0, %s160
      %s182 = sphi 0, %s184
      %s185 = sphi 0, %s182
      %s186 = sphi 0, %s185
      %s202 = sphi 0, %s186
    $region4: #{_lambda_.26} parent=1 // loop_header_branch
      %18 = sbr.rel (%p16) target = $region8
    $region5: #{_lambda_.26} parent=1 // loop_body
      %s20 = ssub.s32 %s15, 1
      %s21 = ssub.s32 %s15, 2
      %s22 = sadd.s32 %s15, 1
      %s23 = ssub.s32 %s15, %s22
      %p24 = scmp.eq.s32.totalorder %s23, 0
      %s26 = sadd.s32 %s25, 1
      %s27 = scalar_select %p24, %s25, %s26
      %p30 = pneg %p24
      %p31 = scmp.eq.s32.totalorder %s15, 1
      %p32 = por %p30, %p31
      %p33 = scmp.ne.s32.totalorder %s25, %s28
      %p34 = scmp.eq.s32.totalorder %s15, 0
      %p35 = por %p33, %p34
      %p36 = scmp.ne.s32.totalorder %s25, %s28
      %p37 = scmp.eq.s32.totalorder %s20, 1
      %p38 = por %p36, %p37
      %p39 = scmp.ne.s32.totalorder %s28, %s29
      %p40 = scmp.eq.s32.totalorder %s20, 0
      %p41 = por %p39, %p40
      %p42 = scmp.ne.s32.totalorder %s28, %s29
      %p43 = scmp.eq.s32.totalorder %s21, 1
      %p44 = por %p42, %p43
      %p46 = scmp.ne.s32.totalorder %s29, %s45
      %p47 = scmp.eq.s32.totalorder %s21, 0
      %p48 = por %p46, %p47
      %s50 = sadd.s32 %s49, 1
      %p53 = scmp.eq.s32.totalorder %s15, 1
      %p54 = scmp.ne.s32.totalorder %s49, %s51
      %p55 = scmp.eq.s32.totalorder %s15, 0
      %p56 = por %p54, %p55
      %p57 = scmp.ne.s32.totalorder %s49, %s51
      %p58 = scmp.eq.s32.totalorder %s20, 1
      %p59 = por %p57, %p58
      %p60 = scmp.ne.s32.totalorder %s51, %s52
      %p61 = scmp.eq.s32.totalorder %s20, 0
      %p62 = por %p60, %p61
      %p63 = scmp.ne.s32.totalorder %s51, %s52
      %p64 = scmp.eq.s32.totalorder %s21, 1
      %p65 = por %p63, %p64
      %p67 = scmp.ne.s32.totalorder %s52, %s66
      %p68 = scmp.eq.s32.totalorder %s21, 0
      %p69 = por %p67, %p68
      %s71 = sadd.s32 %s70, 1
      %p74 = scmp.eq.s32.totalorder %s15, 1
      %p75 = scmp.ne.s32.totalorder %s70, %s72
      %p76 = scmp.eq.s32.totalorder %s15, 0
      %p77 = por %p75, %p76
      %p78 = scmp.ne.s32.totalorder %s70, %s72
      %p79 = scmp.eq.s32.totalorder %s20, 1
      %p80 = por %p78, %p79
      %p81 = scmp.ne.s32.totalorder %s72, %s73
      %p82 = scmp.eq.s32.totalorder %s20, 0
      %p83 = por %p81, %p82
      %p84 = scmp.ne.s32.totalorder %s72, %s73
      %p85 = scmp.eq.s32.totalorder %s21, 1
      %p86 = por %p84, %p85
      %p88 = scmp.ne.s32.totalorder %s73, %s87
      %p89 = scmp.eq.s32.totalorder %s21, 0
      %p90 = por %p88, %p89
      %s92 = sadd.s32 %s91, 1
      %p95 = scmp.eq.s32.totalorder %s15, 1
      %p96 = scmp.ne.s32.totalorder %s91, %s93
      %p97 = scmp.eq.s32.totalorder %s15, 0
      %p98 = por %p96, %p97
      %p99 = scmp.ne.s32.totalorder %s91, %s93
      %p100 = scmp.eq.s32.totalorder %s20, 1
      %p101 = por %p99, %p100
      %p102 = scmp.ne.s32.totalorder %s93, %s94
      %p103 = scmp.eq.s32.totalorder %s20, 0
      %p104 = por %p102, %p103
      %p105 = scmp.ne.s32.totalorder %s93, %s94
      %p106 = scmp.eq.s32.totalorder %s21, 1
      %p107 = por %p105, %p106
      %p109 = scmp.ne.s32.totalorder %s94, %s108
      %p110 = scmp.eq.s32.totalorder %s21, 0
      %p111 = por %p109, %p110
      %s113 = sadd.s32 %s112, 1
      %p116 = scmp.eq.s32.totalorder %s15, 1
      %p117 = scmp.ne.s32.totalorder %s112, %s114
      %p118 = scmp.eq.s32.totalorder %s15, 0
      %p119 = por %p117, %p118
      %p120 = scmp.ne.s32.totalorder %s112, %s114
      %p121 = scmp.eq.s32.totalorder %s20, 1
      %p122 = por %p120, %p121
      %p123 = scmp.ne.s32.totalorder %s114, %s115
      %p124 = scmp.eq.s32.totalorder %s20, 0
      %p125 = por %p123, %p124
      %p126 = scmp.ne.s32.totalorder %s114, %s115
      %p127 = scmp.eq.s32.totalorder %s21, 1
      %p128 = por %p126, %p127
      %p130 = scmp.ne.s32.totalorder %s115, %s129
      %p131 = scmp.eq.s32.totalorder %s21, 0
      %p132 = por %p130, %p131
      %s134 = sadd.s32 %s133, 1
      %p137 = scmp.eq.s32.totalorder %s15, 1
      %p138 = scmp.ne.s32.totalorder %s133, %s135
      %p139 = scmp.eq.s32.totalorder %s15, 0
      %p140 = por %p138, %p139
      %p141 = scmp.ne.s32.totalorder %s133, %s135
      %p142 = scmp.eq.s32.totalorder %s20, 1
      %p143 = por %p141, %p142
      %p144 = scmp.ne.s32.totalorder %s135, %s136
      %p145 = scmp.eq.s32.totalorder %s20, 0
      %p146 = por %p144, %p145
      %p147 = scmp.ne.s32.totalorder %s135, %s136
      %p148 = scmp.eq.s32.totalorder %s21, 1
      %p149 = por %p147, %p148
      %p151 = scmp.ne.s32.totalorder %s136, %s150
      %p152 = scmp.eq.s32.totalorder %s21, 0
      %p153 = por %p151, %p152
      %s154 = ssub.s32 %s15, %s22
      %p155 = scmp.eq.s32.totalorder %s154, 0
      %s157 = sadd.s32 %s156, 1
      %s158 = scalar_select %p155, %s156, %s157
      %p161 = pneg %p155
      %p162 = scmp.eq.s32.totalorder %s15, 1
      %p163 = por %p161, %p162
      %p164 = scmp.ne.s32.totalorder %s156, %s159
      %p165 = scmp.eq.s32.totalorder %s15, 0
      %p166 = por %p164, %p165
      %p167 = scmp.ne.s32.totalorder %s156, %s159
      %p168 = scmp.eq.s32.totalorder %s20, 1
      %p169 = por %p167, %p168
      %p170 = scmp.ne.s32.totalorder %s159, %s160
      %p171 = scmp.eq.s32.totalorder %s20, 0
      %p172 = por %p170, %p171
      %p173 = scmp.ne.s32.totalorder %s159, %s160
      %p174 = scmp.eq.s32.totalorder %s21, 1
      %p175 = por %p173, %p174
      %p177 = scmp.ne.s32.totalorder %s160, %s176
      %p178 = scmp.eq.s32.totalorder %s21, 0
      %p179 = por %p177, %p178
      %s180 = ssub.s32 %s15, %s22
      %p181 = scmp.eq.s32.totalorder %s180, 0
      %s183 = sadd.s32 %s182, 1
      %s184 = scalar_select %p181, %s182, %s183
      %p187 = pneg %p181
      %p188 = scmp.eq.s32.totalorder %s15, 1
      %p189 = por %p187, %p188
      %p190 = scmp.ne.s32.totalorder %s182, %s185
      %p191 = scmp.eq.s32.totalorder %s15, 0
      %p192 = por %p190, %p191
      %p193 = scmp.ne.s32.totalorder %s182, %s185
      %p194 = scmp.eq.s32.totalorder %s20, 1
      %p195 = por %p193, %p194
      %p196 = scmp.ne.s32.totalorder %s185, %s186
      %p197 = scmp.eq.s32.totalorder %s20, 0
      %p198 = por %p196, %p197
      %p199 = scmp.ne.s32.totalorder %s185, %s186
      %p200 = scmp.eq.s32.totalorder %s21, 1
      %p201 = por %p199, %p200
      %p203 = scmp.ne.s32.totalorder %s186, %s202
      %p204 = scmp.eq.s32.totalorder %s21, 0
      %p205 = por %p203, %p204
      %p206 = scmp.le.s32.totalorder 1, %s15
      %p207 = scmp.lt.s32.totalorder %s15, 3
      %p208 = pnand %p206, %p207
      %p209 = pneg %p208
      // Predicated region
      $region9: #{_lambda_.26} parent=5 // pred_check
        _
      $region10: #{_lambda_.26} parent=5 // pred_check_branch
        %211 = sbr.rel (%p208) target = $region12
      $region11: #{_lambda_.26} parent=5 // pred_region
        %s212 = ssub.s32 %s15, 1
        // Predicated region
        $region13: #{_lambda_.26} parent=11 // pred_check
          %p213 = pneg %p62
        $region14: #{_lambda_.26} parent=11 // pred_check_branch
          %215 = sbr.rel (%p213) target = $region16
        $region15: #{_lambda_.26} parent=11 // pred_region
          _
        $region16: #{_lambda_.26} parent=11 // pred_fallthru
          _
        // Predicated region
        $region17: #{_lambda_.26} parent=11 // pred_check
          %p216 = pneg %p83
        $region18: #{_lambda_.26} parent=11 // pred_check_branch
          %218 = sbr.rel (%p216) target = $region20
        $region19: #{_lambda_.26} parent=11 // pred_region
          _
        $region20: #{_lambda_.26} parent=11 // pred_fallthru
          _
        // Predicated region
        $region21: #{_lambda_.26} parent=11 // pred_check
          %p219 = pneg %p104
        $region22: #{_lambda_.26} parent=11 // pred_check_branch
          %221 = sbr.rel (%p219) target = $region24
        $region23: #{_lambda_.26} parent=11 // pred_region
          %223 = vsyncadd [#allocation3], 0
          %s224 = sshll.u32 %s3, 4
          %s225 = int_to_ptr.hbm [resolvable:$true] %s224
          %s226 = sshll.u32 [#allocation2], 4
          %s227 = int_to_ptr.vmem [resolvable:$true] %s226
          %232 = dma.hbm_to_vmem [thread:$0]  %s225, 512, %s227, [#allocation3], 128, 128, 8
        $region24: #{_lambda_.26} parent=11 // pred_fallthru
          _
        // Predicated region
        $region25: #{_lambda_.26} parent=11 // pred_check
          %p233 = pneg %p125
        $region26: #{_lambda_.26} parent=11 // pred_check_branch
          %235 = sbr.rel (%p233) target = $region28
        $region27: #{_lambda_.26} parent=11 // pred_region
          _
        $region28: #{_lambda_.26} parent=11 // pred_fallthru
          _
        // Predicated region
        $region29: #{_lambda_.26} parent=11 // pred_check
          %p236 = pneg %p146
        $region30: #{_lambda_.26} parent=11 // pred_check_branch
          %238 = sbr.rel (%p236) target = $region32
        $region31: #{_lambda_.26} parent=11 // pred_region
          %240 = vsyncadd [#allocation5], 0
          %s242 = sshll.u32 %s5, 4
          %s243 = int_to_ptr.hbm [resolvable:$true] %s242
          %s244 = sshll.u32 [#allocation4], 4
          %s245 = int_to_ptr.vmem [resolvable:$true] %s244
          %247 = dma.hbm_to_vmem [thread:$0]  %s243, 16, %s245, [#allocation5]
        $region32: #{_lambda_.26} parent=11 // pred_fallthru
          _
      $region12: #{_lambda_.26} parent=5 // pred_fallthru
        _
      %p248 = scmp.lt.s32.totalorder %s15, 2
      // Predicated region
      $region33: #{_lambda_.26} parent=5 // pred_check
        %p249 = pneg %p248
      $region34: #{_lambda_.26} parent=5 // pred_check_branch
        %251 = sbr.rel (%p249) target = $region36
      $region35: #{_lambda_.26} parent=5 // pred_region
        // Predicated region
        $region37: #{_lambda_.26} parent=35 // pred_check
          %p252 = pneg %p35
        $region38: #{_lambda_.26} parent=35 // pred_check_branch
          %254 = sbr.rel (%p252) target = $region40
        $region39: #{_lambda_.26} parent=35 // pred_region
          %p255 = scmp.lt.s32.totalorder %s15, 1
          %s256 = scalar_select %p255, %s15, 1
          %s257 = smul.addr %s256, 4
          %s258 = smul.addr %s257, 4
          %s259 = scalar_lea.vmem %s0, %s258
        $region40: #{_lambda_.26} parent=35 // pred_fallthru
          _
        // Predicated region
        $region41: #{_lambda_.26} parent=35 // pred_check
          %p260 = pneg %p166
        $region42: #{_lambda_.26} parent=35 // pred_check_branch
          %262 = sbr.rel (%p260) target = $region44
        $region43: #{_lambda_.26} parent=35 // pred_region
          %p263 = scmp.lt.s32.totalorder %s15, 1
          %s264 = scalar_select %p263, %s15, 1
          %s265 = smul.addr %s264, 4
          %s266 = smul.addr %s265, 4
          %s267 = scalar_lea.vmem %s6, %s266
        $region44: #{_lambda_.26} parent=35 // pred_fallthru
          _
      $region36: #{_lambda_.26} parent=5 // pred_fallthru
        _
      %p268 = scmp.le.s32.totalorder 1, %s15
      %p269 = scmp.lt.s32.totalorder %s15, 3
      %p270 = pnand %p268, %p269
      %p271 = pneg %p270
      // Predicated region
      $region45: #{_lambda_.26} parent=5 // pred_check
        _
      $region46: #{_lambda_.26} parent=5 // pred_check_branch
        %273 = sbr.rel (%p270) target = $region48
      $region47: #{_lambda_.26} parent=5 // pred_region
        %s274 = ssub.s32 %s15, 1
        // Predicated region
        $region49: #{_lambda_.26} parent=47 // pred_check
          %p275 = pneg %p104
        $region50: #{_lambda_.26} parent=47 // pred_check_branch
          %277 = sbr.rel (%p275) target = $region52
        $region51: #{_lambda_.26} parent=47 // pred_region
          %279 = dma.done [#allocation3], 512
        $region52: #{_lambda_.26} parent=47 // pred_fallthru
          _
        // Predicated region
        $region53: #{_lambda_.26} parent=47 // pred_check
          %p280 = pneg %p146
        $region54: #{_lambda_.26} parent=47 // pred_check_branch
          %282 = sbr.rel (%p280) target = $region56
        $region55: #{_lambda_.26} parent=47 // pred_region
          %284 = dma.done [#allocation5], 16
        $region56: #{_lambda_.26} parent=47 // pred_fallthru
          _
        %p285 = scmp.lt.s32.totalorder %s20, 1
        %s286 = scalar_select %p285, %s20, 1
        %s287 = smul.addr %s286, 4
        %s288 = smul.addr %s287, 4
        %s289 = scalar_lea.vmem %s0, %s288
        %p290 = pneg %p41
        %p291 = pneg %p38
        %p292 = pneg %p62
        %p293 = pneg %p59
        %p294 = pneg %p83
        %p295 = pneg %p80
        %p296 = pneg %p104
        %p297 = pneg %p101
        %p298 = pneg %p125
        %p299 = pneg %p122
        %p300 = pneg %p146
        %p301 = pneg %p143
        %p302 = scmp.lt.s32.totalorder %s20, 1
        %s303 = scalar_select %p302, %s20, 1
        %s304 = smul.addr %s303, 4
        %s305 = smul.addr %s304, 4
        %s306 = scalar_lea.vmem %s6, %s305
        %p307 = pneg %p172
        %p308 = pneg %p169
        %p309 = pneg %p198
        %p310 = pneg %p195
        %p311 = scmp.lt.s32.totalorder %s20, 1
        %s312 = scalar_select %p311, %s20, 1
        %s313 = smul.addr %s312, 4
        %s314 = smul.addr %s313, 4
        %s315 = scalar_lea.vmem %s7, %s314
        %p316 = scmp.lt.s32.totalorder %s20, 1
        %s317 = scalar_select %p316, %s20, 1
        %s318 = smul.addr %s317, 4
        %s319 = smul.addr %s318, 4
        %s320 = scalar_lea.vmem %s0, %s319
        %p321 = scmp.lt.s32.totalorder %s20, 1
        %s322 = scalar_select %p321, %s20, 1
        %s323 = smul.addr %s322, 4
        %s324 = smul.addr %s323, 4
        %s325 = scalar_lea.vmem %s6, %s324
        %p326 = scmp.lt.s32.totalorder %s20, 1
        %s327 = scalar_select %p326, %s20, 1
        %s328 = smul.addr %s327, 4
        %s329 = smul.addr %s328, 4
        %s330 = scalar_lea.vmem %s7, %s329
        %v332 = vld [vmem:[%s320] sm:$0xf]
        %v333 = vld [vmem:[%s320 + $0x4] sm:$0xf]
        %v334 = vld [vmem:[%s320 + $0x8] sm:$0xf]
        %v335 = vld [vmem:[%s320 + $0xc] sm:$0xf]
        %v336 = vunpack.c.l.bf16 %v332
        %v337 = vunpack.c.l.bf16 %v333
        %v338 = vunpack.c.l.bf16 %v334
        %v339 = vunpack.c.l.bf16 %v335
        %vm340 = vcmask 261120
        %v341 = vsel %vm340, %v336, 0.0
        %v342 = vsel %vm340, %v337, 0.0
        %v343 = vadd.f32 %v341, %v342
        %v344 = vsel %vm340, %v338, 0.0
        %v345 = vadd.f32 %v343, %v344
        %v346 = vsel %vm340, %v339, 0.0
        %v347 = vadd.f32 %v345, %v346
        %v348 = vrot.slane %v347, 4
        %v349 = vadd.f32 %v347, %v348
        %v350 = vrot.slane %v349, 2
        %v351 = vadd.f32 %v349, %v350
        %v352 = vrot.slane %v351, 1
        %v353 = vadd.f32 %v351, %v352
        %v354 = vld [vmem:[#allocation2] sm:$0xff]
        %v355 = vld [vmem:[#allocation2 + $0x8] sm:$0xff]
        %v356 = vld [vmem:[#allocation2 + $0x10] sm:$0xff]
        %v357 = vld [vmem:[#allocation2 + $0x18] sm:$0xff]
        %v359 = vsel %vm340, %v353, 0
        %361 = vmatpush.msra.mxu0 0.0
        %362 = vmatpush.msra.mxu0 0.0
        %363 = vmatpush.msra.mxu0 0.0
        %364 = vmatpush.msra.mxu0 0.0
        %365 = vmatpush.msra.mxu0 0.0
        %366 = vmatpush.msra.mxu0 0.0
        %367 = vmatpush.msra.mxu0 0.0
        %368 = vmatpush.msra.mxu0 0.0
        %369 = vmatpush.msra.mxu0 0.0
        %370 = vmatpush.msra.mxu0 0.0
        %371 = vmatpush.msra.mxu0 0.0
        %372 = vmatpush.msra.mxu0 0.0
        %373 = vmatpush.msra.mxu0 %v357
        %374 = vmatpush.msra.mxu0 %v356
        %375 = vmatpush.msra.mxu0 %v355
        %376 = vmatpush.msra.mxu0 %v354
        %377 = vmatmul.f32.gmra.mxu0 %v359
        %v378 = vpop.f32.mrf.mxu0
        %v379 = vadd.f32 0.0, %v378
        %380 = vdwg.mxu0
        %v381 = vmul.f32 %v379, 0.00390625
        %v382 = vperm.slane %v381, 0
        %v383 = vsub.f32 %v336, %v382
        %v384 = vsub.f32 %v337, %v382
        %v385 = vsub.f32 %v338, %v382
        %v386 = vsub.f32 %v339, %v382
        %v387 = vmul.f32 %v383, %v383
        %v388 = vmul.f32 %v384, %v384
        %v389 = vmul.f32 %v385, %v385
        %v390 = vmul.f32 %v386, %v386
        %v391 = vsel %vm340, %v387, 0.0
        %v392 = vsel %vm340, %v388, 0.0
        %v393 = vadd.f32 %v391, %v392
        %v394 = vsel %vm340, %v389, 0.0
        %v395 = vadd.f32 %v393, %v394
        %v396 = vsel %vm340, %v390, 0.0
        %v397 = vadd.f32 %v395, %v396
        %v398 = vrot.slane %v397, 4
        %v399 = vadd.f32 %v397, %v398
        %v400 = vrot.slane %v399, 2
        %v401 = vadd.f32 %v399, %v400
        %v402 = vrot.slane %v401, 1
        %v403 = vadd.f32 %v401, %v402
        %v405 = vsel %vm340, %v403, 0
        %407 = vmatpush.msra.mxu0 0.0
        %408 = vmatpush.msra.mxu0 0.0
        %409 = vmatpush.msra.mxu0 0.0
        %410 = vmatpush.msra.mxu0 0.0
        %411 = vmatpush.msra.mxu0 0.0
        %412 = vmatpush.msra.mxu0 0.0
        %413 = vmatpush.msra.mxu0 0.0
        %414 = vmatpush.msra.mxu0 0.0
        %415 = vmatpush.msra.mxu0 0.0
        %416 = vmatpush.msra.mxu0 0.0
        %417 = vmatpush.msra.mxu0 0.0
        %418 = vmatpush.msra.mxu0 0.0
        %419 = vmatpush.msra.mxu0 %v357
        %420 = vmatpush.msra.mxu0 %v356
        %421 = vmatpush.msra.mxu0 %v355
        %422 = vmatpush.msra.mxu0 %v354
        %423 = vmatmul.f32.gmra.mxu0 %v405
        %v424 = vpop.f32.mrf.mxu0
        %v425 = vadd.f32 0.0, %v424
        %426 = vdwg.mxu0
        %v427 = vmul.f32 %v425, 0.00390625
        %v428 = vadd.f32 %v427, 1e-05
        %v429 = vrsqrt.pop %v428
        %v430 = vmul.f32 %v429, %v428
        %v431 = vmul.f32 %v430, %v429
        %v432 = vmul.f32 0.5, %v431
        %v433 = vsub.f32 1.5, %v432
        %v434 = vmul.f32 %v429, %v433
        %vm435 = vweird.f32 %v428
        %vm436 = vweird.f32 %v429
        %vm437 = vmor %vm435, %vm436
        %v438 = vsel %vm437, %v429, %v434
        %v439 = vperm.slane %v438, 0
        %v440 = vmul.f32 %v383, %v439
        %v441 = vmul.f32 %v384, %v439
        %v442 = vmul.f32 %v385, %v439
        %v443 = vmul.f32 %v386, %v439
        %v444 = vld [vmem:[%s1] sm:$0x1]
        %v446 = vperm.slane %v444, 0
        %v448 = vmul.f32 %v440, %v446
        %v449 = vmul.f32 %v441, %v446
        %v450 = vmul.f32 %v442, %v446
        %v451 = vmul.f32 %v443, %v446
        %v452 = vld [vmem:[%s2] sm:$0x1]
        %v454 = vperm.slane %v452, 0
        %v456 = vadd.f32 %v448, %v454
        %v457 = vadd.f32 %v449, %v454
        %v458 = vadd.f32 %v450, %v454
        %v459 = vadd.f32 %v451, %v454
        %v460 = vmax.f32 %v456, 0.0
        %v461 = vmax.f32 %v457, 0.0
        %v462 = vmax.f32 %v458, 0.0
        %v463 = vmax.f32 %v459, 0.0
        %v464 = vpack.c.bf16 %v460, %v460
        %v465 = vpack.c.bf16 %v461, %v461
        %v466 = vpack.c.bf16 %v462, %v462
        %v467 = vpack.c.bf16 %v463, %v463
        %v472 = vunpack.c.l.b16 %v464
        %v473 = vunpack.c.l.b16 %v465
        %v474 = vunpack.c.l.b16 %v466
        %v475 = vunpack.c.l.b16 %v467
        %v476 = vpack.c.b16 %v473, %v472
        %v477 = vpack.c.b16 %v475, %v474
        %vm478 = vsmask.f32 256
        %v480 = vshrl.u32 %v476, 16
        %v482 = vrot.slane %v480, 7
        %v483 = vshll.u32 %v476, 16
        %v485 = vor.u32 %v482, %v483
        %v487 = vshrl.u32 %v477, 16
        %v489 = vrot.slane %v487, 7
        %v490 = vshll.u32 %v477, 16
        %v492 = vor.u32 %v489, %v490
        %v493 = vsel %vm478, %v482, %v492
        %vm496 = vcmask 1040384
        %vm497 = vmand %vm496, %vm478
        %v498 = vsel %vm497, 0, %v485
        %v499 = vsel %vm497, %v489, 0
        %vm500 = vsmask.f32 7424
        %v502 = vshrl.u32 %v498, 16
        %v504 = vshll.u32 %v498, 16
        %v506 = vrot.slane %v504, 1
        %v507 = vor.u32 %v502, %v506
        %v509 = vshll.u32 %v493, 16
        %v511 = vrot.slane %v509, 1
        %v512 = vsel %vm500, %v507, %v511
        %v513 = vshrl.u32 %v493, 16
        %v515 = vor.u32 %v513, %v511
        %v517 = vshll.u32 %v499, 16
        %v519 = vrot.slane %v517, 1
        %v520 = vsel %vm500, %v515, %v519
        %521 = vrot.lane.b32.xlu0 %v512, 32
        %v522 = vpop.permute.xlu0 %521
        %523 = vrot.lane.b32.xlu0 %v520, 32
        %v524 = vpop.permute.xlu0 %523
        %vm527 = vcmask 1046528
        %v528 = vrot.slane %v498, 1
        %v529 = vrot.slane %v493, 1
        %v530 = vsel %vm527, %v528, %v529
        %v531 = vrot.slane %v499, 1
        %v532 = vsel %vm527, %v529, %v531
        %533 = vrot.lane.b32.xlu0 %v530, 64
        %v534 = vpop.permute.xlu0 %533
        %535 = vrot.lane.b32.xlu0 %v532, 64
        %v536 = vpop.permute.xlu0 %535
        %v538 = vsel %vm340, %v498, %v522
        %v540 = vsel %vm340, %v493, %v524
        %vm541 = vcmask 523264
        %v543 = vsel %vm541, %v538, %v534
        %v545 = vsel %vm541, %v540, %v536
        %v546 = vld [vmem:[%s4] sm:$0xf]
        %v547 = vld [vmem:[%s4 + $0x4] sm:$0xf]
        %v548 = vld [vmem:[%s4 + $0x8] sm:$0xf]
        %v549 = vld [vmem:[%s4 + $0xc] sm:$0xf]
        %v550 = vld [vmem:[%s4 + $0x10] sm:$0xf]
        %v551 = vld [vmem:[%s4 + $0x14] sm:$0xf]
        %v552 = vld [vmem:[%s4 + $0x18] sm:$0xf]
        %v553 = vld [vmem:[%s4 + $0x1c] sm:$0xf]
        %v554 = vld [vmem:[%s4 + $0x20] sm:$0xf]
        %v555 = vld [vmem:[%s4 + $0x24] sm:$0xf]
        %v556 = vld [vmem:[%s4 + $0x28] sm:$0xf]
        %v557 = vld [vmem:[%s4 + $0x2c] sm:$0xf]
        %v558 = vld [vmem:[#allocation4] sm:$0x1]
        %v560 = vperm.slane %v558, 0
        %v574 = vunpack.c.l.b16 %v546
        %v575 = vunpack.c.l.b16 %v547
        %v576 = vunpack.c.l.b16 %v548
        %v577 = vunpack.c.l.b16 %v549
        %v578 = vunpack.c.l.b16 %v550
        %v579 = vunpack.c.l.b16 %v551
        %v580 = vunpack.c.l.b16 %v552
        %v581 = vunpack.c.l.b16 %v553
        %v582 = vunpack.c.l.b16 %v554
        %v583 = vunpack.c.l.b16 %v555
        %v584 = vunpack.c.l.b16 %v556
        %v585 = vunpack.c.l.b16 %v557
        %v586 = vpack.c.b16 %v575, %v574
        %v587 = vpack.c.b16 %v577, %v576
        %v588 = vpack.c.b16 %v579, %v578
        %v589 = vpack.c.b16 %v581, %v580
        %v590 = vpack.c.b16 %v583, %v582
        %v591 = vpack.c.b16 %v585, %v584
        %vm598 = vcmask 785408
        %v599 = vsel %vm598, %v543, 0
        %v601 = vsel %vm598, %v545, 0
        %603 = vmatpush.bf16.msra.mxu0 0
        %604 = vmatpush.bf16.msra.mxu0 0
        %605 = vmatpush.bf16.msra.mxu0 %v591
        %606 = vmatpush.bf16.msra.mxu0 %v590
        %607 = vmatpush.bf16.msra.mxu0 %v589
        %608 = vmatpush.bf16.msra.mxu0 %v588
        %609 = vmatpush.bf16.msra.mxu0 %v587
        %610 = vmatpush.bf16.msra.mxu0 %v586
        %611 = vmatmul.bf16.gmra.mxu0 %v599
        %v612 = vpop.f32.mrf.mxu0
        %v613 = vadd.f32 %v560, %v612
        %v614 = vpop.f32.mrf.mxu0
        %v615 = vadd.f32 %v560, %v614
        %616 = vmatmul.bf16.gmra.mxu0 %v601
        %v617 = vpop.f32.mrf.mxu0
        %v618 = vadd.f32 %v560, %v617
        %v619 = vpop.f32.mrf.mxu0
        %v620 = vadd.f32 %v560, %v619
        %621 = vdwg.mxu0
        %v622 = vld [vmem:[%s325] sm:$0xf]
        %v623 = vld [vmem:[%s325 + $0x4] sm:$0xf]
        %v624 = vld [vmem:[%s325 + $0x8] sm:$0xf]
        %v625 = vld [vmem:[%s325 + $0xc] sm:$0xf]
        %v626 = vunpack.c.l.bf16 %v622
        %v627 = vunpack.c.l.bf16 %v623
        %v628 = vunpack.c.l.bf16 %v624
        %v629 = vunpack.c.l.bf16 %v625
        %v630 = vadd.f32 %v613, %v626
        %v631 = vadd.f32 %v615, %v627
        %v632 = vadd.f32 %v618, %v628
        %v633 = vadd.f32 %v620, %v629
        %v634 = vpack.c.bf16 %v630, %v630
        %v635 = vpack.c.bf16 %v631, %v631
        %v636 = vpack.c.bf16 %v632, %v632
        %v637 = vpack.c.bf16 %v633, %v633
        %vm638 = vcmask 257024
        %639 = vst.msk [vmem:[%s330] sm:$0xf] %vm638, %v634
        %640 = vst.msk [vmem:[%s330 + $0x4] sm:$0xf] %vm638, %v635
        %641 = vst.msk [vmem:[%s330 + $0x8] sm:$0xf] %vm638, %v636
        %642 = vst.msk [vmem:[%s330 + $0xc] sm:$0xf] %vm638, %v637
        %p643 = scmp.lt.s32.totalorder %s20, 1
        %s644 = scalar_select %p643, %s20, 1
        %s645 = smul.addr %s644, 4
        %s646 = smul.addr %s645, 4
        %s647 = scalar_lea.vmem %s7, %s646
        // Predicated region
        $region57: #{_lambda_.26} parent=47 // pred_check
          %p648 = pneg %p195
        $region58: #{_lambda_.26} parent=47 // pred_check_branch
          %650 = sbr.rel (%p648) target = $region60
        $region59: #{_lambda_.26} parent=47 // pred_region
          _
        $region60: #{_lambda_.26} parent=47 // pred_fallthru
          _
      $region48: #{_lambda_.26} parent=5 // pred_fallthru
        _
      %p651 = scmp.le.s32.totalorder 2, %s15
      // Predicated region
      $region61: #{_lambda_.26} parent=5 // pred_check
        %p652 = pneg %p651
      $region62: #{_lambda_.26} parent=5 // pred_check_branch
        %654 = sbr.rel (%p652) target = $region64
      $region63: #{_lambda_.26} parent=5 // pred_region
        %s655 = ssub.s32 %s15, 2
        // Predicated region
        $region65: #{_lambda_.26} parent=63 // pred_check
          %p656 = pneg %p201
        $region66: #{_lambda_.26} parent=63 // pred_check_branch
          %658 = sbr.rel (%p656) target = $region68
        $region67: #{_lambda_.26} parent=63 // pred_region
          %p659 = scmp.lt.s32.totalorder %s21, 1
          %s660 = scalar_select %p659, %s21, 1
          %s661 = smul.addr %s660, 4
          %s662 = smul.addr %s661, 4
          %s663 = scalar_lea.vmem %s7, %s662
        $region68: #{_lambda_.26} parent=63 // pred_fallthru
          _
      $region64: #{_lambda_.26} parent=5 // pred_fallthru
        _
    $region6: #{_lambda_.26} parent=1 // loop_footer
      %s19 = sadd.s32 1, %s15
    $region7: #{_lambda_.26} parent=1 // loop_footer_branch
      %14 = sbr.rel target = $region3
    $region8: #{_lambda_.26} parent=1 // loop_exit
      _
    %664 = vsyncpa [#allocation3], 1
    %s665 = scalar_lea.sflag [#allocation3], 1
    %666 = vsyncpa %s665, 1
    %667 = vsyncpa [#allocation5], 1

// kernel: _lambda_.29
$region0: #{_lambda_.29}
  #allocation0 [shape = 'u32[]', space=smem, size = 0x4, offset = 0x4, fixed_abs, tag = 'smem constant byte address 0x4 - core index']
  #allocation1 [shape = 'u32[72,128]{1,0:T(1,128)}', space=vmem, size = 0x9000, scoped, tag = 'internal scratch']
  #allocation2 [shape = 'f32[64,2]{1,0:T(8,128)}', space=vmem, size = 0x8000, scoped, tag = 'scratch operand']
  %s0 = inlined_call_operand.vmem [shape: bf16[64,32], index: 0, kind: input, shape index: {}]
  %s1 = inlined_call_operand.vmem [shape: bf16[32,2], index: 1, kind: input, shape index: {}]
  %s2 = inlined_call_operand.hbm [shape: f32[1,2], index: 2, kind: input, shape index: {}]
  %s3 = inlined_call_operand.vmem [shape: f32[64,2], index: 3, kind: output, shape index: {}]
  %s4 = sld [smem:[#allocation0]]
  $region34: #{_lambda_.29} parent=0
    _
  %s6 = ssub.s32 1, %s4
  %s7 = scalar_select 0, %s6, %s4
  $region1: #{_lambda_.29} parent=0
    #allocation3 [shape = 'u8[512]{0}', space=vmem, size = 0x400, scoped, tag = 'input window, operand 2, single buffered']
    #allocation4 [shape = 's32[1]{0}', space=sflag, size = 0x4, scoped, tag = 'scoped memory for _lambda_.29']
    %8 = vsyncpa [#allocation4], 0
    // Predicated region
    $region2: #{_lambda_.29} parent=1 // pred_check
      _
    $region3: #{_lambda_.29} parent=1 // pred_check_branch
      %10 = sbr.rel (0) target = $region5
    $region4: #{_lambda_.29} parent=1 // pred_region
      _
    $region5: #{_lambda_.29} parent=1 // pred_fallthru
      _
    // Predicated region
    $region6: #{_lambda_.29} parent=1 // pred_check
      _
    $region7: #{_lambda_.29} parent=1 // pred_check_branch
      %12 = sbr.rel (0) target = $region9
    $region8: #{_lambda_.29} parent=1 // pred_region
      _
    $region9: #{_lambda_.29} parent=1 // pred_fallthru
      _
    // Predicated region
    $region10: #{_lambda_.29} parent=1 // pred_check
      _
    $region11: #{_lambda_.29} parent=1 // pred_check_branch
      %14 = sbr.rel (0) target = $region13
    $region12: #{_lambda_.29} parent=1 // pred_region
      %16 = vsyncadd [#allocation4], 0
      %s18 = sshll.u32 %s2, 4
      %s19 = int_to_ptr.hbm [resolvable:$true] %s18
      %s20 = sshll.u32 [#allocation3], 4
      %s21 = int_to_ptr.vmem [resolvable:$true] %s20
      %23 = dma.hbm_to_vmem [thread:$0]  %s19, 16, %s21, [#allocation4]
    $region13: #{_lambda_.29} parent=1 // pred_fallthru
      _
    // Predicated region
    $region14: #{_lambda_.29} parent=1 // pred_check
      _
    $region15: #{_lambda_.29} parent=1 // pred_check_branch
      %25 = sbr.rel (0) target = $region17
    $region16: #{_lambda_.29} parent=1 // pred_region
      %27 = dma.done [#allocation4], 16
    $region17: #{_lambda_.29} parent=1 // pred_fallthru
      _
    %p29 = scmp.eq.s32.totalorder 0, 0
    // Predicated region
    $region18: #{_lambda_.29} parent=1 // pred_check
      %p30 = pneg %p29
    $region19: #{_lambda_.29} parent=1 // pred_check_branch
      %32 = sbr.rel (%p30) target = $region21
    $region20: #{_lambda_.29} parent=1 // pred_region
      %vm33 = vcmask 15360
      %34 = vst.msk [vmem:[#allocation2] sm:$0xff] %vm33, 0.0
      %35 = vst.msk [vmem:[#allocation2 + $0x8] sm:$0xff] %vm33, 0.0
      %36 = vst.msk [vmem:[#allocation2 + $0x10] sm:$0xff] %vm33, 0.0
      %37 = vst.msk [vmem:[#allocation2 + $0x18] sm:$0xff] %vm33, 0.0
      %38 = vst.msk [vmem:[#allocation2 + $0x20] sm:$0xff] %vm33, 0.0
      %39 = vst.msk [vmem:[#allocation2 + $0x28] sm:$0xff] %vm33, 0.0
      %40 = vst.msk [vmem:[#allocation2 + $0x30] sm:$0xff] %vm33, 0.0
      %41 = vst.msk [vmem:[#allocation2 + $0x38] sm:$0xff] %vm33, 0.0
    $region21: #{_lambda_.29} parent=1 // pred_fallthru
      _
    %v42 = vld [vmem:[#allocation2] sm:$0xff]
    %v43 = vld [vmem:[#allocation2 + $0x8] sm:$0xff]
    %v44 = vld [vmem:[#allocation2 + $0x10] sm:$0xff]
    %v45 = vld [vmem:[#allocation2 + $0x18] sm:$0xff]
    %v46 = vld [vmem:[#allocation2 + $0x20] sm:$0xff]
    %v47 = vld [vmem:[#allocation2 + $0x28] sm:$0xff]
    %v48 = vld [vmem:[#allocation2 + $0x30] sm:$0xff]
    %v49 = vld [vmem:[#allocation2 + $0x38] sm:$0xff]
    %v50 = vld [vmem:[%s0] sm:$0xf]
    %v51 = vld [vmem:[%s0 + $0x4] sm:$0xf]
    %v52 = vld [vmem:[%s0 + $0x8] sm:$0xf]
    %v53 = vld [vmem:[%s0 + $0xc] sm:$0xf]
    %v54 = vld [vmem:[%s0 + $0x10] sm:$0xf]
    %v55 = vld [vmem:[%s0 + $0x14] sm:$0xf]
    %v56 = vld [vmem:[%s0 + $0x18] sm:$0xf]
    %v57 = vld [vmem:[%s0 + $0x1c] sm:$0xf]
    %v58 = vld [vmem:[%s1] sm:$0xf]
    %v59 = vld [vmem:[%s1 + $0x4] sm:$0xf]
    %v60 = vld [vmem:[%s1 + $0x8] sm:$0xf]
    %v61 = vld [vmem:[%s1 + $0xc] sm:$0xf]
    %v70 = vunpack.c.l.b16 %v50
    %v71 = vunpack.c.l.b16 %v51
    %v72 = vunpack.c.l.b16 %v52
    %v73 = vunpack.c.l.b16 %v53
    %v74 = vunpack.c.l.b16 %v54
    %v75 = vunpack.c.l.b16 %v55
    %v76 = vunpack.c.l.b16 %v56
    %v77 = vunpack.c.l.b16 %v57
    %v78 = vpack.c.b16 %v71, %v70
    %v79 = vpack.c.b16 %v73, %v72
    %v80 = vpack.c.b16 %v75, %v74
    %v81 = vpack.c.b16 %v77, %v76
    %v86 = vunpack.c.l.b16 %v58
    %v87 = vunpack.c.l.b16 %v59
    %v88 = vunpack.c.l.b16 %v60
    %v89 = vunpack.c.l.b16 %v61
    %v90 = vpack.c.b16 %v87, %v86
    %v91 = vpack.c.b16 %v89, %v88
    %vm94 = vcmask 261120
    %v96 = vsel %vm94, %v78, 0
    %v99 = vsel %vm94, %v79, 0
    %v102 = vsel %vm94, %v80, 0
    %v105 = vsel %vm94, %v81, 0
    %107 = vmatpush.bf16.msra.mxu0 0
    %108 = vmatpush.bf16.msra.mxu0 0
    %109 = vmatpush.bf16.msra.mxu0 0
    %110 = vmatpush.bf16.msra.mxu0 0
    %111 = vmatpush.bf16.msra.mxu0 0
    %112 = vmatpush.bf16.msra.mxu0 0
    %113 = vmatpush.bf16.msra.mxu0 %v91
    %114 = vmatpush.bf16.msra.mxu0 %v90
    %115 = vmatmul.bf16.gmra.mxu0 %v96
    %v116 = vpop.f32.mrf.mxu0
    %v117 = vadd.f32 0.0, %v116
    %v118 = vpop.f32.mrf.mxu0
    %v119 = vadd.f32 0.0, %v118
    %120 = vmatmul.bf16.gmra.mxu0 %v99
    %v121 = vpop.f32.mrf.mxu0
    %v122 = vadd.f32 0.0, %v121
    %v123 = vpop.f32.mrf.mxu0
    %v124 = vadd.f32 0.0, %v123
    %125 = vmatmul.bf16.gmra.mxu0 %v102
    %v126 = vpop.f32.mrf.mxu0
    %v127 = vadd.f32 0.0, %v126
    %v128 = vpop.f32.mrf.mxu0
    %v129 = vadd.f32 0.0, %v128
    %130 = vmatmul.bf16.gmra.mxu0 %v105
    %v131 = vpop.f32.mrf.mxu0
    %v132 = vadd.f32 0.0, %v131
    %v133 = vpop.f32.mrf.mxu0
    %v134 = vadd.f32 0.0, %v133
    %135 = vdwg.mxu0
    %v136 = vadd.f32 %v42, %v117
    %v137 = vadd.f32 %v43, %v119
    %v138 = vadd.f32 %v44, %v122
    %v139 = vadd.f32 %v45, %v124
    %v140 = vadd.f32 %v46, %v127
    %v141 = vadd.f32 %v47, %v129
    %v142 = vadd.f32 %v48, %v132
    %v143 = vadd.f32 %v49, %v134
    %vm144 = vcmask 15360
    %145 = vst.msk [vmem:[#allocation2] sm:$0xff] %vm144, %v136
    %146 = vst.msk [vmem:[#allocation2 + $0x8] sm:$0xff] %vm144, %v137
    %147 = vst.msk [vmem:[#allocation2 + $0x10] sm:$0xff] %vm144, %v138
    %148 = vst.msk [vmem:[#allocation2 + $0x18] sm:$0xff] %vm144, %v139
    %149 = vst.msk [vmem:[#allocation2 + $0x20] sm:$0xff] %vm144, %v140
    %150 = vst.msk [vmem:[#allocation2 + $0x28] sm:$0xff] %vm144, %v141
    %151 = vst.msk [vmem:[#allocation2 + $0x30] sm:$0xff] %vm144, %v142
    %152 = vst.msk [vmem:[#allocation2 + $0x38] sm:$0xff] %vm144, %v143
    // Predicated region
    $region22: #{_lambda_.29} parent=1 // pred_check
      %p153 = pneg %p29
    $region23: #{_lambda_.29} parent=1 // pred_check_branch
      %155 = sbr.rel (%p153) target = $region25
    $region24: #{_lambda_.29} parent=1 // pred_region
      %v156 = vld [vmem:[#allocation2] sm:$0xff]
      %v157 = vld [vmem:[#allocation2 + $0x8] sm:$0xff]
      %v158 = vld [vmem:[#allocation2 + $0x10] sm:$0xff]
      %v159 = vld [vmem:[#allocation2 + $0x18] sm:$0xff]
      %v160 = vld [vmem:[#allocation2 + $0x20] sm:$0xff]
      %v161 = vld [vmem:[#allocation2 + $0x28] sm:$0xff]
      %v162 = vld [vmem:[#allocation2 + $0x30] sm:$0xff]
      %v163 = vld [vmem:[#allocation2 + $0x38] sm:$0xff]
      %v164 = vld [vmem:[#allocation3] sm:$0x1]
      %v166 = vperm.slane %v164, 0
      %v168 = vadd.f32 %v156, %v166
      %v169 = vadd.f32 %v157, %v166
      %v170 = vadd.f32 %v158, %v166
      %v171 = vadd.f32 %v159, %v166
      %v172 = vadd.f32 %v160, %v166
      %v173 = vadd.f32 %v161, %v166
      %v174 = vadd.f32 %v162, %v166
      %v175 = vadd.f32 %v163, %v166
      %176 = vst.msk [vmem:[%s3] sm:$0xff] %vm144, %v168
      %177 = vst.msk [vmem:[%s3 + $0x8] sm:$0xff] %vm144, %v169
      %178 = vst.msk [vmem:[%s3 + $0x10] sm:$0xff] %vm144, %v170
      %179 = vst.msk [vmem:[%s3 + $0x18] sm:$0xff] %vm144, %v171
      %180 = vst.msk [vmem:[%s3 + $0x20] sm:$0xff] %vm144, %v172
      %181 = vst.msk [vmem:[%s3 + $0x28] sm:$0xff] %vm144, %v173
      %182 = vst.msk [vmem:[%s3 + $0x30] sm:$0xff] %vm144, %v174
      %183 = vst.msk [vmem:[%s3 + $0x38] sm:$0xff] %vm144, %v175
    $region25: #{_lambda_.29} parent=1 // pred_fallthru
      _
    // Predicated region
    $region26: #{_lambda_.29} parent=1 // pred_check
      _
    $region27: #{_lambda_.29} parent=1 // pred_check_branch
      %185 = sbr.rel (0) target = $region29
    $region28: #{_lambda_.29} parent=1 // pred_region
      _
    $region29: #{_lambda_.29} parent=1 // pred_fallthru
      _
    // Predicated region
    $region30: #{_lambda_.29} parent=1 // pred_check
      _
    $region31: #{_lambda_.29} parent=1 // pred_check_branch
      %187 = sbr.rel (0) target = $region33
    $region32: #{_lambda_.29} parent=1 // pred_region
      _
    $region33: #{_lambda_.29} parent=1 // pred_fallthru
      _
    %188 = vsyncpa [#allocation4], 1

</llo_original>
